<compile_context>
chip_gen: v7x
topology: tpu7x:2x2x1
jax: 0.10.0
libtpu: 0.0.40
codegen_flags: <defaults>
</compile_context>

<pallas_src>
import math
import functools

import jax
import jax.numpy as jnp
from jax import lax
from jax.experimental import pallas as pl
from jax.experimental.pallas import tpu as pltpu


# ------------------------------ fused kernel --------------------------------

def _visual_layer_kernel(x_ref, pe_ref,
                         wqkv_ref, bqkv_ref, wo_ref, bo_ref,
                         w1_ref, b1_ref, w2_ref, b2_ref,
                         g1_ref, be1_ref, g2_ref, be2_ref,
                         gf_ref, bf_ref,
                         o_ref, xc_ref, *, nhead):
    """Grid step = (batch tile b, encoder layer l).  One post-norm layer."""
    Bt, S, D = xc_ref.shape
    H = nhead
    dh = D // H

    l = pl.program_id(1)
    L = pl.num_programs(1)

    def layer_norm(y, g, b, eps=1e-5):
        # PyTorch LayerNorm: biased variance, eps=1e-5, f32 math.
        mu = jnp.mean(y, axis=-1, keepdims=True)
        yc = y - mu
        var = jnp.mean(yc * yc, axis=-1, keepdims=True)
        return yc * lax.rsqrt(var + eps) * g + b

    # PositionalEncoding (dropout=0 -> identity add), only at the first layer.
    @pl.when(l == 0)
    def _():
        xc_ref[...] = x_ref[...].astype(jnp.float32) + pe_ref[...]

    x = xc_ref[...]                                            # (Bt, S, D) f32

    # ----------------- multi-head self-attention -----------------
    x2 = x.reshape(Bt * S, D)
    qkv = jnp.dot(x2.astype(jnp.bfloat16), wqkv_ref[0],
                  preferred_element_type=jnp.float32)          # (Bt*S, 3D)
    qkv = (qkv + bqkv_ref[0]).reshape(Bt, S, 3 * D)

    # 1/sqrt(dh) is already folded into the q columns of wqkv / bqkv.
    q = qkv[:, :, 0:D]
    k = qkv[:, :, D:2 * D]
    v = qkv[:, :, 2 * D:3 * D]

    # Head-major batches (H*Bt, S, dh) via leading-axis concat of lane-aligned
    # (dh == 128 in the test config) slices, so scores/context are single
    # batched matmuls with one batch dim.
    qh = jnp.concatenate(
        [q[:, :, h * dh:(h + 1) * dh] for h in range(H)], axis=0
    ).astype(jnp.bfloat16)
    kh = jnp.concatenate(
        [k[:, :, h * dh:(h + 1) * dh] for h in range(H)], axis=0
    ).astype(jnp.bfloat16)
    vh = jnp.concatenate(
        [v[:, :, h * dh:(h + 1) * dh] for h in range(H)], axis=0
    ).astype(jnp.bfloat16)

    s = jnp.einsum('bqd,bkd->bqk', qh, kh,
                   preferred_element_type=jnp.float32)         # (H*Bt, S, S)
    s = s - jnp.max(s, axis=-1, keepdims=True)
    p = jnp.exp(s)
    p = p * pl.reciprocal(jnp.sum(p, axis=-1, keepdims=True), approx=True)

    ctx = jnp.einsum('bqk,bkd->bqd', p.astype(jnp.bfloat16), vh,
                     preferred_element_type=jnp.float32)       # (H*Bt, S, dh)
    ctx = jnp.concatenate(                                     # -> (Bt, S, D)
        [ctx[h * Bt:(h + 1) * Bt] for h in range(H)], axis=-1)

    attn = jnp.dot(ctx.reshape(Bt * S, D).astype(jnp.bfloat16), wo_ref[0],
                   preferred_element_type=jnp.float32) + bo_ref[0]
    attn = attn.reshape(Bt, S, D)

    # src + src2 -> norm1  (post-norm; dropout identity)
    x = layer_norm(x + attn, g1_ref[0], be1_ref[0])

    # --------------------- feed-forward ---------------------------
    h1 = jnp.dot(x.reshape(Bt * S, D).astype(jnp.bfloat16), w1_ref[0],
                 preferred_element_type=jnp.float32) + b1_ref[0]
    h1 = jnp.maximum(h1, 0.0)                                  # relu
    ff = jnp.dot(h1.astype(jnp.bfloat16), w2_ref[0],
                 preferred_element_type=jnp.float32) + b2_ref[0]
    ff = ff.reshape(Bt, S, D)

    # src + src2 -> norm2
    x = layer_norm(x + ff, g2_ref[0], be2_ref[0])
    xc_ref[...] = x                                            # carry to l+1

    # Final nn.LayerNorm(d_model) of TransformerEncoder after the last layer.
    @pl.when(l == L - 1)
    def _():
        o_ref[...] = layer_norm(x, gf_ref[...], bf_ref[...]).astype(o_ref.dtype)


# ------------------------------ wrapper --------------------------------------

def _pick_batch_tile(B, S, D, d_inner, nhead):
    """Bt so that Bt*S >= 256 (fill the MXU on the flattened GEMMs), while
    keeping >= 2 grid steps (v7x megacore) and a soft VMEM budget for one
    tile's f32 intermediates."""
    bt = max(1, 256 // max(S, 1))
    bt = min(bt, B)
    if B >= 2:
        bt = min(bt, B // 2)               # keep grid >= 2 for v7x's two TCs
    bt = max(bt, 1)
    bytes_per_batch_elem = S * (6 * D + d_inner) * 4 + nhead * S * S * 4
    budget = 24 * 1024 * 1024
    while bt > 1 and bt * bytes_per_batch_elem > budget:
        bt -= 1
    while bt > 1 and B % bt != 0:
        bt -= 1
    return bt


def _vmem_limit_bytes():
    """Generation-aware scoped VMEM limit: ~3/4 of physical, capped at 96 MiB
    (=> ~96 MiB on 128 MiB v5e/v6e, ~48 MiB on 64 MiB v7x)."""
    cap = 64 * 1024 * 1024
    try:
        info = pltpu.get_tpu_info()
        cap = int(getattr(info, "vmem_capacity_bytes", cap))
    except Exception:
        pass
    return min(int(cap * 3 // 4), 96 * 1024 * 1024)


def visual_forward(image_features_sbd, params, nhead, num_layers):
    """image_features_sbd: (S, B, d_model), seq-first like PyTorch."""
    x = jnp.transpose(image_features_sbd, (1, 0, 2))           # -> (B, S, D)
    B, S, D = x.shape
    pe = params["pe"][:S]
    d_inner = params["w1"].shape[-1]
    Bt = _pick_batch_tile(B, S, D, d_inner, nhead)

    kern = functools.partial(_visual_layer_kernel, nhead=nhead)

    def const_spec(a):                     # grid-invariant small arrays
        nd = a.ndim
        return pl.BlockSpec(a.shape, lambda b, l, _nd=nd: (0,) * _nd)

    def layer_spec(a):                     # stream one layer per 'l' step
        blk = (1,) + a.shape[1:]
        nrest = a.ndim - 1
        return pl.BlockSpec(blk, lambda b, l, _n=nrest: (l,) + (0,) * _n)

    batch_spec = pl.BlockSpec((Bt, S, D), lambda b, l: (b, 0, 0))

    layer_ws = (params["wqkv"], params["bqkv"], params["wo"], params["bo"],
                params["w1"], params["b1"], params["w2"], params["b2"],
                params["g1"], params["be1"], params["g2"], params["be2"])

    out = pl.pallas_call(
        kern,
        grid=(B // Bt, num_layers),
        in_specs=[batch_spec, const_spec(pe)]
                 + [layer_spec(w) for w in layer_ws]
                 + [const_spec(params["gf"]), const_spec(params["bf"])],
        out_specs=batch_spec,
        out_shape=jax.ShapeDtypeStruct((B, S, D), jnp.float32),
        scratch_shapes=[pltpu.VMEM((Bt, S, D), jnp.float32)],   # x carry
        compiler_params=pltpu.CompilerParams(
            dimension_semantics=("parallel", "arbitrary"),
            vmem_limit_bytes=_vmem_limit_bytes()),
    )(x, pe, *layer_ws, params["gf"], params["bf"])

    return jnp.transpose(out, (1, 0, 2))                        # -> (S, B, D)


# ------------------------------ params ---------------------------------------

def make_positional_encoding(max_len, d_model):
    position = jnp.arange(max_len, dtype=jnp.float32)[:, None]
    div_term = jnp.exp(jnp.arange(0, d_model, 2, dtype=jnp.float32)
                       * (-math.log(10000.0) / d_model))
    pe = jnp.zeros((max_len, d_model), jnp.float32)
    pe = pe.at[:, 0::2].set(jnp.sin(position * div_term))
    pe = pe.at[:, 1::2].set(jnp.cos(position * div_term))
    return pe


def init_visual_params(key, d_model, nhead, d_inner, num_layers,
                       max_len=6 * 40, wdtype=jnp.bfloat16):
    assert d_model % nhead == 0
    D, DI, L = d_model, d_inner, num_layers
    dh = D // nhead
    ks = jax.random.split(key, 4)

    def w(k, shape):
        return 0.05 * jax.random.normal(k, shape, jnp.float32)

    # Fused QKV weight, with the attention 1/sqrt(dh) scale folded into the
    # q projection columns (and bias) so the kernel skips the per-layer scale.
    wqkv = w(ks[0], (L, D, 3 * D))
    bqkv = jnp.zeros((L, 1, 3 * D), jnp.float32)
    scale = 1.0 / math.sqrt(dh)
    wqkv = wqkv.at[:, :, :D].multiply(scale)
    bqkv = bqkv.at[:, :, :D].multiply(scale)

    return dict(
        pe=make_positional_encoding(max_len, D),                # f32
        wqkv=wqkv.astype(wdtype),
        bqkv=bqkv,
        wo=w(ks[1], (L, D, D)).astype(wdtype),
        bo=jnp.zeros((L, 1, D), jnp.float32),
        w1=w(ks[2], (L, D, DI)).astype(wdtype),
        b1=jnp.zeros((L, 1, DI), jnp.float32),
        w2=w(ks[3], (L, DI, D)).astype(wdtype),
        b2=jnp.zeros((L, 1, D), jnp.float32),
        g1=jnp.ones((L, 1, D), jnp.float32),
        be1=jnp.zeros((L, 1, D), jnp.float32),
        g2=jnp.ones((L, 1, D), jnp.float32),
        be2=jnp.zeros((L, 1, D), jnp.float32),
        gf=jnp.ones((1, D), jnp.float32),
        bf=jnp.zeros((1, D), jnp.float32),
    )


# --------------------------------- main --------------------------------------

if __name__ == "__main__":
    # Small lane-friendly config (module defaults are 512/8/2048/3):
    # dh = d_model/nhead = 128 keeps per-head slices lane-aligned;
    # B=16, S=32 -> Bt=8, Bt*S=256 GEMM rows, grid=(2, 3).
    d_model, nhead, d_inner, num_layers = 256, 2, 512, 3
    S, B = 32, 16

    key = jax.random.PRNGKey(0)
    pkey, xkey = jax.random.split(key)
    params = init_visual_params(pkey, d_model, nhead, d_inner, num_layers)

    image_features = jax.random.normal(xkey, (S, B, d_model), jnp.float32)

    out = visual_forward(image_features, params, nhead, num_layers)
    out = jax.block_until_ready(out)

    assert out.shape == (S, B, d_model), out.shape
    assert bool(jnp.all(jnp.isfinite(out)))
    print("KERNEL_OK")
</pallas_src>

<mosaic_0001>
module attributes {stable_mosaic.version = 11 : i64} {
  func.func @_visual_layer_kernel(%arg0: i32, %arg1: i32, %arg2: memref<8x32x256xf32, #tpu.memory_space<vmem>>, %arg3: memref<32x256xf32, #tpu.memory_space<vmem>>, %arg4: memref<1x256x768xbf16, #tpu.memory_space<vmem>>, %arg5: memref<1x1x768xf32, #tpu.memory_space<vmem>>, %arg6: memref<1x256x256xbf16, #tpu.memory_space<vmem>>, %arg7: memref<1x1x256xf32, #tpu.memory_space<vmem>>, %arg8: memref<1x256x512xbf16, #tpu.memory_space<vmem>>, %arg9: memref<1x1x512xf32, #tpu.memory_space<vmem>>, %arg10: memref<1x512x256xbf16, #tpu.memory_space<vmem>>, %arg11: memref<1x1x256xf32, #tpu.memory_space<vmem>>, %arg12: memref<1x1x256xf32, #tpu.memory_space<vmem>>, %arg13: memref<1x1x256xf32, #tpu.memory_space<vmem>>, %arg14: memref<1x1x256xf32, #tpu.memory_space<vmem>>, %arg15: memref<1x1x256xf32, #tpu.memory_space<vmem>>, %arg16: memref<1x256xf32, #tpu.memory_space<vmem>>, %arg17: memref<1x256xf32, #tpu.memory_space<vmem>>, %arg18: memref<8x32x256xf32, #tpu.memory_space<vmem>>, %arg19: memref<8x32x256xf32, #tpu.memory_space<vmem>>) attributes {dimension_semantics = [#tpu.dimension_semantics<parallel>, #tpu.dimension_semantics<arbitrary>], iteration_bounds = array<i64: 2, 3>, scalar_prefetch = 0 : i64, scratch_operands = 1 : i64, tpu.core_type = #tpu.core_type<tc>, window_params = [{transform_indices = @transform_0, window_bounds = array<i64: 8, 32, 256>}, {pipeline_mode = #tpu.pipeline_mode<synchronous>, transform_indices = @transform_1, window_bounds = array<i64: 32, 256>}, {transform_indices = @transform_2, window_bounds = array<i64: 1, 256, 768>}, {transform_indices = @transform_3, window_bounds = array<i64: 1, 1, 768>}, {transform_indices = @transform_4, window_bounds = array<i64: 1, 256, 256>}, {transform_indices = @transform_5, window_bounds = array<i64: 1, 1, 256>}, {transform_indices = @transform_6, window_bounds = array<i64: 1, 256, 512>}, {transform_indices = @transform_7, window_bounds = array<i64: 1, 1, 512>}, {transform_indices = @transform_8, window_bounds = array<i64: 1, 512, 256>}, {transform_indices = @transform_9, window_bounds = array<i64: 1, 1, 256>}, {transform_indices = @transform_10, window_bounds = array<i64: 1, 1, 256>}, {transform_indices = @transform_11, window_bounds = array<i64: 1, 1, 256>}, {transform_indices = @transform_12, window_bounds = array<i64: 1, 1, 256>}, {transform_indices = @transform_13, window_bounds = array<i64: 1, 1, 256>}, {pipeline_mode = #tpu.pipeline_mode<synchronous>, transform_indices = @transform_14, window_bounds = array<i64: 1, 256>}, {pipeline_mode = #tpu.pipeline_mode<synchronous>, transform_indices = @transform_15, window_bounds = array<i64: 1, 256>}, {transform_indices = @transform_16, window_bounds = array<i64: 8, 32, 256>}]} {
    %c0_i32 = arith.constant 0 : i32
    %0 = arith.cmpi eq, %arg1, %c0_i32 : i32
    %1 = arith.extui %0 : i1 to i32
    %c0_i32_0 = arith.constant 0 : i32
    %2 = arith.cmpi ne, %1, %c0_i32_0 : i32
    scf.if %2 {
      %c0_61 = arith.constant 0 : index
      %c0_62 = arith.constant 0 : index
      %c0_63 = arith.constant 0 : index
      %133 = vector.load %arg2[%c0_61, %c0_62, %c0_63] : memref<8x32x256xf32, #tpu.memory_space<vmem>>, vector<8x32x256xf32>
      %c0_64 = arith.constant 0 : index
      %c0_65 = arith.constant 0 : index
      %134 = vector.load %arg3[%c0_64, %c0_65] : memref<32x256xf32, #tpu.memory_space<vmem>>, vector<32x256xf32>
      %135 = vector.shape_cast %134 : vector<32x256xf32> to vector<1x32x256xf32>
      %136 = vector.broadcast %135 : vector<1x32x256xf32> to vector<8x32x256xf32>
      %137 = arith.addf %133, %136 : vector<8x32x256xf32>
      %c0_66 = arith.constant 0 : index
      %c0_67 = arith.constant 0 : index
      %c0_68 = arith.constant 0 : index
      %138 = vector.load %arg19[%c0_66, %c0_67, %c0_68] : memref<8x32x256xf32, #tpu.memory_space<vmem>>, vector<8x32x256xf32>
      tpu.vector_store %arg19[%c0_66, %c0_67, %c0_68], %137 {strides = array<i32>} : memref<8x32x256xf32, #tpu.memory_space<vmem>>, vector<8x32x256xf32>,
    } else {
    }
    %c0 = arith.constant 0 : index
    %c0_1 = arith.constant 0 : index
    %c0_2 = arith.constant 0 : index
    %3 = vector.load %arg19[%c0, %c0_1, %c0_2] : memref<8x32x256xf32, #tpu.memory_space<vmem>>, vector<8x32x256xf32>
    %4 = vector.shape_cast %3 : vector<8x32x256xf32> to vector<256x256xf32>
    %5 = arith.truncf %4 : vector<256x256xf32> to vector<256x256xbf16>
    %c0_3 = arith.constant 0 : index
    %c0_4 = arith.constant 0 : index
    %c0_5 = arith.constant 0 : index
    %6 = vector.load %arg4[%c0_3, %c0_4, %c0_5] : memref<1x256x768xbf16, #tpu.memory_space<vmem>>, vector<1x256x768xbf16>
    %7 = vector.shape_cast %6 : vector<1x256x768xbf16> to vector<256x768xbf16>
    %cst = arith.constant dense<0.000000e+00> : vector<256x768xf32>
    %8 = tpu.matmul %5, %7, %cst {dimension_numbers = #tpu.dot_dimension_numbers<[1], [0], [0], [1], [0, 0, 1, 1], [], []>} : vector<256x256xbf16>, vector<256x768xbf16>, vector<256x768xf32> -> vector<256x768xf32>
    %c0_6 = arith.constant 0 : index
    %c0_7 = arith.constant 0 : index
    %c0_8 = arith.constant 0 : index
    %9 = vector.load %arg5[%c0_6, %c0_7, %c0_8] : memref<1x1x768xf32, #tpu.memory_space<vmem>>, vector<1x1x768xf32>
    %10 = vector.shape_cast %9 : vector<1x1x768xf32> to vector<1x768xf32>
    %11 = vector.broadcast %10 : vector<1x768xf32> to vector<256x768xf32>
    %12 = arith.addf %8, %11 : vector<256x768xf32>
    %13 = vector.shape_cast %12 : vector<256x768xf32> to vector<8x32x768xf32>
    %14 = vector.extract_strided_slice %13 {offsets = [0, 0, 0], sizes = [8, 32, 256], strides = [1, 1, 1]} : vector<8x32x768xf32> to vector<8x32x256xf32>
    %15 = vector.extract_strided_slice %13 {offsets = [0, 0, 256], sizes = [8, 32, 256], strides = [1, 1, 1]} : vector<8x32x768xf32> to vector<8x32x256xf32>
    %16 = vector.extract_strided_slice %13 {offsets = [0, 0, 512], sizes = [8, 32, 256], strides = [1, 1, 1]} : vector<8x32x768xf32> to vector<8x32x256xf32>
    %17 = vector.extract_strided_slice %14 {offsets = [0, 0, 0], sizes = [8, 32, 128], strides = [1, 1, 1]} : vector<8x32x256xf32> to vector<8x32x128xf32>
    %18 = vector.extract_strided_slice %14 {offsets = [0, 0, 128], sizes = [8, 32, 128], strides = [1, 1, 1]} : vector<8x32x256xf32> to vector<8x32x128xf32>
    %19 = tpu.concatenate %17, %18 in 0 : vector<8x32x128xf32>, vector<8x32x128xf32> -> vector<16x32x128xf32>
    %20 = arith.truncf %19 : vector<16x32x128xf32> to vector<16x32x128xbf16>
    %21 = vector.extract_strided_slice %15 {offsets = [0, 0, 0], sizes = [8, 32, 128], strides = [1, 1, 1]} : vector<8x32x256xf32> to vector<8x32x128xf32>
    %22 = vector.extract_strided_slice %15 {offsets = [0, 0, 128], sizes = [8, 32, 128], strides = [1, 1, 1]} : vector<8x32x256xf32> to vector<8x32x128xf32>
    %23 = tpu.concatenate %21, %22 in 0 : vector<8x32x128xf32>, vector<8x32x128xf32> -> vector<16x32x128xf32>
    %24 = arith.truncf %23 : vector<16x32x128xf32> to vector<16x32x128xbf16>
    %25 = vector.extract_strided_slice %16 {offsets = [0, 0, 0], sizes = [8, 32, 128], strides = [1, 1, 1]} : vector<8x32x256xf32> to vector<8x32x128xf32>
    %26 = vector.extract_strided_slice %16 {offsets = [0, 0, 128], sizes = [8, 32, 128], strides = [1, 1, 1]} : vector<8x32x256xf32> to vector<8x32x128xf32>
    %27 = tpu.concatenate %25, %26 in 0 : vector<8x32x128xf32>, vector<8x32x128xf32> -> vector<16x32x128xf32>
    %28 = arith.truncf %27 : vector<16x32x128xf32> to vector<16x32x128xbf16>
    "tpu.trace_start"() <{level = 10 : i32, message = "bqd,bkd->bqk"}> : () -> ()
    %cst_9 = arith.constant dense<0.000000e+00> : vector<16x32x32xf32>
    %29 = tpu.matmul %20, %24, %cst_9 {dimension_numbers = #tpu.dot_dimension_numbers<[2], [2], [1], [1], [0, 0, 0, 1, 1, 1], [0], [0]>} : vector<16x32x128xbf16>, vector<16x32x128xbf16>, vector<16x32x32xf32> -> vector<16x32x32xf32>
    "tpu.trace_stop"() : () -> ()
    %cst_10 = arith.constant dense<0xFF800000> : vector<16x32xf32>
    %30 = vector.multi_reduction <maximumf>, %29, %cst_10 [2] : vector<16x32x32xf32> to vector<16x32xf32>
    %31 = vector.shape_cast %30 : vector<16x32xf32> to vector<16x32x1xf32>
    %32 = vector.broadcast %31 : vector<16x32x1xf32> to vector<16x32x32xf32>
    %33 = arith.subf %29, %32 : vector<16x32x32xf32>
    %34 = math.exp %33 : vector<16x32x32xf32>
    %cst_11 = arith.constant dense<0.000000e+00> : vector<16x32xf32>
    %35 = vector.multi_reduction <add>, %34, %cst_11 [2] : vector<16x32x32xf32> to vector<16x32xf32>
    %36 = vector.shape_cast %35 : vector<16x32xf32> to vector<16x32x1xf32>
    %37 = tpu.reciprocal %36 {approx = true} : vector<16x32x1xf32> -> vector<16x32x1xf32>
    %38 = vector.broadcast %37 : vector<16x32x1xf32> to vector<16x32x32xf32>
    %39 = arith.mulf %34, %38 : vector<16x32x32xf32>
    %40 = arith.truncf %39 : vector<16x32x32xf32> to vector<16x32x32xbf16>
    "tpu.trace_start"() <{level = 10 : i32, message = "bqk,bkd->bqd"}> : () -> ()
    %cst_12 = arith.constant dense<0.000000e+00> : vector<16x32x128xf32>
    %41 = tpu.matmul %40, %28, %cst_12 {dimension_numbers = #tpu.dot_dimension_numbers<[2], [1], [1], [2], [0, 0, 0, 1, 1, 2], [0], [0]>} : vector<16x32x32xbf16>, vector<16x32x128xbf16>, vector<16x32x128xf32> -> vector<16x32x128xf32>
    "tpu.trace_stop"() : () -> ()
    %42 = vector.extract_strided_slice %41 {offsets = [0, 0, 0], sizes = [8, 32, 128], strides = [1, 1, 1]} : vector<16x32x128xf32> to vector<8x32x128xf32>
    %43 = vector.extract_strided_slice %41 {offsets = [8, 0, 0], sizes = [8, 32, 128], strides = [1, 1, 1]} : vector<16x32x128xf32> to vector<8x32x128xf32>
    %44 = tpu.concatenate %42, %43 in 2 : vector<8x32x128xf32>, vector<8x32x128xf32> -> vector<8x32x256xf32>
    %45 = vector.shape_cast %44 : vector<8x32x256xf32> to vector<256x256xf32>
    %46 = arith.truncf %45 : vector<256x256xf32> to vector<256x256xbf16>
    %c0_13 = arith.constant 0 : index
    %c0_14 = arith.constant 0 : index
    %c0_15 = arith.constant 0 : index
    %47 = vector.load %arg6[%c0_13, %c0_14, %c0_15] : memref<1x256x256xbf16, #tpu.memory_space<vmem>>, vector<1x256x256xbf16>
    %48 = vector.shape_cast %47 : vector<1x256x256xbf16> to vector<256x256xbf16>
    %cst_16 = arith.constant dense<0.000000e+00> : vector<256x256xf32>
    %49 = tpu.matmul %46, %48, %cst_16 {dimension_numbers = #tpu.dot_dimension_numbers<[1], [0], [0], [1], [0, 0, 1, 1], [], []>} : vector<256x256xbf16>, vector<256x256xbf16>, vector<256x256xf32> -> vector<256x256xf32>
    %c0_17 = arith.constant 0 : index
    %c0_18 = arith.constant 0 : index
    %c0_19 = arith.constant 0 : index
    %50 = vector.load %arg7[%c0_17, %c0_18, %c0_19] : memref<1x1x256xf32, #tpu.memory_space<vmem>>, vector<1x1x256xf32>
    %51 = vector.shape_cast %50 : vector<1x1x256xf32> to vector<1x256xf32>
    %52 = vector.broadcast %51 : vector<1x256xf32> to vector<256x256xf32>
    %53 = arith.addf %49, %52 : vector<256x256xf32>
    %54 = vector.shape_cast %53 : vector<256x256xf32> to vector<8x32x256xf32>
    %55 = arith.addf %3, %54 : vector<8x32x256xf32>
    %c0_20 = arith.constant 0 : index
    %c0_21 = arith.constant 0 : index
    %c0_22 = arith.constant 0 : index
    %56 = vector.load %arg12[%c0_20, %c0_21, %c0_22] : memref<1x1x256xf32, #tpu.memory_space<vmem>>, vector<1x1x256xf32>
    %57 = vector.shape_cast %56 : vector<1x1x256xf32> to vector<1x256xf32>
    %c0_23 = arith.constant 0 : index
    %c0_24 = arith.constant 0 : index
    %c0_25 = arith.constant 0 : index
    %58 = vector.load %arg13[%c0_23, %c0_24, %c0_25] : memref<1x1x256xf32, #tpu.memory_space<vmem>>, vector<1x1x256xf32>
    %59 = vector.shape_cast %58 : vector<1x1x256xf32> to vector<1x256xf32>
    %cst_26 = arith.constant dense<0.000000e+00> : vector<8x32xf32>
    %60 = vector.multi_reduction <add>, %55, %cst_26 [2] : vector<8x32x256xf32> to vector<8x32xf32>
    %61 = vector.shape_cast %60 : vector<8x32xf32> to vector<8x32x1xf32>
    %cst_27 = arith.constant 2.560000e+02 : f32
    %62 = vector.broadcast %cst_27 : f32 to vector<8x32x1xf32>
    %63 = arith.divf %61, %62 : vector<8x32x1xf32>
    %64 = vector.broadcast %63 : vector<8x32x1xf32> to vector<8x32x256xf32>
    %65 = arith.subf %55, %64 : vector<8x32x256xf32>
    %66 = arith.mulf %65, %65 : vector<8x32x256xf32>
    %cst_28 = arith.constant dense<0.000000e+00> : vector<8x32xf32>
    %67 = vector.multi_reduction <add>, %66, %cst_28 [2] : vector<8x32x256xf32> to vector<8x32xf32>
    %68 = vector.shape_cast %67 : vector<8x32xf32> to vector<8x32x1xf32>
    %cst_29 = arith.constant 2.560000e+02 : f32
    %69 = vector.broadcast %cst_29 : f32 to vector<8x32x1xf32>
    %70 = arith.divf %68, %69 : vector<8x32x1xf32>
    %cst_30 = arith.constant 9.99999974E-6 : f32
    %71 = vector.broadcast %cst_30 : f32 to vector<8x32x1xf32>
    %72 = arith.addf %70, %71 : vector<8x32x1xf32>
    %73 = math.rsqrt %72 : vector<8x32x1xf32>
    %74 = vector.broadcast %73 : vector<8x32x1xf32> to vector<8x32x256xf32>
    %75 = arith.mulf %65, %74 : vector<8x32x256xf32>
    %76 = vector.shape_cast %57 : vector<1x256xf32> to vector<1x1x256xf32>
    %77 = vector.broadcast %76 : vector<1x1x256xf32> to vector<8x32x256xf32>
    %78 = arith.mulf %75, %77 : vector<8x32x256xf32>
    %79 = vector.shape_cast %59 : vector<1x256xf32> to vector<1x1x256xf32>
    %80 = vector.broadcast %79 : vector<1x1x256xf32> to vector<8x32x256xf32>
    %81 = arith.addf %78, %80 : vector<8x32x256xf32>
    %82 = vector.shape_cast %81 : vector<8x32x256xf32> to vector<256x256xf32>
    %83 = arith.truncf %82 : vector<256x256xf32> to vector<256x256xbf16>
    %c0_31 = arith.constant 0 : index
    %c0_32 = arith.constant 0 : index
    %c0_33 = arith.constant 0 : index
    %84 = vector.load %arg8[%c0_31, %c0_32, %c0_33] : memref<1x256x512xbf16, #tpu.memory_space<vmem>>, vector<1x256x512xbf16>
    %85 = vector.shape_cast %84 : vector<1x256x512xbf16> to vector<256x512xbf16>
    %cst_34 = arith.constant dense<0.000000e+00> : vector<256x512xf32>
    %86 = tpu.matmul %83, %85, %cst_34 {dimension_numbers = #tpu.dot_dimension_numbers<[1], [0], [0], [1], [0, 0, 1, 1], [], []>} : vector<256x256xbf16>, vector<256x512xbf16>, vector<256x512xf32> -> vector<256x512xf32>
    %c0_35 = arith.constant 0 : index
    %c0_36 = arith.constant 0 : index
    %c0_37 = arith.constant 0 : index
    %87 = vector.load %arg9[%c0_35, %c0_36, %c0_37] : memref<1x1x512xf32, #tpu.memory_space<vmem>>, vector<1x1x512xf32>
    %88 = vector.shape_cast %87 : vector<1x1x512xf32> to vector<1x512xf32>
    %89 = vector.broadcast %88 : vector<1x512xf32> to vector<256x512xf32>
    %90 = arith.addf %86, %89 : vector<256x512xf32>
    %cst_38 = arith.constant 0.000000e+00 : f32
    %91 = vector.broadcast %cst_38 : f32 to vector<256x512xf32>
    %92 = arith.maximumf %90, %91 : vector<256x512xf32>
    %93 = arith.truncf %92 : vector<256x512xf32> to vector<256x512xbf16>
    %c0_39 = arith.constant 0 : index
    %c0_40 = arith.constant 0 : index
    %c0_41 = arith.constant 0 : index
    %94 = vector.load %arg10[%c0_39, %c0_40, %c0_41] : memref<1x512x256xbf16, #tpu.memory_space<vmem>>, vector<1x512x256xbf16>
    %95 = vector.shape_cast %94 : vector<1x512x256xbf16> to vector<512x256xbf16>
    %cst_42 = arith.constant dense<0.000000e+00> : vector<256x256xf32>
    %96 = tpu.matmul %93, %95, %cst_42 {dimension_numbers = #tpu.dot_dimension_numbers<[1], [0], [0], [1], [0, 0, 1, 1], [], []>} : vector<256x512xbf16>, vector<512x256xbf16>, vector<256x256xf32> -> vector<256x256xf32>
    %c0_43 = arith.constant 0 : index
    %c0_44 = arith.constant 0 : index
    %c0_45 = arith.constant 0 : index
    %97 = vector.load %arg11[%c0_43, %c0_44, %c0_45] : memref<1x1x256xf32, #tpu.memory_space<vmem>>, vector<1x1x256xf32>
    %98 = vector.shape_cast %97 : vector<1x1x256xf32> to vector<1x256xf32>
    %99 = vector.broadcast %98 : vector<1x256xf32> to vector<256x256xf32>
    %100 = arith.addf %96, %99 : vector<256x256xf32>
    %101 = vector.shape_cast %100 : vector<256x256xf32> to vector<8x32x256xf32>
    %102 = arith.addf %81, %101 : vector<8x32x256xf32>
    %c0_46 = arith.constant 0 : index
    %c0_47 = arith.constant 0 : index
    %c0_48 = arith.constant 0 : index
    %103 = vector.load %arg14[%c0_46, %c0_47, %c0_48] : memref<1x1x256xf32, #tpu.memory_space<vmem>>, vector<1x1x256xf32>
    %104 = vector.shape_cast %103 : vector<1x1x256xf32> to vector<1x256xf32>
    %c0_49 = arith.constant 0 : index
    %c0_50 = arith.constant 0 : index
    %c0_51 = arith.constant 0 : index
    %105 = vector.load %arg15[%c0_49, %c0_50, %c0_51] : memref<1x1x256xf32, #tpu.memory_space<vmem>>, vector<1x1x256xf32>
    %106 = vector.shape_cast %105 : vector<1x1x256xf32> to vector<1x256xf32>
    %cst_52 = arith.constant dense<0.000000e+00> : vector<8x32xf32>
    %107 = vector.multi_reduction <add>, %102, %cst_52 [2] : vector<8x32x256xf32> to vector<8x32xf32>
    %108 = vector.shape_cast %107 : vector<8x32xf32> to vector<8x32x1xf32>
    %cst_53 = arith.constant 2.560000e+02 : f32
    %109 = vector.broadcast %cst_53 : f32 to vector<8x32x1xf32>
    %110 = arith.divf %108, %109 : vector<8x32x1xf32>
    %111 = vector.broadcast %110 : vector<8x32x1xf32> to vector<8x32x256xf32>
    %112 = arith.subf %102, %111 : vector<8x32x256xf32>
    %113 = arith.mulf %112, %112 : vector<8x32x256xf32>
    %cst_54 = arith.constant dense<0.000000e+00> : vector<8x32xf32>
    %114 = vector.multi_reduction <add>, %113, %cst_54 [2] : vector<8x32x256xf32> to vector<8x32xf32>
    %115 = vector.shape_cast %114 : vector<8x32xf32> to vector<8x32x1xf32>
    %cst_55 = arith.constant 2.560000e+02 : f32
    %116 = vector.broadcast %cst_55 : f32 to vector<8x32x1xf32>
    %117 = arith.divf %115, %116 : vector<8x32x1xf32>
    %cst_56 = arith.constant 9.99999974E-6 : f32
    %118 = vector.broadcast %cst_56 : f32 to vector<8x32x1xf32>
    %119 = arith.addf %117, %118 : vector<8x32x1xf32>
    %120 = math.rsqrt %119 : vector<8x32x1xf32>
    %121 = vector.broadcast %120 : vector<8x32x1xf32> to vector<8x32x256xf32>
    %122 = arith.mulf %112, %121 : vector<8x32x256xf32>
    %123 = vector.shape_cast %104 : vector<1x256xf32> to vector<1x1x256xf32>
    %124 = vector.broadcast %123 : vector<1x1x256xf32> to vector<8x32x256xf32>
    %125 = arith.mulf %122, %124 : vector<8x32x256xf32>
    %126 = vector.shape_cast %106 : vector<1x256xf32> to vector<1x1x256xf32>
    %127 = vector.broadcast %126 : vector<1x1x256xf32> to vector<8x32x256xf32>
    %128 = arith.addf %125, %127 : vector<8x32x256xf32>
    %c0_57 = arith.constant 0 : index
    %c0_58 = arith.constant 0 : index
    %c0_59 = arith.constant 0 : index
    %129 = vector.load %arg19[%c0_57, %c0_58, %c0_59] : memref<8x32x256xf32, #tpu.memory_space<vmem>>, vector<8x32x256xf32>
    tpu.vector_store %arg19[%c0_57, %c0_58, %c0_59], %128 {strides = array<i32>} : memref<8x32x256xf32, #tpu.memory_space<vmem>>, vector<8x32x256xf32>,
    %c2_i32 = arith.constant 2 : i32
    %130 = arith.cmpi eq, %arg1, %c2_i32 : i32
    %131 = arith.extui %130 : i1 to i32
    %c0_i32_60 = arith.constant 0 : i32
    %132 = arith.cmpi ne, %131, %c0_i32_60 : i32
    scf.if %132 {
      %c0_61 = arith.constant 0 : index
      %c0_62 = arith.constant 0 : index
      %133 = vector.load %arg16[%c0_61, %c0_62] : memref<1x256xf32, #tpu.memory_space<vmem>>, vector<1x256xf32>
      %c0_63 = arith.constant 0 : index
      %c0_64 = arith.constant 0 : index
      %134 = vector.load %arg17[%c0_63, %c0_64] : memref<1x256xf32, #tpu.memory_space<vmem>>, vector<1x256xf32>
      %cst_65 = arith.constant dense<0.000000e+00> : vector<8x32xf32>
      %135 = vector.multi_reduction <add>, %128, %cst_65 [2] : vector<8x32x256xf32> to vector<8x32xf32>
      %136 = vector.shape_cast %135 : vector<8x32xf32> to vector<8x32x1xf32>
      %cst_66 = arith.constant 2.560000e+02 : f32
      %137 = vector.broadcast %cst_66 : f32 to vector<8x32x1xf32>
      %138 = arith.divf %136, %137 : vector<8x32x1xf32>
      %139 = vector.broadcast %138 : vector<8x32x1xf32> to vector<8x32x256xf32>
      %140 = arith.subf %128, %139 : vector<8x32x256xf32>
      %141 = arith.mulf %140, %140 : vector<8x32x256xf32>
      %cst_67 = arith.constant dense<0.000000e+00> : vector<8x32xf32>
      %142 = vector.multi_reduction <add>, %141, %cst_67 [2] : vector<8x32x256xf32> to vector<8x32xf32>
      %143 = vector.shape_cast %142 : vector<8x32xf32> to vector<8x32x1xf32>
      %cst_68 = arith.constant 2.560000e+02 : f32
      %144 = vector.broadcast %cst_68 : f32 to vector<8x32x1xf32>
      %145 = arith.divf %143, %144 : vector<8x32x1xf32>
      %cst_69 = arith.constant 9.99999974E-6 : f32
      %146 = vector.broadcast %cst_69 : f32 to vector<8x32x1xf32>
      %147 = arith.addf %145, %146 : vector<8x32x1xf32>
      %148 = math.rsqrt %147 : vector<8x32x1xf32>
      %149 = vector.broadcast %148 : vector<8x32x1xf32> to vector<8x32x256xf32>
      %150 = arith.mulf %140, %149 : vector<8x32x256xf32>
      %151 = vector.shape_cast %133 : vector<1x256xf32> to vector<1x1x256xf32>
      %152 = vector.broadcast %151 : vector<1x1x256xf32> to vector<8x32x256xf32>
      %153 = arith.mulf %150, %152 : vector<8x32x256xf32>
      %154 = vector.shape_cast %134 : vector<1x256xf32> to vector<1x1x256xf32>
      %155 = vector.broadcast %154 : vector<1x1x256xf32> to vector<8x32x256xf32>
      %156 = arith.addf %153, %155 : vector<8x32x256xf32>
      %c0_70 = arith.constant 0 : index
      %c0_71 = arith.constant 0 : index
      %c0_72 = arith.constant 0 : index
      %157 = vector.load %arg18[%c0_70, %c0_71, %c0_72] : memref<8x32x256xf32, #tpu.memory_space<vmem>>, vector<8x32x256xf32>
      tpu.vector_store %arg18[%c0_70, %c0_71, %c0_72], %156 {strides = array<i32>} : memref<8x32x256xf32, #tpu.memory_space<vmem>>, vector<8x32x256xf32>,
    } else {
    }
    return
  }
  func.func @transform_0(%arg0: i32, %arg1: i32) -> (i32, i32, i32) {
    %c0_i32 = arith.constant 0 : i32
    %c0_i32_0 = arith.constant 0 : i32
    %c0_i32_1 = arith.constant 0 : i32
    return %arg0, %c0_i32, %c0_i32_0 : i32, i32, i32
  }
  func.func @transform_1(%arg0: i32, %arg1: i32) -> (i32, i32) {
    %c0_i32 = arith.constant 0 : i32
    %c0_i32_0 = arith.constant 0 : i32
    %c0_i32_1 = arith.constant 0 : i32
    return %c0_i32, %c0_i32_0 : i32, i32
  }
  func.func @transform_2(%arg0: i32, %arg1: i32) -> (i32, i32, i32) {
    %c0_i32 = arith.constant 0 : i32
    %c0_i32_0 = arith.constant 0 : i32
    %c0_i32_1 = arith.constant 0 : i32
    return %arg1, %c0_i32, %c0_i32_0 : i32, i32, i32
  }
  func.func @transform_3(%arg0: i32, %arg1: i32) -> (i32, i32, i32) {
    %c0_i32 = arith.constant 0 : i32
    %c0_i32_0 = arith.constant 0 : i32
    %c0_i32_1 = arith.constant 0 : i32
    return %arg1, %c0_i32, %c0_i32_0 : i32, i32, i32
  }
  func.func @transform_4(%arg0: i32, %arg1: i32) -> (i32, i32, i32) {
    %c0_i32 = arith.constant 0 : i32
    %c0_i32_0 = arith.constant 0 : i32
    %c0_i32_1 = arith.constant 0 : i32
    return %arg1, %c0_i32, %c0_i32_0 : i32, i32, i32
  }
  func.func @transform_5(%arg0: i32, %arg1: i32) -> (i32, i32, i32) {
    %c0_i32 = arith.constant 0 : i32
    %c0_i32_0 = arith.constant 0 : i32
    %c0_i32_1 = arith.constant 0 : i32
    return %arg1, %c0_i32, %c0_i32_0 : i32, i32, i32
  }
  func.func @transform_6(%arg0: i32, %arg1: i32) -> (i32, i32, i32) {
    %c0_i32 = arith.constant 0 : i32
    %c0_i32_0 = arith.constant 0 : i32
    %c0_i32_1 = arith.constant 0 : i32
    return %arg1, %c0_i32, %c0_i32_0 : i32, i32, i32
  }
  func.func @transform_7(%arg0: i32, %arg1: i32) -> (i32, i32, i32) {
    %c0_i32 = arith.constant 0 : i32
    %c0_i32_0 = arith.constant 0 : i32
    %c0_i32_1 = arith.constant 0 : i32
    return %arg1, %c0_i32, %c0_i32_0 : i32, i32, i32
  }
  func.func @transform_8(%arg0: i32, %arg1: i32) -> (i32, i32, i32) {
    %c0_i32 = arith.constant 0 : i32
    %c0_i32_0 = arith.constant 0 : i32
    %c0_i32_1 = arith.constant 0 : i32
    return %arg1, %c0_i32, %c0_i32_0 : i32, i32, i32
  }
  func.func @transform_9(%arg0: i32, %arg1: i32) -> (i32, i32, i32) {
    %c0_i32 = arith.constant 0 : i32
    %c0_i32_0 = arith.constant 0 : i32
    %c0_i32_1 = arith.constant 0 : i32
    return %arg1, %c0_i32, %c0_i32_0 : i32, i32, i32
  }
  func.func @transform_10(%arg0: i32, %arg1: i32) -> (i32, i32, i32) {
    %c0_i32 = arith.constant 0 : i32
    %c0_i32_0 = arith.constant 0 : i32
    %c0_i32_1 = arith.constant 0 : i32
    return %arg1, %c0_i32, %c0_i32_0 : i32, i32, i32
  }
  func.func @transform_11(%arg0: i32, %arg1: i32) -> (i32, i32, i32) {
    %c0_i32 = arith.constant 0 : i32
    %c0_i32_0 = arith.constant 0 : i32
    %c0_i32_1 = arith.constant 0 : i32
    return %arg1, %c0_i32, %c0_i32_0 : i32, i32, i32
  }
  func.func @transform_12(%arg0: i32, %arg1: i32) -> (i32, i32, i32) {
    %c0_i32 = arith.constant 0 : i32
    %c0_i32_0 = arith.constant 0 : i32
    %c0_i32_1 = arith.constant 0 : i32
    return %arg1, %c0_i32, %c0_i32_0 : i32, i32, i32
  }
  func.func @transform_13(%arg0: i32, %arg1: i32) -> (i32, i32, i32) {
    %c0_i32 = arith.constant 0 : i32
    %c0_i32_0 = arith.constant 0 : i32
    %c0_i32_1 = arith.constant 0 : i32
    return %arg1, %c0_i32, %c0_i32_0 : i32, i32, i32
  }
  func.func @transform_14(%arg0: i32, %arg1: i32) -> (i32, i32) {
    %c0_i32 = arith.constant 0 : i32
    %c0_i32_0 = arith.constant 0 : i32
    %c0_i32_1 = arith.constant 0 : i32
    return %c0_i32, %c0_i32_0 : i32, i32
  }
  func.func @transform_15(%arg0: i32, %arg1: i32) -> (i32, i32) {
    %c0_i32 = arith.constant 0 : i32
    %c0_i32_0 = arith.constant 0 : i32
    %c0_i32_1 = arith.constant 0 : i32
    return %c0_i32, %c0_i32_0 : i32, i32
  }
  func.func @transform_16(%arg0: i32, %arg1: i32) -> (i32, i32, i32) {
    %c0_i32 = arith.constant 0 : i32
    %c0_i32_0 = arith.constant 0 : i32
    %c0_i32_1 = arith.constant 0 : i32
    return %arg0, %c0_i32, %c0_i32_0 : i32, i32, i32
  }
}

</mosaic_0001>

<llo_original>
// kernel: tpu_custom_call.1
$region0: #{tpu_custom_call.1}
  #allocation0 [shape = 'u32[]', space=smem, size = 0x4, offset = 0x4, fixed_abs, tag = 'smem constant byte address 0x4 - core index']
  #allocation1 [shape = 'u32[144,128]{1,0:T(1,128)}', space=vmem, size = 0x12000, scoped, tag = 'internal scratch']
  #allocation2 [shape = 'f32[8,32,256]{2,1,0:T(8,128)}', space=vmem, size = 0x40000, scoped, tag = 'scratch operand']
  %s0 = inlined_call_operand.hbm [shape: f32[16,32,256], index: 0, kind: input, shape index: {}]
  %s1 = inlined_call_operand.hbm [shape: f32[32,256], index: 1, kind: input, shape index: {}]
  %s2 = inlined_call_operand.hbm [shape: bf16[3,256,768], index: 2, kind: input, shape index: {}]
  %s3 = inlined_call_operand.hbm [shape: f32[3,1,768], index: 3, kind: input, shape index: {}]
  %s4 = inlined_call_operand.hbm [shape: bf16[3,256,256], index: 4, kind: input, shape index: {}]
  %s5 = inlined_call_operand.hbm [shape: f32[3,1,256], index: 5, kind: input, shape index: {}]
  %s6 = inlined_call_operand.hbm [shape: bf16[3,256,512], index: 6, kind: input, shape index: {}]
  %s7 = inlined_call_operand.hbm [shape: f32[3,1,512], index: 7, kind: input, shape index: {}]
  %s8 = inlined_call_operand.hbm [shape: bf16[3,512,256], index: 8, kind: input, shape index: {}]
  %s9 = inlined_call_operand.hbm [shape: f32[3,1,256], index: 9, kind: input, shape index: {}]
  %s10 = inlined_call_operand.hbm [shape: f32[3,1,256], index: 10, kind: input, shape index: {}]
  %s11 = inlined_call_operand.hbm [shape: f32[3,1,256], index: 11, kind: input, shape index: {}]
  %s12 = inlined_call_operand.hbm [shape: f32[3,1,256], index: 12, kind: input, shape index: {}]
  %s13 = inlined_call_operand.hbm [shape: f32[3,1,256], index: 13, kind: input, shape index: {}]
  %s14 = inlined_call_operand.hbm [shape: f32[1,256], index: 14, kind: input, shape index: {}]
  %s15 = inlined_call_operand.hbm [shape: f32[1,256], index: 15, kind: input, shape index: {}]
  %s16 = inlined_call_operand.hbm [shape: f32[16,32,256], index: 16, kind: output, shape index: {}]
  %s17 = sld [smem:[#allocation0]]
  $region169: #{tpu_custom_call.1} parent=0
    _
  %s19 = ssub.s32 1, %s17
  %s20 = scalar_select 0, %s19, %s17
  $region1: #{tpu_custom_call.1} parent=0
    #allocation3 [shape = 'u8[524288]{0}', space=vmem, size = 0x80000, scoped, tag = 'input window, operand 0']
    #allocation4 [shape = 's32[2]{0}', space=sflag, size = 0x8, scoped, tag = 'scoped memory for tpu_custom_call.1']
    #allocation5 [shape = 's32[2]{0}', space=sflag, size = 0x8, scoped, tag = 'scoped memory for tpu_custom_call.1']
    #allocation6 [shape = 'u8[32768]{0}', space=vmem, size = 0x8000, scoped, tag = 'input window, operand 1, single buffered']
    #allocation7 [shape = 's32[1]{0}', space=sflag, size = 0x4, scoped, tag = 'scoped memory for tpu_custom_call.1']
    #allocation8 [shape = 'u8[786432]{0}', space=vmem, size = 0xc0000, scoped, tag = 'input window, operand 2']
    #allocation9 [shape = 'u8[6144]{0}', space=vmem, size = 0x1800, scoped, tag = 'input window, operand 3']
    #allocation10 [shape = 'u8[262144]{0}', space=vmem, size = 0x40000, scoped, tag = 'input window, operand 4']
    #allocation11 [shape = 'u8[2048]{0}', space=vmem, size = 0x800, scoped, tag = 'input window, operand 5']
    #allocation12 [shape = 'u8[524288]{0}', space=vmem, size = 0x80000, scoped, tag = 'input window, operand 6']
    #allocation13 [shape = 'u8[4096]{0}', space=vmem, size = 0x1000, scoped, tag = 'input window, operand 7']
    #allocation14 [shape = 'u8[524288]{0}', space=vmem, size = 0x80000, scoped, tag = 'input window, operand 8']
    #allocation15 [shape = 'u8[2048]{0}', space=vmem, size = 0x800, scoped, tag = 'input window, operand 9']
    #allocation16 [shape = 'u8[2048]{0}', space=vmem, size = 0x800, scoped, tag = 'input window, operand 10']
    #allocation17 [shape = 'u8[2048]{0}', space=vmem, size = 0x800, scoped, tag = 'input window, operand 11']
    #allocation18 [shape = 'u8[2048]{0}', space=vmem, size = 0x800, scoped, tag = 'input window, operand 12']
    #allocation19 [shape = 'u8[2048]{0}', space=vmem, size = 0x800, scoped, tag = 'input window, operand 13']
    #allocation20 [shape = 'u8[1024]{0}', space=vmem, size = 0x400, scoped, tag = 'input window, operand 14, single buffered']
    #allocation21 [shape = 'u8[1024]{0}', space=vmem, size = 0x400, scoped, tag = 'input window, operand 15, single buffered']
    #allocation22 [shape = 's32[1]{0}', space=sflag, size = 0x4, scoped, tag = 'scoped memory for tpu_custom_call.1']
    #allocation23 [shape = 'u8[524288]{0}', space=vmem, size = 0x80000, scoped, tag = 'output window, operand 0']
    %21 = vsyncpa [#allocation4], 0
    %s22 = scalar_lea.sflag [#allocation4], 1
    %23 = vsyncpa %s22, 0
    %24 = vsyncpa [#allocation7], 0
    %25 = vsyncpa [#allocation22], 0
    %26 = vsyncpa [#allocation5], 0
    %s27 = scalar_lea.sflag [#allocation5], 1
    %28 = vsyncpa %s27, 0
    loop: start=0, step=1, limit=8
    $region2: #{tpu_custom_call.1} parent=1 // loop_pre_header
      _
    $region3: #{tpu_custom_call.1} parent=1 // loop_header
      %s30 = sphi 0, %s34
      %p31 = scmp.ge.s32.totalorder %s30, 8
      %s37 = sphi 0, %s49
      %s38 = sphi 0, %s45
      %s39 = sphi 0, %s37
      %s40 = sphi 0, %s38
      %s41 = sphi 0, %s39
      %s42 = sphi 0, %s40
      %s52 = sphi 0, %s54
      %s55 = sphi 0, %s52
      %s56 = sphi 0, %s55
      %s72 = sphi 0, %s56
      %s76 = sphi 0, %s76
      %s78 = sphi 0, %s76
      %s79 = sphi 0, %s78
      %s93 = sphi 0, %s79
      %s99 = sphi 0, %s101
      %s102 = sphi 0, %s99
      %s103 = sphi 0, %s102
      %s119 = sphi 0, %s103
      %s125 = sphi 0, %s127
      %s128 = sphi 0, %s125
      %s129 = sphi 0, %s128
      %s145 = sphi 0, %s129
      %s151 = sphi 0, %s153
      %s154 = sphi 0, %s151
      %s155 = sphi 0, %s154
      %s171 = sphi 0, %s155
      %s177 = sphi 0, %s179
      %s180 = sphi 0, %s177
      %s181 = sphi 0, %s180
      %s197 = sphi 0, %s181
      %s203 = sphi 0, %s205
      %s206 = sphi 0, %s203
      %s207 = sphi 0, %s206
      %s223 = sphi 0, %s207
      %s229 = sphi 0, %s231
      %s232 = sphi 0, %s229
      %s233 = sphi 0, %s232
      %s249 = sphi 0, %s233
      %s255 = sphi 0, %s257
      %s258 = sphi 0, %s255
      %s259 = sphi 0, %s258
      %s275 = sphi 0, %s259
      %s281 = sphi 0, %s283
      %s284 = sphi 0, %s281
      %s285 = sphi 0, %s284
      %s301 = sphi 0, %s285
      %s307 = sphi 0, %s309
      %s310 = sphi 0, %s307
      %s311 = sphi 0, %s310
      %s327 = sphi 0, %s311
      %s333 = sphi 0, %s335
      %s336 = sphi 0, %s333
      %s337 = sphi 0, %s336
      %s353 = sphi 0, %s337
      %s359 = sphi 0, %s361
      %s362 = sphi 0, %s359
      %s363 = sphi 0, %s362
      %s379 = sphi 0, %s363
      %s385 = sphi 0, %s387
      %s388 = sphi 0, %s385
      %s389 = sphi 0, %s388
      %s405 = sphi 0, %s389
      %s409 = sphi 0, %s409
      %s411 = sphi 0, %s409
      %s412 = sphi 0, %s411
      %s426 = sphi 0, %s412
      %s430 = sphi 0, %s430
      %s432 = sphi 0, %s430
      %s433 = sphi 0, %s432
      %s447 = sphi 0, %s433
      %s453 = sphi 0, %s455
      %s456 = sphi 0, %s453
      %s457 = sphi 0, %s456
      %s473 = sphi 0, %s457
    $region4: #{tpu_custom_call.1} parent=1 // loop_header_branch
      %33 = sbr.rel (%p31) target = $region8
    $region5: #{tpu_custom_call.1} parent=1 // loop_body
      %s35 = ssub.s32 %s30, 1
      %s36 = ssub.s32 %s30, 2
      %s43 = sadd.s32 1, %s38
      %p44 = scmp.ge.s32.totalorder %s43, 3
      %s45 = scalar_select %p44, 0, %s43
      %s46 = sadd.s32 1, %s37
      %s47 = scalar_select %p44, %s46, %s37
      %p48 = scmp.ge.s32.totalorder %s47, 2
      %s49 = scalar_select %p48, 0, %s47
      %s50 = ssub.s32 %s37, %s49
      %p51 = scmp.eq.s32.totalorder %s50, 0
      %s53 = sadd.s32 %s52, 1
      %s54 = scalar_select %p51, %s52, %s53
      %p57 = pneg %p51
      %p58 = scmp.eq.s32.totalorder %s30, 5
      %p59 = por %p57, %p58
      %p60 = scmp.ne.s32.totalorder %s52, %s55
      %p61 = scmp.eq.s32.totalorder %s30, 0
      %p62 = por %p60, %p61
      %p63 = scmp.ne.s32.totalorder %s52, %s55
      %p64 = scmp.eq.s32.totalorder %s35, 5
      %p65 = por %p63, %p64
      %p66 = scmp.ne.s32.totalorder %s55, %s56
      %p67 = scmp.eq.s32.totalorder %s35, 0
      %p68 = por %p66, %p67
      %p69 = scmp.ne.s32.totalorder %s55, %s56
      %p70 = scmp.eq.s32.totalorder %s36, 5
      %p71 = por %p69, %p70
      %p73 = scmp.ne.s32.totalorder %s56, %s72
      %p74 = scmp.eq.s32.totalorder %s36, 0
      %p75 = por %p73, %p74
      %s77 = sadd.s32 %s76, 1
      %p80 = scmp.eq.s32.totalorder %s30, 5
      %p81 = scmp.ne.s32.totalorder %s76, %s78
      %p82 = scmp.eq.s32.totalorder %s30, 0
      %p83 = por %p81, %p82
      %p84 = scmp.ne.s32.totalorder %s76, %s78
      %p85 = scmp.eq.s32.totalorder %s35, 5
      %p86 = por %p84, %p85
      %p87 = scmp.ne.s32.totalorder %s78, %s79
      %p88 = scmp.eq.s32.totalorder %s35, 0
      %p89 = por %p87, %p88
      %p90 = scmp.ne.s32.totalorder %s78, %s79
      %p91 = scmp.eq.s32.totalorder %s36, 5
      %p92 = por %p90, %p91
      %p94 = scmp.ne.s32.totalorder %s79, %s93
      %p95 = scmp.eq.s32.totalorder %s36, 0
      %p96 = por %p94, %p95
      %s97 = ssub.s32 %s38, %s45
      %p98 = scmp.eq.s32.totalorder %s97, 0
      %s100 = sadd.s32 %s99, 1
      %s101 = scalar_select %p98, %s99, %s100
      %p104 = pneg %p98
      %p105 = scmp.eq.s32.totalorder %s30, 5
      %p106 = por %p104, %p105
      %p107 = scmp.ne.s32.totalorder %s99, %s102
      %p108 = scmp.eq.s32.totalorder %s30, 0
      %p109 = por %p107, %p108
      %p110 = scmp.ne.s32.totalorder %s99, %s102
      %p111 = scmp.eq.s32.totalorder %s35, 5
      %p112 = por %p110, %p111
      %p113 = scmp.ne.s32.totalorder %s102, %s103
      %p114 = scmp.eq.s32.totalorder %s35, 0
      %p115 = por %p113, %p114
      %p116 = scmp.ne.s32.totalorder %s102, %s103
      %p117 = scmp.eq.s32.totalorder %s36, 5
      %p118 = por %p116, %p117
      %p120 = scmp.ne.s32.totalorder %s103, %s119
      %p121 = scmp.eq.s32.totalorder %s36, 0
      %p122 = por %p120, %p121
      %s123 = ssub.s32 %s38, %s45
      %p124 = scmp.eq.s32.totalorder %s123, 0
      %s126 = sadd.s32 %s125, 1
      %s127 = scalar_select %p124, %s125, %s126
      %p130 = pneg %p124
      %p131 = scmp.eq.s32.totalorder %s30, 5
      %p132 = por %p130, %p131
      %p133 = scmp.ne.s32.totalorder %s125, %s128
      %p134 = scmp.eq.s32.totalorder %s30, 0
      %p135 = por %p133, %p134
      %p136 = scmp.ne.s32.totalorder %s125, %s128
      %p137 = scmp.eq.s32.totalorder %s35, 5
      %p138 = por %p136, %p137
      %p139 = scmp.ne.s32.totalorder %s128, %s129
      %p140 = scmp.eq.s32.totalorder %s35, 0
      %p141 = por %p139, %p140
      %p142 = scmp.ne.s32.totalorder %s128, %s129
      %p143 = scmp.eq.s32.totalorder %s36, 5
      %p144 = por %p142, %p143
      %p146 = scmp.ne.s32.totalorder %s129, %s145
      %p147 = scmp.eq.s32.totalorder %s36, 0
      %p148 = por %p146, %p147
      %s149 = ssub.s32 %s38, %s45
      %p150 = scmp.eq.s32.totalorder %s149, 0
      %s152 = sadd.s32 %s151, 1
      %s153 = scalar_select %p150, %s151, %s152
      %p156 = pneg %p150
      %p157 = scmp.eq.s32.totalorder %s30, 5
      %p158 = por %p156, %p157
      %p159 = scmp.ne.s32.totalorder %s151, %s154
      %p160 = scmp.eq.s32.totalorder %s30, 0
      %p161 = por %p159, %p160
      %p162 = scmp.ne.s32.totalorder %s151, %s154
      %p163 = scmp.eq.s32.totalorder %s35, 5
      %p164 = por %p162, %p163
      %p165 = scmp.ne.s32.totalorder %s154, %s155
      %p166 = scmp.eq.s32.totalorder %s35, 0
      %p167 = por %p165, %p166
      %p168 = scmp.ne.s32.totalorder %s154, %s155
      %p169 = scmp.eq.s32.totalorder %s36, 5
      %p170 = por %p168, %p169
      %p172 = scmp.ne.s32.totalorder %s155, %s171
      %p173 = scmp.eq.s32.totalorder %s36, 0
      %p174 = por %p172, %p173
      %s175 = ssub.s32 %s38, %s45
      %p176 = scmp.eq.s32.totalorder %s175, 0
      %s178 = sadd.s32 %s177, 1
      %s179 = scalar_select %p176, %s177, %s178
      %p182 = pneg %p176
      %p183 = scmp.eq.s32.totalorder %s30, 5
      %p184 = por %p182, %p183
      %p185 = scmp.ne.s32.totalorder %s177, %s180
      %p186 = scmp.eq.s32.totalorder %s30, 0
      %p187 = por %p185, %p186
      %p188 = scmp.ne.s32.totalorder %s177, %s180
      %p189 = scmp.eq.s32.totalorder %s35, 5
      %p190 = por %p188, %p189
      %p191 = scmp.ne.s32.totalorder %s180, %s181
      %p192 = scmp.eq.s32.totalorder %s35, 0
      %p193 = por %p191, %p192
      %p194 = scmp.ne.s32.totalorder %s180, %s181
      %p195 = scmp.eq.s32.totalorder %s36, 5
      %p196 = por %p194, %p195
      %p198 = scmp.ne.s32.totalorder %s181, %s197
      %p199 = scmp.eq.s32.totalorder %s36, 0
      %p200 = por %p198, %p199
      %s201 = ssub.s32 %s38, %s45
      %p202 = scmp.eq.s32.totalorder %s201, 0
      %s204 = sadd.s32 %s203, 1
      %s205 = scalar_select %p202, %s203, %s204
      %p208 = pneg %p202
      %p209 = scmp.eq.s32.totalorder %s30, 5
      %p210 = por %p208, %p209
      %p211 = scmp.ne.s32.totalorder %s203, %s206
      %p212 = scmp.eq.s32.totalorder %s30, 0
      %p213 = por %p211, %p212
      %p214 = scmp.ne.s32.totalorder %s203, %s206
      %p215 = scmp.eq.s32.totalorder %s35, 5
      %p216 = por %p214, %p215
      %p217 = scmp.ne.s32.totalorder %s206, %s207
      %p218 = scmp.eq.s32.totalorder %s35, 0
      %p219 = por %p217, %p218
      %p220 = scmp.ne.s32.totalorder %s206, %s207
      %p221 = scmp.eq.s32.totalorder %s36, 5
      %p222 = por %p220, %p221
      %p224 = scmp.ne.s32.totalorder %s207, %s223
      %p225 = scmp.eq.s32.totalorder %s36, 0
      %p226 = por %p224, %p225
      %s227 = ssub.s32 %s38, %s45
      %p228 = scmp.eq.s32.totalorder %s227, 0
      %s230 = sadd.s32 %s229, 1
      %s231 = scalar_select %p228, %s229, %s230
      %p234 = pneg %p228
      %p235 = scmp.eq.s32.totalorder %s30, 5
      %p236 = por %p234, %p235
      %p237 = scmp.ne.s32.totalorder %s229, %s232
      %p238 = scmp.eq.s32.totalorder %s30, 0
      %p239 = por %p237, %p238
      %p240 = scmp.ne.s32.totalorder %s229, %s232
      %p241 = scmp.eq.s32.totalorder %s35, 5
      %p242 = por %p240, %p241
      %p243 = scmp.ne.s32.totalorder %s232, %s233
      %p244 = scmp.eq.s32.totalorder %s35, 0
      %p245 = por %p243, %p244
      %p246 = scmp.ne.s32.totalorder %s232, %s233
      %p247 = scmp.eq.s32.totalorder %s36, 5
      %p248 = por %p246, %p247
      %p250 = scmp.ne.s32.totalorder %s233, %s249
      %p251 = scmp.eq.s32.totalorder %s36, 0
      %p252 = por %p250, %p251
      %s253 = ssub.s32 %s38, %s45
      %p254 = scmp.eq.s32.totalorder %s253, 0
      %s256 = sadd.s32 %s255, 1
      %s257 = scalar_select %p254, %s255, %s256
      %p260 = pneg %p254
      %p261 = scmp.eq.s32.totalorder %s30, 5
      %p262 = por %p260, %p261
      %p263 = scmp.ne.s32.totalorder %s255, %s258
      %p264 = scmp.eq.s32.totalorder %s30, 0
      %p265 = por %p263, %p264
      %p266 = scmp.ne.s32.totalorder %s255, %s258
      %p267 = scmp.eq.s32.totalorder %s35, 5
      %p268 = por %p266, %p267
      %p269 = scmp.ne.s32.totalorder %s258, %s259
      %p270 = scmp.eq.s32.totalorder %s35, 0
      %p271 = por %p269, %p270
      %p272 = scmp.ne.s32.totalorder %s258, %s259
      %p273 = scmp.eq.s32.totalorder %s36, 5
      %p274 = por %p272, %p273
      %p276 = scmp.ne.s32.totalorder %s259, %s275
      %p277 = scmp.eq.s32.totalorder %s36, 0
      %p278 = por %p276, %p277
      %s279 = ssub.s32 %s38, %s45
      %p280 = scmp.eq.s32.totalorder %s279, 0
      %s282 = sadd.s32 %s281, 1
      %s283 = scalar_select %p280, %s281, %s282
      %p286 = pneg %p280
      %p287 = scmp.eq.s32.totalorder %s30, 5
      %p288 = por %p286, %p287
      %p289 = scmp.ne.s32.totalorder %s281, %s284
      %p290 = scmp.eq.s32.totalorder %s30, 0
      %p291 = por %p289, %p290
      %p292 = scmp.ne.s32.totalorder %s281, %s284
      %p293 = scmp.eq.s32.totalorder %s35, 5
      %p294 = por %p292, %p293
      %p295 = scmp.ne.s32.totalorder %s284, %s285
      %p296 = scmp.eq.s32.totalorder %s35, 0
      %p297 = por %p295, %p296
      %p298 = scmp.ne.s32.totalorder %s284, %s285
      %p299 = scmp.eq.s32.totalorder %s36, 5
      %p300 = por %p298, %p299
      %p302 = scmp.ne.s32.totalorder %s285, %s301
      %p303 = scmp.eq.s32.totalorder %s36, 0
      %p304 = por %p302, %p303
      %s305 = ssub.s32 %s38, %s45
      %p306 = scmp.eq.s32.totalorder %s305, 0
      %s308 = sadd.s32 %s307, 1
      %s309 = scalar_select %p306, %s307, %s308
      %p312 = pneg %p306
      %p313 = scmp.eq.s32.totalorder %s30, 5
      %p314 = por %p312, %p313
      %p315 = scmp.ne.s32.totalorder %s307, %s310
      %p316 = scmp.eq.s32.totalorder %s30, 0
      %p317 = por %p315, %p316
      %p318 = scmp.ne.s32.totalorder %s307, %s310
      %p319 = scmp.eq.s32.totalorder %s35, 5
      %p320 = por %p318, %p319
      %p321 = scmp.ne.s32.totalorder %s310, %s311
      %p322 = scmp.eq.s32.totalorder %s35, 0
      %p323 = por %p321, %p322
      %p324 = scmp.ne.s32.totalorder %s310, %s311
      %p325 = scmp.eq.s32.totalorder %s36, 5
      %p326 = por %p324, %p325
      %p328 = scmp.ne.s32.totalorder %s311, %s327
      %p329 = scmp.eq.s32.totalorder %s36, 0
      %p330 = por %p328, %p329
      %s331 = ssub.s32 %s38, %s45
      %p332 = scmp.eq.s32.totalorder %s331, 0
      %s334 = sadd.s32 %s333, 1
      %s335 = scalar_select %p332, %s333, %s334
      %p338 = pneg %p332
      %p339 = scmp.eq.s32.totalorder %s30, 5
      %p340 = por %p338, %p339
      %p341 = scmp.ne.s32.totalorder %s333, %s336
      %p342 = scmp.eq.s32.totalorder %s30, 0
      %p343 = por %p341, %p342
      %p344 = scmp.ne.s32.totalorder %s333, %s336
      %p345 = scmp.eq.s32.totalorder %s35, 5
      %p346 = por %p344, %p345
      %p347 = scmp.ne.s32.totalorder %s336, %s337
      %p348 = scmp.eq.s32.totalorder %s35, 0
      %p349 = por %p347, %p348
      %p350 = scmp.ne.s32.totalorder %s336, %s337
      %p351 = scmp.eq.s32.totalorder %s36, 5
      %p352 = por %p350, %p351
      %p354 = scmp.ne.s32.totalorder %s337, %s353
      %p355 = scmp.eq.s32.totalorder %s36, 0
      %p356 = por %p354, %p355
      %s357 = ssub.s32 %s38, %s45
      %p358 = scmp.eq.s32.totalorder %s357, 0
      %s360 = sadd.s32 %s359, 1
      %s361 = scalar_select %p358, %s359, %s360
      %p364 = pneg %p358
      %p365 = scmp.eq.s32.totalorder %s30, 5
      %p366 = por %p364, %p365
      %p367 = scmp.ne.s32.totalorder %s359, %s362
      %p368 = scmp.eq.s32.totalorder %s30, 0
      %p369 = por %p367, %p368
      %p370 = scmp.ne.s32.totalorder %s359, %s362
      %p371 = scmp.eq.s32.totalorder %s35, 5
      %p372 = por %p370, %p371
      %p373 = scmp.ne.s32.totalorder %s362, %s363
      %p374 = scmp.eq.s32.totalorder %s35, 0
      %p375 = por %p373, %p374
      %p376 = scmp.ne.s32.totalorder %s362, %s363
      %p377 = scmp.eq.s32.totalorder %s36, 5
      %p378 = por %p376, %p377
      %p380 = scmp.ne.s32.totalorder %s363, %s379
      %p381 = scmp.eq.s32.totalorder %s36, 0
      %p382 = por %p380, %p381
      %s383 = ssub.s32 %s38, %s45
      %p384 = scmp.eq.s32.totalorder %s383, 0
      %s386 = sadd.s32 %s385, 1
      %s387 = scalar_select %p384, %s385, %s386
      %p390 = pneg %p384
      %p391 = scmp.eq.s32.totalorder %s30, 5
      %p392 = por %p390, %p391
      %p393 = scmp.ne.s32.totalorder %s385, %s388
      %p394 = scmp.eq.s32.totalorder %s30, 0
      %p395 = por %p393, %p394
      %p396 = scmp.ne.s32.totalorder %s385, %s388
      %p397 = scmp.eq.s32.totalorder %s35, 5
      %p398 = por %p396, %p397
      %p399 = scmp.ne.s32.totalorder %s388, %s389
      %p400 = scmp.eq.s32.totalorder %s35, 0
      %p401 = por %p399, %p400
      %p402 = scmp.ne.s32.totalorder %s388, %s389
      %p403 = scmp.eq.s32.totalorder %s36, 5
      %p404 = por %p402, %p403
      %p406 = scmp.ne.s32.totalorder %s389, %s405
      %p407 = scmp.eq.s32.totalorder %s36, 0
      %p408 = por %p406, %p407
      %s410 = sadd.s32 %s409, 1
      %p413 = scmp.eq.s32.totalorder %s30, 5
      %p414 = scmp.ne.s32.totalorder %s409, %s411
      %p415 = scmp.eq.s32.totalorder %s30, 0
      %p416 = por %p414, %p415
      %p417 = scmp.ne.s32.totalorder %s409, %s411
      %p418 = scmp.eq.s32.totalorder %s35, 5
      %p419 = por %p417, %p418
      %p420 = scmp.ne.s32.totalorder %s411, %s412
      %p421 = scmp.eq.s32.totalorder %s35, 0
      %p422 = por %p420, %p421
      %p423 = scmp.ne.s32.totalorder %s411, %s412
      %p424 = scmp.eq.s32.totalorder %s36, 5
      %p425 = por %p423, %p424
      %p427 = scmp.ne.s32.totalorder %s412, %s426
      %p428 = scmp.eq.s32.totalorder %s36, 0
      %p429 = por %p427, %p428
      %s431 = sadd.s32 %s430, 1
      %p434 = scmp.eq.s32.totalorder %s30, 5
      %p435 = scmp.ne.s32.totalorder %s430, %s432
      %p436 = scmp.eq.s32.totalorder %s30, 0
      %p437 = por %p435, %p436
      %p438 = scmp.ne.s32.totalorder %s430, %s432
      %p439 = scmp.eq.s32.totalorder %s35, 5
      %p440 = por %p438, %p439
      %p441 = scmp.ne.s32.totalorder %s432, %s433
      %p442 = scmp.eq.s32.totalorder %s35, 0
      %p443 = por %p441, %p442
      %p444 = scmp.ne.s32.totalorder %s432, %s433
      %p445 = scmp.eq.s32.totalorder %s36, 5
      %p446 = por %p444, %p445
      %p448 = scmp.ne.s32.totalorder %s433, %s447
      %p449 = scmp.eq.s32.totalorder %s36, 0
      %p450 = por %p448, %p449
      %s451 = ssub.s32 %s37, %s49
      %p452 = scmp.eq.s32.totalorder %s451, 0
      %s454 = sadd.s32 %s453, 1
      %s455 = scalar_select %p452, %s453, %s454
      %p458 = pneg %p452
      %p459 = scmp.eq.s32.totalorder %s30, 5
      %p460 = por %p458, %p459
      %p461 = scmp.ne.s32.totalorder %s453, %s456
      %p462 = scmp.eq.s32.totalorder %s30, 0
      %p463 = por %p461, %p462
      %p464 = scmp.ne.s32.totalorder %s453, %s456
      %p465 = scmp.eq.s32.totalorder %s35, 5
      %p466 = por %p464, %p465
      %p467 = scmp.ne.s32.totalorder %s456, %s457
      %p468 = scmp.eq.s32.totalorder %s35, 0
      %p469 = por %p467, %p468
      %p470 = scmp.ne.s32.totalorder %s456, %s457
      %p471 = scmp.eq.s32.totalorder %s36, 5
      %p472 = por %p470, %p471
      %p474 = scmp.ne.s32.totalorder %s457, %s473
      %p475 = scmp.eq.s32.totalorder %s36, 0
      %p476 = por %p474, %p475
      %p477 = scmp.le.s32.totalorder 1, %s30
      %p478 = scmp.lt.s32.totalorder %s30, 7
      %p479 = pnand %p477, %p478
      %p480 = pneg %p479
      // Predicated region
      $region9: #{tpu_custom_call.1} parent=5 // pred_check
        _
      $region10: #{tpu_custom_call.1} parent=5 // pred_check_branch
        %482 = sbr.rel (%p479) target = $region12
      $region11: #{tpu_custom_call.1} parent=5 // pred_region
        %s483 = ssub.s32 %s30, 1
        // Predicated region
        $region13: #{tpu_custom_call.1} parent=11 // pred_check
          %p484 = pneg %p89
        $region14: #{tpu_custom_call.1} parent=11 // pred_check_branch
          %486 = sbr.rel (%p484) target = $region16
        $region15: #{tpu_custom_call.1} parent=11 // pred_region
          %s488 = ssub.s32 1024, 1024
          %489 = vsyncadd [#allocation7], %s488
          %s490 = sshll.u32 [#allocation6], 4
          %s491 = int_to_ptr.vmem [resolvable:$true] %s490
          %496 = dma.hbm_to_vmem [thread:$0]  %s1, 1024, %s491, [#allocation7], 256, 256, 16
        $region16: #{tpu_custom_call.1} parent=11 // pred_fallthru
          _
        // Predicated region
        $region17: #{tpu_custom_call.1} parent=11 // pred_check
          %p497 = pneg %p422
        $region18: #{tpu_custom_call.1} parent=11 // pred_check_branch
          %499 = sbr.rel (%p497) target = $region20
        $region19: #{tpu_custom_call.1} parent=11 // pred_region
          %s501 = ssub.s32 32, 32
          %502 = vsyncadd [#allocation7], %s501
          %s504 = sshll.u32 [#allocation20], 4
          %s505 = int_to_ptr.vmem [resolvable:$true] %s504
          %507 = dma.hbm_to_vmem [thread:$0]  %s14, 32, %s505, [#allocation7]
        $region20: #{tpu_custom_call.1} parent=11 // pred_fallthru
          _
        // Predicated region
        $region21: #{tpu_custom_call.1} parent=11 // pred_check
          %p508 = pneg %p443
        $region22: #{tpu_custom_call.1} parent=11 // pred_check_branch
          %510 = sbr.rel (%p508) target = $region24
        $region23: #{tpu_custom_call.1} parent=11 // pred_region
          %s512 = ssub.s32 32, 32
          %513 = vsyncadd [#allocation22], %s512
          %s515 = sshll.u32 [#allocation21], 4
          %s516 = int_to_ptr.vmem [resolvable:$true] %s515
          %518 = dma.hbm_to_vmem [thread:$0]  %s15, 32, %s516, [#allocation22]
        $region24: #{tpu_custom_call.1} parent=11 // pred_fallthru
          _
      $region12: #{tpu_custom_call.1} parent=5 // pred_fallthru
        _
      %p519 = scmp.lt.s32.totalorder %s30, 6
      // Predicated region
      $region25: #{tpu_custom_call.1} parent=5 // pred_check
        %p520 = pneg %p519
      $region26: #{tpu_custom_call.1} parent=5 // pred_check_branch
        %522 = sbr.rel (%p520) target = $region28
      $region27: #{tpu_custom_call.1} parent=5 // pred_region
        // Predicated region
        $region29: #{tpu_custom_call.1} parent=27 // pred_check
          %p523 = pneg %p62
        $region30: #{tpu_custom_call.1} parent=27 // pred_check_branch
          %525 = sbr.rel (%p523) target = $region32
        $region31: #{tpu_custom_call.1} parent=27 // pred_region
          %s526 = sand.u32 %s30, 1
          %s527 = scalar_lea.sflag [#allocation4], %s526
          %s528 = sand.u32 %s52, 1
          %s529 = smul.addr %s528, 512
          %s530 = scalar_lea.vmem [#allocation3], %s529
          %s531 = smul.u32 8, %s37
          %s533 = ssub.s32 8192, 8192
          %534 = vsyncadd %s527, %s533
          %s535 = smul.addr %s531, 8
          %s536 = smul.addr %s535, 128
          %s537 = scalar_lea.hbm %s0, %s536
          %s538 = sshll.u32 %s530, 4
          %s539 = int_to_ptr.vmem [resolvable:$true] %s538
          %544 = dma.hbm_to_vmem [thread:$0]  %s537, 8192, %s539, %s527, 256, 256, 16
        $region32: #{tpu_custom_call.1} parent=27 // pred_fallthru
          _
        // Predicated region
        $region33: #{tpu_custom_call.1} parent=27 // pred_check
          %p545 = pneg %p109
        $region34: #{tpu_custom_call.1} parent=27 // pred_check_branch
          %547 = sbr.rel (%p545) target = $region36
        $region35: #{tpu_custom_call.1} parent=27 // pred_region
          %s548 = sand.u32 %s30, 1
          %s549 = scalar_lea.sflag [#allocation4], %s548
          %s550 = sand.u32 %s99, 1
          %s551 = smul.addr %s550, 768
          %s552 = scalar_lea.vmem [#allocation8], %s551
          %s554 = ssub.s32 12288, 12288
          %555 = vsyncadd %s549, %s554
          %s556 = smul.addr %s38, 192
          %s557 = smul.addr %s556, 64
          %s558 = scalar_lea.hbm %s2, %s557
          %s559 = sshll.u32 %s552, 4
          %s560 = int_to_ptr.vmem [resolvable:$true] %s559
          %565 = dma.hbm_to_vmem [thread:$0]  %s558, 12288, %s560, %s549, 384, 384, 24
        $region36: #{tpu_custom_call.1} parent=27 // pred_fallthru
          _
        // Predicated region
        $region37: #{tpu_custom_call.1} parent=27 // pred_check
          %p566 = pneg %p135
        $region38: #{tpu_custom_call.1} parent=27 // pred_check_branch
          %568 = sbr.rel (%p566) target = $region40
        $region39: #{tpu_custom_call.1} parent=27 // pred_region
          %s569 = sand.u32 %s30, 1
          %s570 = scalar_lea.sflag [#allocation4], %s569
          %s571 = sand.u32 %s125, 1
          %s572 = smul.addr %s571, 6
          %s573 = scalar_lea.vmem [#allocation9], %s572
          %s575 = ssub.s32 96, 96
          %576 = vsyncadd %s570, %s575
          %s577 = smul.addr %s38, 6
          %s578 = smul.addr %s577, 16
          %s579 = scalar_lea.hbm %s3, %s578
          %s581 = sshll.u32 %s573, 4
          %s582 = int_to_ptr.vmem [resolvable:$true] %s581
          %584 = dma.hbm_to_vmem [thread:$0]  %s579, 96, %s582, %s570
        $region40: #{tpu_custom_call.1} parent=27 // pred_fallthru
          _
        // Predicated region
        $region41: #{tpu_custom_call.1} parent=27 // pred_check
          %p585 = pneg %p161
        $region42: #{tpu_custom_call.1} parent=27 // pred_check_branch
          %587 = sbr.rel (%p585) target = $region44
        $region43: #{tpu_custom_call.1} parent=27 // pred_region
          %s588 = sand.u32 %s30, 1
          %s589 = scalar_lea.sflag [#allocation4], %s588
          %s590 = sand.u32 %s151, 1
          %s591 = smul.addr %s590, 256
          %s592 = scalar_lea.vmem [#allocation10], %s591
          %s594 = ssub.s32 4096, 4096
          %595 = vsyncadd %s589, %s594
          %s596 = smul.addr %s38, 64
          %s597 = smul.addr %s596, 64
          %s598 = scalar_lea.hbm %s4, %s597
          %s599 = sshll.u32 %s592, 4
          %s600 = int_to_ptr.vmem [resolvable:$true] %s599
          %605 = dma.hbm_to_vmem [thread:$0]  %s598, 4096, %s600, %s589, 128, 128, 8
        $region44: #{tpu_custom_call.1} parent=27 // pred_fallthru
          _
        // Predicated region
        $region45: #{tpu_custom_call.1} parent=27 // pred_check
          %p606 = pneg %p187
        $region46: #{tpu_custom_call.1} parent=27 // pred_check_branch
          %608 = sbr.rel (%p606) target = $region48
        $region47: #{tpu_custom_call.1} parent=27 // pred_region
          %s609 = sand.u32 %s30, 1
          %s610 = scalar_lea.sflag [#allocation4], %s609
          %s611 = sand.u32 %s177, 1
          %s612 = smul.addr %s611, 2
          %s613 = scalar_lea.vmem [#allocation11], %s612
          %s615 = ssub.s32 32, 32
          %616 = vsyncadd %s610, %s615
          %s617 = smul.addr %s38, 2
          %s618 = smul.addr %s617, 16
          %s619 = scalar_lea.hbm %s5, %s618
          %s621 = sshll.u32 %s613, 4
          %s622 = int_to_ptr.vmem [resolvable:$true] %s621
          %624 = dma.hbm_to_vmem [thread:$0]  %s619, 32, %s622, %s610
        $region48: #{tpu_custom_call.1} parent=27 // pred_fallthru
          _
        // Predicated region
        $region49: #{tpu_custom_call.1} parent=27 // pred_check
          %p625 = pneg %p213
        $region50: #{tpu_custom_call.1} parent=27 // pred_check_branch
          %627 = sbr.rel (%p625) target = $region52
        $region51: #{tpu_custom_call.1} parent=27 // pred_region
          %s628 = sand.u32 %s30, 1
          %s629 = scalar_lea.sflag [#allocation4], %s628
          %s630 = sand.u32 %s203, 1
          %s631 = smul.addr %s630, 512
          %s632 = scalar_lea.vmem [#allocation12], %s631
          %s634 = ssub.s32 8192, 8192
          %635 = vsyncadd %s629, %s634
          %s636 = smul.addr %s38, 128
          %s637 = smul.addr %s636, 64
          %s638 = scalar_lea.hbm %s6, %s637
          %s639 = sshll.u32 %s632, 4
          %s640 = int_to_ptr.vmem [resolvable:$true] %s639
          %645 = dma.hbm_to_vmem [thread:$0]  %s638, 8192, %s640, %s629, 256, 256, 16
        $region52: #{tpu_custom_call.1} parent=27 // pred_fallthru
          _
        // Predicated region
        $region53: #{tpu_custom_call.1} parent=27 // pred_check
          %p646 = pneg %p239
        $region54: #{tpu_custom_call.1} parent=27 // pred_check_branch
          %648 = sbr.rel (%p646) target = $region56
        $region55: #{tpu_custom_call.1} parent=27 // pred_region
          %s649 = sand.u32 %s30, 1
          %s650 = scalar_lea.sflag [#allocation4], %s649
          %s651 = sand.u32 %s229, 1
          %s652 = smul.addr %s651, 4
          %s653 = scalar_lea.vmem [#allocation13], %s652
          %s655 = ssub.s32 64, 64
          %656 = vsyncadd %s650, %s655
          %s657 = smul.addr %s38, 4
          %s658 = smul.addr %s657, 16
          %s659 = scalar_lea.hbm %s7, %s658
          %s661 = sshll.u32 %s653, 4
          %s662 = int_to_ptr.vmem [resolvable:$true] %s661
          %664 = dma.hbm_to_vmem [thread:$0]  %s659, 64, %s662, %s650
        $region56: #{tpu_custom_call.1} parent=27 // pred_fallthru
          _
        // Predicated region
        $region57: #{tpu_custom_call.1} parent=27 // pred_check
          %p665 = pneg %p265
        $region58: #{tpu_custom_call.1} parent=27 // pred_check_branch
          %667 = sbr.rel (%p665) target = $region60
        $region59: #{tpu_custom_call.1} parent=27 // pred_region
          %s668 = sand.u32 %s30, 1
          %s669 = scalar_lea.sflag [#allocation4], %s668
          %s670 = sand.u32 %s255, 1
          %s671 = smul.addr %s670, 512
          %s672 = scalar_lea.vmem [#allocation14], %s671
          %s674 = ssub.s32 8192, 8192
          %675 = vsyncadd %s669, %s674
          %s676 = smul.addr %s38, 128
          %s677 = smul.addr %s676, 64
          %s678 = scalar_lea.hbm %s8, %s677
          %s679 = sshll.u32 %s672, 4
          %s680 = int_to_ptr.vmem [resolvable:$true] %s679
          %685 = dma.hbm_to_vmem [thread:$0]  %s678, 8192, %s680, %s669, 128, 128, 8
        $region60: #{tpu_custom_call.1} parent=27 // pred_fallthru
          _
        // Predicated region
        $region61: #{tpu_custom_call.1} parent=27 // pred_check
          %p686 = pneg %p291
        $region62: #{tpu_custom_call.1} parent=27 // pred_check_branch
          %688 = sbr.rel (%p686) target = $region64
        $region63: #{tpu_custom_call.1} parent=27 // pred_region
          %s689 = sand.u32 %s30, 1
          %s690 = scalar_lea.sflag [#allocation4], %s689
          %s691 = sand.u32 %s281, 1
          %s692 = smul.addr %s691, 2
          %s693 = scalar_lea.vmem [#allocation15], %s692
          %s695 = ssub.s32 32, 32
          %696 = vsyncadd %s690, %s695
          %s697 = smul.addr %s38, 2
          %s698 = smul.addr %s697, 16
          %s699 = scalar_lea.hbm %s9, %s698
          %s701 = sshll.u32 %s693, 4
          %s702 = int_to_ptr.vmem [resolvable:$true] %s701
          %704 = dma.hbm_to_vmem [thread:$0]  %s699, 32, %s702, %s690
        $region64: #{tpu_custom_call.1} parent=27 // pred_fallthru
          _
        // Predicated region
        $region65: #{tpu_custom_call.1} parent=27 // pred_check
          %p705 = pneg %p317
        $region66: #{tpu_custom_call.1} parent=27 // pred_check_branch
          %707 = sbr.rel (%p705) target = $region68
        $region67: #{tpu_custom_call.1} parent=27 // pred_region
          %s708 = sand.u32 %s30, 1
          %s709 = scalar_lea.sflag [#allocation4], %s708
          %s710 = sand.u32 %s307, 1
          %s711 = smul.addr %s710, 2
          %s712 = scalar_lea.vmem [#allocation16], %s711
          %s714 = ssub.s32 32, 32
          %715 = vsyncadd %s709, %s714
          %s716 = smul.addr %s38, 2
          %s717 = smul.addr %s716, 16
          %s718 = scalar_lea.hbm %s10, %s717
          %s720 = sshll.u32 %s712, 4
          %s721 = int_to_ptr.vmem [resolvable:$true] %s720
          %723 = dma.hbm_to_vmem [thread:$0]  %s718, 32, %s721, %s709
        $region68: #{tpu_custom_call.1} parent=27 // pred_fallthru
          _
        // Predicated region
        $region69: #{tpu_custom_call.1} parent=27 // pred_check
          %p724 = pneg %p343
        $region70: #{tpu_custom_call.1} parent=27 // pred_check_branch
          %726 = sbr.rel (%p724) target = $region72
        $region71: #{tpu_custom_call.1} parent=27 // pred_region
          %s727 = sand.u32 %s30, 1
          %s728 = scalar_lea.sflag [#allocation4], %s727
          %s729 = sand.u32 %s333, 1
          %s730 = smul.addr %s729, 2
          %s731 = scalar_lea.vmem [#allocation17], %s730
          %s733 = ssub.s32 32, 32
          %734 = vsyncadd %s728, %s733
          %s735 = smul.addr %s38, 2
          %s736 = smul.addr %s735, 16
          %s737 = scalar_lea.hbm %s11, %s736
          %s739 = sshll.u32 %s731, 4
          %s740 = int_to_ptr.vmem [resolvable:$true] %s739
          %742 = dma.hbm_to_vmem [thread:$0]  %s737, 32, %s740, %s728
        $region72: #{tpu_custom_call.1} parent=27 // pred_fallthru
          _
        // Predicated region
        $region73: #{tpu_custom_call.1} parent=27 // pred_check
          %p743 = pneg %p369
        $region74: #{tpu_custom_call.1} parent=27 // pred_check_branch
          %745 = sbr.rel (%p743) target = $region76
        $region75: #{tpu_custom_call.1} parent=27 // pred_region
          %s746 = sand.u32 %s30, 1
          %s747 = scalar_lea.sflag [#allocation4], %s746
          %s748 = sand.u32 %s359, 1
          %s749 = smul.addr %s748, 2
          %s750 = scalar_lea.vmem [#allocation18], %s749
          %s752 = ssub.s32 32, 32
          %753 = vsyncadd %s747, %s752
          %s754 = smul.addr %s38, 2
          %s755 = smul.addr %s754, 16
          %s756 = scalar_lea.hbm %s12, %s755
          %s758 = sshll.u32 %s750, 4
          %s759 = int_to_ptr.vmem [resolvable:$true] %s758
          %761 = dma.hbm_to_vmem [thread:$0]  %s756, 32, %s759, %s747
        $region76: #{tpu_custom_call.1} parent=27 // pred_fallthru
          _
        // Predicated region
        $region77: #{tpu_custom_call.1} parent=27 // pred_check
          %p762 = pneg %p395
        $region78: #{tpu_custom_call.1} parent=27 // pred_check_branch
          %764 = sbr.rel (%p762) target = $region80
        $region79: #{tpu_custom_call.1} parent=27 // pred_region
          %s765 = sand.u32 %s30, 1
          %s766 = scalar_lea.sflag [#allocation4], %s765
          %s767 = sand.u32 %s385, 1
          %s768 = smul.addr %s767, 2
          %s769 = scalar_lea.vmem [#allocation19], %s768
          %s771 = ssub.s32 32, 32
          %772 = vsyncadd %s766, %s771
          %s773 = smul.addr %s38, 2
          %s774 = smul.addr %s773, 16
          %s775 = scalar_lea.hbm %s13, %s774
          %s777 = sshll.u32 %s769, 4
          %s778 = int_to_ptr.vmem [resolvable:$true] %s777
          %780 = dma.hbm_to_vmem [thread:$0]  %s775, 32, %s778, %s766
        $region80: #{tpu_custom_call.1} parent=27 // pred_fallthru
          _
      $region28: #{tpu_custom_call.1} parent=5 // pred_fallthru
        _
      %p781 = scmp.le.s32.totalorder 1, %s30
      %p782 = scmp.lt.s32.totalorder %s30, 7
      %p783 = pnand %p781, %p782
      %p784 = pneg %p783
      // Predicated region
      $region81: #{tpu_custom_call.1} parent=5 // pred_check
        _
      $region82: #{tpu_custom_call.1} parent=5 // pred_check_branch
        %786 = sbr.rel (%p783) target = $region84
      $region83: #{tpu_custom_call.1} parent=5 // pred_region
        %s787 = ssub.s32 %s30, 1
        %s788 = sand.u32 %s35, 1
        %s789 = scalar_lea.sflag [#allocation4], %s788
        %s790 = sand.u32 %s55, 1
        %s791 = smul.addr %s790, 512
        %s792 = scalar_lea.vmem [#allocation3], %s791
        // Predicated region
        $region85: #{tpu_custom_call.1} parent=83 // pred_check
          %p793 = pneg %p68
        $region86: #{tpu_custom_call.1} parent=83 // pred_check_branch
          %795 = sbr.rel (%p793) target = $region88
        $region87: #{tpu_custom_call.1} parent=83 // pred_region
          %796 = dma.done %s789, 8192
        $region88: #{tpu_custom_call.1} parent=83 // pred_fallthru
          _
        // Predicated region
        $region89: #{tpu_custom_call.1} parent=83 // pred_check
          %p797 = pneg %p89
        $region90: #{tpu_custom_call.1} parent=83 // pred_check_branch
          %799 = sbr.rel (%p797) target = $region92
        $region91: #{tpu_custom_call.1} parent=83 // pred_region
          %800 = dma.done [#allocation7], 1024
        $region92: #{tpu_custom_call.1} parent=83 // pred_fallthru
          _
        %s801 = sand.u32 %s35, 1
        %s802 = scalar_lea.sflag [#allocation4], %s801
        %s803 = sand.u32 %s102, 1
        %s804 = smul.addr %s803, 768
        %s805 = scalar_lea.vmem [#allocation8], %s804
        // Predicated region
        $region93: #{tpu_custom_call.1} parent=83 // pred_check
          %p806 = pneg %p115
        $region94: #{tpu_custom_call.1} parent=83 // pred_check_branch
          %808 = sbr.rel (%p806) target = $region96
        $region95: #{tpu_custom_call.1} parent=83 // pred_region
          %809 = dma.done %s802, 12288
        $region96: #{tpu_custom_call.1} parent=83 // pred_fallthru
          _
        %s810 = sand.u32 %s35, 1
        %s811 = scalar_lea.sflag [#allocation4], %s810
        %s812 = sand.u32 %s128, 1
        %s813 = smul.addr %s812, 6
        %s814 = scalar_lea.vmem [#allocation9], %s813
        // Predicated region
        $region97: #{tpu_custom_call.1} parent=83 // pred_check
          %p815 = pneg %p141
        $region98: #{tpu_custom_call.1} parent=83 // pred_check_branch
          %817 = sbr.rel (%p815) target = $region100
        $region99: #{tpu_custom_call.1} parent=83 // pred_region
          %818 = dma.done %s811, 96
        $region100: #{tpu_custom_call.1} parent=83 // pred_fallthru
          _
        %s819 = sand.u32 %s35, 1
        %s820 = scalar_lea.sflag [#allocation4], %s819
        %s821 = sand.u32 %s154, 1
        %s822 = smul.addr %s821, 256
        %s823 = scalar_lea.vmem [#allocation10], %s822
        // Predicated region
        $region101: #{tpu_custom_call.1} parent=83 // pred_check
          %p824 = pneg %p167
        $region102: #{tpu_custom_call.1} parent=83 // pred_check_branch
          %826 = sbr.rel (%p824) target = $region104
        $region103: #{tpu_custom_call.1} parent=83 // pred_region
          %827 = dma.done %s820, 4096
        $region104: #{tpu_custom_call.1} parent=83 // pred_fallthru
          _
        %s828 = sand.u32 %s35, 1
        %s829 = scalar_lea.sflag [#allocation4], %s828
        %s830 = sand.u32 %s180, 1
        %s831 = smul.addr %s830, 2
        %s832 = scalar_lea.vmem [#allocation11], %s831
        // Predicated region
        $region105: #{tpu_custom_call.1} parent=83 // pred_check
          %p833 = pneg %p193
        $region106: #{tpu_custom_call.1} parent=83 // pred_check_branch
          %835 = sbr.rel (%p833) target = $region108
        $region107: #{tpu_custom_call.1} parent=83 // pred_region
          %836 = dma.done %s829, 32
        $region108: #{tpu_custom_call.1} parent=83 // pred_fallthru
          _
        %s837 = sand.u32 %s35, 1
        %s838 = scalar_lea.sflag [#allocation4], %s837
        %s839 = sand.u32 %s206, 1
        %s840 = smul.addr %s839, 512
        %s841 = scalar_lea.vmem [#allocation12], %s840
        // Predicated region
        $region109: #{tpu_custom_call.1} parent=83 // pred_check
          %p842 = pneg %p219
        $region110: #{tpu_custom_call.1} parent=83 // pred_check_branch
          %844 = sbr.rel (%p842) target = $region112
        $region111: #{tpu_custom_call.1} parent=83 // pred_region
          %845 = dma.done %s838, 8192
        $region112: #{tpu_custom_call.1} parent=83 // pred_fallthru
          _
        %s846 = sand.u32 %s35, 1
        %s847 = scalar_lea.sflag [#allocation4], %s846
        %s848 = sand.u32 %s232, 1
        %s849 = smul.addr %s848, 4
        %s850 = scalar_lea.vmem [#allocation13], %s849
        // Predicated region
        $region113: #{tpu_custom_call.1} parent=83 // pred_check
          %p851 = pneg %p245
        $region114: #{tpu_custom_call.1} parent=83 // pred_check_branch
          %853 = sbr.rel (%p851) target = $region116
        $region115: #{tpu_custom_call.1} parent=83 // pred_region
          %854 = dma.done %s847, 64
        $region116: #{tpu_custom_call.1} parent=83 // pred_fallthru
          _
        %s855 = sand.u32 %s35, 1
        %s856 = scalar_lea.sflag [#allocation4], %s855
        %s857 = sand.u32 %s258, 1
        %s858 = smul.addr %s857, 512
        %s859 = scalar_lea.vmem [#allocation14], %s858
        // Predicated region
        $region117: #{tpu_custom_call.1} parent=83 // pred_check
          %p860 = pneg %p271
        $region118: #{tpu_custom_call.1} parent=83 // pred_check_branch
          %862 = sbr.rel (%p860) target = $region120
        $region119: #{tpu_custom_call.1} parent=83 // pred_region
          %863 = dma.done %s856, 8192
        $region120: #{tpu_custom_call.1} parent=83 // pred_fallthru
          _
        %s864 = sand.u32 %s35, 1
        %s865 = scalar_lea.sflag [#allocation4], %s864
        %s866 = sand.u32 %s284, 1
        %s867 = smul.addr %s866, 2
        %s868 = scalar_lea.vmem [#allocation15], %s867
        // Predicated region
        $region121: #{tpu_custom_call.1} parent=83 // pred_check
          %p869 = pneg %p297
        $region122: #{tpu_custom_call.1} parent=83 // pred_check_branch
          %871 = sbr.rel (%p869) target = $region124
        $region123: #{tpu_custom_call.1} parent=83 // pred_region
          %872 = dma.done %s865, 32
        $region124: #{tpu_custom_call.1} parent=83 // pred_fallthru
          _
        %s873 = sand.u32 %s35, 1
        %s874 = scalar_lea.sflag [#allocation4], %s873
        %s875 = sand.u32 %s310, 1
        %s876 = smul.addr %s875, 2
        %s877 = scalar_lea.vmem [#allocation16], %s876
        // Predicated region
        $region125: #{tpu_custom_call.1} parent=83 // pred_check
          %p878 = pneg %p323
        $region126: #{tpu_custom_call.1} parent=83 // pred_check_branch
          %880 = sbr.rel (%p878) target = $region128
        $region127: #{tpu_custom_call.1} parent=83 // pred_region
          %881 = dma.done %s874, 32
        $region128: #{tpu_custom_call.1} parent=83 // pred_fallthru
          _
        %s882 = sand.u32 %s35, 1
        %s883 = scalar_lea.sflag [#allocation4], %s882
        %s884 = sand.u32 %s336, 1
        %s885 = smul.addr %s884, 2
        %s886 = scalar_lea.vmem [#allocation17], %s885
        // Predicated region
        $region129: #{tpu_custom_call.1} parent=83 // pred_check
          %p887 = pneg %p349
        $region130: #{tpu_custom_call.1} parent=83 // pred_check_branch
          %889 = sbr.rel (%p887) target = $region132
        $region131: #{tpu_custom_call.1} parent=83 // pred_region
          %890 = dma.done %s883, 32
        $region132: #{tpu_custom_call.1} parent=83 // pred_fallthru
          _
        %s891 = sand.u32 %s35, 1
        %s892 = scalar_lea.sflag [#allocation4], %s891
        %s893 = sand.u32 %s362, 1
        %s894 = smul.addr %s893, 2
        %s895 = scalar_lea.vmem [#allocation18], %s894
        // Predicated region
        $region133: #{tpu_custom_call.1} parent=83 // pred_check
          %p896 = pneg %p375
        $region134: #{tpu_custom_call.1} parent=83 // pred_check_branch
          %898 = sbr.rel (%p896) target = $region136
        $region135: #{tpu_custom_call.1} parent=83 // pred_region
          %899 = dma.done %s892, 32
        $region136: #{tpu_custom_call.1} parent=83 // pred_fallthru
          _
        %s900 = sand.u32 %s35, 1
        %s901 = scalar_lea.sflag [#allocation4], %s900
        %s902 = sand.u32 %s388, 1
        %s903 = smul.addr %s902, 2
        %s904 = scalar_lea.vmem [#allocation19], %s903
        // Predicated region
        $region137: #{tpu_custom_call.1} parent=83 // pred_check
          %p905 = pneg %p401
        $region138: #{tpu_custom_call.1} parent=83 // pred_check_branch
          %907 = sbr.rel (%p905) target = $region140
        $region139: #{tpu_custom_call.1} parent=83 // pred_region
          %908 = dma.done %s901, 32
        $region140: #{tpu_custom_call.1} parent=83 // pred_fallthru
          _
        // Predicated region
        $region141: #{tpu_custom_call.1} parent=83 // pred_check
          %p909 = pneg %p422
        $region142: #{tpu_custom_call.1} parent=83 // pred_check_branch
          %911 = sbr.rel (%p909) target = $region144
        $region143: #{tpu_custom_call.1} parent=83 // pred_region
          %912 = dma.done [#allocation7], 32
        $region144: #{tpu_custom_call.1} parent=83 // pred_fallthru
          _
        // Predicated region
        $region145: #{tpu_custom_call.1} parent=83 // pred_check
          %p913 = pneg %p443
        $region146: #{tpu_custom_call.1} parent=83 // pred_check_branch
          %915 = sbr.rel (%p913) target = $region148
        $region147: #{tpu_custom_call.1} parent=83 // pred_region
          %916 = dma.done [#allocation22], 32
        $region148: #{tpu_custom_call.1} parent=83 // pred_fallthru
          _
        %s917 = sand.u32 %s35, 1
        %s918 = scalar_lea.sflag [#allocation4], %s917
        %s919 = sand.u32 %s55, 1
        %s920 = smul.addr %s919, 512
        %s921 = scalar_lea.vmem [#allocation3], %s920
        %p922 = pneg %p68
        %p923 = pneg %p65
        %p924 = pneg %p89
        %p925 = pneg %p86
        %s926 = sand.u32 %s35, 1
        %s927 = scalar_lea.sflag [#allocation4], %s926
        %s928 = sand.u32 %s102, 1
        %s929 = smul.addr %s928, 768
        %s930 = scalar_lea.vmem [#allocation8], %s929
        %p931 = pneg %p115
        %p932 = pneg %p112
        %s933 = sand.u32 %s35, 1
        %s934 = scalar_lea.sflag [#allocation4], %s933
        %s935 = sand.u32 %s128, 1
        %s936 = smul.addr %s935, 6
        %s937 = scalar_lea.vmem [#allocation9], %s936
        %p938 = pneg %p141
        %p939 = pneg %p138
        %s940 = sand.u32 %s35, 1
        %s941 = scalar_lea.sflag [#allocation4], %s940
        %s942 = sand.u32 %s154, 1
        %s943 = smul.addr %s942, 256
        %s944 = scalar_lea.vmem [#allocation10], %s943
        %p945 = pneg %p167
        %p946 = pneg %p164
        %s947 = sand.u32 %s35, 1
        %s948 = scalar_lea.sflag [#allocation4], %s947
        %s949 = sand.u32 %s180, 1
        %s950 = smul.addr %s949, 2
        %s951 = scalar_lea.vmem [#allocation11], %s950
        %p952 = pneg %p193
        %p953 = pneg %p190
        %s954 = sand.u32 %s35, 1
        %s955 = scalar_lea.sflag [#allocation4], %s954
        %s956 = sand.u32 %s206, 1
        %s957 = smul.addr %s956, 512
        %s958 = scalar_lea.vmem [#allocation12], %s957
        %p959 = pneg %p219
        %p960 = pneg %p216
        %s961 = sand.u32 %s35, 1
        %s962 = scalar_lea.sflag [#allocation4], %s961
        %s963 = sand.u32 %s232, 1
        %s964 = smul.addr %s963, 4
        %s965 = scalar_lea.vmem [#allocation13], %s964
        %p966 = pneg %p245
        %p967 = pneg %p242
        %s968 = sand.u32 %s35, 1
        %s969 = scalar_lea.sflag [#allocation4], %s968
        %s970 = sand.u32 %s258, 1
        %s971 = smul.addr %s970, 512
        %s972 = scalar_lea.vmem [#allocation14], %s971
        %p973 = pneg %p271
        %p974 = pneg %p268
        %s975 = sand.u32 %s35, 1
        %s976 = scalar_lea.sflag [#allocation4], %s975
        %s977 = sand.u32 %s284, 1
        %s978 = smul.addr %s977, 2
        %s979 = scalar_lea.vmem [#allocation15], %s978
        %p980 = pneg %p297
        %p981 = pneg %p294
        %s982 = sand.u32 %s35, 1
        %s983 = scalar_lea.sflag [#allocation4], %s982
        %s984 = sand.u32 %s310, 1
        %s985 = smul.addr %s984, 2
        %s986 = scalar_lea.vmem [#allocation16], %s985
        %p987 = pneg %p323
        %p988 = pneg %p320
        %s989 = sand.u32 %s35, 1
        %s990 = scalar_lea.sflag [#allocation4], %s989
        %s991 = sand.u32 %s336, 1
        %s992 = smul.addr %s991, 2
        %s993 = scalar_lea.vmem [#allocation17], %s992
        %p994 = pneg %p349
        %p995 = pneg %p346
        %s996 = sand.u32 %s35, 1
        %s997 = scalar_lea.sflag [#allocation4], %s996
        %s998 = sand.u32 %s362, 1
        %s999 = smul.addr %s998, 2
        %s1000 = scalar_lea.vmem [#allocation18], %s999
        %p1001 = pneg %p375
        %p1002 = pneg %p372
        %s1003 = sand.u32 %s35, 1
        %s1004 = scalar_lea.sflag [#allocation4], %s1003
        %s1005 = sand.u32 %s388, 1
        %s1006 = smul.addr %s1005, 2
        %s1007 = scalar_lea.vmem [#allocation19], %s1006
        %p1008 = pneg %p401
        %p1009 = pneg %p398
        %p1010 = pneg %p422
        %p1011 = pneg %p419
        %p1012 = pneg %p443
        %p1013 = pneg %p440
        %p1014 = pneg %p469
        %p1015 = pneg %p466
        %s1016 = sand.u32 %s456, 1
        %s1017 = scalar_lea.sflag [#allocation5], %s1016
        %s1018 = sand.u32 %s456, 1
        %s1019 = smul.addr %s1018, 512
        %s1020 = scalar_lea.vmem [#allocation23], %s1019
        %s1021 = smul.u32 8, %s39
        %s1022 = smul.u32 8, %s39
        %p1024 = scmp.eq.s32.totalorder %s40, 0
        // Predicated region
        $region149: #{tpu_custom_call.1} parent=83 // pred_check
          %p1025 = pneg %p1024
        $region150: #{tpu_custom_call.1} parent=83 // pred_check_branch
          %1027 = sbr.rel (%p1025) target = $region152
        $region151: #{tpu_custom_call.1} parent=83 // pred_region
          %v1028 = vld [vmem:[%s792] sm:$0xff]
          %v1029 = vld [vmem:[%s792 + $0x8] sm:$0xff]
          %v1030 = vld [vmem:[%s792 + $0x10] sm:$0xff]
          %v1031 = vld [vmem:[%s792 + $0x18] sm:$0xff]
          %v1032 = vld [vmem:[%s792 + $0x20] sm:$0xff]
          %v1033 = vld [vmem:[%s792 + $0x28] sm:$0xff]
          %v1034 = vld [vmem:[%s792 + $0x30] sm:$0xff]
          %v1035 = vld [vmem:[%s792 + $0x38] sm:$0xff]
          %v1036 = vld [vmem:[%s792 + $0x40] sm:$0xff]
          %v1037 = vld [vmem:[%s792 + $0x48] sm:$0xff]
          %v1038 = vld [vmem:[%s792 + $0x50] sm:$0xff]
          %v1039 = vld [vmem:[%s792 + $0x58] sm:$0xff]
          %v1040 = vld [vmem:[%s792 + $0x60] sm:$0xff]
          %v1041 = vld [vmem:[%s792 + $0x68] sm:$0xff]
          %v1042 = vld [vmem:[%s792 + $0x70] sm:$0xff]
          %v1043 = vld [vmem:[%s792 + $0x78] sm:$0xff]
          %v1044 = vld [vmem:[%s792 + $0x80] sm:$0xff]
          %v1045 = vld [vmem:[%s792 + $0x88] sm:$0xff]
          %v1046 = vld [vmem:[%s792 + $0x90] sm:$0xff]
          %v1047 = vld [vmem:[%s792 + $0x98] sm:$0xff]
          %v1048 = vld [vmem:[%s792 + $0xa0] sm:$0xff]
          %v1049 = vld [vmem:[%s792 + $0xa8] sm:$0xff]
          %v1050 = vld [vmem:[%s792 + $0xb0] sm:$0xff]
          %v1051 = vld [vmem:[%s792 + $0xb8] sm:$0xff]
          %v1052 = vld [vmem:[%s792 + $0xc0] sm:$0xff]
          %v1053 = vld [vmem:[%s792 + $0xc8] sm:$0xff]
          %v1054 = vld [vmem:[%s792 + $0xd0] sm:$0xff]
          %v1055 = vld [vmem:[%s792 + $0xd8] sm:$0xff]
          %v1056 = vld [vmem:[%s792 + $0xe0] sm:$0xff]
          %v1057 = vld [vmem:[%s792 + $0xe8] sm:$0xff]
          %v1058 = vld [vmem:[%s792 + $0xf0] sm:$0xff]
          %v1059 = vld [vmem:[%s792 + $0xf8] sm:$0xff]
          %v1060 = vld [vmem:[%s792 + $0x100] sm:$0xff]
          %v1061 = vld [vmem:[%s792 + $0x108] sm:$0xff]
          %v1062 = vld [vmem:[%s792 + $0x110] sm:$0xff]
          %v1063 = vld [vmem:[%s792 + $0x118] sm:$0xff]
          %v1064 = vld [vmem:[%s792 + $0x120] sm:$0xff]
          %v1065 = vld [vmem:[%s792 + $0x128] sm:$0xff]
          %v1066 = vld [vmem:[%s792 + $0x130] sm:$0xff]
          %v1067 = vld [vmem:[%s792 + $0x138] sm:$0xff]
          %v1068 = vld [vmem:[%s792 + $0x140] sm:$0xff]
          %v1069 = vld [vmem:[%s792 + $0x148] sm:$0xff]
          %v1070 = vld [vmem:[%s792 + $0x150] sm:$0xff]
          %v1071 = vld [vmem:[%s792 + $0x158] sm:$0xff]
          %v1072 = vld [vmem:[%s792 + $0x160] sm:$0xff]
          %v1073 = vld [vmem:[%s792 + $0x168] sm:$0xff]
          %v1074 = vld [vmem:[%s792 + $0x170] sm:$0xff]
          %v1075 = vld [vmem:[%s792 + $0x178] sm:$0xff]
          %v1076 = vld [vmem:[%s792 + $0x180] sm:$0xff]
          %v1077 = vld [vmem:[%s792 + $0x188] sm:$0xff]
          %v1078 = vld [vmem:[%s792 + $0x190] sm:$0xff]
          %v1079 = vld [vmem:[%s792 + $0x198] sm:$0xff]
          %v1080 = vld [vmem:[%s792 + $0x1a0] sm:$0xff]
          %v1081 = vld [vmem:[%s792 + $0x1a8] sm:$0xff]
          %v1082 = vld [vmem:[%s792 + $0x1b0] sm:$0xff]
          %v1083 = vld [vmem:[%s792 + $0x1b8] sm:$0xff]
          %v1084 = vld [vmem:[%s792 + $0x1c0] sm:$0xff]
          %v1085 = vld [vmem:[%s792 + $0x1c8] sm:$0xff]
          %v1086 = vld [vmem:[%s792 + $0x1d0] sm:$0xff]
          %v1087 = vld [vmem:[%s792 + $0x1d8] sm:$0xff]
          %v1088 = vld [vmem:[%s792 + $0x1e0] sm:$0xff]
          %v1089 = vld [vmem:[%s792 + $0x1e8] sm:$0xff]
          %v1090 = vld [vmem:[%s792 + $0x1f0] sm:$0xff]
          %v1091 = vld [vmem:[%s792 + $0x1f8] sm:$0xff]
          %v1092 = vld [vmem:[#allocation6] sm:$0xff]
          %v1093 = vld [vmem:[#allocation6 + $0x8] sm:$0xff]
          %v1094 = vld [vmem:[#allocation6 + $0x10] sm:$0xff]
          %v1095 = vld [vmem:[#allocation6 + $0x18] sm:$0xff]
          %v1096 = vld [vmem:[#allocation6 + $0x20] sm:$0xff]
          %v1097 = vld [vmem:[#allocation6 + $0x28] sm:$0xff]
          %v1098 = vld [vmem:[#allocation6 + $0x30] sm:$0xff]
          %v1099 = vld [vmem:[#allocation6 + $0x38] sm:$0xff]
          %v1100 = vadd.f32 %v1028, %v1092
          %v1101 = vadd.f32 %v1029, %v1093
          %v1102 = vadd.f32 %v1030, %v1094
          %v1103 = vadd.f32 %v1031, %v1095
          %v1104 = vadd.f32 %v1032, %v1096
          %v1105 = vadd.f32 %v1033, %v1097
          %v1106 = vadd.f32 %v1034, %v1098
          %v1107 = vadd.f32 %v1035, %v1099
          %v1108 = vadd.f32 %v1036, %v1092
          %v1109 = vadd.f32 %v1037, %v1093
          %v1110 = vadd.f32 %v1038, %v1094
          %v1111 = vadd.f32 %v1039, %v1095
          %v1112 = vadd.f32 %v1040, %v1096
          %v1113 = vadd.f32 %v1041, %v1097
          %v1114 = vadd.f32 %v1042, %v1098
          %v1115 = vadd.f32 %v1043, %v1099
          %v1116 = vadd.f32 %v1044, %v1092
          %v1117 = vadd.f32 %v1045, %v1093
          %v1118 = vadd.f32 %v1046, %v1094
          %v1119 = vadd.f32 %v1047, %v1095
          %v1120 = vadd.f32 %v1048, %v1096
          %v1121 = vadd.f32 %v1049, %v1097
          %v1122 = vadd.f32 %v1050, %v1098
          %v1123 = vadd.f32 %v1051, %v1099
          %v1124 = vadd.f32 %v1052, %v1092
          %v1125 = vadd.f32 %v1053, %v1093
          %v1126 = vadd.f32 %v1054, %v1094
          %v1127 = vadd.f32 %v1055, %v1095
          %v1128 = vadd.f32 %v1056, %v1096
          %v1129 = vadd.f32 %v1057, %v1097
          %v1130 = vadd.f32 %v1058, %v1098
          %v1131 = vadd.f32 %v1059, %v1099
          %v1132 = vadd.f32 %v1060, %v1092
          %v1133 = vadd.f32 %v1061, %v1093
          %v1134 = vadd.f32 %v1062, %v1094
          %v1135 = vadd.f32 %v1063, %v1095
          %v1136 = vadd.f32 %v1064, %v1096
          %v1137 = vadd.f32 %v1065, %v1097
          %v1138 = vadd.f32 %v1066, %v1098
          %v1139 = vadd.f32 %v1067, %v1099
          %v1140 = vadd.f32 %v1068, %v1092
          %v1141 = vadd.f32 %v1069, %v1093
          %v1142 = vadd.f32 %v1070, %v1094
          %v1143 = vadd.f32 %v1071, %v1095
          %v1144 = vadd.f32 %v1072, %v1096
          %v1145 = vadd.f32 %v1073, %v1097
          %v1146 = vadd.f32 %v1074, %v1098
          %v1147 = vadd.f32 %v1075, %v1099
          %v1148 = vadd.f32 %v1076, %v1092
          %v1149 = vadd.f32 %v1077, %v1093
          %v1150 = vadd.f32 %v1078, %v1094
          %v1151 = vadd.f32 %v1079, %v1095
          %v1152 = vadd.f32 %v1080, %v1096
          %v1153 = vadd.f32 %v1081, %v1097
          %v1154 = vadd.f32 %v1082, %v1098
          %v1155 = vadd.f32 %v1083, %v1099
          %v1156 = vadd.f32 %v1084, %v1092
          %v1157 = vadd.f32 %v1085, %v1093
          %v1158 = vadd.f32 %v1086, %v1094
          %v1159 = vadd.f32 %v1087, %v1095
          %v1160 = vadd.f32 %v1088, %v1096
          %v1161 = vadd.f32 %v1089, %v1097
          %v1162 = vadd.f32 %v1090, %v1098
          %v1163 = vadd.f32 %v1091, %v1099
          %1164 = vst [vmem:[#allocation2] sm:$0xff] %v1100
          %1165 = vst [vmem:[#allocation2 + $0x8] sm:$0xff] %v1101
          %1166 = vst [vmem:[#allocation2 + $0x10] sm:$0xff] %v1102
          %1167 = vst [vmem:[#allocation2 + $0x18] sm:$0xff] %v1103
          %1168 = vst [vmem:[#allocation2 + $0x20] sm:$0xff] %v1104
          %1169 = vst [vmem:[#allocation2 + $0x28] sm:$0xff] %v1105
          %1170 = vst [vmem:[#allocation2 + $0x30] sm:$0xff] %v1106
          %1171 = vst [vmem:[#allocation2 + $0x38] sm:$0xff] %v1107
          %1172 = vst [vmem:[#allocation2 + $0x40] sm:$0xff] %v1108
          %1173 = vst [vmem:[#allocation2 + $0x48] sm:$0xff] %v1109
          %1174 = vst [vmem:[#allocation2 + $0x50] sm:$0xff] %v1110
          %1175 = vst [vmem:[#allocation2 + $0x58] sm:$0xff] %v1111
          %1176 = vst [vmem:[#allocation2 + $0x60] sm:$0xff] %v1112
          %1177 = vst [vmem:[#allocation2 + $0x68] sm:$0xff] %v1113
          %1178 = vst [vmem:[#allocation2 + $0x70] sm:$0xff] %v1114
          %1179 = vst [vmem:[#allocation2 + $0x78] sm:$0xff] %v1115
          %1180 = vst [vmem:[#allocation2 + $0x80] sm:$0xff] %v1116
          %1181 = vst [vmem:[#allocation2 + $0x88] sm:$0xff] %v1117
          %1182 = vst [vmem:[#allocation2 + $0x90] sm:$0xff] %v1118
          %1183 = vst [vmem:[#allocation2 + $0x98] sm:$0xff] %v1119
          %1184 = vst [vmem:[#allocation2 + $0xa0] sm:$0xff] %v1120
          %1185 = vst [vmem:[#allocation2 + $0xa8] sm:$0xff] %v1121
          %1186 = vst [vmem:[#allocation2 + $0xb0] sm:$0xff] %v1122
          %1187 = vst [vmem:[#allocation2 + $0xb8] sm:$0xff] %v1123
          %1188 = vst [vmem:[#allocation2 + $0xc0] sm:$0xff] %v1124
          %1189 = vst [vmem:[#allocation2 + $0xc8] sm:$0xff] %v1125
          %1190 = vst [vmem:[#allocation2 + $0xd0] sm:$0xff] %v1126
          %1191 = vst [vmem:[#allocation2 + $0xd8] sm:$0xff] %v1127
          %1192 = vst [vmem:[#allocation2 + $0xe0] sm:$0xff] %v1128
          %1193 = vst [vmem:[#allocation2 + $0xe8] sm:$0xff] %v1129
          %1194 = vst [vmem:[#allocation2 + $0xf0] sm:$0xff] %v1130
          %1195 = vst [vmem:[#allocation2 + $0xf8] sm:$0xff] %v1131
          %1196 = vst [vmem:[#allocation2 + $0x100] sm:$0xff] %v1132
          %1197 = vst [vmem:[#allocation2 + $0x108] sm:$0xff] %v1133
          %1198 = vst [vmem:[#allocation2 + $0x110] sm:$0xff] %v1134
          %1199 = vst [vmem:[#allocation2 + $0x118] sm:$0xff] %v1135
          %1200 = vst [vmem:[#allocation2 + $0x120] sm:$0xff] %v1136
          %1201 = vst [vmem:[#allocation2 + $0x128] sm:$0xff] %v1137
          %1202 = vst [vmem:[#allocation2 + $0x130] sm:$0xff] %v1138
          %1203 = vst [vmem:[#allocation2 + $0x138] sm:$0xff] %v1139
          %1204 = vst [vmem:[#allocation2 + $0x140] sm:$0xff] %v1140
          %1205 = vst [vmem:[#allocation2 + $0x148] sm:$0xff] %v1141
          %1206 = vst [vmem:[#allocation2 + $0x150] sm:$0xff] %v1142
          %1207 = vst [vmem:[#allocation2 + $0x158] sm:$0xff] %v1143
          %1208 = vst [vmem:[#allocation2 + $0x160] sm:$0xff] %v1144
          %1209 = vst [vmem:[#allocation2 + $0x168] sm:$0xff] %v1145
          %1210 = vst [vmem:[#allocation2 + $0x170] sm:$0xff] %v1146
          %1211 = vst [vmem:[#allocation2 + $0x178] sm:$0xff] %v1147
          %1212 = vst [vmem:[#allocation2 + $0x180] sm:$0xff] %v1148
          %1213 = vst [vmem:[#allocation2 + $0x188] sm:$0xff] %v1149
          %1214 = vst [vmem:[#allocation2 + $0x190] sm:$0xff] %v1150
          %1215 = vst [vmem:[#allocation2 + $0x198] sm:$0xff] %v1151
          %1216 = vst [vmem:[#allocation2 + $0x1a0] sm:$0xff] %v1152
          %1217 = vst [vmem:[#allocation2 + $0x1a8] sm:$0xff] %v1153
          %1218 = vst [vmem:[#allocation2 + $0x1b0] sm:$0xff] %v1154
          %1219 = vst [vmem:[#allocation2 + $0x1b8] sm:$0xff] %v1155
          %1220 = vst [vmem:[#allocation2 + $0x1c0] sm:$0xff] %v1156
          %1221 = vst [vmem:[#allocation2 + $0x1c8] sm:$0xff] %v1157
          %1222 = vst [vmem:[#allocation2 + $0x1d0] sm:$0xff] %v1158
          %1223 = vst [vmem:[#allocation2 + $0x1d8] sm:$0xff] %v1159
          %1224 = vst [vmem:[#allocation2 + $0x1e0] sm:$0xff] %v1160
          %1225 = vst [vmem:[#allocation2 + $0x1e8] sm:$0xff] %v1161
          %1226 = vst [vmem:[#allocation2 + $0x1f0] sm:$0xff] %v1162
          %1227 = vst [vmem:[#allocation2 + $0x1f8] sm:$0xff] %v1163
        $region152: #{tpu_custom_call.1} parent=83 // pred_fallthru
          _
        %v1228 = vld [vmem:[#allocation2] sm:$0xff]
        %v1229 = vld [vmem:[#allocation2 + $0x8] sm:$0xff]
        %v1230 = vld [vmem:[#allocation2 + $0x10] sm:$0xff]
        %v1231 = vld [vmem:[#allocation2 + $0x18] sm:$0xff]
        %v1232 = vld [vmem:[#allocation2 + $0x20] sm:$0xff]
        %v1233 = vld [vmem:[#allocation2 + $0x28] sm:$0xff]
        %v1234 = vld [vmem:[#allocation2 + $0x30] sm:$0xff]
        %v1235 = vld [vmem:[#allocation2 + $0x38] sm:$0xff]
        %v1236 = vld [vmem:[#allocation2 + $0x40] sm:$0xff]
        %v1237 = vld [vmem:[#allocation2 + $0x48] sm:$0xff]
        %v1238 = vld [vmem:[#allocation2 + $0x50] sm:$0xff]
        %v1239 = vld [vmem:[#allocation2 + $0x58] sm:$0xff]
        %v1240 = vld [vmem:[#allocation2 + $0x60] sm:$0xff]
        %v1241 = vld [vmem:[#allocation2 + $0x68] sm:$0xff]
        %v1242 = vld [vmem:[#allocation2 + $0x70] sm:$0xff]
        %v1243 = vld [vmem:[#allocation2 + $0x78] sm:$0xff]
        %v1244 = vld [vmem:[#allocation2 + $0x80] sm:$0xff]
        %v1245 = vld [vmem:[#allocation2 + $0x88] sm:$0xff]
        %v1246 = vld [vmem:[#allocation2 + $0x90] sm:$0xff]
        %v1247 = vld [vmem:[#allocation2 + $0x98] sm:$0xff]
        %v1248 = vld [vmem:[#allocation2 + $0xa0] sm:$0xff]
        %v1249 = vld [vmem:[#allocation2 + $0xa8] sm:$0xff]
        %v1250 = vld [vmem:[#allocation2 + $0xb0] sm:$0xff]
        %v1251 = vld [vmem:[#allocation2 + $0xb8] sm:$0xff]
        %v1252 = vld [vmem:[#allocation2 + $0xc0] sm:$0xff]
        %v1253 = vld [vmem:[#allocation2 + $0xc8] sm:$0xff]
        %v1254 = vld [vmem:[#allocation2 + $0xd0] sm:$0xff]
        %v1255 = vld [vmem:[#allocation2 + $0xd8] sm:$0xff]
        %v1256 = vld [vmem:[#allocation2 + $0xe0] sm:$0xff]
        %v1257 = vld [vmem:[#allocation2 + $0xe8] sm:$0xff]
        %v1258 = vld [vmem:[#allocation2 + $0xf0] sm:$0xff]
        %v1259 = vld [vmem:[#allocation2 + $0xf8] sm:$0xff]
        %v1260 = vld [vmem:[#allocation2 + $0x100] sm:$0xff]
        %v1261 = vld [vmem:[#allocation2 + $0x108] sm:$0xff]
        %v1262 = vld [vmem:[#allocation2 + $0x110] sm:$0xff]
        %v1263 = vld [vmem:[#allocation2 + $0x118] sm:$0xff]
        %v1264 = vld [vmem:[#allocation2 + $0x120] sm:$0xff]
        %v1265 = vld [vmem:[#allocation2 + $0x128] sm:$0xff]
        %v1266 = vld [vmem:[#allocation2 + $0x130] sm:$0xff]
        %v1267 = vld [vmem:[#allocation2 + $0x138] sm:$0xff]
        %v1268 = vld [vmem:[#allocation2 + $0x140] sm:$0xff]
        %v1269 = vld [vmem:[#allocation2 + $0x148] sm:$0xff]
        %v1270 = vld [vmem:[#allocation2 + $0x150] sm:$0xff]
        %v1271 = vld [vmem:[#allocation2 + $0x158] sm:$0xff]
        %v1272 = vld [vmem:[#allocation2 + $0x160] sm:$0xff]
        %v1273 = vld [vmem:[#allocation2 + $0x168] sm:$0xff]
        %v1274 = vld [vmem:[#allocation2 + $0x170] sm:$0xff]
        %v1275 = vld [vmem:[#allocation2 + $0x178] sm:$0xff]
        %v1276 = vld [vmem:[#allocation2 + $0x180] sm:$0xff]
        %v1277 = vld [vmem:[#allocation2 + $0x188] sm:$0xff]
        %v1278 = vld [vmem:[#allocation2 + $0x190] sm:$0xff]
        %v1279 = vld [vmem:[#allocation2 + $0x198] sm:$0xff]
        %v1280 = vld [vmem:[#allocation2 + $0x1a0] sm:$0xff]
        %v1281 = vld [vmem:[#allocation2 + $0x1a8] sm:$0xff]
        %v1282 = vld [vmem:[#allocation2 + $0x1b0] sm:$0xff]
        %v1283 = vld [vmem:[#allocation2 + $0x1b8] sm:$0xff]
        %v1284 = vld [vmem:[#allocation2 + $0x1c0] sm:$0xff]
        %v1285 = vld [vmem:[#allocation2 + $0x1c8] sm:$0xff]
        %v1286 = vld [vmem:[#allocation2 + $0x1d0] sm:$0xff]
        %v1287 = vld [vmem:[#allocation2 + $0x1d8] sm:$0xff]
        %v1288 = vld [vmem:[#allocation2 + $0x1e0] sm:$0xff]
        %v1289 = vld [vmem:[#allocation2 + $0x1e8] sm:$0xff]
        %v1290 = vld [vmem:[#allocation2 + $0x1f0] sm:$0xff]
        %v1291 = vld [vmem:[#allocation2 + $0x1f8] sm:$0xff]
        %v1292 = vpack.c.bf16 %v1230, %v1228
        %v1293 = vpack.c.bf16 %v1231, %v1229
        %v1294 = vpack.c.bf16 %v1234, %v1232
        %v1295 = vpack.c.bf16 %v1235, %v1233
        %v1296 = vpack.c.bf16 %v1238, %v1236
        %v1297 = vpack.c.bf16 %v1239, %v1237
        %v1298 = vpack.c.bf16 %v1242, %v1240
        %v1299 = vpack.c.bf16 %v1243, %v1241
        %v1300 = vpack.c.bf16 %v1246, %v1244
        %v1301 = vpack.c.bf16 %v1247, %v1245
        %v1302 = vpack.c.bf16 %v1250, %v1248
        %v1303 = vpack.c.bf16 %v1251, %v1249
        %v1304 = vpack.c.bf16 %v1254, %v1252
        %v1305 = vpack.c.bf16 %v1255, %v1253
        %v1306 = vpack.c.bf16 %v1258, %v1256
        %v1307 = vpack.c.bf16 %v1259, %v1257
        %v1308 = vpack.c.bf16 %v1262, %v1260
        %v1309 = vpack.c.bf16 %v1263, %v1261
        %v1310 = vpack.c.bf16 %v1266, %v1264
        %v1311 = vpack.c.bf16 %v1267, %v1265
        %v1312 = vpack.c.bf16 %v1270, %v1268
        %v1313 = vpack.c.bf16 %v1271, %v1269
        %v1314 = vpack.c.bf16 %v1274, %v1272
        %v1315 = vpack.c.bf16 %v1275, %v1273
        %v1316 = vpack.c.bf16 %v1278, %v1276
        %v1317 = vpack.c.bf16 %v1279, %v1277
        %v1318 = vpack.c.bf16 %v1282, %v1280
        %v1319 = vpack.c.bf16 %v1283, %v1281
        %v1320 = vpack.c.bf16 %v1286, %v1284
        %v1321 = vpack.c.bf16 %v1287, %v1285
        %v1322 = vpack.c.bf16 %v1290, %v1288
        %v1323 = vpack.c.bf16 %v1291, %v1289
        %v1324 = vld [vmem:[%s805] sm:$0xff]
        %v1325 = vld [vmem:[%s805 + $0x8] sm:$0xff]
        %v1326 = vld [vmem:[%s805 + $0x10] sm:$0xff]
        %v1327 = vld [vmem:[%s805 + $0x18] sm:$0xff]
        %v1328 = vld [vmem:[%s805 + $0x20] sm:$0xff]
        %v1329 = vld [vmem:[%s805 + $0x28] sm:$0xff]
        %v1330 = vld [vmem:[%s805 + $0x30] sm:$0xff]
        %v1331 = vld [vmem:[%s805 + $0x38] sm:$0xff]
        %v1332 = vld [vmem:[%s805 + $0x40] sm:$0xff]
        %v1333 = vld [vmem:[%s805 + $0x48] sm:$0xff]
        %v1334 = vld [vmem:[%s805 + $0x50] sm:$0xff]
        %v1335 = vld [vmem:[%s805 + $0x58] sm:$0xff]
        %v1336 = vld [vmem:[%s805 + $0x60] sm:$0xff]
        %v1337 = vld [vmem:[%s805 + $0x68] sm:$0xff]
        %v1338 = vld [vmem:[%s805 + $0x70] sm:$0xff]
        %v1339 = vld [vmem:[%s805 + $0x78] sm:$0xff]
        %v1340 = vld [vmem:[%s805 + $0x80] sm:$0xff]
        %v1341 = vld [vmem:[%s805 + $0x88] sm:$0xff]
        %v1342 = vld [vmem:[%s805 + $0x90] sm:$0xff]
        %v1343 = vld [vmem:[%s805 + $0x98] sm:$0xff]
        %v1344 = vld [vmem:[%s805 + $0xa0] sm:$0xff]
        %v1345 = vld [vmem:[%s805 + $0xa8] sm:$0xff]
        %v1346 = vld [vmem:[%s805 + $0xb0] sm:$0xff]
        %v1347 = vld [vmem:[%s805 + $0xb8] sm:$0xff]
        %v1348 = vld [vmem:[%s805 + $0xc0] sm:$0xff]
        %v1349 = vld [vmem:[%s805 + $0xc8] sm:$0xff]
        %v1350 = vld [vmem:[%s805 + $0xd0] sm:$0xff]
        %v1351 = vld [vmem:[%s805 + $0xd8] sm:$0xff]
        %v1352 = vld [vmem:[%s805 + $0xe0] sm:$0xff]
        %v1353 = vld [vmem:[%s805 + $0xe8] sm:$0xff]
        %v1354 = vld [vmem:[%s805 + $0xf0] sm:$0xff]
        %v1355 = vld [vmem:[%s805 + $0xf8] sm:$0xff]
        %v1356 = vld [vmem:[%s805 + $0x100] sm:$0xff]
        %v1357 = vld [vmem:[%s805 + $0x108] sm:$0xff]
        %v1358 = vld [vmem:[%s805 + $0x110] sm:$0xff]
        %v1359 = vld [vmem:[%s805 + $0x118] sm:$0xff]
        %v1360 = vld [vmem:[%s805 + $0x120] sm:$0xff]
        %v1361 = vld [vmem:[%s805 + $0x128] sm:$0xff]
        %v1362 = vld [vmem:[%s805 + $0x130] sm:$0xff]
        %v1363 = vld [vmem:[%s805 + $0x138] sm:$0xff]
        %v1364 = vld [vmem:[%s805 + $0x140] sm:$0xff]
        %v1365 = vld [vmem:[%s805 + $0x148] sm:$0xff]
        %v1366 = vld [vmem:[%s805 + $0x150] sm:$0xff]
        %v1367 = vld [vmem:[%s805 + $0x158] sm:$0xff]
        %v1368 = vld [vmem:[%s805 + $0x160] sm:$0xff]
        %v1369 = vld [vmem:[%s805 + $0x168] sm:$0xff]
        %v1370 = vld [vmem:[%s805 + $0x170] sm:$0xff]
        %v1371 = vld [vmem:[%s805 + $0x178] sm:$0xff]
        %v1372 = vld [vmem:[%s805 + $0x180] sm:$0xff]
        %v1373 = vld [vmem:[%s805 + $0x188] sm:$0xff]
        %v1374 = vld [vmem:[%s805 + $0x190] sm:$0xff]
        %v1375 = vld [vmem:[%s805 + $0x198] sm:$0xff]
        %v1376 = vld [vmem:[%s805 + $0x1a0] sm:$0xff]
        %v1377 = vld [vmem:[%s805 + $0x1a8] sm:$0xff]
        %v1378 = vld [vmem:[%s805 + $0x1b0] sm:$0xff]
        %v1379 = vld [vmem:[%s805 + $0x1b8] sm:$0xff]
        %v1380 = vld [vmem:[%s805 + $0x1c0] sm:$0xff]
        %v1381 = vld [vmem:[%s805 + $0x1c8] sm:$0xff]
        %v1382 = vld [vmem:[%s805 + $0x1d0] sm:$0xff]
        %v1383 = vld [vmem:[%s805 + $0x1d8] sm:$0xff]
        %v1384 = vld [vmem:[%s805 + $0x1e0] sm:$0xff]
        %v1385 = vld [vmem:[%s805 + $0x1e8] sm:$0xff]
        %v1386 = vld [vmem:[%s805 + $0x1f0] sm:$0xff]
        %v1387 = vld [vmem:[%s805 + $0x1f8] sm:$0xff]
        %v1388 = vld [vmem:[%s805 + $0x200] sm:$0xff]
        %v1389 = vld [vmem:[%s805 + $0x208] sm:$0xff]
        %v1390 = vld [vmem:[%s805 + $0x210] sm:$0xff]
        %v1391 = vld [vmem:[%s805 + $0x218] sm:$0xff]
        %v1392 = vld [vmem:[%s805 + $0x220] sm:$0xff]
        %v1393 = vld [vmem:[%s805 + $0x228] sm:$0xff]
        %v1394 = vld [vmem:[%s805 + $0x230] sm:$0xff]
        %v1395 = vld [vmem:[%s805 + $0x238] sm:$0xff]
        %v1396 = vld [vmem:[%s805 + $0x240] sm:$0xff]
        %v1397 = vld [vmem:[%s805 + $0x248] sm:$0xff]
        %v1398 = vld [vmem:[%s805 + $0x250] sm:$0xff]
        %v1399 = vld [vmem:[%s805 + $0x258] sm:$0xff]
        %v1400 = vld [vmem:[%s805 + $0x260] sm:$0xff]
        %v1401 = vld [vmem:[%s805 + $0x268] sm:$0xff]
        %v1402 = vld [vmem:[%s805 + $0x270] sm:$0xff]
        %v1403 = vld [vmem:[%s805 + $0x278] sm:$0xff]
        %v1404 = vld [vmem:[%s805 + $0x280] sm:$0xff]
        %v1405 = vld [vmem:[%s805 + $0x288] sm:$0xff]
        %v1406 = vld [vmem:[%s805 + $0x290] sm:$0xff]
        %v1407 = vld [vmem:[%s805 + $0x298] sm:$0xff]
        %v1408 = vld [vmem:[%s805 + $0x2a0] sm:$0xff]
        %v1409 = vld [vmem:[%s805 + $0x2a8] sm:$0xff]
        %v1410 = vld [vmem:[%s805 + $0x2b0] sm:$0xff]
        %v1411 = vld [vmem:[%s805 + $0x2b8] sm:$0xff]
        %v1412 = vld [vmem:[%s805 + $0x2c0] sm:$0xff]
        %v1413 = vld [vmem:[%s805 + $0x2c8] sm:$0xff]
        %v1414 = vld [vmem:[%s805 + $0x2d0] sm:$0xff]
        %v1415 = vld [vmem:[%s805 + $0x2d8] sm:$0xff]
        %v1416 = vld [vmem:[%s805 + $0x2e0] sm:$0xff]
        %v1417 = vld [vmem:[%s805 + $0x2e8] sm:$0xff]
        %v1418 = vld [vmem:[%s805 + $0x2f0] sm:$0xff]
        %v1419 = vld [vmem:[%s805 + $0x2f8] sm:$0xff]
        %v1420 = vld [vmem:[%s814] sm:$0x3f]
        %v1422 = vlaneseq
        %v1423 = vshrl.u32 %v1422, 7
        %v1424 = vsub.s32 0, %v1423
        %v1425 = vrot.slane %v1420, %v1424
        %v1426 = vlaneseq
        %v1427 = vshrl.u32 %v1426, 7
        %v1428 = vsub.s32 1, %v1427
        %v1429 = vrot.slane %v1420, %v1428
        %v1430 = vlaneseq
        %v1431 = vshrl.u32 %v1430, 7
        %v1432 = vsub.s32 2, %v1431
        %v1433 = vrot.slane %v1420, %v1432
        %v1434 = vlaneseq
        %v1435 = vshrl.u32 %v1434, 7
        %v1436 = vsub.s32 3, %v1435
        %v1437 = vrot.slane %v1420, %v1436
        %v1438 = vlaneseq
        %v1439 = vshrl.u32 %v1438, 7
        %v1440 = vsub.s32 4, %v1439
        %v1441 = vrot.slane %v1420, %v1440
        %v1442 = vlaneseq
        %v1443 = vshrl.u32 %v1442, 7
        %v1444 = vsub.s32 5, %v1443
        %v1445 = vrot.slane %v1420, %v1444
        %v1548 = vunpack.c.l.b16 %v1324
        %v1549 = vunpack.c.h.b16 %v1324
        %v1550 = vunpack.c.l.b16 %v1325
        %v1551 = vunpack.c.h.b16 %v1325
        %v1552 = vunpack.c.l.b16 %v1326
        %v1553 = vunpack.c.h.b16 %v1326
        %v1554 = vunpack.c.l.b16 %v1327
        %v1555 = vunpack.c.h.b16 %v1327
        %v1556 = vunpack.c.l.b16 %v1328
        %v1557 = vunpack.c.h.b16 %v1328
        %v1558 = vunpack.c.l.b16 %v1329
        %v1559 = vunpack.c.h.b16 %v1329
        %v1560 = vunpack.c.l.b16 %v1330
        %v1561 = vunpack.c.h.b16 %v1330
        %v1562 = vunpack.c.l.b16 %v1331
        %v1563 = vunpack.c.h.b16 %v1331
        %v1564 = vunpack.c.l.b16 %v1332
        %v1565 = vunpack.c.h.b16 %v1332
        %v1566 = vunpack.c.l.b16 %v1333
        %v1567 = vunpack.c.h.b16 %v1333
        %v1568 = vunpack.c.l.b16 %v1334
        %v1569 = vunpack.c.h.b16 %v1334
        %v1570 = vunpack.c.l.b16 %v1335
        %v1571 = vunpack.c.h.b16 %v1335
        %v1572 = vunpack.c.l.b16 %v1336
        %v1573 = vunpack.c.h.b16 %v1336
        %v1574 = vunpack.c.l.b16 %v1337
        %v1575 = vunpack.c.h.b16 %v1337
        %v1576 = vunpack.c.l.b16 %v1338
        %v1577 = vunpack.c.h.b16 %v1338
        %v1578 = vunpack.c.l.b16 %v1339
        %v1579 = vunpack.c.h.b16 %v1339
        %v1580 = vunpack.c.l.b16 %v1340
        %v1581 = vunpack.c.h.b16 %v1340
        %v1582 = vunpack.c.l.b16 %v1341
        %v1583 = vunpack.c.h.b16 %v1341
        %v1584 = vunpack.c.l.b16 %v1342
        %v1585 = vunpack.c.h.b16 %v1342
        %v1586 = vunpack.c.l.b16 %v1343
        %v1587 = vunpack.c.h.b16 %v1343
        %v1588 = vunpack.c.l.b16 %v1344
        %v1589 = vunpack.c.h.b16 %v1344
        %v1590 = vunpack.c.l.b16 %v1345
        %v1591 = vunpack.c.h.b16 %v1345
        %v1592 = vunpack.c.l.b16 %v1346
        %v1593 = vunpack.c.h.b16 %v1346
        %v1594 = vunpack.c.l.b16 %v1347
        %v1595 = vunpack.c.h.b16 %v1347
        %v1596 = vunpack.c.l.b16 %v1348
        %v1597 = vunpack.c.h.b16 %v1348
        %v1598 = vunpack.c.l.b16 %v1349
        %v1599 = vunpack.c.h.b16 %v1349
        %v1600 = vunpack.c.l.b16 %v1350
        %v1601 = vunpack.c.h.b16 %v1350
        %v1602 = vunpack.c.l.b16 %v1351
        %v1603 = vunpack.c.h.b16 %v1351
        %v1604 = vunpack.c.l.b16 %v1352
        %v1605 = vunpack.c.h.b16 %v1352
        %v1606 = vunpack.c.l.b16 %v1353
        %v1607 = vunpack.c.h.b16 %v1353
        %v1608 = vunpack.c.l.b16 %v1354
        %v1609 = vunpack.c.h.b16 %v1354
        %v1610 = vunpack.c.l.b16 %v1355
        %v1611 = vunpack.c.h.b16 %v1355
        %v1612 = vunpack.c.l.b16 %v1356
        %v1613 = vunpack.c.h.b16 %v1356
        %v1614 = vunpack.c.l.b16 %v1357
        %v1615 = vunpack.c.h.b16 %v1357
        %v1616 = vunpack.c.l.b16 %v1358
        %v1617 = vunpack.c.h.b16 %v1358
        %v1618 = vunpack.c.l.b16 %v1359
        %v1619 = vunpack.c.h.b16 %v1359
        %v1620 = vunpack.c.l.b16 %v1360
        %v1621 = vunpack.c.h.b16 %v1360
        %v1622 = vunpack.c.l.b16 %v1361
        %v1623 = vunpack.c.h.b16 %v1361
        %v1624 = vunpack.c.l.b16 %v1362
        %v1625 = vunpack.c.h.b16 %v1362
        %v1626 = vunpack.c.l.b16 %v1363
        %v1627 = vunpack.c.h.b16 %v1363
        %v1628 = vunpack.c.l.b16 %v1364
        %v1629 = vunpack.c.h.b16 %v1364
        %v1630 = vunpack.c.l.b16 %v1365
        %v1631 = vunpack.c.h.b16 %v1365
        %v1632 = vunpack.c.l.b16 %v1366
        %v1633 = vunpack.c.h.b16 %v1366
        %v1634 = vunpack.c.l.b16 %v1367
        %v1635 = vunpack.c.h.b16 %v1367
        %v1636 = vunpack.c.l.b16 %v1368
        %v1637 = vunpack.c.h.b16 %v1368
        %v1638 = vunpack.c.l.b16 %v1369
        %v1639 = vunpack.c.h.b16 %v1369
        %v1640 = vunpack.c.l.b16 %v1370
        %v1641 = vunpack.c.h.b16 %v1370
        %v1642 = vunpack.c.l.b16 %v1371
        %v1643 = vunpack.c.h.b16 %v1371
        %v1644 = vunpack.c.l.b16 %v1372
        %v1645 = vunpack.c.h.b16 %v1372
        %v1646 = vunpack.c.l.b16 %v1373
        %v1647 = vunpack.c.h.b16 %v1373
        %v1648 = vunpack.c.l.b16 %v1374
        %v1649 = vunpack.c.h.b16 %v1374
        %v1650 = vunpack.c.l.b16 %v1375
        %v1651 = vunpack.c.h.b16 %v1375
        %v1652 = vunpack.c.l.b16 %v1376
        %v1653 = vunpack.c.h.b16 %v1376
        %v1654 = vunpack.c.l.b16 %v1377
        %v1655 = vunpack.c.h.b16 %v1377
        %v1656 = vunpack.c.l.b16 %v1378
        %v1657 = vunpack.c.h.b16 %v1378
        %v1658 = vunpack.c.l.b16 %v1379
        %v1659 = vunpack.c.h.b16 %v1379
        %v1660 = vunpack.c.l.b16 %v1380
        %v1661 = vunpack.c.h.b16 %v1380
        %v1662 = vunpack.c.l.b16 %v1381
        %v1663 = vunpack.c.h.b16 %v1381
        %v1664 = vunpack.c.l.b16 %v1382
        %v1665 = vunpack.c.h.b16 %v1382
        %v1666 = vunpack.c.l.b16 %v1383
        %v1667 = vunpack.c.h.b16 %v1383
        %v1668 = vunpack.c.l.b16 %v1384
        %v1669 = vunpack.c.h.b16 %v1384
        %v1670 = vunpack.c.l.b16 %v1385
        %v1671 = vunpack.c.h.b16 %v1385
        %v1672 = vunpack.c.l.b16 %v1386
        %v1673 = vunpack.c.h.b16 %v1386
        %v1674 = vunpack.c.l.b16 %v1387
        %v1675 = vunpack.c.h.b16 %v1387
        %v1676 = vunpack.c.l.b16 %v1388
        %v1677 = vunpack.c.h.b16 %v1388
        %v1678 = vunpack.c.l.b16 %v1389
        %v1679 = vunpack.c.h.b16 %v1389
        %v1680 = vunpack.c.l.b16 %v1390
        %v1681 = vunpack.c.h.b16 %v1390
        %v1682 = vunpack.c.l.b16 %v1391
        %v1683 = vunpack.c.h.b16 %v1391
        %v1684 = vunpack.c.l.b16 %v1392
        %v1685 = vunpack.c.h.b16 %v1392
        %v1686 = vunpack.c.l.b16 %v1393
        %v1687 = vunpack.c.h.b16 %v1393
        %v1688 = vunpack.c.l.b16 %v1394
        %v1689 = vunpack.c.h.b16 %v1394
        %v1690 = vunpack.c.l.b16 %v1395
        %v1691 = vunpack.c.h.b16 %v1395
        %v1692 = vunpack.c.l.b16 %v1396
        %v1693 = vunpack.c.h.b16 %v1396
        %v1694 = vunpack.c.l.b16 %v1397
        %v1695 = vunpack.c.h.b16 %v1397
        %v1696 = vunpack.c.l.b16 %v1398
        %v1697 = vunpack.c.h.b16 %v1398
        %v1698 = vunpack.c.l.b16 %v1399
        %v1699 = vunpack.c.h.b16 %v1399
        %v1700 = vunpack.c.l.b16 %v1400
        %v1701 = vunpack.c.h.b16 %v1400
        %v1702 = vunpack.c.l.b16 %v1401
        %v1703 = vunpack.c.h.b16 %v1401
        %v1704 = vunpack.c.l.b16 %v1402
        %v1705 = vunpack.c.h.b16 %v1402
        %v1706 = vunpack.c.l.b16 %v1403
        %v1707 = vunpack.c.h.b16 %v1403
        %v1708 = vunpack.c.l.b16 %v1404
        %v1709 = vunpack.c.h.b16 %v1404
        %v1710 = vunpack.c.l.b16 %v1405
        %v1711 = vunpack.c.h.b16 %v1405
        %v1712 = vunpack.c.l.b16 %v1406
        %v1713 = vunpack.c.h.b16 %v1406
        %v1714 = vunpack.c.l.b16 %v1407
        %v1715 = vunpack.c.h.b16 %v1407
        %v1716 = vunpack.c.l.b16 %v1408
        %v1717 = vunpack.c.h.b16 %v1408
        %v1718 = vunpack.c.l.b16 %v1409
        %v1719 = vunpack.c.h.b16 %v1409
        %v1720 = vunpack.c.l.b16 %v1410
        %v1721 = vunpack.c.h.b16 %v1410
        %v1722 = vunpack.c.l.b16 %v1411
        %v1723 = vunpack.c.h.b16 %v1411
        %v1724 = vunpack.c.l.b16 %v1412
        %v1725 = vunpack.c.h.b16 %v1412
        %v1726 = vunpack.c.l.b16 %v1413
        %v1727 = vunpack.c.h.b16 %v1413
        %v1728 = vunpack.c.l.b16 %v1414
        %v1729 = vunpack.c.h.b16 %v1414
        %v1730 = vunpack.c.l.b16 %v1415
        %v1731 = vunpack.c.h.b16 %v1415
        %v1732 = vunpack.c.l.b16 %v1416
        %v1733 = vunpack.c.h.b16 %v1416
        %v1734 = vunpack.c.l.b16 %v1417
        %v1735 = vunpack.c.h.b16 %v1417
        %v1736 = vunpack.c.l.b16 %v1418
        %v1737 = vunpack.c.h.b16 %v1418
        %v1738 = vunpack.c.l.b16 %v1419
        %v1739 = vunpack.c.h.b16 %v1419
        %v1740 = vpack.c.b16 %v1554, %v1548
        %v1741 = vpack.c.b16 %v1555, %v1549
        %v1742 = vpack.c.b16 %v1556, %v1550
        %v1743 = vpack.c.b16 %v1557, %v1551
        %v1744 = vpack.c.b16 %v1558, %v1552
        %v1745 = vpack.c.b16 %v1559, %v1553
        %v1746 = vpack.c.b16 %v1566, %v1560
        %v1747 = vpack.c.b16 %v1567, %v1561
        %v1748 = vpack.c.b16 %v1568, %v1562
        %v1749 = vpack.c.b16 %v1569, %v1563
        %v1750 = vpack.c.b16 %v1570, %v1564
        %v1751 = vpack.c.b16 %v1571, %v1565
        %v1752 = vpack.c.b16 %v1578, %v1572
        %v1753 = vpack.c.b16 %v1579, %v1573
        %v1754 = vpack.c.b16 %v1580, %v1574
        %v1755 = vpack.c.b16 %v1581, %v1575
        %v1756 = vpack.c.b16 %v1582, %v1576
        %v1757 = vpack.c.b16 %v1583, %v1577
        %v1758 = vpack.c.b16 %v1590, %v1584
        %v1759 = vpack.c.b16 %v1591, %v1585
        %v1760 = vpack.c.b16 %v1592, %v1586
        %v1761 = vpack.c.b16 %v1593, %v1587
        %v1762 = vpack.c.b16 %v1594, %v1588
        %v1763 = vpack.c.b16 %v1595, %v1589
        %v1764 = vpack.c.b16 %v1602, %v1596
        %v1765 = vpack.c.b16 %v1603, %v1597
        %v1766 = vpack.c.b16 %v1604, %v1598
        %v1767 = vpack.c.b16 %v1605, %v1599
        %v1768 = vpack.c.b16 %v1606, %v1600
        %v1769 = vpack.c.b16 %v1607, %v1601
        %v1770 = vpack.c.b16 %v1614, %v1608
        %v1771 = vpack.c.b16 %v1615, %v1609
        %v1772 = vpack.c.b16 %v1616, %v1610
        %v1773 = vpack.c.b16 %v1617, %v1611
        %v1774 = vpack.c.b16 %v1618, %v1612
        %v1775 = vpack.c.b16 %v1619, %v1613
        %v1776 = vpack.c.b16 %v1626, %v1620
        %v1777 = vpack.c.b16 %v1627, %v1621
        %v1778 = vpack.c.b16 %v1628, %v1622
        %v1779 = vpack.c.b16 %v1629, %v1623
        %v1780 = vpack.c.b16 %v1630, %v1624
        %v1781 = vpack.c.b16 %v1631, %v1625
        %v1782 = vpack.c.b16 %v1638, %v1632
        %v1783 = vpack.c.b16 %v1639, %v1633
        %v1784 = vpack.c.b16 %v1640, %v1634
        %v1785 = vpack.c.b16 %v1641, %v1635
        %v1786 = vpack.c.b16 %v1642, %v1636
        %v1787 = vpack.c.b16 %v1643, %v1637
        %v1788 = vpack.c.b16 %v1650, %v1644
        %v1789 = vpack.c.b16 %v1651, %v1645
        %v1790 = vpack.c.b16 %v1652, %v1646
        %v1791 = vpack.c.b16 %v1653, %v1647
        %v1792 = vpack.c.b16 %v1654, %v1648
        %v1793 = vpack.c.b16 %v1655, %v1649
        %v1794 = vpack.c.b16 %v1662, %v1656
        %v1795 = vpack.c.b16 %v1663, %v1657
        %v1796 = vpack.c.b16 %v1664, %v1658
        %v1797 = vpack.c.b16 %v1665, %v1659
        %v1798 = vpack.c.b16 %v1666, %v1660
        %v1799 = vpack.c.b16 %v1667, %v1661
        %v1800 = vpack.c.b16 %v1674, %v1668
        %v1801 = vpack.c.b16 %v1675, %v1669
        %v1802 = vpack.c.b16 %v1676, %v1670
        %v1803 = vpack.c.b16 %v1677, %v1671
        %v1804 = vpack.c.b16 %v1678, %v1672
        %v1805 = vpack.c.b16 %v1679, %v1673
        %v1806 = vpack.c.b16 %v1686, %v1680
        %v1807 = vpack.c.b16 %v1687, %v1681
        %v1808 = vpack.c.b16 %v1688, %v1682
        %v1809 = vpack.c.b16 %v1689, %v1683
        %v1810 = vpack.c.b16 %v1690, %v1684
        %v1811 = vpack.c.b16 %v1691, %v1685
        %v1812 = vpack.c.b16 %v1698, %v1692
        %v1813 = vpack.c.b16 %v1699, %v1693
        %v1814 = vpack.c.b16 %v1700, %v1694
        %v1815 = vpack.c.b16 %v1701, %v1695
        %v1816 = vpack.c.b16 %v1702, %v1696
        %v1817 = vpack.c.b16 %v1703, %v1697
        %v1818 = vpack.c.b16 %v1710, %v1704
        %v1819 = vpack.c.b16 %v1711, %v1705
        %v1820 = vpack.c.b16 %v1712, %v1706
        %v1821 = vpack.c.b16 %v1713, %v1707
        %v1822 = vpack.c.b16 %v1714, %v1708
        %v1823 = vpack.c.b16 %v1715, %v1709
        %v1824 = vpack.c.b16 %v1722, %v1716
        %v1825 = vpack.c.b16 %v1723, %v1717
        %v1826 = vpack.c.b16 %v1724, %v1718
        %v1827 = vpack.c.b16 %v1725, %v1719
        %v1828 = vpack.c.b16 %v1726, %v1720
        %v1829 = vpack.c.b16 %v1727, %v1721
        %v1830 = vpack.c.b16 %v1734, %v1728
        %v1831 = vpack.c.b16 %v1735, %v1729
        %v1832 = vpack.c.b16 %v1736, %v1730
        %v1833 = vpack.c.b16 %v1737, %v1731
        %v1834 = vpack.c.b16 %v1738, %v1732
        %v1835 = vpack.c.b16 %v1739, %v1733
        %1932 = vmatprep.subr.bf16.mxu0 %v1741
        %1933 = vmatpush1.bf16.msra.mxu0 %v1740
        %1934 = vmatprep.subr.bf16.mxu0 %v1747
        %1935 = vmatpush1.bf16.msra.mxu0 %v1746
        %1936 = vmatprep.subr.bf16.mxu0 %v1753
        %1937 = vmatpush1.bf16.msra.mxu0 %v1752
        %1938 = vmatprep.subr.bf16.mxu0 %v1759
        %1939 = vmatpush1.bf16.msra.mxu0 %v1758
        %1940 = vmatprep.subr.bf16.mxu0 %v1765
        %1941 = vmatpush1.bf16.msra.mxu0 %v1764
        %1942 = vmatprep.subr.bf16.mxu0 %v1771
        %1943 = vmatpush1.bf16.msra.mxu0 %v1770
        %1944 = vmatprep.subr.bf16.mxu0 %v1777
        %1945 = vmatpush1.bf16.msra.mxu0 %v1776
        %1946 = vmatprep.subr.bf16.mxu0 %v1783
        %1947 = vmatpush1.bf16.msra.mxu0 %v1782
        %1948 = vmatprep.subr.bf16.mxu0 %v1789
        %1949 = vmatpush1.bf16.msra.mxu0 %v1788
        %1950 = vmatprep.subr.bf16.mxu0 %v1795
        %1951 = vmatpush1.bf16.msra.mxu0 %v1794
        %1952 = vmatprep.subr.bf16.mxu0 %v1801
        %1953 = vmatpush1.bf16.msra.mxu0 %v1800
        %1954 = vmatprep.subr.bf16.mxu0 %v1807
        %1955 = vmatpush1.bf16.msra.mxu0 %v1806
        %1956 = vmatprep.subr.bf16.mxu0 %v1813
        %1957 = vmatpush1.bf16.msra.mxu0 %v1812
        %1958 = vmatprep.subr.bf16.mxu0 %v1819
        %1959 = vmatpush1.bf16.msra.mxu0 %v1818
        %1960 = vmatprep.subr.bf16.mxu0 %v1825
        %1961 = vmatpush1.bf16.msra.mxu0 %v1824
        %1962 = vmatprep.subr.bf16.mxu0 %v1831
        %1963 = vmatpush1.bf16.msra.mxu0 %v1830
        %1964 = vmatprep.mubr.bf16.mxu0 %v1293
        %1965 = vmatmul.mubr.bf16.gmra.mrb[0].mxu0 %v1292
        %v1966 = vpop.f32.mrb[0].mxu0
        %v1967 = vadd.f32 %v1425, %v1966
        %v1968 = vpop.f32.mrb[0].mxu0
        %v1969 = vadd.f32 %v1429, %v1968
        %v1970 = vpop.f32.mrb[0].mxu0
        %v1971 = vadd.f32 %v1425, %v1970
        %v1972 = vpop.f32.mrb[0].mxu0
        %v1973 = vadd.f32 %v1429, %v1972
        %1974 = vmatprep.mubr.bf16.mxu0 %v1295
        %1975 = vmatmul.mubr.bf16.gmra.mrb[0].mxu0 %v1294
        %v1976 = vpop.f32.mrb[0].mxu0
        %v1977 = vadd.f32 %v1425, %v1976
        %v1978 = vpop.f32.mrb[0].mxu0
        %v1979 = vadd.f32 %v1429, %v1978
        %v1980 = vpop.f32.mrb[0].mxu0
        %v1981 = vadd.f32 %v1425, %v1980
        %v1982 = vpop.f32.mrb[0].mxu0
        %v1983 = vadd.f32 %v1429, %v1982
        %1984 = vmatprep.mubr.bf16.mxu0 %v1297
        %1985 = vmatmul.mubr.bf16.gmra.mrb[0].mxu0 %v1296
        %v1986 = vpop.f32.mrb[0].mxu0
        %v1987 = vadd.f32 %v1425, %v1986
        %v1988 = vpop.f32.mrb[0].mxu0
        %v1989 = vadd.f32 %v1429, %v1988
        %v1990 = vpop.f32.mrb[0].mxu0
        %v1991 = vadd.f32 %v1425, %v1990
        %v1992 = vpop.f32.mrb[0].mxu0
        %v1993 = vadd.f32 %v1429, %v1992
        %1994 = vmatprep.mubr.bf16.mxu0 %v1299
        %1995 = vmatmul.mubr.bf16.gmra.mrb[0].mxu0 %v1298
        %v1996 = vpop.f32.mrb[0].mxu0
        %v1997 = vadd.f32 %v1425, %v1996
        %v1998 = vpop.f32.mrb[0].mxu0
        %v1999 = vadd.f32 %v1429, %v1998
        %v2000 = vpop.f32.mrb[0].mxu0
        %v2001 = vadd.f32 %v1425, %v2000
        %v2002 = vpop.f32.mrb[0].mxu0
        %v2003 = vadd.f32 %v1429, %v2002
        %2004 = vmatprep.mubr.bf16.mxu0 %v1301
        %2005 = vmatmul.mubr.bf16.gmra.mrb[0].mxu0 %v1300
        %v2006 = vpop.f32.mrb[0].mxu0
        %v2007 = vadd.f32 %v1425, %v2006
        %v2008 = vpop.f32.mrb[0].mxu0
        %v2009 = vadd.f32 %v1429, %v2008
        %v2010 = vpop.f32.mrb[0].mxu0
        %v2011 = vadd.f32 %v1425, %v2010
        %v2012 = vpop.f32.mrb[0].mxu0
        %v2013 = vadd.f32 %v1429, %v2012
        %2014 = vmatprep.mubr.bf16.mxu0 %v1303
        %2015 = vmatmul.mubr.bf16.gmra.mrb[0].mxu0 %v1302
        %v2016 = vpop.f32.mrb[0].mxu0
        %v2017 = vadd.f32 %v1425, %v2016
        %v2018 = vpop.f32.mrb[0].mxu0
        %v2019 = vadd.f32 %v1429, %v2018
        %v2020 = vpop.f32.mrb[0].mxu0
        %v2021 = vadd.f32 %v1425, %v2020
        %v2022 = vpop.f32.mrb[0].mxu0
        %v2023 = vadd.f32 %v1429, %v2022
        %2024 = vmatprep.mubr.bf16.mxu0 %v1305
        %2025 = vmatmul.mubr.bf16.gmra.mrb[0].mxu0 %v1304
        %v2026 = vpop.f32.mrb[0].mxu0
        %v2027 = vadd.f32 %v1425, %v2026
        %v2028 = vpop.f32.mrb[0].mxu0
        %v2029 = vadd.f32 %v1429, %v2028
        %v2030 = vpop.f32.mrb[0].mxu0
        %v2031 = vadd.f32 %v1425, %v2030
        %v2032 = vpop.f32.mrb[0].mxu0
        %v2033 = vadd.f32 %v1429, %v2032
        %2034 = vmatprep.mubr.bf16.mxu0 %v1307
        %2035 = vmatmul.mubr.bf16.gmra.mrb[0].mxu0 %v1306
        %v2036 = vpop.f32.mrb[0].mxu0
        %v2037 = vadd.f32 %v1425, %v2036
        %v2038 = vpop.f32.mrb[0].mxu0
        %v2039 = vadd.f32 %v1429, %v2038
        %v2040 = vpop.f32.mrb[0].mxu0
        %v2041 = vadd.f32 %v1425, %v2040
        %v2042 = vpop.f32.mrb[0].mxu0
        %v2043 = vadd.f32 %v1429, %v2042
        %2044 = vmatprep.mubr.bf16.mxu0 %v1309
        %2045 = vmatmul.mubr.bf16.gmra.mrb[0].mxu0 %v1308
        %v2046 = vpop.f32.mrb[0].mxu0
        %v2047 = vadd.f32 %v1425, %v2046
        %v2048 = vpop.f32.mrb[0].mxu0
        %v2049 = vadd.f32 %v1429, %v2048
        %v2050 = vpop.f32.mrb[0].mxu0
        %v2051 = vadd.f32 %v1425, %v2050
        %v2052 = vpop.f32.mrb[0].mxu0
        %v2053 = vadd.f32 %v1429, %v2052
        %2054 = vmatprep.mubr.bf16.mxu0 %v1311
        %2055 = vmatmul.mubr.bf16.gmra.mrb[0].mxu0 %v1310
        %v2056 = vpop.f32.mrb[0].mxu0
        %v2057 = vadd.f32 %v1425, %v2056
        %v2058 = vpop.f32.mrb[0].mxu0
        %v2059 = vadd.f32 %v1429, %v2058
        %v2060 = vpop.f32.mrb[0].mxu0
        %v2061 = vadd.f32 %v1425, %v2060
        %v2062 = vpop.f32.mrb[0].mxu0
        %v2063 = vadd.f32 %v1429, %v2062
        %2064 = vmatprep.mubr.bf16.mxu0 %v1313
        %2065 = vmatmul.mubr.bf16.gmra.mrb[0].mxu0 %v1312
        %v2066 = vpop.f32.mrb[0].mxu0
        %v2067 = vadd.f32 %v1425, %v2066
        %v2068 = vpop.f32.mrb[0].mxu0
        %v2069 = vadd.f32 %v1429, %v2068
        %v2070 = vpop.f32.mrb[0].mxu0
        %v2071 = vadd.f32 %v1425, %v2070
        %v2072 = vpop.f32.mrb[0].mxu0
        %v2073 = vadd.f32 %v1429, %v2072
        %2074 = vmatprep.mubr.bf16.mxu0 %v1315
        %2075 = vmatmul.mubr.bf16.gmra.mrb[0].mxu0 %v1314
        %v2076 = vpop.f32.mrb[0].mxu0
        %v2077 = vadd.f32 %v1425, %v2076
        %v2078 = vpop.f32.mrb[0].mxu0
        %v2079 = vadd.f32 %v1429, %v2078
        %v2080 = vpop.f32.mrb[0].mxu0
        %v2081 = vadd.f32 %v1425, %v2080
        %v2082 = vpop.f32.mrb[0].mxu0
        %v2083 = vadd.f32 %v1429, %v2082
        %2084 = vmatprep.mubr.bf16.mxu0 %v1317
        %2085 = vmatmul.mubr.bf16.gmra.mrb[0].mxu0 %v1316
        %v2086 = vpop.f32.mrb[0].mxu0
        %v2087 = vadd.f32 %v1425, %v2086
        %v2088 = vpop.f32.mrb[0].mxu0
        %v2089 = vadd.f32 %v1429, %v2088
        %v2090 = vpop.f32.mrb[0].mxu0
        %v2091 = vadd.f32 %v1425, %v2090
        %v2092 = vpop.f32.mrb[0].mxu0
        %v2093 = vadd.f32 %v1429, %v2092
        %2094 = vmatprep.mubr.bf16.mxu0 %v1319
        %2095 = vmatmul.mubr.bf16.gmra.mrb[0].mxu0 %v1318
        %v2096 = vpop.f32.mrb[0].mxu0
        %v2097 = vadd.f32 %v1425, %v2096
        %v2098 = vpop.f32.mrb[0].mxu0
        %v2099 = vadd.f32 %v1429, %v2098
        %v2100 = vpop.f32.mrb[0].mxu0
        %v2101 = vadd.f32 %v1425, %v2100
        %v2102 = vpop.f32.mrb[0].mxu0
        %v2103 = vadd.f32 %v1429, %v2102
        %2104 = vmatprep.mubr.bf16.mxu0 %v1321
        %2105 = vmatmul.mubr.bf16.gmra.mrb[0].mxu0 %v1320
        %v2106 = vpop.f32.mrb[0].mxu0
        %v2107 = vadd.f32 %v1425, %v2106
        %v2108 = vpop.f32.mrb[0].mxu0
        %v2109 = vadd.f32 %v1429, %v2108
        %v2110 = vpop.f32.mrb[0].mxu0
        %v2111 = vadd.f32 %v1425, %v2110
        %v2112 = vpop.f32.mrb[0].mxu0
        %v2113 = vadd.f32 %v1429, %v2112
        %2114 = vmatprep.mubr.bf16.mxu0 %v1323
        %2115 = vmatmul.mubr.bf16.gmra.mrb[0].mxu0 %v1322
        %v2116 = vpop.f32.mrb[0].mxu0
        %v2117 = vadd.f32 %v1425, %v2116
        %v2118 = vpop.f32.mrb[0].mxu0
        %v2119 = vadd.f32 %v1429, %v2118
        %v2120 = vpop.f32.mrb[0].mxu0
        %v2121 = vadd.f32 %v1425, %v2120
        %v2122 = vpop.f32.mrb[0].mxu0
        %v2123 = vadd.f32 %v1429, %v2122
        %2124 = vdwg.mxu0
        %2125 = vmatprep.subr.bf16.mxu0 %v1743
        %2126 = vmatpush1.bf16.msra.mxu0 %v1742
        %2127 = vmatprep.subr.bf16.mxu0 %v1749
        %2128 = vmatpush1.bf16.msra.mxu0 %v1748
        %2129 = vmatprep.subr.bf16.mxu0 %v1755
        %2130 = vmatpush1.bf16.msra.mxu0 %v1754
        %2131 = vmatprep.subr.bf16.mxu0 %v1761
        %2132 = vmatpush1.bf16.msra.mxu0 %v1760
        %2133 = vmatprep.subr.bf16.mxu0 %v1767
        %2134 = vmatpush1.bf16.msra.mxu0 %v1766
        %2135 = vmatprep.subr.bf16.mxu0 %v1773
        %2136 = vmatpush1.bf16.msra.mxu0 %v1772
        %2137 = vmatprep.subr.bf16.mxu0 %v1779
        %2138 = vmatpush1.bf16.msra.mxu0 %v1778
        %2139 = vmatprep.subr.bf16.mxu0 %v1785
        %2140 = vmatpush1.bf16.msra.mxu0 %v1784
        %2141 = vmatprep.subr.bf16.mxu0 %v1791
        %2142 = vmatpush1.bf16.msra.mxu0 %v1790
        %2143 = vmatprep.subr.bf16.mxu0 %v1797
        %2144 = vmatpush1.bf16.msra.mxu0 %v1796
        %2145 = vmatprep.subr.bf16.mxu0 %v1803
        %2146 = vmatpush1.bf16.msra.mxu0 %v1802
        %2147 = vmatprep.subr.bf16.mxu0 %v1809
        %2148 = vmatpush1.bf16.msra.mxu0 %v1808
        %2149 = vmatprep.subr.bf16.mxu0 %v1815
        %2150 = vmatpush1.bf16.msra.mxu0 %v1814
        %2151 = vmatprep.subr.bf16.mxu0 %v1821
        %2152 = vmatpush1.bf16.msra.mxu0 %v1820
        %2153 = vmatprep.subr.bf16.mxu0 %v1827
        %2154 = vmatpush1.bf16.msra.mxu0 %v1826
        %2155 = vmatprep.subr.bf16.mxu0 %v1833
        %2156 = vmatpush1.bf16.msra.mxu0 %v1832
        %2157 = vmatprep.mubr.bf16.mxu0 %v1293
        %2158 = vmatmul.mubr.bf16.gmra.mrb[0].mxu0 %v1292
        %v2159 = vpop.f32.mrb[0].mxu0
        %v2160 = vadd.f32 %v1433, %v2159
        %v2161 = vpop.f32.mrb[0].mxu0
        %v2162 = vadd.f32 %v1437, %v2161
        %v2163 = vpop.f32.mrb[0].mxu0
        %v2164 = vadd.f32 %v1433, %v2163
        %v2165 = vpop.f32.mrb[0].mxu0
        %v2166 = vadd.f32 %v1437, %v2165
        %2167 = vmatprep.mubr.bf16.mxu0 %v1295
        %2168 = vmatmul.mubr.bf16.gmra.mrb[0].mxu0 %v1294
        %v2169 = vpop.f32.mrb[0].mxu0
        %v2170 = vadd.f32 %v1433, %v2169
        %v2171 = vpop.f32.mrb[0].mxu0
        %v2172 = vadd.f32 %v1437, %v2171
        %v2173 = vpop.f32.mrb[0].mxu0
        %v2174 = vadd.f32 %v1433, %v2173
        %v2175 = vpop.f32.mrb[0].mxu0
        %v2176 = vadd.f32 %v1437, %v2175
        %2177 = vmatprep.mubr.bf16.mxu0 %v1297
        %2178 = vmatmul.mubr.bf16.gmra.mrb[0].mxu0 %v1296
        %v2179 = vpop.f32.mrb[0].mxu0
        %v2180 = vadd.f32 %v1433, %v2179
        %v2181 = vpop.f32.mrb[0].mxu0
        %v2182 = vadd.f32 %v1437, %v2181
        %v2183 = vpop.f32.mrb[0].mxu0
        %v2184 = vadd.f32 %v1433, %v2183
        %v2185 = vpop.f32.mrb[0].mxu0
        %v2186 = vadd.f32 %v1437, %v2185
        %2187 = vmatprep.mubr.bf16.mxu0 %v1299
        %2188 = vmatmul.mubr.bf16.gmra.mrb[0].mxu0 %v1298
        %v2189 = vpop.f32.mrb[0].mxu0
        %v2190 = vadd.f32 %v1433, %v2189
        %v2191 = vpop.f32.mrb[0].mxu0
        %v2192 = vadd.f32 %v1437, %v2191
        %v2193 = vpop.f32.mrb[0].mxu0
        %v2194 = vadd.f32 %v1433, %v2193
        %v2195 = vpop.f32.mrb[0].mxu0
        %v2196 = vadd.f32 %v1437, %v2195
        %2197 = vmatprep.mubr.bf16.mxu0 %v1301
        %2198 = vmatmul.mubr.bf16.gmra.mrb[0].mxu0 %v1300
        %v2199 = vpop.f32.mrb[0].mxu0
        %v2200 = vadd.f32 %v1433, %v2199
        %v2201 = vpop.f32.mrb[0].mxu0
        %v2202 = vadd.f32 %v1437, %v2201
        %v2203 = vpop.f32.mrb[0].mxu0
        %v2204 = vadd.f32 %v1433, %v2203
        %v2205 = vpop.f32.mrb[0].mxu0
        %v2206 = vadd.f32 %v1437, %v2205
        %2207 = vmatprep.mubr.bf16.mxu0 %v1303
        %2208 = vmatmul.mubr.bf16.gmra.mrb[0].mxu0 %v1302
        %v2209 = vpop.f32.mrb[0].mxu0
        %v2210 = vadd.f32 %v1433, %v2209
        %v2211 = vpop.f32.mrb[0].mxu0
        %v2212 = vadd.f32 %v1437, %v2211
        %v2213 = vpop.f32.mrb[0].mxu0
        %v2214 = vadd.f32 %v1433, %v2213
        %v2215 = vpop.f32.mrb[0].mxu0
        %v2216 = vadd.f32 %v1437, %v2215
        %2217 = vmatprep.mubr.bf16.mxu0 %v1305
        %2218 = vmatmul.mubr.bf16.gmra.mrb[0].mxu0 %v1304
        %v2219 = vpop.f32.mrb[0].mxu0
        %v2220 = vadd.f32 %v1433, %v2219
        %v2221 = vpop.f32.mrb[0].mxu0
        %v2222 = vadd.f32 %v1437, %v2221
        %v2223 = vpop.f32.mrb[0].mxu0
        %v2224 = vadd.f32 %v1433, %v2223
        %v2225 = vpop.f32.mrb[0].mxu0
        %v2226 = vadd.f32 %v1437, %v2225
        %2227 = vmatprep.mubr.bf16.mxu0 %v1307
        %2228 = vmatmul.mubr.bf16.gmra.mrb[0].mxu0 %v1306
        %v2229 = vpop.f32.mrb[0].mxu0
        %v2230 = vadd.f32 %v1433, %v2229
        %v2231 = vpop.f32.mrb[0].mxu0
        %v2232 = vadd.f32 %v1437, %v2231
        %v2233 = vpop.f32.mrb[0].mxu0
        %v2234 = vadd.f32 %v1433, %v2233
        %v2235 = vpop.f32.mrb[0].mxu0
        %v2236 = vadd.f32 %v1437, %v2235
        %2237 = vmatprep.mubr.bf16.mxu0 %v1309
        %2238 = vmatmul.mubr.bf16.gmra.mrb[0].mxu0 %v1308
        %v2239 = vpop.f32.mrb[0].mxu0
        %v2240 = vadd.f32 %v1433, %v2239
        %v2241 = vpop.f32.mrb[0].mxu0
        %v2242 = vadd.f32 %v1437, %v2241
        %v2243 = vpop.f32.mrb[0].mxu0
        %v2244 = vadd.f32 %v1433, %v2243
        %v2245 = vpop.f32.mrb[0].mxu0
        %v2246 = vadd.f32 %v1437, %v2245
        %2247 = vmatprep.mubr.bf16.mxu0 %v1311
        %2248 = vmatmul.mubr.bf16.gmra.mrb[0].mxu0 %v1310
        %v2249 = vpop.f32.mrb[0].mxu0
        %v2250 = vadd.f32 %v1433, %v2249
        %v2251 = vpop.f32.mrb[0].mxu0
        %v2252 = vadd.f32 %v1437, %v2251
        %v2253 = vpop.f32.mrb[0].mxu0
        %v2254 = vadd.f32 %v1433, %v2253
        %v2255 = vpop.f32.mrb[0].mxu0
        %v2256 = vadd.f32 %v1437, %v2255
        %2257 = vmatprep.mubr.bf16.mxu0 %v1313
        %2258 = vmatmul.mubr.bf16.gmra.mrb[0].mxu0 %v1312
        %v2259 = vpop.f32.mrb[0].mxu0
        %v2260 = vadd.f32 %v1433, %v2259
        %v2261 = vpop.f32.mrb[0].mxu0
        %v2262 = vadd.f32 %v1437, %v2261
        %v2263 = vpop.f32.mrb[0].mxu0
        %v2264 = vadd.f32 %v1433, %v2263
        %v2265 = vpop.f32.mrb[0].mxu0
        %v2266 = vadd.f32 %v1437, %v2265
        %2267 = vmatprep.mubr.bf16.mxu0 %v1315
        %2268 = vmatmul.mubr.bf16.gmra.mrb[0].mxu0 %v1314
        %v2269 = vpop.f32.mrb[0].mxu0
        %v2270 = vadd.f32 %v1433, %v2269
        %v2271 = vpop.f32.mrb[0].mxu0
        %v2272 = vadd.f32 %v1437, %v2271
        %v2273 = vpop.f32.mrb[0].mxu0
        %v2274 = vadd.f32 %v1433, %v2273
        %v2275 = vpop.f32.mrb[0].mxu0
        %v2276 = vadd.f32 %v1437, %v2275
        %2277 = vmatprep.mubr.bf16.mxu0 %v1317
        %2278 = vmatmul.mubr.bf16.gmra.mrb[0].mxu0 %v1316
        %v2279 = vpop.f32.mrb[0].mxu0
        %v2280 = vadd.f32 %v1433, %v2279
        %v2281 = vpop.f32.mrb[0].mxu0
        %v2282 = vadd.f32 %v1437, %v2281
        %v2283 = vpop.f32.mrb[0].mxu0
        %v2284 = vadd.f32 %v1433, %v2283
        %v2285 = vpop.f32.mrb[0].mxu0
        %v2286 = vadd.f32 %v1437, %v2285
        %2287 = vmatprep.mubr.bf16.mxu0 %v1319
        %2288 = vmatmul.mubr.bf16.gmra.mrb[0].mxu0 %v1318
        %v2289 = vpop.f32.mrb[0].mxu0
        %v2290 = vadd.f32 %v1433, %v2289
        %v2291 = vpop.f32.mrb[0].mxu0
        %v2292 = vadd.f32 %v1437, %v2291
        %v2293 = vpop.f32.mrb[0].mxu0
        %v2294 = vadd.f32 %v1433, %v2293
        %v2295 = vpop.f32.mrb[0].mxu0
        %v2296 = vadd.f32 %v1437, %v2295
        %2297 = vmatprep.mubr.bf16.mxu0 %v1321
        %2298 = vmatmul.mubr.bf16.gmra.mrb[0].mxu0 %v1320
        %v2299 = vpop.f32.mrb[0].mxu0
        %v2300 = vadd.f32 %v1433, %v2299
        %v2301 = vpop.f32.mrb[0].mxu0
        %v2302 = vadd.f32 %v1437, %v2301
        %v2303 = vpop.f32.mrb[0].mxu0
        %v2304 = vadd.f32 %v1433, %v2303
        %v2305 = vpop.f32.mrb[0].mxu0
        %v2306 = vadd.f32 %v1437, %v2305
        %2307 = vmatprep.mubr.bf16.mxu0 %v1323
        %2308 = vmatmul.mubr.bf16.gmra.mrb[0].mxu0 %v1322
        %v2309 = vpop.f32.mrb[0].mxu0
        %v2310 = vadd.f32 %v1433, %v2309
        %v2311 = vpop.f32.mrb[0].mxu0
        %v2312 = vadd.f32 %v1437, %v2311
        %v2313 = vpop.f32.mrb[0].mxu0
        %v2314 = vadd.f32 %v1433, %v2313
        %v2315 = vpop.f32.mrb[0].mxu0
        %v2316 = vadd.f32 %v1437, %v2315
        %2317 = vdwg.mxu0
        %2318 = vmatprep.subr.bf16.mxu0 %v1745
        %2319 = vmatpush1.bf16.msra.mxu0 %v1744
        %2320 = vmatprep.subr.bf16.mxu0 %v1751
        %2321 = vmatpush1.bf16.msra.mxu0 %v1750
        %2322 = vmatprep.subr.bf16.mxu0 %v1757
        %2323 = vmatpush1.bf16.msra.mxu0 %v1756
        %2324 = vmatprep.subr.bf16.mxu0 %v1763
        %2325 = vmatpush1.bf16.msra.mxu0 %v1762
        %2326 = vmatprep.subr.bf16.mxu0 %v1769
        %2327 = vmatpush1.bf16.msra.mxu0 %v1768
        %2328 = vmatprep.subr.bf16.mxu0 %v1775
        %2329 = vmatpush1.bf16.msra.mxu0 %v1774
        %2330 = vmatprep.subr.bf16.mxu0 %v1781
        %2331 = vmatpush1.bf16.msra.mxu0 %v1780
        %2332 = vmatprep.subr.bf16.mxu0 %v1787
        %2333 = vmatpush1.bf16.msra.mxu0 %v1786
        %2334 = vmatprep.subr.bf16.mxu0 %v1793
        %2335 = vmatpush1.bf16.msra.mxu0 %v1792
        %2336 = vmatprep.subr.bf16.mxu0 %v1799
        %2337 = vmatpush1.bf16.msra.mxu0 %v1798
        %2338 = vmatprep.subr.bf16.mxu0 %v1805
        %2339 = vmatpush1.bf16.msra.mxu0 %v1804
        %2340 = vmatprep.subr.bf16.mxu0 %v1811
        %2341 = vmatpush1.bf16.msra.mxu0 %v1810
        %2342 = vmatprep.subr.bf16.mxu0 %v1817
        %2343 = vmatpush1.bf16.msra.mxu0 %v1816
        %2344 = vmatprep.subr.bf16.mxu0 %v1823
        %2345 = vmatpush1.bf16.msra.mxu0 %v1822
        %2346 = vmatprep.subr.bf16.mxu0 %v1829
        %2347 = vmatpush1.bf16.msra.mxu0 %v1828
        %2348 = vmatprep.subr.bf16.mxu0 %v1835
        %2349 = vmatpush1.bf16.msra.mxu0 %v1834
        %2350 = vmatprep.mubr.bf16.mxu0 %v1293
        %2351 = vmatmul.mubr.bf16.gmra.mrb[0].mxu0 %v1292
        %v2352 = vpop.f32.mrb[0].mxu0
        %v2353 = vadd.f32 %v1441, %v2352
        %v2354 = vpop.f32.mrb[0].mxu0
        %v2355 = vadd.f32 %v1445, %v2354
        %v2356 = vpop.f32.mrb[0].mxu0
        %v2357 = vadd.f32 %v1441, %v2356
        %v2358 = vpop.f32.mrb[0].mxu0
        %v2359 = vadd.f32 %v1445, %v2358
        %2360 = vmatprep.mubr.bf16.mxu0 %v1295
        %2361 = vmatmul.mubr.bf16.gmra.mrb[0].mxu0 %v1294
        %v2362 = vpop.f32.mrb[0].mxu0
        %v2363 = vadd.f32 %v1441, %v2362
        %v2364 = vpop.f32.mrb[0].mxu0
        %v2365 = vadd.f32 %v1445, %v2364
        %v2366 = vpop.f32.mrb[0].mxu0
        %v2367 = vadd.f32 %v1441, %v2366
        %v2368 = vpop.f32.mrb[0].mxu0
        %v2369 = vadd.f32 %v1445, %v2368
        %2370 = vmatprep.mubr.bf16.mxu0 %v1297
        %2371 = vmatmul.mubr.bf16.gmra.mrb[0].mxu0 %v1296
        %v2372 = vpop.f32.mrb[0].mxu0
        %v2373 = vadd.f32 %v1441, %v2372
        %v2374 = vpop.f32.mrb[0].mxu0
        %v2375 = vadd.f32 %v1445, %v2374
        %v2376 = vpop.f32.mrb[0].mxu0
        %v2377 = vadd.f32 %v1441, %v2376
        %v2378 = vpop.f32.mrb[0].mxu0
        %v2379 = vadd.f32 %v1445, %v2378
        %2380 = vmatprep.mubr.bf16.mxu0 %v1299
        %2381 = vmatmul.mubr.bf16.gmra.mrb[0].mxu0 %v1298
        %v2382 = vpop.f32.mrb[0].mxu0
        %v2383 = vadd.f32 %v1441, %v2382
        %v2384 = vpop.f32.mrb[0].mxu0
        %v2385 = vadd.f32 %v1445, %v2384
        %v2386 = vpop.f32.mrb[0].mxu0
        %v2387 = vadd.f32 %v1441, %v2386
        %v2388 = vpop.f32.mrb[0].mxu0
        %v2389 = vadd.f32 %v1445, %v2388
        %2390 = vmatprep.mubr.bf16.mxu0 %v1301
        %2391 = vmatmul.mubr.bf16.gmra.mrb[0].mxu0 %v1300
        %v2392 = vpop.f32.mrb[0].mxu0
        %v2393 = vadd.f32 %v1441, %v2392
        %v2394 = vpop.f32.mrb[0].mxu0
        %v2395 = vadd.f32 %v1445, %v2394
        %v2396 = vpop.f32.mrb[0].mxu0
        %v2397 = vadd.f32 %v1441, %v2396
        %v2398 = vpop.f32.mrb[0].mxu0
        %v2399 = vadd.f32 %v1445, %v2398
        %2400 = vmatprep.mubr.bf16.mxu0 %v1303
        %2401 = vmatmul.mubr.bf16.gmra.mrb[0].mxu0 %v1302
        %v2402 = vpop.f32.mrb[0].mxu0
        %v2403 = vadd.f32 %v1441, %v2402
        %v2404 = vpop.f32.mrb[0].mxu0
        %v2405 = vadd.f32 %v1445, %v2404
        %v2406 = vpop.f32.mrb[0].mxu0
        %v2407 = vadd.f32 %v1441, %v2406
        %v2408 = vpop.f32.mrb[0].mxu0
        %v2409 = vadd.f32 %v1445, %v2408
        %2410 = vmatprep.mubr.bf16.mxu0 %v1305
        %2411 = vmatmul.mubr.bf16.gmra.mrb[0].mxu0 %v1304
        %v2412 = vpop.f32.mrb[0].mxu0
        %v2413 = vadd.f32 %v1441, %v2412
        %v2414 = vpop.f32.mrb[0].mxu0
        %v2415 = vadd.f32 %v1445, %v2414
        %v2416 = vpop.f32.mrb[0].mxu0
        %v2417 = vadd.f32 %v1441, %v2416
        %v2418 = vpop.f32.mrb[0].mxu0
        %v2419 = vadd.f32 %v1445, %v2418
        %2420 = vmatprep.mubr.bf16.mxu0 %v1307
        %2421 = vmatmul.mubr.bf16.gmra.mrb[0].mxu0 %v1306
        %v2422 = vpop.f32.mrb[0].mxu0
        %v2423 = vadd.f32 %v1441, %v2422
        %v2424 = vpop.f32.mrb[0].mxu0
        %v2425 = vadd.f32 %v1445, %v2424
        %v2426 = vpop.f32.mrb[0].mxu0
        %v2427 = vadd.f32 %v1441, %v2426
        %v2428 = vpop.f32.mrb[0].mxu0
        %v2429 = vadd.f32 %v1445, %v2428
        %2430 = vmatprep.mubr.bf16.mxu0 %v1309
        %2431 = vmatmul.mubr.bf16.gmra.mrb[0].mxu0 %v1308
        %v2432 = vpop.f32.mrb[0].mxu0
        %v2433 = vadd.f32 %v1441, %v2432
        %v2434 = vpop.f32.mrb[0].mxu0
        %v2435 = vadd.f32 %v1445, %v2434
        %v2436 = vpop.f32.mrb[0].mxu0
        %v2437 = vadd.f32 %v1441, %v2436
        %v2438 = vpop.f32.mrb[0].mxu0
        %v2439 = vadd.f32 %v1445, %v2438
        %2440 = vmatprep.mubr.bf16.mxu0 %v1311
        %2441 = vmatmul.mubr.bf16.gmra.mrb[0].mxu0 %v1310
        %v2442 = vpop.f32.mrb[0].mxu0
        %v2443 = vadd.f32 %v1441, %v2442
        %v2444 = vpop.f32.mrb[0].mxu0
        %v2445 = vadd.f32 %v1445, %v2444
        %v2446 = vpop.f32.mrb[0].mxu0
        %v2447 = vadd.f32 %v1441, %v2446
        %v2448 = vpop.f32.mrb[0].mxu0
        %v2449 = vadd.f32 %v1445, %v2448
        %2450 = vmatprep.mubr.bf16.mxu0 %v1313
        %2451 = vmatmul.mubr.bf16.gmra.mrb[0].mxu0 %v1312
        %v2452 = vpop.f32.mrb[0].mxu0
        %v2453 = vadd.f32 %v1441, %v2452
        %v2454 = vpop.f32.mrb[0].mxu0
        %v2455 = vadd.f32 %v1445, %v2454
        %v2456 = vpop.f32.mrb[0].mxu0
        %v2457 = vadd.f32 %v1441, %v2456
        %v2458 = vpop.f32.mrb[0].mxu0
        %v2459 = vadd.f32 %v1445, %v2458
        %2460 = vmatprep.mubr.bf16.mxu0 %v1315
        %2461 = vmatmul.mubr.bf16.gmra.mrb[0].mxu0 %v1314
        %v2462 = vpop.f32.mrb[0].mxu0
        %v2463 = vadd.f32 %v1441, %v2462
        %v2464 = vpop.f32.mrb[0].mxu0
        %v2465 = vadd.f32 %v1445, %v2464
        %v2466 = vpop.f32.mrb[0].mxu0
        %v2467 = vadd.f32 %v1441, %v2466
        %v2468 = vpop.f32.mrb[0].mxu0
        %v2469 = vadd.f32 %v1445, %v2468
        %2470 = vmatprep.mubr.bf16.mxu0 %v1317
        %2471 = vmatmul.mubr.bf16.gmra.mrb[0].mxu0 %v1316
        %v2472 = vpop.f32.mrb[0].mxu0
        %v2473 = vadd.f32 %v1441, %v2472
        %v2474 = vpop.f32.mrb[0].mxu0
        %v2475 = vadd.f32 %v1445, %v2474
        %v2476 = vpop.f32.mrb[0].mxu0
        %v2477 = vadd.f32 %v1441, %v2476
        %v2478 = vpop.f32.mrb[0].mxu0
        %v2479 = vadd.f32 %v1445, %v2478
        %2480 = vmatprep.mubr.bf16.mxu0 %v1319
        %2481 = vmatmul.mubr.bf16.gmra.mrb[0].mxu0 %v1318
        %v2482 = vpop.f32.mrb[0].mxu0
        %v2483 = vadd.f32 %v1441, %v2482
        %v2484 = vpop.f32.mrb[0].mxu0
        %v2485 = vadd.f32 %v1445, %v2484
        %v2486 = vpop.f32.mrb[0].mxu0
        %v2487 = vadd.f32 %v1441, %v2486
        %v2488 = vpop.f32.mrb[0].mxu0
        %v2489 = vadd.f32 %v1445, %v2488
        %2490 = vmatprep.mubr.bf16.mxu0 %v1321
        %2491 = vmatmul.mubr.bf16.gmra.mrb[0].mxu0 %v1320
        %v2492 = vpop.f32.mrb[0].mxu0
        %v2493 = vadd.f32 %v1441, %v2492
        %v2494 = vpop.f32.mrb[0].mxu0
        %v2495 = vadd.f32 %v1445, %v2494
        %v2496 = vpop.f32.mrb[0].mxu0
        %v2497 = vadd.f32 %v1441, %v2496
        %v2498 = vpop.f32.mrb[0].mxu0
        %v2499 = vadd.f32 %v1445, %v2498
        %2500 = vmatprep.mubr.bf16.mxu0 %v1323
        %2501 = vmatmul.mubr.bf16.gmra.mrb[0].mxu0 %v1322
        %v2502 = vpop.f32.mrb[0].mxu0
        %v2503 = vadd.f32 %v1441, %v2502
        %v2504 = vpop.f32.mrb[0].mxu0
        %v2505 = vadd.f32 %v1445, %v2504
        %v2506 = vpop.f32.mrb[0].mxu0
        %v2507 = vadd.f32 %v1441, %v2506
        %v2508 = vpop.f32.mrb[0].mxu0
        %v2509 = vadd.f32 %v1445, %v2508
        %2510 = vdwg.mxu0
        %v2511 = vpack.c.bf16 %v1971, %v1967
        %v2512 = vpack.c.bf16 %v1981, %v1977
        %v2513 = vpack.c.bf16 %v1991, %v1987
        %v2514 = vpack.c.bf16 %v2001, %v1997
        %v2515 = vpack.c.bf16 %v2011, %v2007
        %v2516 = vpack.c.bf16 %v2021, %v2017
        %v2517 = vpack.c.bf16 %v2031, %v2027
        %v2518 = vpack.c.bf16 %v2041, %v2037
        %v2519 = vpack.c.bf16 %v2051, %v2047
        %v2520 = vpack.c.bf16 %v2061, %v2057
        %v2521 = vpack.c.bf16 %v2071, %v2067
        %v2522 = vpack.c.bf16 %v2081, %v2077
        %v2523 = vpack.c.bf16 %v2091, %v2087
        %v2524 = vpack.c.bf16 %v2101, %v2097
        %v2525 = vpack.c.bf16 %v2111, %v2107
        %v2526 = vpack.c.bf16 %v2121, %v2117
        %v2527 = vpack.c.bf16 %v1973, %v1969
        %v2528 = vpack.c.bf16 %v1983, %v1979
        %v2529 = vpack.c.bf16 %v1993, %v1989
        %v2530 = vpack.c.bf16 %v2003, %v1999
        %v2531 = vpack.c.bf16 %v2013, %v2009
        %v2532 = vpack.c.bf16 %v2023, %v2019
        %v2533 = vpack.c.bf16 %v2033, %v2029
        %v2534 = vpack.c.bf16 %v2043, %v2039
        %v2535 = vpack.c.bf16 %v2053, %v2049
        %v2536 = vpack.c.bf16 %v2063, %v2059
        %v2537 = vpack.c.bf16 %v2073, %v2069
        %v2538 = vpack.c.bf16 %v2083, %v2079
        %v2539 = vpack.c.bf16 %v2093, %v2089
        %v2540 = vpack.c.bf16 %v2103, %v2099
        %v2541 = vpack.c.bf16 %v2113, %v2109
        %v2542 = vpack.c.bf16 %v2123, %v2119
        %v2543 = vpack.c.bf16 %v2164, %v2160
        %v2544 = vpack.c.bf16 %v2174, %v2170
        %v2545 = vpack.c.bf16 %v2184, %v2180
        %v2546 = vpack.c.bf16 %v2194, %v2190
        %v2547 = vpack.c.bf16 %v2204, %v2200
        %v2548 = vpack.c.bf16 %v2214, %v2210
        %v2549 = vpack.c.bf16 %v2224, %v2220
        %v2550 = vpack.c.bf16 %v2234, %v2230
        %v2551 = vpack.c.bf16 %v2244, %v2240
        %v2552 = vpack.c.bf16 %v2254, %v2250
        %v2553 = vpack.c.bf16 %v2264, %v2260
        %v2554 = vpack.c.bf16 %v2274, %v2270
        %v2555 = vpack.c.bf16 %v2284, %v2280
        %v2556 = vpack.c.bf16 %v2294, %v2290
        %v2557 = vpack.c.bf16 %v2304, %v2300
        %v2558 = vpack.c.bf16 %v2314, %v2310
        %v2559 = vpack.c.bf16 %v2166, %v2162
        %v2560 = vpack.c.bf16 %v2176, %v2172
        %v2561 = vpack.c.bf16 %v2186, %v2182
        %v2562 = vpack.c.bf16 %v2196, %v2192
        %v2563 = vpack.c.bf16 %v2206, %v2202
        %v2564 = vpack.c.bf16 %v2216, %v2212
        %v2565 = vpack.c.bf16 %v2226, %v2222
        %v2566 = vpack.c.bf16 %v2236, %v2232
        %v2567 = vpack.c.bf16 %v2246, %v2242
        %v2568 = vpack.c.bf16 %v2256, %v2252
        %v2569 = vpack.c.bf16 %v2266, %v2262
        %v2570 = vpack.c.bf16 %v2276, %v2272
        %v2571 = vpack.c.bf16 %v2286, %v2282
        %v2572 = vpack.c.bf16 %v2296, %v2292
        %v2573 = vpack.c.bf16 %v2306, %v2302
        %v2574 = vpack.c.bf16 %v2316, %v2312
        %v2575 = vpack.c.bf16 %v2357, %v2353
        %v2576 = vpack.c.bf16 %v2367, %v2363
        %v2577 = vpack.c.bf16 %v2377, %v2373
        %v2578 = vpack.c.bf16 %v2387, %v2383
        %v2579 = vpack.c.bf16 %v2397, %v2393
        %v2580 = vpack.c.bf16 %v2407, %v2403
        %v2581 = vpack.c.bf16 %v2417, %v2413
        %v2582 = vpack.c.bf16 %v2427, %v2423
        %v2583 = vpack.c.bf16 %v2437, %v2433
        %v2584 = vpack.c.bf16 %v2447, %v2443
        %v2585 = vpack.c.bf16 %v2457, %v2453
        %v2586 = vpack.c.bf16 %v2467, %v2463
        %v2587 = vpack.c.bf16 %v2477, %v2473
        %v2588 = vpack.c.bf16 %v2487, %v2483
        %v2589 = vpack.c.bf16 %v2497, %v2493
        %v2590 = vpack.c.bf16 %v2507, %v2503
        %v2591 = vpack.c.bf16 %v2359, %v2355
        %v2592 = vpack.c.bf16 %v2369, %v2365
        %v2593 = vpack.c.bf16 %v2379, %v2375
        %v2594 = vpack.c.bf16 %v2389, %v2385
        %v2595 = vpack.c.bf16 %v2399, %v2395
        %v2596 = vpack.c.bf16 %v2409, %v2405
        %v2597 = vpack.c.bf16 %v2419, %v2415
        %v2598 = vpack.c.bf16 %v2429, %v2425
        %v2599 = vpack.c.bf16 %v2439, %v2435
        %v2600 = vpack.c.bf16 %v2449, %v2445
        %v2601 = vpack.c.bf16 %v2459, %v2455
        %v2602 = vpack.c.bf16 %v2469, %v2465
        %v2603 = vpack.c.bf16 %v2479, %v2475
        %v2604 = vpack.c.bf16 %v2489, %v2485
        %v2605 = vpack.c.bf16 %v2499, %v2495
        %v2606 = vpack.c.bf16 %v2509, %v2505
        %2607 = vmatprep.subr.bf16.mxu0 0
        %2608 = vmatpush1.bf16.xpose.msra.mxu0 %v2543
        %2609 = vmatprep.subr.bf16.mxu0 0
        %2610 = vmatpush1.bf16.xpose.msra.mxu0 %v2544
        %2611 = vmatprep.subr.bf16.mxu0 0
        %2612 = vmatpush1.bf16.xpose.msra.mxu0 0
        %2613 = vmatprep.subr.bf16.mxu0 0
        %2614 = vmatpush1.bf16.xpose.msra.mxu0 0
        %2615 = vmatprep.subr.bf16.mxu0 0
        %2616 = vmatpush1.bf16.xpose.msra.mxu0 0
        %2617 = vmatprep.subr.bf16.mxu0 0
        %2618 = vmatpush1.bf16.xpose.msra.mxu0 0
        %2619 = vmatprep.subr.bf16.mxu0 0
        %2620 = vmatpush1.bf16.xpose.msra.mxu0 0
        %2621 = vmatprep.subr.bf16.mxu0 0
        %2622 = vmatpush1.bf16.xpose.msra.mxu0 0
        %2623 = vmatprep.subr.bf16.mxu0 0
        %2624 = vmatpush1.bf16.xpose.msra.mxu0 0
        %2625 = vmatprep.subr.bf16.mxu0 0
        %2626 = vmatpush1.bf16.xpose.msra.mxu0 0
        %2627 = vmatprep.subr.bf16.mxu0 0
        %2628 = vmatpush1.bf16.xpose.msra.mxu0 0
        %2629 = vmatprep.subr.bf16.mxu0 0
        %2630 = vmatpush1.bf16.xpose.msra.mxu0 0
        %2631 = vmatprep.subr.bf16.mxu0 0
        %2632 = vmatpush1.bf16.xpose.msra.mxu0 0
        %2633 = vmatprep.subr.bf16.mxu0 0
        %2634 = vmatpush1.bf16.xpose.msra.mxu0 0
        %2635 = vmatprep.subr.bf16.mxu0 0
        %2636 = vmatpush1.bf16.xpose.msra.mxu0 0
        %2637 = vmatprep.subr.bf16.mxu0 0
        %2638 = vmatpush1.bf16.xpose.msra.mxu0 0
        %2639 = vmatprep.mubr.bf16.mxu0 0
        %2640 = vmatmul.mubr.bf16.gmra.mrb[0].mxu0 %v2511
        %v2641 = vpop.f32.mrb[0].mxu0
        %v2642 = vadd.f32 0.0, %v2641
        %v2643 = vpop.f32.mrb[0].mxu0
        %v2644 = vpop.f32.mrb[0].mxu0
        %v2645 = vadd.f32 0.0, %v2644
        %v2646 = vpop.f32.mrb[0].mxu0
        %2647 = vmatprep.mubr.bf16.mxu0 0
        %2648 = vmatmul.mubr.bf16.gmra.mrb[0].mxu0 %v2512
        %v2649 = vpop.f32.mrb[0].mxu0
        %v2650 = vadd.f32 0.0, %v2649
        %v2651 = vpop.f32.mrb[0].mxu0
        %v2652 = vpop.f32.mrb[0].mxu0
        %v2653 = vadd.f32 0.0, %v2652
        %v2654 = vpop.f32.mrb[0].mxu0
        %2655 = vdwg.mxu0
        %2656 = vmatprep.subr.bf16.mxu0 0
        %2657 = vmatpush1.bf16.xpose.msra.mxu0 %v2545
        %2658 = vmatprep.subr.bf16.mxu0 0
        %2659 = vmatpush1.bf16.xpose.msra.mxu0 %v2546
        %2660 = vmatprep.subr.bf16.mxu0 0
        %2661 = vmatpush1.bf16.xpose.msra.mxu0 0
        %2662 = vmatprep.subr.bf16.mxu0 0
        %2663 = vmatpush1.bf16.xpose.msra.mxu0 0
        %2664 = vmatprep.subr.bf16.mxu0 0
        %2665 = vmatpush1.bf16.xpose.msra.mxu0 0
        %2666 = vmatprep.subr.bf16.mxu0 0
        %2667 = vmatpush1.bf16.xpose.msra.mxu0 0
        %2668 = vmatprep.subr.bf16.mxu0 0
        %2669 = vmatpush1.bf16.xpose.msra.mxu0 0
        %2670 = vmatprep.subr.bf16.mxu0 0
        %2671 = vmatpush1.bf16.xpose.msra.mxu0 0
        %2672 = vmatprep.subr.bf16.mxu0 0
        %2673 = vmatpush1.bf16.xpose.msra.mxu0 0
        %2674 = vmatprep.subr.bf16.mxu0 0
        %2675 = vmatpush1.bf16.xpose.msra.mxu0 0
        %2676 = vmatprep.subr.bf16.mxu0 0
        %2677 = vmatpush1.bf16.xpose.msra.mxu0 0
        %2678 = vmatprep.subr.bf16.mxu0 0
        %2679 = vmatpush1.bf16.xpose.msra.mxu0 0
        %2680 = vmatprep.subr.bf16.mxu0 0
        %2681 = vmatpush1.bf16.xpose.msra.mxu0 0
        %2682 = vmatprep.subr.bf16.mxu0 0
        %2683 = vmatpush1.bf16.xpose.msra.mxu0 0
        %2684 = vmatprep.subr.bf16.mxu0 0
        %2685 = vmatpush1.bf16.xpose.msra.mxu0 0
        %2686 = vmatprep.subr.bf16.mxu0 0
        %2687 = vmatpush1.bf16.xpose.msra.mxu0 0
        %2688 = vmatprep.mubr.bf16.mxu0 0
        %2689 = vmatmul.mubr.bf16.gmra.mrb[0].mxu0 %v2513
        %v2690 = vpop.f32.mrb[0].mxu0
        %v2691 = vadd.f32 0.0, %v2690
        %v2692 = vpop.f32.mrb[0].mxu0
        %v2693 = vpop.f32.mrb[0].mxu0
        %v2694 = vadd.f32 0.0, %v2693
        %v2695 = vpop.f32.mrb[0].mxu0
        %2696 = vmatprep.mubr.bf16.mxu0 0
        %2697 = vmatmul.mubr.bf16.gmra.mrb[0].mxu0 %v2514
        %v2698 = vpop.f32.mrb[0].mxu0
        %v2699 = vadd.f32 0.0, %v2698
        %v2700 = vpop.f32.mrb[0].mxu0
        %v2701 = vpop.f32.mrb[0].mxu0
        %v2702 = vadd.f32 0.0, %v2701
        %v2703 = vpop.f32.mrb[0].mxu0
        %2704 = vdwg.mxu0
        %2705 = vmatprep.subr.bf16.mxu0 0
        %2706 = vmatpush1.bf16.xpose.msra.mxu0 %v2547
        %2707 = vmatprep.subr.bf16.mxu0 0
        %2708 = vmatpush1.bf16.xpose.msra.mxu0 %v2548
        %2709 = vmatprep.subr.bf16.mxu0 0
        %2710 = vmatpush1.bf16.xpose.msra.mxu0 0
        %2711 = vmatprep.subr.bf16.mxu0 0
        %2712 = vmatpush1.bf16.xpose.msra.mxu0 0
        %2713 = vmatprep.subr.bf16.mxu0 0
        %2714 = vmatpush1.bf16.xpose.msra.mxu0 0
        %2715 = vmatprep.subr.bf16.mxu0 0
        %2716 = vmatpush1.bf16.xpose.msra.mxu0 0
        %2717 = vmatprep.subr.bf16.mxu0 0
        %2718 = vmatpush1.bf16.xpose.msra.mxu0 0
        %2719 = vmatprep.subr.bf16.mxu0 0
        %2720 = vmatpush1.bf16.xpose.msra.mxu0 0
        %2721 = vmatprep.subr.bf16.mxu0 0
        %2722 = vmatpush1.bf16.xpose.msra.mxu0 0
        %2723 = vmatprep.subr.bf16.mxu0 0
        %2724 = vmatpush1.bf16.xpose.msra.mxu0 0
        %2725 = vmatprep.subr.bf16.mxu0 0
        %2726 = vmatpush1.bf16.xpose.msra.mxu0 0
        %2727 = vmatprep.subr.bf16.mxu0 0
        %2728 = vmatpush1.bf16.xpose.msra.mxu0 0
        %2729 = vmatprep.subr.bf16.mxu0 0
        %2730 = vmatpush1.bf16.xpose.msra.mxu0 0
        %2731 = vmatprep.subr.bf16.mxu0 0
        %2732 = vmatpush1.bf16.xpose.msra.mxu0 0
        %2733 = vmatprep.subr.bf16.mxu0 0
        %2734 = vmatpush1.bf16.xpose.msra.mxu0 0
        %2735 = vmatprep.subr.bf16.mxu0 0
        %2736 = vmatpush1.bf16.xpose.msra.mxu0 0
        %2737 = vmatprep.mubr.bf16.mxu0 0
        %2738 = vmatmul.mubr.bf16.gmra.mrb[0].mxu0 %v2515
        %v2739 = vpop.f32.mrb[0].mxu0
        %v2740 = vadd.f32 0.0, %v2739
        %v2741 = vpop.f32.mrb[0].mxu0
        %v2742 = vpop.f32.mrb[0].mxu0
        %v2743 = vadd.f32 0.0, %v2742
        %v2744 = vpop.f32.mrb[0].mxu0
        %2745 = vmatprep.mubr.bf16.mxu0 0
        %2746 = vmatmul.mubr.bf16.gmra.mrb[0].mxu0 %v2516
        %v2747 = vpop.f32.mrb[0].mxu0
        %v2748 = vadd.f32 0.0, %v2747
        %v2749 = vpop.f32.mrb[0].mxu0
        %v2750 = vpop.f32.mrb[0].mxu0
        %v2751 = vadd.f32 0.0, %v2750
        %v2752 = vpop.f32.mrb[0].mxu0
        %2753 = vdwg.mxu0
        %2754 = vmatprep.subr.bf16.mxu0 0
        %2755 = vmatpush1.bf16.xpose.msra.mxu0 %v2549
        %2756 = vmatprep.subr.bf16.mxu0 0
        %2757 = vmatpush1.bf16.xpose.msra.mxu0 %v2550
        %2758 = vmatprep.subr.bf16.mxu0 0
        %2759 = vmatpush1.bf16.xpose.msra.mxu0 0
        %2760 = vmatprep.subr.bf16.mxu0 0
        %2761 = vmatpush1.bf16.xpose.msra.mxu0 0
        %2762 = vmatprep.subr.bf16.mxu0 0
        %2763 = vmatpush1.bf16.xpose.msra.mxu0 0
        %2764 = vmatprep.subr.bf16.mxu0 0
        %2765 = vmatpush1.bf16.xpose.msra.mxu0 0
        %2766 = vmatprep.subr.bf16.mxu0 0
        %2767 = vmatpush1.bf16.xpose.msra.mxu0 0
        %2768 = vmatprep.subr.bf16.mxu0 0
        %2769 = vmatpush1.bf16.xpose.msra.mxu0 0
        %2770 = vmatprep.subr.bf16.mxu0 0
        %2771 = vmatpush1.bf16.xpose.msra.mxu0 0
        %2772 = vmatprep.subr.bf16.mxu0 0
        %2773 = vmatpush1.bf16.xpose.msra.mxu0 0
        %2774 = vmatprep.subr.bf16.mxu0 0
        %2775 = vmatpush1.bf16.xpose.msra.mxu0 0
        %2776 = vmatprep.subr.bf16.mxu0 0
        %2777 = vmatpush1.bf16.xpose.msra.mxu0 0
        %2778 = vmatprep.subr.bf16.mxu0 0
        %2779 = vmatpush1.bf16.xpose.msra.mxu0 0
        %2780 = vmatprep.subr.bf16.mxu0 0
        %2781 = vmatpush1.bf16.xpose.msra.mxu0 0
        %2782 = vmatprep.subr.bf16.mxu0 0
        %2783 = vmatpush1.bf16.xpose.msra.mxu0 0
        %2784 = vmatprep.subr.bf16.mxu0 0
        %2785 = vmatpush1.bf16.xpose.msra.mxu0 0
        %2786 = vmatprep.mubr.bf16.mxu0 0
        %2787 = vmatmul.mubr.bf16.gmra.mrb[0].mxu0 %v2517
        %v2788 = vpop.f32.mrb[0].mxu0
        %v2789 = vadd.f32 0.0, %v2788
        %v2790 = vpop.f32.mrb[0].mxu0
        %v2791 = vpop.f32.mrb[0].mxu0
        %v2792 = vadd.f32 0.0, %v2791
        %v2793 = vpop.f32.mrb[0].mxu0
        %2794 = vmatprep.mubr.bf16.mxu0 0
        %2795 = vmatmul.mubr.bf16.gmra.mrb[0].mxu0 %v2518
        %v2796 = vpop.f32.mrb[0].mxu0
        %v2797 = vadd.f32 0.0, %v2796
        %v2798 = vpop.f32.mrb[0].mxu0
        %v2799 = vpop.f32.mrb[0].mxu0
        %v2800 = vadd.f32 0.0, %v2799
        %v2801 = vpop.f32.mrb[0].mxu0
        %2802 = vdwg.mxu0
        %2803 = vmatprep.subr.bf16.mxu0 0
        %2804 = vmatpush1.bf16.xpose.msra.mxu0 %v2551
        %2805 = vmatprep.subr.bf16.mxu0 0
        %2806 = vmatpush1.bf16.xpose.msra.mxu0 %v2552
        %2807 = vmatprep.subr.bf16.mxu0 0
        %2808 = vmatpush1.bf16.xpose.msra.mxu0 0
        %2809 = vmatprep.subr.bf16.mxu0 0
        %2810 = vmatpush1.bf16.xpose.msra.mxu0 0
        %2811 = vmatprep.subr.bf16.mxu0 0
        %2812 = vmatpush1.bf16.xpose.msra.mxu0 0
        %2813 = vmatprep.subr.bf16.mxu0 0
        %2814 = vmatpush1.bf16.xpose.msra.mxu0 0
        %2815 = vmatprep.subr.bf16.mxu0 0
        %2816 = vmatpush1.bf16.xpose.msra.mxu0 0
        %2817 = vmatprep.subr.bf16.mxu0 0
        %2818 = vmatpush1.bf16.xpose.msra.mxu0 0
        %2819 = vmatprep.subr.bf16.mxu0 0
        %2820 = vmatpush1.bf16.xpose.msra.mxu0 0
        %2821 = vmatprep.subr.bf16.mxu0 0
        %2822 = vmatpush1.bf16.xpose.msra.mxu0 0
        %2823 = vmatprep.subr.bf16.mxu0 0
        %2824 = vmatpush1.bf16.xpose.msra.mxu0 0
        %2825 = vmatprep.subr.bf16.mxu0 0
        %2826 = vmatpush1.bf16.xpose.msra.mxu0 0
        %2827 = vmatprep.subr.bf16.mxu0 0
        %2828 = vmatpush1.bf16.xpose.msra.mxu0 0
        %2829 = vmatprep.subr.bf16.mxu0 0
        %2830 = vmatpush1.bf16.xpose.msra.mxu0 0
        %2831 = vmatprep.subr.bf16.mxu0 0
        %2832 = vmatpush1.bf16.xpose.msra.mxu0 0
        %2833 = vmatprep.subr.bf16.mxu0 0
        %2834 = vmatpush1.bf16.xpose.msra.mxu0 0
        %2835 = vmatprep.mubr.bf16.mxu0 0
        %2836 = vmatmul.mubr.bf16.gmra.mrb[0].mxu0 %v2519
        %v2837 = vpop.f32.mrb[0].mxu0
        %v2838 = vadd.f32 0.0, %v2837
        %v2839 = vpop.f32.mrb[0].mxu0
        %v2840 = vpop.f32.mrb[0].mxu0
        %v2841 = vadd.f32 0.0, %v2840
        %v2842 = vpop.f32.mrb[0].mxu0
        %2843 = vmatprep.mubr.bf16.mxu0 0
        %2844 = vmatmul.mubr.bf16.gmra.mrb[0].mxu0 %v2520
        %v2845 = vpop.f32.mrb[0].mxu0
        %v2846 = vadd.f32 0.0, %v2845
        %v2847 = vpop.f32.mrb[0].mxu0
        %v2848 = vpop.f32.mrb[0].mxu0
        %v2849 = vadd.f32 0.0, %v2848
        %v2850 = vpop.f32.mrb[0].mxu0
        %2851 = vdwg.mxu0
        %2852 = vmatprep.subr.bf16.mxu0 0
        %2853 = vmatpush1.bf16.xpose.msra.mxu0 %v2553
        %2854 = vmatprep.subr.bf16.mxu0 0
        %2855 = vmatpush1.bf16.xpose.msra.mxu0 %v2554
        %2856 = vmatprep.subr.bf16.mxu0 0
        %2857 = vmatpush1.bf16.xpose.msra.mxu0 0
        %2858 = vmatprep.subr.bf16.mxu0 0
        %2859 = vmatpush1.bf16.xpose.msra.mxu0 0
        %2860 = vmatprep.subr.bf16.mxu0 0
        %2861 = vmatpush1.bf16.xpose.msra.mxu0 0
        %2862 = vmatprep.subr.bf16.mxu0 0
        %2863 = vmatpush1.bf16.xpose.msra.mxu0 0
        %2864 = vmatprep.subr.bf16.mxu0 0
        %2865 = vmatpush1.bf16.xpose.msra.mxu0 0
        %2866 = vmatprep.subr.bf16.mxu0 0
        %2867 = vmatpush1.bf16.xpose.msra.mxu0 0
        %2868 = vmatprep.subr.bf16.mxu0 0
        %2869 = vmatpush1.bf16.xpose.msra.mxu0 0
        %2870 = vmatprep.subr.bf16.mxu0 0
        %2871 = vmatpush1.bf16.xpose.msra.mxu0 0
        %2872 = vmatprep.subr.bf16.mxu0 0
        %2873 = vmatpush1.bf16.xpose.msra.mxu0 0
        %2874 = vmatprep.subr.bf16.mxu0 0
        %2875 = vmatpush1.bf16.xpose.msra.mxu0 0
        %2876 = vmatprep.subr.bf16.mxu0 0
        %2877 = vmatpush1.bf16.xpose.msra.mxu0 0
        %2878 = vmatprep.subr.bf16.mxu0 0
        %2879 = vmatpush1.bf16.xpose.msra.mxu0 0
        %2880 = vmatprep.subr.bf16.mxu0 0
        %2881 = vmatpush1.bf16.xpose.msra.mxu0 0
        %2882 = vmatprep.subr.bf16.mxu0 0
        %2883 = vmatpush1.bf16.xpose.msra.mxu0 0
        %2884 = vmatprep.mubr.bf16.mxu0 0
        %2885 = vmatmul.mubr.bf16.gmra.mrb[0].mxu0 %v2521
        %v2886 = vpop.f32.mrb[0].mxu0
        %v2887 = vadd.f32 0.0, %v2886
        %v2888 = vpop.f32.mrb[0].mxu0
        %v2889 = vpop.f32.mrb[0].mxu0
        %v2890 = vadd.f32 0.0, %v2889
        %v2891 = vpop.f32.mrb[0].mxu0
        %2892 = vmatprep.mubr.bf16.mxu0 0
        %2893 = vmatmul.mubr.bf16.gmra.mrb[0].mxu0 %v2522
        %v2894 = vpop.f32.mrb[0].mxu0
        %v2895 = vadd.f32 0.0, %v2894
        %v2896 = vpop.f32.mrb[0].mxu0
        %v2897 = vpop.f32.mrb[0].mxu0
        %v2898 = vadd.f32 0.0, %v2897
        %v2899 = vpop.f32.mrb[0].mxu0
        %2900 = vdwg.mxu0
        %2901 = vmatprep.subr.bf16.mxu0 0
        %2902 = vmatpush1.bf16.xpose.msra.mxu0 %v2555
        %2903 = vmatprep.subr.bf16.mxu0 0
        %2904 = vmatpush1.bf16.xpose.msra.mxu0 %v2556
        %2905 = vmatprep.subr.bf16.mxu0 0
        %2906 = vmatpush1.bf16.xpose.msra.mxu0 0
        %2907 = vmatprep.subr.bf16.mxu0 0
        %2908 = vmatpush1.bf16.xpose.msra.mxu0 0
        %2909 = vmatprep.subr.bf16.mxu0 0
        %2910 = vmatpush1.bf16.xpose.msra.mxu0 0
        %2911 = vmatprep.subr.bf16.mxu0 0
        %2912 = vmatpush1.bf16.xpose.msra.mxu0 0
        %2913 = vmatprep.subr.bf16.mxu0 0
        %2914 = vmatpush1.bf16.xpose.msra.mxu0 0
        %2915 = vmatprep.subr.bf16.mxu0 0
        %2916 = vmatpush1.bf16.xpose.msra.mxu0 0
        %2917 = vmatprep.subr.bf16.mxu0 0
        %2918 = vmatpush1.bf16.xpose.msra.mxu0 0
        %2919 = vmatprep.subr.bf16.mxu0 0
        %2920 = vmatpush1.bf16.xpose.msra.mxu0 0
        %2921 = vmatprep.subr.bf16.mxu0 0
        %2922 = vmatpush1.bf16.xpose.msra.mxu0 0
        %2923 = vmatprep.subr.bf16.mxu0 0
        %2924 = vmatpush1.bf16.xpose.msra.mxu0 0
        %2925 = vmatprep.subr.bf16.mxu0 0
        %2926 = vmatpush1.bf16.xpose.msra.mxu0 0
        %2927 = vmatprep.subr.bf16.mxu0 0
        %2928 = vmatpush1.bf16.xpose.msra.mxu0 0
        %2929 = vmatprep.subr.bf16.mxu0 0
        %2930 = vmatpush1.bf16.xpose.msra.mxu0 0
        %2931 = vmatprep.subr.bf16.mxu0 0
        %2932 = vmatpush1.bf16.xpose.msra.mxu0 0
        %2933 = vmatprep.mubr.bf16.mxu0 0
        %2934 = vmatmul.mubr.bf16.gmra.mrb[0].mxu0 %v2523
        %v2935 = vpop.f32.mrb[0].mxu0
        %v2936 = vadd.f32 0.0, %v2935
        %v2937 = vpop.f32.mrb[0].mxu0
        %v2938 = vpop.f32.mrb[0].mxu0
        %v2939 = vadd.f32 0.0, %v2938
        %v2940 = vpop.f32.mrb[0].mxu0
        %2941 = vmatprep.mubr.bf16.mxu0 0
        %2942 = vmatmul.mubr.bf16.gmra.mrb[0].mxu0 %v2524
        %v2943 = vpop.f32.mrb[0].mxu0
        %v2944 = vadd.f32 0.0, %v2943
        %v2945 = vpop.f32.mrb[0].mxu0
        %v2946 = vpop.f32.mrb[0].mxu0
        %v2947 = vadd.f32 0.0, %v2946
        %v2948 = vpop.f32.mrb[0].mxu0
        %2949 = vdwg.mxu0
        %2950 = vmatprep.subr.bf16.mxu0 0
        %2951 = vmatpush1.bf16.xpose.msra.mxu0 %v2557
        %2952 = vmatprep.subr.bf16.mxu0 0
        %2953 = vmatpush1.bf16.xpose.msra.mxu0 %v2558
        %2954 = vmatprep.subr.bf16.mxu0 0
        %2955 = vmatpush1.bf16.xpose.msra.mxu0 0
        %2956 = vmatprep.subr.bf16.mxu0 0
        %2957 = vmatpush1.bf16.xpose.msra.mxu0 0
        %2958 = vmatprep.subr.bf16.mxu0 0
        %2959 = vmatpush1.bf16.xpose.msra.mxu0 0
        %2960 = vmatprep.subr.bf16.mxu0 0
        %2961 = vmatpush1.bf16.xpose.msra.mxu0 0
        %2962 = vmatprep.subr.bf16.mxu0 0
        %2963 = vmatpush1.bf16.xpose.msra.mxu0 0
        %2964 = vmatprep.subr.bf16.mxu0 0
        %2965 = vmatpush1.bf16.xpose.msra.mxu0 0
        %2966 = vmatprep.subr.bf16.mxu0 0
        %2967 = vmatpush1.bf16.xpose.msra.mxu0 0
        %2968 = vmatprep.subr.bf16.mxu0 0
        %2969 = vmatpush1.bf16.xpose.msra.mxu0 0
        %2970 = vmatprep.subr.bf16.mxu0 0
        %2971 = vmatpush1.bf16.xpose.msra.mxu0 0
        %2972 = vmatprep.subr.bf16.mxu0 0
        %2973 = vmatpush1.bf16.xpose.msra.mxu0 0
        %2974 = vmatprep.subr.bf16.mxu0 0
        %2975 = vmatpush1.bf16.xpose.msra.mxu0 0
        %2976 = vmatprep.subr.bf16.mxu0 0
        %2977 = vmatpush1.bf16.xpose.msra.mxu0 0
        %2978 = vmatprep.subr.bf16.mxu0 0
        %2979 = vmatpush1.bf16.xpose.msra.mxu0 0
        %2980 = vmatprep.subr.bf16.mxu0 0
        %2981 = vmatpush1.bf16.xpose.msra.mxu0 0
        %2982 = vmatprep.mubr.bf16.mxu0 0
        %2983 = vmatmul.mubr.bf16.gmra.mrb[0].mxu0 %v2525
        %v2984 = vpop.f32.mrb[0].mxu0
        %v2985 = vadd.f32 0.0, %v2984
        %v2986 = vpop.f32.mrb[0].mxu0
        %v2987 = vpop.f32.mrb[0].mxu0
        %v2988 = vadd.f32 0.0, %v2987
        %v2989 = vpop.f32.mrb[0].mxu0
        %2990 = vmatprep.mubr.bf16.mxu0 0
        %2991 = vmatmul.mubr.bf16.gmra.mrb[0].mxu0 %v2526
        %v2992 = vpop.f32.mrb[0].mxu0
        %v2993 = vadd.f32 0.0, %v2992
        %v2994 = vpop.f32.mrb[0].mxu0
        %v2995 = vpop.f32.mrb[0].mxu0
        %v2996 = vadd.f32 0.0, %v2995
        %v2997 = vpop.f32.mrb[0].mxu0
        %2998 = vdwg.mxu0
        %2999 = vmatprep.subr.bf16.mxu0 0
        %3000 = vmatpush1.bf16.xpose.msra.mxu0 %v2559
        %3001 = vmatprep.subr.bf16.mxu0 0
        %3002 = vmatpush1.bf16.xpose.msra.mxu0 %v2560
        %3003 = vmatprep.subr.bf16.mxu0 0
        %3004 = vmatpush1.bf16.xpose.msra.mxu0 0
        %3005 = vmatprep.subr.bf16.mxu0 0
        %3006 = vmatpush1.bf16.xpose.msra.mxu0 0
        %3007 = vmatprep.subr.bf16.mxu0 0
        %3008 = vmatpush1.bf16.xpose.msra.mxu0 0
        %3009 = vmatprep.subr.bf16.mxu0 0
        %3010 = vmatpush1.bf16.xpose.msra.mxu0 0
        %3011 = vmatprep.subr.bf16.mxu0 0
        %3012 = vmatpush1.bf16.xpose.msra.mxu0 0
        %3013 = vmatprep.subr.bf16.mxu0 0
        %3014 = vmatpush1.bf16.xpose.msra.mxu0 0
        %3015 = vmatprep.subr.bf16.mxu0 0
        %3016 = vmatpush1.bf16.xpose.msra.mxu0 0
        %3017 = vmatprep.subr.bf16.mxu0 0
        %3018 = vmatpush1.bf16.xpose.msra.mxu0 0
        %3019 = vmatprep.subr.bf16.mxu0 0
        %3020 = vmatpush1.bf16.xpose.msra.mxu0 0
        %3021 = vmatprep.subr.bf16.mxu0 0
        %3022 = vmatpush1.bf16.xpose.msra.mxu0 0
        %3023 = vmatprep.subr.bf16.mxu0 0
        %3024 = vmatpush1.bf16.xpose.msra.mxu0 0
        %3025 = vmatprep.subr.bf16.mxu0 0
        %3026 = vmatpush1.bf16.xpose.msra.mxu0 0
        %3027 = vmatprep.subr.bf16.mxu0 0
        %3028 = vmatpush1.bf16.xpose.msra.mxu0 0
        %3029 = vmatprep.subr.bf16.mxu0 0
        %3030 = vmatpush1.bf16.xpose.msra.mxu0 0
        %3031 = vmatprep.mubr.bf16.mxu0 0
        %3032 = vmatmul.mubr.bf16.gmra.mrb[0].mxu0 %v2527
        %v3033 = vpop.f32.mrb[0].mxu0
        %v3034 = vadd.f32 0.0, %v3033
        %v3035 = vpop.f32.mrb[0].mxu0
        %v3036 = vpop.f32.mrb[0].mxu0
        %v3037 = vadd.f32 0.0, %v3036
        %v3038 = vpop.f32.mrb[0].mxu0
        %3039 = vmatprep.mubr.bf16.mxu0 0
        %3040 = vmatmul.mubr.bf16.gmra.mrb[0].mxu0 %v2528
        %v3041 = vpop.f32.mrb[0].mxu0
        %v3042 = vadd.f32 0.0, %v3041
        %v3043 = vpop.f32.mrb[0].mxu0
        %v3044 = vpop.f32.mrb[0].mxu0
        %v3045 = vadd.f32 0.0, %v3044
        %v3046 = vpop.f32.mrb[0].mxu0
        %3047 = vdwg.mxu0
        %3048 = vmatprep.subr.bf16.mxu0 0
        %3049 = vmatpush1.bf16.xpose.msra.mxu0 %v2561
        %3050 = vmatprep.subr.bf16.mxu0 0
        %3051 = vmatpush1.bf16.xpose.msra.mxu0 %v2562
        %3052 = vmatprep.subr.bf16.mxu0 0
        %3053 = vmatpush1.bf16.xpose.msra.mxu0 0
        %3054 = vmatprep.subr.bf16.mxu0 0
        %3055 = vmatpush1.bf16.xpose.msra.mxu0 0
        %3056 = vmatprep.subr.bf16.mxu0 0
        %3057 = vmatpush1.bf16.xpose.msra.mxu0 0
        %3058 = vmatprep.subr.bf16.mxu0 0
        %3059 = vmatpush1.bf16.xpose.msra.mxu0 0
        %3060 = vmatprep.subr.bf16.mxu0 0
        %3061 = vmatpush1.bf16.xpose.msra.mxu0 0
        %3062 = vmatprep.subr.bf16.mxu0 0
        %3063 = vmatpush1.bf16.xpose.msra.mxu0 0
        %3064 = vmatprep.subr.bf16.mxu0 0
        %3065 = vmatpush1.bf16.xpose.msra.mxu0 0
        %3066 = vmatprep.subr.bf16.mxu0 0
        %3067 = vmatpush1.bf16.xpose.msra.mxu0 0
        %3068 = vmatprep.subr.bf16.mxu0 0
        %3069 = vmatpush1.bf16.xpose.msra.mxu0 0
        %3070 = vmatprep.subr.bf16.mxu0 0
        %3071 = vmatpush1.bf16.xpose.msra.mxu0 0
        %3072 = vmatprep.subr.bf16.mxu0 0
        %3073 = vmatpush1.bf16.xpose.msra.mxu0 0
        %3074 = vmatprep.subr.bf16.mxu0 0
        %3075 = vmatpush1.bf16.xpose.msra.mxu0 0
        %3076 = vmatprep.subr.bf16.mxu0 0
        %3077 = vmatpush1.bf16.xpose.msra.mxu0 0
        %3078 = vmatprep.subr.bf16.mxu0 0
        %3079 = vmatpush1.bf16.xpose.msra.mxu0 0
        %3080 = vmatprep.mubr.bf16.mxu0 0
        %3081 = vmatmul.mubr.bf16.gmra.mrb[0].mxu0 %v2529
        %v3082 = vpop.f32.mrb[0].mxu0
        %v3083 = vadd.f32 0.0, %v3082
        %v3084 = vpop.f32.mrb[0].mxu0
        %v3085 = vpop.f32.mrb[0].mxu0
        %v3086 = vadd.f32 0.0, %v3085
        %v3087 = vpop.f32.mrb[0].mxu0
        %3088 = vmatprep.mubr.bf16.mxu0 0
        %3089 = vmatmul.mubr.bf16.gmra.mrb[0].mxu0 %v2530
        %v3090 = vpop.f32.mrb[0].mxu0
        %v3091 = vadd.f32 0.0, %v3090
        %v3092 = vpop.f32.mrb[0].mxu0
        %v3093 = vpop.f32.mrb[0].mxu0
        %v3094 = vadd.f32 0.0, %v3093
        %v3095 = vpop.f32.mrb[0].mxu0
        %3096 = vdwg.mxu0
        %3097 = vmatprep.subr.bf16.mxu0 0
        %3098 = vmatpush1.bf16.xpose.msra.mxu0 %v2563
        %3099 = vmatprep.subr.bf16.mxu0 0
        %3100 = vmatpush1.bf16.xpose.msra.mxu0 %v2564
        %3101 = vmatprep.subr.bf16.mxu0 0
        %3102 = vmatpush1.bf16.xpose.msra.mxu0 0
        %3103 = vmatprep.subr.bf16.mxu0 0
        %3104 = vmatpush1.bf16.xpose.msra.mxu0 0
        %3105 = vmatprep.subr.bf16.mxu0 0
        %3106 = vmatpush1.bf16.xpose.msra.mxu0 0
        %3107 = vmatprep.subr.bf16.mxu0 0
        %3108 = vmatpush1.bf16.xpose.msra.mxu0 0
        %3109 = vmatprep.subr.bf16.mxu0 0
        %3110 = vmatpush1.bf16.xpose.msra.mxu0 0
        %3111 = vmatprep.subr.bf16.mxu0 0
        %3112 = vmatpush1.bf16.xpose.msra.mxu0 0
        %3113 = vmatprep.subr.bf16.mxu0 0
        %3114 = vmatpush1.bf16.xpose.msra.mxu0 0
        %3115 = vmatprep.subr.bf16.mxu0 0
        %3116 = vmatpush1.bf16.xpose.msra.mxu0 0
        %3117 = vmatprep.subr.bf16.mxu0 0
        %3118 = vmatpush1.bf16.xpose.msra.mxu0 0
        %3119 = vmatprep.subr.bf16.mxu0 0
        %3120 = vmatpush1.bf16.xpose.msra.mxu0 0
        %3121 = vmatprep.subr.bf16.mxu0 0
        %3122 = vmatpush1.bf16.xpose.msra.mxu0 0
        %3123 = vmatprep.subr.bf16.mxu0 0
        %3124 = vmatpush1.bf16.xpose.msra.mxu0 0
        %3125 = vmatprep.subr.bf16.mxu0 0
        %3126 = vmatpush1.bf16.xpose.msra.mxu0 0
        %3127 = vmatprep.subr.bf16.mxu0 0
        %3128 = vmatpush1.bf16.xpose.msra.mxu0 0
        %3129 = vmatprep.mubr.bf16.mxu0 0
        %3130 = vmatmul.mubr.bf16.gmra.mrb[0].mxu0 %v2531
        %v3131 = vpop.f32.mrb[0].mxu0
        %v3132 = vadd.f32 0.0, %v3131
        %v3133 = vpop.f32.mrb[0].mxu0
        %v3134 = vpop.f32.mrb[0].mxu0
        %v3135 = vadd.f32 0.0, %v3134
        %v3136 = vpop.f32.mrb[0].mxu0
        %3137 = vmatprep.mubr.bf16.mxu0 0
        %3138 = vmatmul.mubr.bf16.gmra.mrb[0].mxu0 %v2532
        %v3139 = vpop.f32.mrb[0].mxu0
        %v3140 = vadd.f32 0.0, %v3139
        %v3141 = vpop.f32.mrb[0].mxu0
        %v3142 = vpop.f32.mrb[0].mxu0
        %v3143 = vadd.f32 0.0, %v3142
        %v3144 = vpop.f32.mrb[0].mxu0
        %3145 = vdwg.mxu0
        %3146 = vmatprep.subr.bf16.mxu0 0
        %3147 = vmatpush1.bf16.xpose.msra.mxu0 %v2565
        %3148 = vmatprep.subr.bf16.mxu0 0
        %3149 = vmatpush1.bf16.xpose.msra.mxu0 %v2566
        %3150 = vmatprep.subr.bf16.mxu0 0
        %3151 = vmatpush1.bf16.xpose.msra.mxu0 0
        %3152 = vmatprep.subr.bf16.mxu0 0
        %3153 = vmatpush1.bf16.xpose.msra.mxu0 0
        %3154 = vmatprep.subr.bf16.mxu0 0
        %3155 = vmatpush1.bf16.xpose.msra.mxu0 0
        %3156 = vmatprep.subr.bf16.mxu0 0
        %3157 = vmatpush1.bf16.xpose.msra.mxu0 0
        %3158 = vmatprep.subr.bf16.mxu0 0
        %3159 = vmatpush1.bf16.xpose.msra.mxu0 0
        %3160 = vmatprep.subr.bf16.mxu0 0
        %3161 = vmatpush1.bf16.xpose.msra.mxu0 0
        %3162 = vmatprep.subr.bf16.mxu0 0
        %3163 = vmatpush1.bf16.xpose.msra.mxu0 0
        %3164 = vmatprep.subr.bf16.mxu0 0
        %3165 = vmatpush1.bf16.xpose.msra.mxu0 0
        %3166 = vmatprep.subr.bf16.mxu0 0
        %3167 = vmatpush1.bf16.xpose.msra.mxu0 0
        %3168 = vmatprep.subr.bf16.mxu0 0
        %3169 = vmatpush1.bf16.xpose.msra.mxu0 0
        %3170 = vmatprep.subr.bf16.mxu0 0
        %3171 = vmatpush1.bf16.xpose.msra.mxu0 0
        %3172 = vmatprep.subr.bf16.mxu0 0
        %3173 = vmatpush1.bf16.xpose.msra.mxu0 0
        %3174 = vmatprep.subr.bf16.mxu0 0
        %3175 = vmatpush1.bf16.xpose.msra.mxu0 0
        %3176 = vmatprep.subr.bf16.mxu0 0
        %3177 = vmatpush1.bf16.xpose.msra.mxu0 0
        %3178 = vmatprep.mubr.bf16.mxu0 0
        %3179 = vmatmul.mubr.bf16.gmra.mrb[0].mxu0 %v2533
        %v3180 = vpop.f32.mrb[0].mxu0
        %v3181 = vadd.f32 0.0, %v3180
        %v3182 = vpop.f32.mrb[0].mxu0
        %v3183 = vpop.f32.mrb[0].mxu0
        %v3184 = vadd.f32 0.0, %v3183
        %v3185 = vpop.f32.mrb[0].mxu0
        %3186 = vmatprep.mubr.bf16.mxu0 0
        %3187 = vmatmul.mubr.bf16.gmra.mrb[0].mxu0 %v2534
        %v3188 = vpop.f32.mrb[0].mxu0
        %v3189 = vadd.f32 0.0, %v3188
        %v3190 = vpop.f32.mrb[0].mxu0
        %v3191 = vpop.f32.mrb[0].mxu0
        %v3192 = vadd.f32 0.0, %v3191
        %v3193 = vpop.f32.mrb[0].mxu0
        %3194 = vdwg.mxu0
        %3195 = vmatprep.subr.bf16.mxu0 0
        %3196 = vmatpush1.bf16.xpose.msra.mxu0 %v2567
        %3197 = vmatprep.subr.bf16.mxu0 0
        %3198 = vmatpush1.bf16.xpose.msra.mxu0 %v2568
        %3199 = vmatprep.subr.bf16.mxu0 0
        %3200 = vmatpush1.bf16.xpose.msra.mxu0 0
        %3201 = vmatprep.subr.bf16.mxu0 0
        %3202 = vmatpush1.bf16.xpose.msra.mxu0 0
        %3203 = vmatprep.subr.bf16.mxu0 0
        %3204 = vmatpush1.bf16.xpose.msra.mxu0 0
        %3205 = vmatprep.subr.bf16.mxu0 0
        %3206 = vmatpush1.bf16.xpose.msra.mxu0 0
        %3207 = vmatprep.subr.bf16.mxu0 0
        %3208 = vmatpush1.bf16.xpose.msra.mxu0 0
        %3209 = vmatprep.subr.bf16.mxu0 0
        %3210 = vmatpush1.bf16.xpose.msra.mxu0 0
        %3211 = vmatprep.subr.bf16.mxu0 0
        %3212 = vmatpush1.bf16.xpose.msra.mxu0 0
        %3213 = vmatprep.subr.bf16.mxu0 0
        %3214 = vmatpush1.bf16.xpose.msra.mxu0 0
        %3215 = vmatprep.subr.bf16.mxu0 0
        %3216 = vmatpush1.bf16.xpose.msra.mxu0 0
        %3217 = vmatprep.subr.bf16.mxu0 0
        %3218 = vmatpush1.bf16.xpose.msra.mxu0 0
        %3219 = vmatprep.subr.bf16.mxu0 0
        %3220 = vmatpush1.bf16.xpose.msra.mxu0 0
        %3221 = vmatprep.subr.bf16.mxu0 0
        %3222 = vmatpush1.bf16.xpose.msra.mxu0 0
        %3223 = vmatprep.subr.bf16.mxu0 0
        %3224 = vmatpush1.bf16.xpose.msra.mxu0 0
        %3225 = vmatprep.subr.bf16.mxu0 0
        %3226 = vmatpush1.bf16.xpose.msra.mxu0 0
        %3227 = vmatprep.mubr.bf16.mxu0 0
        %3228 = vmatmul.mubr.bf16.gmra.mrb[0].mxu0 %v2535
        %v3229 = vpop.f32.mrb[0].mxu0
        %v3230 = vadd.f32 0.0, %v3229
        %v3231 = vpop.f32.mrb[0].mxu0
        %v3232 = vpop.f32.mrb[0].mxu0
        %v3233 = vadd.f32 0.0, %v3232
        %v3234 = vpop.f32.mrb[0].mxu0
        %3235 = vmatprep.mubr.bf16.mxu0 0
        %3236 = vmatmul.mubr.bf16.gmra.mrb[0].mxu0 %v2536
        %v3237 = vpop.f32.mrb[0].mxu0
        %v3238 = vadd.f32 0.0, %v3237
        %v3239 = vpop.f32.mrb[0].mxu0
        %v3240 = vpop.f32.mrb[0].mxu0
        %v3241 = vadd.f32 0.0, %v3240
        %v3242 = vpop.f32.mrb[0].mxu0
        %3243 = vdwg.mxu0
        %3244 = vmatprep.subr.bf16.mxu0 0
        %3245 = vmatpush1.bf16.xpose.msra.mxu0 %v2569
        %3246 = vmatprep.subr.bf16.mxu0 0
        %3247 = vmatpush1.bf16.xpose.msra.mxu0 %v2570
        %3248 = vmatprep.subr.bf16.mxu0 0
        %3249 = vmatpush1.bf16.xpose.msra.mxu0 0
        %3250 = vmatprep.subr.bf16.mxu0 0
        %3251 = vmatpush1.bf16.xpose.msra.mxu0 0
        %3252 = vmatprep.subr.bf16.mxu0 0
        %3253 = vmatpush1.bf16.xpose.msra.mxu0 0
        %3254 = vmatprep.subr.bf16.mxu0 0
        %3255 = vmatpush1.bf16.xpose.msra.mxu0 0
        %3256 = vmatprep.subr.bf16.mxu0 0
        %3257 = vmatpush1.bf16.xpose.msra.mxu0 0
        %3258 = vmatprep.subr.bf16.mxu0 0
        %3259 = vmatpush1.bf16.xpose.msra.mxu0 0
        %3260 = vmatprep.subr.bf16.mxu0 0
        %3261 = vmatpush1.bf16.xpose.msra.mxu0 0
        %3262 = vmatprep.subr.bf16.mxu0 0
        %3263 = vmatpush1.bf16.xpose.msra.mxu0 0
        %3264 = vmatprep.subr.bf16.mxu0 0
        %3265 = vmatpush1.bf16.xpose.msra.mxu0 0
        %3266 = vmatprep.subr.bf16.mxu0 0
        %3267 = vmatpush1.bf16.xpose.msra.mxu0 0
        %3268 = vmatprep.subr.bf16.mxu0 0
        %3269 = vmatpush1.bf16.xpose.msra.mxu0 0
        %3270 = vmatprep.subr.bf16.mxu0 0
        %3271 = vmatpush1.bf16.xpose.msra.mxu0 0
        %3272 = vmatprep.subr.bf16.mxu0 0
        %3273 = vmatpush1.bf16.xpose.msra.mxu0 0
        %3274 = vmatprep.subr.bf16.mxu0 0
        %3275 = vmatpush1.bf16.xpose.msra.mxu0 0
        %3276 = vmatprep.mubr.bf16.mxu0 0
        %3277 = vmatmul.mubr.bf16.gmra.mrb[0].mxu0 %v2537
        %v3278 = vpop.f32.mrb[0].mxu0
        %v3279 = vadd.f32 0.0, %v3278
        %v3280 = vpop.f32.mrb[0].mxu0
        %v3281 = vpop.f32.mrb[0].mxu0
        %v3282 = vadd.f32 0.0, %v3281
        %v3283 = vpop.f32.mrb[0].mxu0
        %3284 = vmatprep.mubr.bf16.mxu0 0
        %3285 = vmatmul.mubr.bf16.gmra.mrb[0].mxu0 %v2538
        %v3286 = vpop.f32.mrb[0].mxu0
        %v3287 = vadd.f32 0.0, %v3286
        %v3288 = vpop.f32.mrb[0].mxu0
        %v3289 = vpop.f32.mrb[0].mxu0
        %v3290 = vadd.f32 0.0, %v3289
        %v3291 = vpop.f32.mrb[0].mxu0
        %3292 = vdwg.mxu0
        %3293 = vmatprep.subr.bf16.mxu0 0
        %3294 = vmatpush1.bf16.xpose.msra.mxu0 %v2571
        %3295 = vmatprep.subr.bf16.mxu0 0
        %3296 = vmatpush1.bf16.xpose.msra.mxu0 %v2572
        %3297 = vmatprep.subr.bf16.mxu0 0
        %3298 = vmatpush1.bf16.xpose.msra.mxu0 0
        %3299 = vmatprep.subr.bf16.mxu0 0
        %3300 = vmatpush1.bf16.xpose.msra.mxu0 0
        %3301 = vmatprep.subr.bf16.mxu0 0
        %3302 = vmatpush1.bf16.xpose.msra.mxu0 0
        %3303 = vmatprep.subr.bf16.mxu0 0
        %3304 = vmatpush1.bf16.xpose.msra.mxu0 0
        %3305 = vmatprep.subr.bf16.mxu0 0
        %3306 = vmatpush1.bf16.xpose.msra.mxu0 0
        %3307 = vmatprep.subr.bf16.mxu0 0
        %3308 = vmatpush1.bf16.xpose.msra.mxu0 0
        %3309 = vmatprep.subr.bf16.mxu0 0
        %3310 = vmatpush1.bf16.xpose.msra.mxu0 0
        %3311 = vmatprep.subr.bf16.mxu0 0
        %3312 = vmatpush1.bf16.xpose.msra.mxu0 0
        %3313 = vmatprep.subr.bf16.mxu0 0
        %3314 = vmatpush1.bf16.xpose.msra.mxu0 0
        %3315 = vmatprep.subr.bf16.mxu0 0
        %3316 = vmatpush1.bf16.xpose.msra.mxu0 0
        %3317 = vmatprep.subr.bf16.mxu0 0
        %3318 = vmatpush1.bf16.xpose.msra.mxu0 0
        %3319 = vmatprep.subr.bf16.mxu0 0
        %3320 = vmatpush1.bf16.xpose.msra.mxu0 0
        %3321 = vmatprep.subr.bf16.mxu0 0
        %3322 = vmatpush1.bf16.xpose.msra.mxu0 0
        %3323 = vmatprep.subr.bf16.mxu0 0
        %3324 = vmatpush1.bf16.xpose.msra.mxu0 0
        %3325 = vmatprep.mubr.bf16.mxu0 0
        %3326 = vmatmul.mubr.bf16.gmra.mrb[0].mxu0 %v2539
        %v3327 = vpop.f32.mrb[0].mxu0
        %v3328 = vadd.f32 0.0, %v3327
        %v3329 = vpop.f32.mrb[0].mxu0
        %v3330 = vpop.f32.mrb[0].mxu0
        %v3331 = vadd.f32 0.0, %v3330
        %v3332 = vpop.f32.mrb[0].mxu0
        %3333 = vmatprep.mubr.bf16.mxu0 0
        %3334 = vmatmul.mubr.bf16.gmra.mrb[0].mxu0 %v2540
        %v3335 = vpop.f32.mrb[0].mxu0
        %v3336 = vadd.f32 0.0, %v3335
        %v3337 = vpop.f32.mrb[0].mxu0
        %v3338 = vpop.f32.mrb[0].mxu0
        %v3339 = vadd.f32 0.0, %v3338
        %v3340 = vpop.f32.mrb[0].mxu0
        %3341 = vdwg.mxu0
        %3342 = vmatprep.subr.bf16.mxu0 0
        %3343 = vmatpush1.bf16.xpose.msra.mxu0 %v2573
        %3344 = vmatprep.subr.bf16.mxu0 0
        %3345 = vmatpush1.bf16.xpose.msra.mxu0 %v2574
        %3346 = vmatprep.subr.bf16.mxu0 0
        %3347 = vmatpush1.bf16.xpose.msra.mxu0 0
        %3348 = vmatprep.subr.bf16.mxu0 0
        %3349 = vmatpush1.bf16.xpose.msra.mxu0 0
        %3350 = vmatprep.subr.bf16.mxu0 0
        %3351 = vmatpush1.bf16.xpose.msra.mxu0 0
        %3352 = vmatprep.subr.bf16.mxu0 0
        %3353 = vmatpush1.bf16.xpose.msra.mxu0 0
        %3354 = vmatprep.subr.bf16.mxu0 0
        %3355 = vmatpush1.bf16.xpose.msra.mxu0 0
        %3356 = vmatprep.subr.bf16.mxu0 0
        %3357 = vmatpush1.bf16.xpose.msra.mxu0 0
        %3358 = vmatprep.subr.bf16.mxu0 0
        %3359 = vmatpush1.bf16.xpose.msra.mxu0 0
        %3360 = vmatprep.subr.bf16.mxu0 0
        %3361 = vmatpush1.bf16.xpose.msra.mxu0 0
        %3362 = vmatprep.subr.bf16.mxu0 0
        %3363 = vmatpush1.bf16.xpose.msra.mxu0 0
        %3364 = vmatprep.subr.bf16.mxu0 0
        %3365 = vmatpush1.bf16.xpose.msra.mxu0 0
        %3366 = vmatprep.subr.bf16.mxu0 0
        %3367 = vmatpush1.bf16.xpose.msra.mxu0 0
        %3368 = vmatprep.subr.bf16.mxu0 0
        %3369 = vmatpush1.bf16.xpose.msra.mxu0 0
        %3370 = vmatprep.subr.bf16.mxu0 0
        %3371 = vmatpush1.bf16.xpose.msra.mxu0 0
        %3372 = vmatprep.subr.bf16.mxu0 0
        %3373 = vmatpush1.bf16.xpose.msra.mxu0 0
        %3374 = vmatprep.mubr.bf16.mxu0 0
        %3375 = vmatmul.mubr.bf16.gmra.mrb[0].mxu0 %v2541
        %v3376 = vpop.f32.mrb[0].mxu0
        %v3377 = vadd.f32 0.0, %v3376
        %v3378 = vpop.f32.mrb[0].mxu0
        %v3379 = vpop.f32.mrb[0].mxu0
        %v3380 = vadd.f32 0.0, %v3379
        %v3381 = vpop.f32.mrb[0].mxu0
        %3382 = vmatprep.mubr.bf16.mxu0 0
        %3383 = vmatmul.mubr.bf16.gmra.mrb[0].mxu0 %v2542
        %v3384 = vpop.f32.mrb[0].mxu0
        %v3385 = vadd.f32 0.0, %v3384
        %v3386 = vpop.f32.mrb[0].mxu0
        %v3387 = vpop.f32.mrb[0].mxu0
        %v3388 = vadd.f32 0.0, %v3387
        %v3389 = vpop.f32.mrb[0].mxu0
        %3390 = vdwg.mxu0
        %vm3391 = vcmask 261120
        %v3392 = vsel %vm3391, %v2642, -inf
        %3393 = vmax.xlane.f32.xlu0 %v3392
        %v3394 = vpop.xlane.xlu0 %3393
        %v3395 = vsel %vm3391, %v2645, -inf
        %3396 = vmax.xlane.f32.xlu0 %v3395
        %v3397 = vpop.xlane.xlu0 %3396
        %v3398 = vsel %vm3391, %v2650, -inf
        %3399 = vmax.xlane.f32.xlu0 %v3398
        %v3400 = vpop.xlane.xlu0 %3399
        %v3401 = vsel %vm3391, %v2653, -inf
        %3402 = vmax.xlane.f32.xlu0 %v3401
        %v3403 = vpop.xlane.xlu0 %3402
        %v3404 = vsel %vm3391, %v2691, -inf
        %3405 = vmax.xlane.f32.xlu0 %v3404
        %v3406 = vpop.xlane.xlu0 %3405
        %v3407 = vsel %vm3391, %v2694, -inf
        %3408 = vmax.xlane.f32.xlu0 %v3407
        %v3409 = vpop.xlane.xlu0 %3408
        %v3410 = vsel %vm3391, %v2699, -inf
        %3411 = vmax.xlane.f32.xlu0 %v3410
        %v3412 = vpop.xlane.xlu0 %3411
        %v3413 = vsel %vm3391, %v2702, -inf
        %3414 = vmax.xlane.f32.xlu0 %v3413
        %v3415 = vpop.xlane.xlu0 %3414
        %v3416 = vsel %vm3391, %v2740, -inf
        %3417 = vmax.xlane.f32.xlu0 %v3416
        %v3418 = vpop.xlane.xlu0 %3417
        %v3419 = vsel %vm3391, %v2743, -inf
        %3420 = vmax.xlane.f32.xlu0 %v3419
        %v3421 = vpop.xlane.xlu0 %3420
        %v3422 = vsel %vm3391, %v2748, -inf
        %3423 = vmax.xlane.f32.xlu0 %v3422
        %v3424 = vpop.xlane.xlu0 %3423
        %v3425 = vsel %vm3391, %v2751, -inf
        %3426 = vmax.xlane.f32.xlu0 %v3425
        %v3427 = vpop.xlane.xlu0 %3426
        %v3428 = vsel %vm3391, %v2789, -inf
        %3429 = vmax.xlane.f32.xlu0 %v3428
        %v3430 = vpop.xlane.xlu0 %3429
        %v3431 = vsel %vm3391, %v2792, -inf
        %3432 = vmax.xlane.f32.xlu0 %v3431
        %v3433 = vpop.xlane.xlu0 %3432
        %v3434 = vsel %vm3391, %v2797, -inf
        %3435 = vmax.xlane.f32.xlu0 %v3434
        %v3436 = vpop.xlane.xlu0 %3435
        %v3437 = vsel %vm3391, %v2800, -inf
        %3438 = vmax.xlane.f32.xlu0 %v3437
        %v3439 = vpop.xlane.xlu0 %3438
        %v3440 = vsel %vm3391, %v2838, -inf
        %3441 = vmax.xlane.f32.xlu0 %v3440
        %v3442 = vpop.xlane.xlu0 %3441
        %v3443 = vsel %vm3391, %v2841, -inf
        %3444 = vmax.xlane.f32.xlu0 %v3443
        %v3445 = vpop.xlane.xlu0 %3444
        %v3446 = vsel %vm3391, %v2846, -inf
        %3447 = vmax.xlane.f32.xlu0 %v3446
        %v3448 = vpop.xlane.xlu0 %3447
        %v3449 = vsel %vm3391, %v2849, -inf
        %3450 = vmax.xlane.f32.xlu0 %v3449
        %v3451 = vpop.xlane.xlu0 %3450
        %v3452 = vsel %vm3391, %v2887, -inf
        %3453 = vmax.xlane.f32.xlu0 %v3452
        %v3454 = vpop.xlane.xlu0 %3453
        %v3455 = vsel %vm3391, %v2890, -inf
        %3456 = vmax.xlane.f32.xlu0 %v3455
        %v3457 = vpop.xlane.xlu0 %3456
        %v3458 = vsel %vm3391, %v2895, -inf
        %3459 = vmax.xlane.f32.xlu0 %v3458
        %v3460 = vpop.xlane.xlu0 %3459
        %v3461 = vsel %vm3391, %v2898, -inf
        %3462 = vmax.xlane.f32.xlu0 %v3461
        %v3463 = vpop.xlane.xlu0 %3462
        %v3464 = vsel %vm3391, %v2936, -inf
        %3465 = vmax.xlane.f32.xlu0 %v3464
        %v3466 = vpop.xlane.xlu0 %3465
        %v3467 = vsel %vm3391, %v2939, -inf
        %3468 = vmax.xlane.f32.xlu0 %v3467
        %v3469 = vpop.xlane.xlu0 %3468
        %v3470 = vsel %vm3391, %v2944, -inf
        %3471 = vmax.xlane.f32.xlu0 %v3470
        %v3472 = vpop.xlane.xlu0 %3471
        %v3473 = vsel %vm3391, %v2947, -inf
        %3474 = vmax.xlane.f32.xlu0 %v3473
        %v3475 = vpop.xlane.xlu0 %3474
        %v3476 = vsel %vm3391, %v2985, -inf
        %3477 = vmax.xlane.f32.xlu0 %v3476
        %v3478 = vpop.xlane.xlu0 %3477
        %v3479 = vsel %vm3391, %v2988, -inf
        %3480 = vmax.xlane.f32.xlu0 %v3479
        %v3481 = vpop.xlane.xlu0 %3480
        %v3482 = vsel %vm3391, %v2993, -inf
        %3483 = vmax.xlane.f32.xlu0 %v3482
        %v3484 = vpop.xlane.xlu0 %3483
        %v3485 = vsel %vm3391, %v2996, -inf
        %3486 = vmax.xlane.f32.xlu0 %v3485
        %v3487 = vpop.xlane.xlu0 %3486
        %v3488 = vsel %vm3391, %v3034, -inf
        %3489 = vmax.xlane.f32.xlu0 %v3488
        %v3490 = vpop.xlane.xlu0 %3489
        %v3491 = vsel %vm3391, %v3037, -inf
        %3492 = vmax.xlane.f32.xlu0 %v3491
        %v3493 = vpop.xlane.xlu0 %3492
        %v3494 = vsel %vm3391, %v3042, -inf
        %3495 = vmax.xlane.f32.xlu0 %v3494
        %v3496 = vpop.xlane.xlu0 %3495
        %v3497 = vsel %vm3391, %v3045, -inf
        %3498 = vmax.xlane.f32.xlu0 %v3497
        %v3499 = vpop.xlane.xlu0 %3498
        %v3500 = vsel %vm3391, %v3083, -inf
        %3501 = vmax.xlane.f32.xlu0 %v3500
        %v3502 = vpop.xlane.xlu0 %3501
        %v3503 = vsel %vm3391, %v3086, -inf
        %3504 = vmax.xlane.f32.xlu0 %v3503
        %v3505 = vpop.xlane.xlu0 %3504
        %v3506 = vsel %vm3391, %v3091, -inf
        %3507 = vmax.xlane.f32.xlu0 %v3506
        %v3508 = vpop.xlane.xlu0 %3507
        %v3509 = vsel %vm3391, %v3094, -inf
        %3510 = vmax.xlane.f32.xlu0 %v3509
        %v3511 = vpop.xlane.xlu0 %3510
        %v3512 = vsel %vm3391, %v3132, -inf
        %3513 = vmax.xlane.f32.xlu0 %v3512
        %v3514 = vpop.xlane.xlu0 %3513
        %v3515 = vsel %vm3391, %v3135, -inf
        %3516 = vmax.xlane.f32.xlu0 %v3515
        %v3517 = vpop.xlane.xlu0 %3516
        %v3518 = vsel %vm3391, %v3140, -inf
        %3519 = vmax.xlane.f32.xlu0 %v3518
        %v3520 = vpop.xlane.xlu0 %3519
        %v3521 = vsel %vm3391, %v3143, -inf
        %3522 = vmax.xlane.f32.xlu0 %v3521
        %v3523 = vpop.xlane.xlu0 %3522
        %v3524 = vsel %vm3391, %v3181, -inf
        %3525 = vmax.xlane.f32.xlu0 %v3524
        %v3526 = vpop.xlane.xlu0 %3525
        %v3527 = vsel %vm3391, %v3184, -inf
        %3528 = vmax.xlane.f32.xlu0 %v3527
        %v3529 = vpop.xlane.xlu0 %3528
        %v3530 = vsel %vm3391, %v3189, -inf
        %3531 = vmax.xlane.f32.xlu0 %v3530
        %v3532 = vpop.xlane.xlu0 %3531
        %v3533 = vsel %vm3391, %v3192, -inf
        %3534 = vmax.xlane.f32.xlu0 %v3533
        %v3535 = vpop.xlane.xlu0 %3534
        %v3536 = vsel %vm3391, %v3230, -inf
        %3537 = vmax.xlane.f32.xlu0 %v3536
        %v3538 = vpop.xlane.xlu0 %3537
        %v3539 = vsel %vm3391, %v3233, -inf
        %3540 = vmax.xlane.f32.xlu0 %v3539
        %v3541 = vpop.xlane.xlu0 %3540
        %v3542 = vsel %vm3391, %v3238, -inf
        %3543 = vmax.xlane.f32.xlu0 %v3542
        %v3544 = vpop.xlane.xlu0 %3543
        %v3545 = vsel %vm3391, %v3241, -inf
        %3546 = vmax.xlane.f32.xlu0 %v3545
        %v3547 = vpop.xlane.xlu0 %3546
        %v3548 = vsel %vm3391, %v3279, -inf
        %3549 = vmax.xlane.f32.xlu0 %v3548
        %v3550 = vpop.xlane.xlu0 %3549
        %v3551 = vsel %vm3391, %v3282, -inf
        %3552 = vmax.xlane.f32.xlu0 %v3551
        %v3553 = vpop.xlane.xlu0 %3552
        %v3554 = vsel %vm3391, %v3287, -inf
        %3555 = vmax.xlane.f32.xlu0 %v3554
        %v3556 = vpop.xlane.xlu0 %3555
        %v3557 = vsel %vm3391, %v3290, -inf
        %3558 = vmax.xlane.f32.xlu0 %v3557
        %v3559 = vpop.xlane.xlu0 %3558
        %v3560 = vsel %vm3391, %v3328, -inf
        %3561 = vmax.xlane.f32.xlu0 %v3560
        %v3562 = vpop.xlane.xlu0 %3561
        %v3563 = vsel %vm3391, %v3331, -inf
        %3564 = vmax.xlane.f32.xlu0 %v3563
        %v3565 = vpop.xlane.xlu0 %3564
        %v3566 = vsel %vm3391, %v3336, -inf
        %3567 = vmax.xlane.f32.xlu0 %v3566
        %v3568 = vpop.xlane.xlu0 %3567
        %v3569 = vsel %vm3391, %v3339, -inf
        %3570 = vmax.xlane.f32.xlu0 %v3569
        %v3571 = vpop.xlane.xlu0 %3570
        %v3572 = vsel %vm3391, %v3377, -inf
        %3573 = vmax.xlane.f32.xlu0 %v3572
        %v3574 = vpop.xlane.xlu0 %3573
        %v3575 = vsel %vm3391, %v3380, -inf
        %3576 = vmax.xlane.f32.xlu0 %v3575
        %v3577 = vpop.xlane.xlu0 %3576
        %v3578 = vsel %vm3391, %v3385, -inf
        %3579 = vmax.xlane.f32.xlu0 %v3578
        %v3580 = vpop.xlane.xlu0 %3579
        %v3581 = vsel %vm3391, %v3388, -inf
        %3582 = vmax.xlane.f32.xlu0 %v3581
        %v3583 = vpop.xlane.xlu0 %3582
        %v3584 = vsub.f32 %v2642, %v3394
        %v3585 = vsub.f32 %v2645, %v3397
        %v3586 = vsub.f32 %v2650, %v3400
        %v3587 = vsub.f32 %v2653, %v3403
        %v3588 = vsub.f32 %v2691, %v3406
        %v3589 = vsub.f32 %v2694, %v3409
        %v3590 = vsub.f32 %v2699, %v3412
        %v3591 = vsub.f32 %v2702, %v3415
        %v3592 = vsub.f32 %v2740, %v3418
        %v3593 = vsub.f32 %v2743, %v3421
        %v3594 = vsub.f32 %v2748, %v3424
        %v3595 = vsub.f32 %v2751, %v3427
        %v3596 = vsub.f32 %v2789, %v3430
        %v3597 = vsub.f32 %v2792, %v3433
        %v3598 = vsub.f32 %v2797, %v3436
        %v3599 = vsub.f32 %v2800, %v3439
        %v3600 = vsub.f32 %v2838, %v3442
        %v3601 = vsub.f32 %v2841, %v3445
        %v3602 = vsub.f32 %v2846, %v3448
        %v3603 = vsub.f32 %v2849, %v3451
        %v3604 = vsub.f32 %v2887, %v3454
        %v3605 = vsub.f32 %v2890, %v3457
        %v3606 = vsub.f32 %v2895, %v3460
        %v3607 = vsub.f32 %v2898, %v3463
        %v3608 = vsub.f32 %v2936, %v3466
        %v3609 = vsub.f32 %v2939, %v3469
        %v3610 = vsub.f32 %v2944, %v3472
        %v3611 = vsub.f32 %v2947, %v3475
        %v3612 = vsub.f32 %v2985, %v3478
        %v3613 = vsub.f32 %v2988, %v3481
        %v3614 = vsub.f32 %v2993, %v3484
        %v3615 = vsub.f32 %v2996, %v3487
        %v3616 = vsub.f32 %v3034, %v3490
        %v3617 = vsub.f32 %v3037, %v3493
        %v3618 = vsub.f32 %v3042, %v3496
        %v3619 = vsub.f32 %v3045, %v3499
        %v3620 = vsub.f32 %v3083, %v3502
        %v3621 = vsub.f32 %v3086, %v3505
        %v3622 = vsub.f32 %v3091, %v3508
        %v3623 = vsub.f32 %v3094, %v3511
        %v3624 = vsub.f32 %v3132, %v3514
        %v3625 = vsub.f32 %v3135, %v3517
        %v3626 = vsub.f32 %v3140, %v3520
        %v3627 = vsub.f32 %v3143, %v3523
        %v3628 = vsub.f32 %v3181, %v3526
        %v3629 = vsub.f32 %v3184, %v3529
        %v3630 = vsub.f32 %v3189, %v3532
        %v3631 = vsub.f32 %v3192, %v3535
        %v3632 = vsub.f32 %v3230, %v3538
        %v3633 = vsub.f32 %v3233, %v3541
        %v3634 = vsub.f32 %v3238, %v3544
        %v3635 = vsub.f32 %v3241, %v3547
        %v3636 = vsub.f32 %v3279, %v3550
        %v3637 = vsub.f32 %v3282, %v3553
        %v3638 = vsub.f32 %v3287, %v3556
        %v3639 = vsub.f32 %v3290, %v3559
        %v3640 = vsub.f32 %v3328, %v3562
        %v3641 = vsub.f32 %v3331, %v3565
        %v3642 = vsub.f32 %v3336, %v3568
        %v3643 = vsub.f32 %v3339, %v3571
        %v3644 = vsub.f32 %v3377, %v3574
        %v3645 = vsub.f32 %v3380, %v3577
        %v3646 = vsub.f32 %v3385, %v3580
        %v3647 = vsub.f32 %v3388, %v3583
        %v3648 = vmul.f32 %v3584, 1.442695
        %v3649 = vpow.pop %v3648
        %v3650 = vmul.f32 %v3585, 1.442695
        %v3651 = vpow.pop %v3650
        %v3652 = vmul.f32 %v3586, 1.442695
        %v3653 = vpow.pop %v3652
        %v3654 = vmul.f32 %v3587, 1.442695
        %v3655 = vpow.pop %v3654
        %v3656 = vmul.f32 %v3588, 1.442695
        %v3657 = vpow.pop %v3656
        %v3658 = vmul.f32 %v3589, 1.442695
        %v3659 = vpow.pop %v3658
        %v3660 = vmul.f32 %v3590, 1.442695
        %v3661 = vpow.pop %v3660
        %v3662 = vmul.f32 %v3591, 1.442695
        %v3663 = vpow.pop %v3662
        %v3664 = vmul.f32 %v3592, 1.442695
        %v3665 = vpow.pop %v3664
        %v3666 = vmul.f32 %v3593, 1.442695
        %v3667 = vpow.pop %v3666
        %v3668 = vmul.f32 %v3594, 1.442695
        %v3669 = vpow.pop %v3668
        %v3670 = vmul.f32 %v3595, 1.442695
        %v3671 = vpow.pop %v3670
        %v3672 = vmul.f32 %v3596, 1.442695
        %v3673 = vpow.pop %v3672
        %v3674 = vmul.f32 %v3597, 1.442695
        %v3675 = vpow.pop %v3674
        %v3676 = vmul.f32 %v3598, 1.442695
        %v3677 = vpow.pop %v3676
        %v3678 = vmul.f32 %v3599, 1.442695
        %v3679 = vpow.pop %v3678
        %v3680 = vmul.f32 %v3600, 1.442695
        %v3681 = vpow.pop %v3680
        %v3682 = vmul.f32 %v3601, 1.442695
        %v3683 = vpow.pop %v3682
        %v3684 = vmul.f32 %v3602, 1.442695
        %v3685 = vpow.pop %v3684
        %v3686 = vmul.f32 %v3603, 1.442695
        %v3687 = vpow.pop %v3686
        %v3688 = vmul.f32 %v3604, 1.442695
        %v3689 = vpow.pop %v3688
        %v3690 = vmul.f32 %v3605, 1.442695
        %v3691 = vpow.pop %v3690
        %v3692 = vmul.f32 %v3606, 1.442695
        %v3693 = vpow.pop %v3692
        %v3694 = vmul.f32 %v3607, 1.442695
        %v3695 = vpow.pop %v3694
        %v3696 = vmul.f32 %v3608, 1.442695
        %v3697 = vpow.pop %v3696
        %v3698 = vmul.f32 %v3609, 1.442695
        %v3699 = vpow.pop %v3698
        %v3700 = vmul.f32 %v3610, 1.442695
        %v3701 = vpow.pop %v3700
        %v3702 = vmul.f32 %v3611, 1.442695
        %v3703 = vpow.pop %v3702
        %v3704 = vmul.f32 %v3612, 1.442695
        %v3705 = vpow.pop %v3704
        %v3706 = vmul.f32 %v3613, 1.442695
        %v3707 = vpow.pop %v3706
        %v3708 = vmul.f32 %v3614, 1.442695
        %v3709 = vpow.pop %v3708
        %v3710 = vmul.f32 %v3615, 1.442695
        %v3711 = vpow.pop %v3710
        %v3712 = vmul.f32 %v3616, 1.442695
        %v3713 = vpow.pop %v3712
        %v3714 = vmul.f32 %v3617, 1.442695
        %v3715 = vpow.pop %v3714
        %v3716 = vmul.f32 %v3618, 1.442695
        %v3717 = vpow.pop %v3716
        %v3718 = vmul.f32 %v3619, 1.442695
        %v3719 = vpow.pop %v3718
        %v3720 = vmul.f32 %v3620, 1.442695
        %v3721 = vpow.pop %v3720
        %v3722 = vmul.f32 %v3621, 1.442695
        %v3723 = vpow.pop %v3722
        %v3724 = vmul.f32 %v3622, 1.442695
        %v3725 = vpow.pop %v3724
        %v3726 = vmul.f32 %v3623, 1.442695
        %v3727 = vpow.pop %v3726
        %v3728 = vmul.f32 %v3624, 1.442695
        %v3729 = vpow.pop %v3728
        %v3730 = vmul.f32 %v3625, 1.442695
        %v3731 = vpow.pop %v3730
        %v3732 = vmul.f32 %v3626, 1.442695
        %v3733 = vpow.pop %v3732
        %v3734 = vmul.f32 %v3627, 1.442695
        %v3735 = vpow.pop %v3734
        %v3736 = vmul.f32 %v3628, 1.442695
        %v3737 = vpow.pop %v3736
        %v3738 = vmul.f32 %v3629, 1.442695
        %v3739 = vpow.pop %v3738
        %v3740 = vmul.f32 %v3630, 1.442695
        %v3741 = vpow.pop %v3740
        %v3742 = vmul.f32 %v3631, 1.442695
        %v3743 = vpow.pop %v3742
        %v3744 = vmul.f32 %v3632, 1.442695
        %v3745 = vpow.pop %v3744
        %v3746 = vmul.f32 %v3633, 1.442695
        %v3747 = vpow.pop %v3746
        %v3748 = vmul.f32 %v3634, 1.442695
        %v3749 = vpow.pop %v3748
        %v3750 = vmul.f32 %v3635, 1.442695
        %v3751 = vpow.pop %v3750
        %v3752 = vmul.f32 %v3636, 1.442695
        %v3753 = vpow.pop %v3752
        %v3754 = vmul.f32 %v3637, 1.442695
        %v3755 = vpow.pop %v3754
        %v3756 = vmul.f32 %v3638, 1.442695
        %v3757 = vpow.pop %v3756
        %v3758 = vmul.f32 %v3639, 1.442695
        %v3759 = vpow.pop %v3758
        %v3760 = vmul.f32 %v3640, 1.442695
        %v3761 = vpow.pop %v3760
        %v3762 = vmul.f32 %v3641, 1.442695
        %v3763 = vpow.pop %v3762
        %v3764 = vmul.f32 %v3642, 1.442695
        %v3765 = vpow.pop %v3764
        %v3766 = vmul.f32 %v3643, 1.442695
        %v3767 = vpow.pop %v3766
        %v3768 = vmul.f32 %v3644, 1.442695
        %v3769 = vpow.pop %v3768
        %v3770 = vmul.f32 %v3645, 1.442695
        %v3771 = vpow.pop %v3770
        %v3772 = vmul.f32 %v3646, 1.442695
        %v3773 = vpow.pop %v3772
        %v3774 = vmul.f32 %v3647, 1.442695
        %v3775 = vpow.pop %v3774
        %v3776 = vsel %vm3391, %v3649, 0.0
        %3777 = vadd.xlane.f32.xlu0 %v3776
        %v3778 = vpop.xlane.xlu0 %3777
        %v3779 = vsel %vm3391, %v3651, 0.0
        %3780 = vadd.xlane.f32.xlu0 %v3779
        %v3781 = vpop.xlane.xlu0 %3780
        %v3782 = vsel %vm3391, %v3653, 0.0
        %3783 = vadd.xlane.f32.xlu0 %v3782
        %v3784 = vpop.xlane.xlu0 %3783
        %v3785 = vsel %vm3391, %v3655, 0.0
        %3786 = vadd.xlane.f32.xlu0 %v3785
        %v3787 = vpop.xlane.xlu0 %3786
        %v3788 = vsel %vm3391, %v3657, 0.0
        %3789 = vadd.xlane.f32.xlu0 %v3788
        %v3790 = vpop.xlane.xlu0 %3789
        %v3791 = vsel %vm3391, %v3659, 0.0
        %3792 = vadd.xlane.f32.xlu0 %v3791
        %v3793 = vpop.xlane.xlu0 %3792
        %v3794 = vsel %vm3391, %v3661, 0.0
        %3795 = vadd.xlane.f32.xlu0 %v3794
        %v3796 = vpop.xlane.xlu0 %3795
        %v3797 = vsel %vm3391, %v3663, 0.0
        %3798 = vadd.xlane.f32.xlu0 %v3797
        %v3799 = vpop.xlane.xlu0 %3798
        %v3800 = vsel %vm3391, %v3665, 0.0
        %3801 = vadd.xlane.f32.xlu0 %v3800
        %v3802 = vpop.xlane.xlu0 %3801
        %v3803 = vsel %vm3391, %v3667, 0.0
        %3804 = vadd.xlane.f32.xlu0 %v3803
        %v3805 = vpop.xlane.xlu0 %3804
        %v3806 = vsel %vm3391, %v3669, 0.0
        %3807 = vadd.xlane.f32.xlu0 %v3806
        %v3808 = vpop.xlane.xlu0 %3807
        %v3809 = vsel %vm3391, %v3671, 0.0
        %3810 = vadd.xlane.f32.xlu0 %v3809
        %v3811 = vpop.xlane.xlu0 %3810
        %v3812 = vsel %vm3391, %v3673, 0.0
        %3813 = vadd.xlane.f32.xlu0 %v3812
        %v3814 = vpop.xlane.xlu0 %3813
        %v3815 = vsel %vm3391, %v3675, 0.0
        %3816 = vadd.xlane.f32.xlu0 %v3815
        %v3817 = vpop.xlane.xlu0 %3816
        %v3818 = vsel %vm3391, %v3677, 0.0
        %3819 = vadd.xlane.f32.xlu0 %v3818
        %v3820 = vpop.xlane.xlu0 %3819
        %v3821 = vsel %vm3391, %v3679, 0.0
        %3822 = vadd.xlane.f32.xlu0 %v3821
        %v3823 = vpop.xlane.xlu0 %3822
        %v3824 = vsel %vm3391, %v3681, 0.0
        %3825 = vadd.xlane.f32.xlu0 %v3824
        %v3826 = vpop.xlane.xlu0 %3825
        %v3827 = vsel %vm3391, %v3683, 0.0
        %3828 = vadd.xlane.f32.xlu0 %v3827
        %v3829 = vpop.xlane.xlu0 %3828
        %v3830 = vsel %vm3391, %v3685, 0.0
        %3831 = vadd.xlane.f32.xlu0 %v3830
        %v3832 = vpop.xlane.xlu0 %3831
        %v3833 = vsel %vm3391, %v3687, 0.0
        %3834 = vadd.xlane.f32.xlu0 %v3833
        %v3835 = vpop.xlane.xlu0 %3834
        %v3836 = vsel %vm3391, %v3689, 0.0
        %3837 = vadd.xlane.f32.xlu0 %v3836
        %v3838 = vpop.xlane.xlu0 %3837
        %v3839 = vsel %vm3391, %v3691, 0.0
        %3840 = vadd.xlane.f32.xlu0 %v3839
        %v3841 = vpop.xlane.xlu0 %3840
        %v3842 = vsel %vm3391, %v3693, 0.0
        %3843 = vadd.xlane.f32.xlu0 %v3842
        %v3844 = vpop.xlane.xlu0 %3843
        %v3845 = vsel %vm3391, %v3695, 0.0
        %3846 = vadd.xlane.f32.xlu0 %v3845
        %v3847 = vpop.xlane.xlu0 %3846
        %v3848 = vsel %vm3391, %v3697, 0.0
        %3849 = vadd.xlane.f32.xlu0 %v3848
        %v3850 = vpop.xlane.xlu0 %3849
        %v3851 = vsel %vm3391, %v3699, 0.0
        %3852 = vadd.xlane.f32.xlu0 %v3851
        %v3853 = vpop.xlane.xlu0 %3852
        %v3854 = vsel %vm3391, %v3701, 0.0
        %3855 = vadd.xlane.f32.xlu0 %v3854
        %v3856 = vpop.xlane.xlu0 %3855
        %v3857 = vsel %vm3391, %v3703, 0.0
        %3858 = vadd.xlane.f32.xlu0 %v3857
        %v3859 = vpop.xlane.xlu0 %3858
        %v3860 = vsel %vm3391, %v3705, 0.0
        %3861 = vadd.xlane.f32.xlu0 %v3860
        %v3862 = vpop.xlane.xlu0 %3861
        %v3863 = vsel %vm3391, %v3707, 0.0
        %3864 = vadd.xlane.f32.xlu0 %v3863
        %v3865 = vpop.xlane.xlu0 %3864
        %v3866 = vsel %vm3391, %v3709, 0.0
        %3867 = vadd.xlane.f32.xlu0 %v3866
        %v3868 = vpop.xlane.xlu0 %3867
        %v3869 = vsel %vm3391, %v3711, 0.0
        %3870 = vadd.xlane.f32.xlu0 %v3869
        %v3871 = vpop.xlane.xlu0 %3870
        %v3872 = vsel %vm3391, %v3713, 0.0
        %3873 = vadd.xlane.f32.xlu0 %v3872
        %v3874 = vpop.xlane.xlu0 %3873
        %v3875 = vsel %vm3391, %v3715, 0.0
        %3876 = vadd.xlane.f32.xlu0 %v3875
        %v3877 = vpop.xlane.xlu0 %3876
        %v3878 = vsel %vm3391, %v3717, 0.0
        %3879 = vadd.xlane.f32.xlu0 %v3878
        %v3880 = vpop.xlane.xlu0 %3879
        %v3881 = vsel %vm3391, %v3719, 0.0
        %3882 = vadd.xlane.f32.xlu0 %v3881
        %v3883 = vpop.xlane.xlu0 %3882
        %v3884 = vsel %vm3391, %v3721, 0.0
        %3885 = vadd.xlane.f32.xlu0 %v3884
        %v3886 = vpop.xlane.xlu0 %3885
        %v3887 = vsel %vm3391, %v3723, 0.0
        %3888 = vadd.xlane.f32.xlu0 %v3887
        %v3889 = vpop.xlane.xlu0 %3888
        %v3890 = vsel %vm3391, %v3725, 0.0
        %3891 = vadd.xlane.f32.xlu0 %v3890
        %v3892 = vpop.xlane.xlu0 %3891
        %v3893 = vsel %vm3391, %v3727, 0.0
        %3894 = vadd.xlane.f32.xlu0 %v3893
        %v3895 = vpop.xlane.xlu0 %3894
        %v3896 = vsel %vm3391, %v3729, 0.0
        %3897 = vadd.xlane.f32.xlu0 %v3896
        %v3898 = vpop.xlane.xlu0 %3897
        %v3899 = vsel %vm3391, %v3731, 0.0
        %3900 = vadd.xlane.f32.xlu0 %v3899
        %v3901 = vpop.xlane.xlu0 %3900
        %v3902 = vsel %vm3391, %v3733, 0.0
        %3903 = vadd.xlane.f32.xlu0 %v3902
        %v3904 = vpop.xlane.xlu0 %3903
        %v3905 = vsel %vm3391, %v3735, 0.0
        %3906 = vadd.xlane.f32.xlu0 %v3905
        %v3907 = vpop.xlane.xlu0 %3906
        %v3908 = vsel %vm3391, %v3737, 0.0
        %3909 = vadd.xlane.f32.xlu0 %v3908
        %v3910 = vpop.xlane.xlu0 %3909
        %v3911 = vsel %vm3391, %v3739, 0.0
        %3912 = vadd.xlane.f32.xlu0 %v3911
        %v3913 = vpop.xlane.xlu0 %3912
        %v3914 = vsel %vm3391, %v3741, 0.0
        %3915 = vadd.xlane.f32.xlu0 %v3914
        %v3916 = vpop.xlane.xlu0 %3915
        %v3917 = vsel %vm3391, %v3743, 0.0
        %3918 = vadd.xlane.f32.xlu0 %v3917
        %v3919 = vpop.xlane.xlu0 %3918
        %v3920 = vsel %vm3391, %v3745, 0.0
        %3921 = vadd.xlane.f32.xlu0 %v3920
        %v3922 = vpop.xlane.xlu0 %3921
        %v3923 = vsel %vm3391, %v3747, 0.0
        %3924 = vadd.xlane.f32.xlu0 %v3923
        %v3925 = vpop.xlane.xlu0 %3924
        %v3926 = vsel %vm3391, %v3749, 0.0
        %3927 = vadd.xlane.f32.xlu0 %v3926
        %v3928 = vpop.xlane.xlu0 %3927
        %v3929 = vsel %vm3391, %v3751, 0.0
        %3930 = vadd.xlane.f32.xlu0 %v3929
        %v3931 = vpop.xlane.xlu0 %3930
        %v3932 = vsel %vm3391, %v3753, 0.0
        %3933 = vadd.xlane.f32.xlu0 %v3932
        %v3934 = vpop.xlane.xlu0 %3933
        %v3935 = vsel %vm3391, %v3755, 0.0
        %3936 = vadd.xlane.f32.xlu0 %v3935
        %v3937 = vpop.xlane.xlu0 %3936
        %v3938 = vsel %vm3391, %v3757, 0.0
        %3939 = vadd.xlane.f32.xlu0 %v3938
        %v3940 = vpop.xlane.xlu0 %3939
        %v3941 = vsel %vm3391, %v3759, 0.0
        %3942 = vadd.xlane.f32.xlu0 %v3941
        %v3943 = vpop.xlane.xlu0 %3942
        %v3944 = vsel %vm3391, %v3761, 0.0
        %3945 = vadd.xlane.f32.xlu0 %v3944
        %v3946 = vpop.xlane.xlu0 %3945
        %v3947 = vsel %vm3391, %v3763, 0.0
        %3948 = vadd.xlane.f32.xlu0 %v3947
        %v3949 = vpop.xlane.xlu0 %3948
        %v3950 = vsel %vm3391, %v3765, 0.0
        %3951 = vadd.xlane.f32.xlu0 %v3950
        %v3952 = vpop.xlane.xlu0 %3951
        %v3953 = vsel %vm3391, %v3767, 0.0
        %3954 = vadd.xlane.f32.xlu0 %v3953
        %v3955 = vpop.xlane.xlu0 %3954
        %v3956 = vsel %vm3391, %v3769, 0.0
        %3957 = vadd.xlane.f32.xlu0 %v3956
        %v3958 = vpop.xlane.xlu0 %3957
        %v3959 = vsel %vm3391, %v3771, 0.0
        %3960 = vadd.xlane.f32.xlu0 %v3959
        %v3961 = vpop.xlane.xlu0 %3960
        %v3962 = vsel %vm3391, %v3773, 0.0
        %3963 = vadd.xlane.f32.xlu0 %v3962
        %v3964 = vpop.xlane.xlu0 %3963
        %v3965 = vsel %vm3391, %v3775, 0.0
        %3966 = vadd.xlane.f32.xlu0 %v3965
        %v3967 = vpop.xlane.xlu0 %3966
        %v3968 = vrcp.pop %v3778
        %v3969 = vrcp.pop %v3781
        %v3970 = vrcp.pop %v3784
        %v3971 = vrcp.pop %v3787
        %v3972 = vrcp.pop %v3790
        %v3973 = vrcp.pop %v3793
        %v3974 = vrcp.pop %v3796
        %v3975 = vrcp.pop %v3799
        %v3976 = vrcp.pop %v3802
        %v3977 = vrcp.pop %v3805
        %v3978 = vrcp.pop %v3808
        %v3979 = vrcp.pop %v3811
        %v3980 = vrcp.pop %v3814
        %v3981 = vrcp.pop %v3817
        %v3982 = vrcp.pop %v3820
        %v3983 = vrcp.pop %v3823
        %v3984 = vrcp.pop %v3826
        %v3985 = vrcp.pop %v3829
        %v3986 = vrcp.pop %v3832
        %v3987 = vrcp.pop %v3835
        %v3988 = vrcp.pop %v3838
        %v3989 = vrcp.pop %v3841
        %v3990 = vrcp.pop %v3844
        %v3991 = vrcp.pop %v3847
        %v3992 = vrcp.pop %v3850
        %v3993 = vrcp.pop %v3853
        %v3994 = vrcp.pop %v3856
        %v3995 = vrcp.pop %v3859
        %v3996 = vrcp.pop %v3862
        %v3997 = vrcp.pop %v3865
        %v3998 = vrcp.pop %v3868
        %v3999 = vrcp.pop %v3871
        %v4000 = vrcp.pop %v3874
        %v4001 = vrcp.pop %v3877
        %v4002 = vrcp.pop %v3880
        %v4003 = vrcp.pop %v3883
        %v4004 = vrcp.pop %v3886
        %v4005 = vrcp.pop %v3889
        %v4006 = vrcp.pop %v3892
        %v4007 = vrcp.pop %v3895
        %v4008 = vrcp.pop %v3898
        %v4009 = vrcp.pop %v3901
        %v4010 = vrcp.pop %v3904
        %v4011 = vrcp.pop %v3907
        %v4012 = vrcp.pop %v3910
        %v4013 = vrcp.pop %v3913
        %v4014 = vrcp.pop %v3916
        %v4015 = vrcp.pop %v3919
        %v4016 = vrcp.pop %v3922
        %v4017 = vrcp.pop %v3925
        %v4018 = vrcp.pop %v3928
        %v4019 = vrcp.pop %v3931
        %v4020 = vrcp.pop %v3934
        %v4021 = vrcp.pop %v3937
        %v4022 = vrcp.pop %v3940
        %v4023 = vrcp.pop %v3943
        %v4024 = vrcp.pop %v3946
        %v4025 = vrcp.pop %v3949
        %v4026 = vrcp.pop %v3952
        %v4027 = vrcp.pop %v3955
        %v4028 = vrcp.pop %v3958
        %v4029 = vrcp.pop %v3961
        %v4030 = vrcp.pop %v3964
        %v4031 = vrcp.pop %v3967
        %v4032 = vmul.f32 %v3649, %v3968
        %v4033 = vmul.f32 %v3651, %v3969
        %v4034 = vmul.f32 %v3653, %v3970
        %v4035 = vmul.f32 %v3655, %v3971
        %v4036 = vmul.f32 %v3657, %v3972
        %v4037 = vmul.f32 %v3659, %v3973
        %v4038 = vmul.f32 %v3661, %v3974
        %v4039 = vmul.f32 %v3663, %v3975
        %v4040 = vmul.f32 %v3665, %v3976
        %v4041 = vmul.f32 %v3667, %v3977
        %v4042 = vmul.f32 %v3669, %v3978
        %v4043 = vmul.f32 %v3671, %v3979
        %v4044 = vmul.f32 %v3673, %v3980
        %v4045 = vmul.f32 %v3675, %v3981
        %v4046 = vmul.f32 %v3677, %v3982
        %v4047 = vmul.f32 %v3679, %v3983
        %v4048 = vmul.f32 %v3681, %v3984
        %v4049 = vmul.f32 %v3683, %v3985
        %v4050 = vmul.f32 %v3685, %v3986
        %v4051 = vmul.f32 %v3687, %v3987
        %v4052 = vmul.f32 %v3689, %v3988
        %v4053 = vmul.f32 %v3691, %v3989
        %v4054 = vmul.f32 %v3693, %v3990
        %v4055 = vmul.f32 %v3695, %v3991
        %v4056 = vmul.f32 %v3697, %v3992
        %v4057 = vmul.f32 %v3699, %v3993
        %v4058 = vmul.f32 %v3701, %v3994
        %v4059 = vmul.f32 %v3703, %v3995
        %v4060 = vmul.f32 %v3705, %v3996
        %v4061 = vmul.f32 %v3707, %v3997
        %v4062 = vmul.f32 %v3709, %v3998
        %v4063 = vmul.f32 %v3711, %v3999
        %v4064 = vmul.f32 %v3713, %v4000
        %v4065 = vmul.f32 %v3715, %v4001
        %v4066 = vmul.f32 %v3717, %v4002
        %v4067 = vmul.f32 %v3719, %v4003
        %v4068 = vmul.f32 %v3721, %v4004
        %v4069 = vmul.f32 %v3723, %v4005
        %v4070 = vmul.f32 %v3725, %v4006
        %v4071 = vmul.f32 %v3727, %v4007
        %v4072 = vmul.f32 %v3729, %v4008
        %v4073 = vmul.f32 %v3731, %v4009
        %v4074 = vmul.f32 %v3733, %v4010
        %v4075 = vmul.f32 %v3735, %v4011
        %v4076 = vmul.f32 %v3737, %v4012
        %v4077 = vmul.f32 %v3739, %v4013
        %v4078 = vmul.f32 %v3741, %v4014
        %v4079 = vmul.f32 %v3743, %v4015
        %v4080 = vmul.f32 %v3745, %v4016
        %v4081 = vmul.f32 %v3747, %v4017
        %v4082 = vmul.f32 %v3749, %v4018
        %v4083 = vmul.f32 %v3751, %v4019
        %v4084 = vmul.f32 %v3753, %v4020
        %v4085 = vmul.f32 %v3755, %v4021
        %v4086 = vmul.f32 %v3757, %v4022
        %v4087 = vmul.f32 %v3759, %v4023
        %v4088 = vmul.f32 %v3761, %v4024
        %v4089 = vmul.f32 %v3763, %v4025
        %v4090 = vmul.f32 %v3765, %v4026
        %v4091 = vmul.f32 %v3767, %v4027
        %v4092 = vmul.f32 %v3769, %v4028
        %v4093 = vmul.f32 %v3771, %v4029
        %v4094 = vmul.f32 %v3773, %v4030
        %v4095 = vmul.f32 %v3775, %v4031
        %v4096 = vpack.c.bf16 %v4033, %v4032
        %v4097 = vpack.c.bf16 %v4035, %v4034
        %v4098 = vpack.c.bf16 %v4037, %v4036
        %v4099 = vpack.c.bf16 %v4039, %v4038
        %v4100 = vpack.c.bf16 %v4041, %v4040
        %v4101 = vpack.c.bf16 %v4043, %v4042
        %v4102 = vpack.c.bf16 %v4045, %v4044
        %v4103 = vpack.c.bf16 %v4047, %v4046
        %v4104 = vpack.c.bf16 %v4049, %v4048
        %v4105 = vpack.c.bf16 %v4051, %v4050
        %v4106 = vpack.c.bf16 %v4053, %v4052
        %v4107 = vpack.c.bf16 %v4055, %v4054
        %v4108 = vpack.c.bf16 %v4057, %v4056
        %v4109 = vpack.c.bf16 %v4059, %v4058
        %v4110 = vpack.c.bf16 %v4061, %v4060
        %v4111 = vpack.c.bf16 %v4063, %v4062
        %v4112 = vpack.c.bf16 %v4065, %v4064
        %v4113 = vpack.c.bf16 %v4067, %v4066
        %v4114 = vpack.c.bf16 %v4069, %v4068
        %v4115 = vpack.c.bf16 %v4071, %v4070
        %v4116 = vpack.c.bf16 %v4073, %v4072
        %v4117 = vpack.c.bf16 %v4075, %v4074
        %v4118 = vpack.c.bf16 %v4077, %v4076
        %v4119 = vpack.c.bf16 %v4079, %v4078
        %v4120 = vpack.c.bf16 %v4081, %v4080
        %v4121 = vpack.c.bf16 %v4083, %v4082
        %v4122 = vpack.c.bf16 %v4085, %v4084
        %v4123 = vpack.c.bf16 %v4087, %v4086
        %v4124 = vpack.c.bf16 %v4089, %v4088
        %v4125 = vpack.c.bf16 %v4091, %v4090
        %v4126 = vpack.c.bf16 %v4093, %v4092
        %v4127 = vpack.c.bf16 %v4095, %v4094
        %v4129 = vsel %vm3391, %v4096, 0
        %v4132 = vsel %vm3391, %v4097, 0
        %4134 = vmatprep.subr.bf16.mxu0 0
        %4135 = vmatpush1.bf16.msra.mxu0 %v2575
        %4136 = vmatprep.subr.bf16.mxu0 0
        %4137 = vmatpush1.bf16.msra.mxu0 %v2576
        %4138 = vmatprep.subr.bf16.mxu0 0
        %4139 = vmatpush1.bf16.msra.mxu0 0
        %4140 = vmatprep.subr.bf16.mxu0 0
        %4141 = vmatpush1.bf16.msra.mxu0 0
        %4142 = vmatprep.subr.bf16.mxu0 0
        %4143 = vmatpush1.bf16.msra.mxu0 0
        %4144 = vmatprep.subr.bf16.mxu0 0
        %4145 = vmatpush1.bf16.msra.mxu0 0
        %4146 = vmatprep.subr.bf16.mxu0 0
        %4147 = vmatpush1.bf16.msra.mxu0 0
        %4148 = vmatprep.subr.bf16.mxu0 0
        %4149 = vmatpush1.bf16.msra.mxu0 0
        %4150 = vmatprep.subr.bf16.mxu0 0
        %4151 = vmatpush1.bf16.msra.mxu0 0
        %4152 = vmatprep.subr.bf16.mxu0 0
        %4153 = vmatpush1.bf16.msra.mxu0 0
        %4154 = vmatprep.subr.bf16.mxu0 0
        %4155 = vmatpush1.bf16.msra.mxu0 0
        %4156 = vmatprep.subr.bf16.mxu0 0
        %4157 = vmatpush1.bf16.msra.mxu0 0
        %4158 = vmatprep.subr.bf16.mxu0 0
        %4159 = vmatpush1.bf16.msra.mxu0 0
        %4160 = vmatprep.subr.bf16.mxu0 0
        %4161 = vmatpush1.bf16.msra.mxu0 0
        %4162 = vmatprep.subr.bf16.mxu0 0
        %4163 = vmatpush1.bf16.msra.mxu0 0
        %4164 = vmatprep.subr.bf16.mxu0 0
        %4165 = vmatpush1.bf16.msra.mxu0 0
        %4166 = vmatprep.mubr.bf16.mxu0 0
        %4167 = vmatmul.mubr.bf16.gmra.mrb[0].mxu0 %v4129
        %v4168 = vpop.f32.mrb[0].mxu0
        %v4169 = vadd.f32 0.0, %v4168
        %v4170 = vpop.f32.mrb[0].mxu0
        %v4171 = vpop.f32.mrb[0].mxu0
        %v4172 = vadd.f32 0.0, %v4171
        %v4173 = vpop.f32.mrb[0].mxu0
        %4174 = vmatprep.mubr.bf16.mxu0 0
        %4175 = vmatmul.mubr.bf16.gmra.mrb[0].mxu0 %v4132
        %v4176 = vpop.f32.mrb[0].mxu0
        %v4177 = vadd.f32 0.0, %v4176
        %v4178 = vpop.f32.mrb[0].mxu0
        %v4179 = vpop.f32.mrb[0].mxu0
        %v4180 = vadd.f32 0.0, %v4179
        %v4181 = vpop.f32.mrb[0].mxu0
        %4182 = vdwg.mxu0
        %v4184 = vsel %vm3391, %v4098, 0
        %v4187 = vsel %vm3391, %v4099, 0
        %4189 = vmatprep.subr.bf16.mxu0 0
        %4190 = vmatpush1.bf16.msra.mxu0 %v2577
        %4191 = vmatprep.subr.bf16.mxu0 0
        %4192 = vmatpush1.bf16.msra.mxu0 %v2578
        %4193 = vmatprep.subr.bf16.mxu0 0
        %4194 = vmatpush1.bf16.msra.mxu0 0
        %4195 = vmatprep.subr.bf16.mxu0 0
        %4196 = vmatpush1.bf16.msra.mxu0 0
        %4197 = vmatprep.subr.bf16.mxu0 0
        %4198 = vmatpush1.bf16.msra.mxu0 0
        %4199 = vmatprep.subr.bf16.mxu0 0
        %4200 = vmatpush1.bf16.msra.mxu0 0
        %4201 = vmatprep.subr.bf16.mxu0 0
        %4202 = vmatpush1.bf16.msra.mxu0 0
        %4203 = vmatprep.subr.bf16.mxu0 0
        %4204 = vmatpush1.bf16.msra.mxu0 0
        %4205 = vmatprep.subr.bf16.mxu0 0
        %4206 = vmatpush1.bf16.msra.mxu0 0
        %4207 = vmatprep.subr.bf16.mxu0 0
        %4208 = vmatpush1.bf16.msra.mxu0 0
        %4209 = vmatprep.subr.bf16.mxu0 0
        %4210 = vmatpush1.bf16.msra.mxu0 0
        %4211 = vmatprep.subr.bf16.mxu0 0
        %4212 = vmatpush1.bf16.msra.mxu0 0
        %4213 = vmatprep.subr.bf16.mxu0 0
        %4214 = vmatpush1.bf16.msra.mxu0 0
        %4215 = vmatprep.subr.bf16.mxu0 0
        %4216 = vmatpush1.bf16.msra.mxu0 0
        %4217 = vmatprep.subr.bf16.mxu0 0
        %4218 = vmatpush1.bf16.msra.mxu0 0
        %4219 = vmatprep.subr.bf16.mxu0 0
        %4220 = vmatpush1.bf16.msra.mxu0 0
        %4221 = vmatprep.mubr.bf16.mxu0 0
        %4222 = vmatmul.mubr.bf16.gmra.mrb[0].mxu0 %v4184
        %v4223 = vpop.f32.mrb[0].mxu0
        %v4224 = vadd.f32 0.0, %v4223
        %v4225 = vpop.f32.mrb[0].mxu0
        %v4226 = vpop.f32.mrb[0].mxu0
        %v4227 = vadd.f32 0.0, %v4226
        %v4228 = vpop.f32.mrb[0].mxu0
        %4229 = vmatprep.mubr.bf16.mxu0 0
        %4230 = vmatmul.mubr.bf16.gmra.mrb[0].mxu0 %v4187
        %v4231 = vpop.f32.mrb[0].mxu0
        %v4232 = vadd.f32 0.0, %v4231
        %v4233 = vpop.f32.mrb[0].mxu0
        %v4234 = vpop.f32.mrb[0].mxu0
        %v4235 = vadd.f32 0.0, %v4234
        %v4236 = vpop.f32.mrb[0].mxu0
        %4237 = vdwg.mxu0
        %v4239 = vsel %vm3391, %v4100, 0
        %v4242 = vsel %vm3391, %v4101, 0
        %4244 = vmatprep.subr.bf16.mxu0 0
        %4245 = vmatpush1.bf16.msra.mxu0 %v2579
        %4246 = vmatprep.subr.bf16.mxu0 0
        %4247 = vmatpush1.bf16.msra.mxu0 %v2580
        %4248 = vmatprep.subr.bf16.mxu0 0
        %4249 = vmatpush1.bf16.msra.mxu0 0
        %4250 = vmatprep.subr.bf16.mxu0 0
        %4251 = vmatpush1.bf16.msra.mxu0 0
        %4252 = vmatprep.subr.bf16.mxu0 0
        %4253 = vmatpush1.bf16.msra.mxu0 0
        %4254 = vmatprep.subr.bf16.mxu0 0
        %4255 = vmatpush1.bf16.msra.mxu0 0
        %4256 = vmatprep.subr.bf16.mxu0 0
        %4257 = vmatpush1.bf16.msra.mxu0 0
        %4258 = vmatprep.subr.bf16.mxu0 0
        %4259 = vmatpush1.bf16.msra.mxu0 0
        %4260 = vmatprep.subr.bf16.mxu0 0
        %4261 = vmatpush1.bf16.msra.mxu0 0
        %4262 = vmatprep.subr.bf16.mxu0 0
        %4263 = vmatpush1.bf16.msra.mxu0 0
        %4264 = vmatprep.subr.bf16.mxu0 0
        %4265 = vmatpush1.bf16.msra.mxu0 0
        %4266 = vmatprep.subr.bf16.mxu0 0
        %4267 = vmatpush1.bf16.msra.mxu0 0
        %4268 = vmatprep.subr.bf16.mxu0 0
        %4269 = vmatpush1.bf16.msra.mxu0 0
        %4270 = vmatprep.subr.bf16.mxu0 0
        %4271 = vmatpush1.bf16.msra.mxu0 0
        %4272 = vmatprep.subr.bf16.mxu0 0
        %4273 = vmatpush1.bf16.msra.mxu0 0
        %4274 = vmatprep.subr.bf16.mxu0 0
        %4275 = vmatpush1.bf16.msra.mxu0 0
        %4276 = vmatprep.mubr.bf16.mxu0 0
        %4277 = vmatmul.mubr.bf16.gmra.mrb[0].mxu0 %v4239
        %v4278 = vpop.f32.mrb[0].mxu0
        %v4279 = vadd.f32 0.0, %v4278
        %v4280 = vpop.f32.mrb[0].mxu0
        %v4281 = vpop.f32.mrb[0].mxu0
        %v4282 = vadd.f32 0.0, %v4281
        %v4283 = vpop.f32.mrb[0].mxu0
        %4284 = vmatprep.mubr.bf16.mxu0 0
        %4285 = vmatmul.mubr.bf16.gmra.mrb[0].mxu0 %v4242
        %v4286 = vpop.f32.mrb[0].mxu0
        %v4287 = vadd.f32 0.0, %v4286
        %v4288 = vpop.f32.mrb[0].mxu0
        %v4289 = vpop.f32.mrb[0].mxu0
        %v4290 = vadd.f32 0.0, %v4289
        %v4291 = vpop.f32.mrb[0].mxu0
        %4292 = vdwg.mxu0
        %v4294 = vsel %vm3391, %v4102, 0
        %v4297 = vsel %vm3391, %v4103, 0
        %4299 = vmatprep.subr.bf16.mxu0 0
        %4300 = vmatpush1.bf16.msra.mxu0 %v2581
        %4301 = vmatprep.subr.bf16.mxu0 0
        %4302 = vmatpush1.bf16.msra.mxu0 %v2582
        %4303 = vmatprep.subr.bf16.mxu0 0
        %4304 = vmatpush1.bf16.msra.mxu0 0
        %4305 = vmatprep.subr.bf16.mxu0 0
        %4306 = vmatpush1.bf16.msra.mxu0 0
        %4307 = vmatprep.subr.bf16.mxu0 0
        %4308 = vmatpush1.bf16.msra.mxu0 0
        %4309 = vmatprep.subr.bf16.mxu0 0
        %4310 = vmatpush1.bf16.msra.mxu0 0
        %4311 = vmatprep.subr.bf16.mxu0 0
        %4312 = vmatpush1.bf16.msra.mxu0 0
        %4313 = vmatprep.subr.bf16.mxu0 0
        %4314 = vmatpush1.bf16.msra.mxu0 0
        %4315 = vmatprep.subr.bf16.mxu0 0
        %4316 = vmatpush1.bf16.msra.mxu0 0
        %4317 = vmatprep.subr.bf16.mxu0 0
        %4318 = vmatpush1.bf16.msra.mxu0 0
        %4319 = vmatprep.subr.bf16.mxu0 0
        %4320 = vmatpush1.bf16.msra.mxu0 0
        %4321 = vmatprep.subr.bf16.mxu0 0
        %4322 = vmatpush1.bf16.msra.mxu0 0
        %4323 = vmatprep.subr.bf16.mxu0 0
        %4324 = vmatpush1.bf16.msra.mxu0 0
        %4325 = vmatprep.subr.bf16.mxu0 0
        %4326 = vmatpush1.bf16.msra.mxu0 0
        %4327 = vmatprep.subr.bf16.mxu0 0
        %4328 = vmatpush1.bf16.msra.mxu0 0
        %4329 = vmatprep.subr.bf16.mxu0 0
        %4330 = vmatpush1.bf16.msra.mxu0 0
        %4331 = vmatprep.mubr.bf16.mxu0 0
        %4332 = vmatmul.mubr.bf16.gmra.mrb[0].mxu0 %v4294
        %v4333 = vpop.f32.mrb[0].mxu0
        %v4334 = vadd.f32 0.0, %v4333
        %v4335 = vpop.f32.mrb[0].mxu0
        %v4336 = vpop.f32.mrb[0].mxu0
        %v4337 = vadd.f32 0.0, %v4336
        %v4338 = vpop.f32.mrb[0].mxu0
        %4339 = vmatprep.mubr.bf16.mxu0 0
        %4340 = vmatmul.mubr.bf16.gmra.mrb[0].mxu0 %v4297
        %v4341 = vpop.f32.mrb[0].mxu0
        %v4342 = vadd.f32 0.0, %v4341
        %v4343 = vpop.f32.mrb[0].mxu0
        %v4344 = vpop.f32.mrb[0].mxu0
        %v4345 = vadd.f32 0.0, %v4344
        %v4346 = vpop.f32.mrb[0].mxu0
        %4347 = vdwg.mxu0
        %v4349 = vsel %vm3391, %v4104, 0
        %v4352 = vsel %vm3391, %v4105, 0
        %4354 = vmatprep.subr.bf16.mxu0 0
        %4355 = vmatpush1.bf16.msra.mxu0 %v2583
        %4356 = vmatprep.subr.bf16.mxu0 0
        %4357 = vmatpush1.bf16.msra.mxu0 %v2584
        %4358 = vmatprep.subr.bf16.mxu0 0
        %4359 = vmatpush1.bf16.msra.mxu0 0
        %4360 = vmatprep.subr.bf16.mxu0 0
        %4361 = vmatpush1.bf16.msra.mxu0 0
        %4362 = vmatprep.subr.bf16.mxu0 0
        %4363 = vmatpush1.bf16.msra.mxu0 0
        %4364 = vmatprep.subr.bf16.mxu0 0
        %4365 = vmatpush1.bf16.msra.mxu0 0
        %4366 = vmatprep.subr.bf16.mxu0 0
        %4367 = vmatpush1.bf16.msra.mxu0 0
        %4368 = vmatprep.subr.bf16.mxu0 0
        %4369 = vmatpush1.bf16.msra.mxu0 0
        %4370 = vmatprep.subr.bf16.mxu0 0
        %4371 = vmatpush1.bf16.msra.mxu0 0
        %4372 = vmatprep.subr.bf16.mxu0 0
        %4373 = vmatpush1.bf16.msra.mxu0 0
        %4374 = vmatprep.subr.bf16.mxu0 0
        %4375 = vmatpush1.bf16.msra.mxu0 0
        %4376 = vmatprep.subr.bf16.mxu0 0
        %4377 = vmatpush1.bf16.msra.mxu0 0
        %4378 = vmatprep.subr.bf16.mxu0 0
        %4379 = vmatpush1.bf16.msra.mxu0 0
        %4380 = vmatprep.subr.bf16.mxu0 0
        %4381 = vmatpush1.bf16.msra.mxu0 0
        %4382 = vmatprep.subr.bf16.mxu0 0
        %4383 = vmatpush1.bf16.msra.mxu0 0
        %4384 = vmatprep.subr.bf16.mxu0 0
        %4385 = vmatpush1.bf16.msra.mxu0 0
        %4386 = vmatprep.mubr.bf16.mxu0 0
        %4387 = vmatmul.mubr.bf16.gmra.mrb[0].mxu0 %v4349
        %v4388 = vpop.f32.mrb[0].mxu0
        %v4389 = vadd.f32 0.0, %v4388
        %v4390 = vpop.f32.mrb[0].mxu0
        %v4391 = vpop.f32.mrb[0].mxu0
        %v4392 = vadd.f32 0.0, %v4391
        %v4393 = vpop.f32.mrb[0].mxu0
        %4394 = vmatprep.mubr.bf16.mxu0 0
        %4395 = vmatmul.mubr.bf16.gmra.mrb[0].mxu0 %v4352
        %v4396 = vpop.f32.mrb[0].mxu0
        %v4397 = vadd.f32 0.0, %v4396
        %v4398 = vpop.f32.mrb[0].mxu0
        %v4399 = vpop.f32.mrb[0].mxu0
        %v4400 = vadd.f32 0.0, %v4399
        %v4401 = vpop.f32.mrb[0].mxu0
        %4402 = vdwg.mxu0
        %v4404 = vsel %vm3391, %v4106, 0
        %v4407 = vsel %vm3391, %v4107, 0
        %4409 = vmatprep.subr.bf16.mxu0 0
        %4410 = vmatpush1.bf16.msra.mxu0 %v2585
        %4411 = vmatprep.subr.bf16.mxu0 0
        %4412 = vmatpush1.bf16.msra.mxu0 %v2586
        %4413 = vmatprep.subr.bf16.mxu0 0
        %4414 = vmatpush1.bf16.msra.mxu0 0
        %4415 = vmatprep.subr.bf16.mxu0 0
        %4416 = vmatpush1.bf16.msra.mxu0 0
        %4417 = vmatprep.subr.bf16.mxu0 0
        %4418 = vmatpush1.bf16.msra.mxu0 0
        %4419 = vmatprep.subr.bf16.mxu0 0
        %4420 = vmatpush1.bf16.msra.mxu0 0
        %4421 = vmatprep.subr.bf16.mxu0 0
        %4422 = vmatpush1.bf16.msra.mxu0 0
        %4423 = vmatprep.subr.bf16.mxu0 0
        %4424 = vmatpush1.bf16.msra.mxu0 0
        %4425 = vmatprep.subr.bf16.mxu0 0
        %4426 = vmatpush1.bf16.msra.mxu0 0
        %4427 = vmatprep.subr.bf16.mxu0 0
        %4428 = vmatpush1.bf16.msra.mxu0 0
        %4429 = vmatprep.subr.bf16.mxu0 0
        %4430 = vmatpush1.bf16.msra.mxu0 0
        %4431 = vmatprep.subr.bf16.mxu0 0
        %4432 = vmatpush1.bf16.msra.mxu0 0
        %4433 = vmatprep.subr.bf16.mxu0 0
        %4434 = vmatpush1.bf16.msra.mxu0 0
        %4435 = vmatprep.subr.bf16.mxu0 0
        %4436 = vmatpush1.bf16.msra.mxu0 0
        %4437 = vmatprep.subr.bf16.mxu0 0
        %4438 = vmatpush1.bf16.msra.mxu0 0
        %4439 = vmatprep.subr.bf16.mxu0 0
        %4440 = vmatpush1.bf16.msra.mxu0 0
        %4441 = vmatprep.mubr.bf16.mxu0 0
        %4442 = vmatmul.mubr.bf16.gmra.mrb[0].mxu0 %v4404
        %v4443 = vpop.f32.mrb[0].mxu0
        %v4444 = vadd.f32 0.0, %v4443
        %v4445 = vpop.f32.mrb[0].mxu0
        %v4446 = vpop.f32.mrb[0].mxu0
        %v4447 = vadd.f32 0.0, %v4446
        %v4448 = vpop.f32.mrb[0].mxu0
        %4449 = vmatprep.mubr.bf16.mxu0 0
        %4450 = vmatmul.mubr.bf16.gmra.mrb[0].mxu0 %v4407
        %v4451 = vpop.f32.mrb[0].mxu0
        %v4452 = vadd.f32 0.0, %v4451
        %v4453 = vpop.f32.mrb[0].mxu0
        %v4454 = vpop.f32.mrb[0].mxu0
        %v4455 = vadd.f32 0.0, %v4454
        %v4456 = vpop.f32.mrb[0].mxu0
        %4457 = vdwg.mxu0
        %v4459 = vsel %vm3391, %v4108, 0
        %v4462 = vsel %vm3391, %v4109, 0
        %4464 = vmatprep.subr.bf16.mxu0 0
        %4465 = vmatpush1.bf16.msra.mxu0 %v2587
        %4466 = vmatprep.subr.bf16.mxu0 0
        %4467 = vmatpush1.bf16.msra.mxu0 %v2588
        %4468 = vmatprep.subr.bf16.mxu0 0
        %4469 = vmatpush1.bf16.msra.mxu0 0
        %4470 = vmatprep.subr.bf16.mxu0 0
        %4471 = vmatpush1.bf16.msra.mxu0 0
        %4472 = vmatprep.subr.bf16.mxu0 0
        %4473 = vmatpush1.bf16.msra.mxu0 0
        %4474 = vmatprep.subr.bf16.mxu0 0
        %4475 = vmatpush1.bf16.msra.mxu0 0
        %4476 = vmatprep.subr.bf16.mxu0 0
        %4477 = vmatpush1.bf16.msra.mxu0 0
        %4478 = vmatprep.subr.bf16.mxu0 0
        %4479 = vmatpush1.bf16.msra.mxu0 0
        %4480 = vmatprep.subr.bf16.mxu0 0
        %4481 = vmatpush1.bf16.msra.mxu0 0
        %4482 = vmatprep.subr.bf16.mxu0 0
        %4483 = vmatpush1.bf16.msra.mxu0 0
        %4484 = vmatprep.subr.bf16.mxu0 0
        %4485 = vmatpush1.bf16.msra.mxu0 0
        %4486 = vmatprep.subr.bf16.mxu0 0
        %4487 = vmatpush1.bf16.msra.mxu0 0
        %4488 = vmatprep.subr.bf16.mxu0 0
        %4489 = vmatpush1.bf16.msra.mxu0 0
        %4490 = vmatprep.subr.bf16.mxu0 0
        %4491 = vmatpush1.bf16.msra.mxu0 0
        %4492 = vmatprep.subr.bf16.mxu0 0
        %4493 = vmatpush1.bf16.msra.mxu0 0
        %4494 = vmatprep.subr.bf16.mxu0 0
        %4495 = vmatpush1.bf16.msra.mxu0 0
        %4496 = vmatprep.mubr.bf16.mxu0 0
        %4497 = vmatmul.mubr.bf16.gmra.mrb[0].mxu0 %v4459
        %v4498 = vpop.f32.mrb[0].mxu0
        %v4499 = vadd.f32 0.0, %v4498
        %v4500 = vpop.f32.mrb[0].mxu0
        %v4501 = vpop.f32.mrb[0].mxu0
        %v4502 = vadd.f32 0.0, %v4501
        %v4503 = vpop.f32.mrb[0].mxu0
        %4504 = vmatprep.mubr.bf16.mxu0 0
        %4505 = vmatmul.mubr.bf16.gmra.mrb[0].mxu0 %v4462
        %v4506 = vpop.f32.mrb[0].mxu0
        %v4507 = vadd.f32 0.0, %v4506
        %v4508 = vpop.f32.mrb[0].mxu0
        %v4509 = vpop.f32.mrb[0].mxu0
        %v4510 = vadd.f32 0.0, %v4509
        %v4511 = vpop.f32.mrb[0].mxu0
        %4512 = vdwg.mxu0
        %v4514 = vsel %vm3391, %v4110, 0
        %v4517 = vsel %vm3391, %v4111, 0
        %4519 = vmatprep.subr.bf16.mxu0 0
        %4520 = vmatpush1.bf16.msra.mxu0 %v2589
        %4521 = vmatprep.subr.bf16.mxu0 0
        %4522 = vmatpush1.bf16.msra.mxu0 %v2590
        %4523 = vmatprep.subr.bf16.mxu0 0
        %4524 = vmatpush1.bf16.msra.mxu0 0
        %4525 = vmatprep.subr.bf16.mxu0 0
        %4526 = vmatpush1.bf16.msra.mxu0 0
        %4527 = vmatprep.subr.bf16.mxu0 0
        %4528 = vmatpush1.bf16.msra.mxu0 0
        %4529 = vmatprep.subr.bf16.mxu0 0
        %4530 = vmatpush1.bf16.msra.mxu0 0
        %4531 = vmatprep.subr.bf16.mxu0 0
        %4532 = vmatpush1.bf16.msra.mxu0 0
        %4533 = vmatprep.subr.bf16.mxu0 0
        %4534 = vmatpush1.bf16.msra.mxu0 0
        %4535 = vmatprep.subr.bf16.mxu0 0
        %4536 = vmatpush1.bf16.msra.mxu0 0
        %4537 = vmatprep.subr.bf16.mxu0 0
        %4538 = vmatpush1.bf16.msra.mxu0 0
        %4539 = vmatprep.subr.bf16.mxu0 0
        %4540 = vmatpush1.bf16.msra.mxu0 0
        %4541 = vmatprep.subr.bf16.mxu0 0
        %4542 = vmatpush1.bf16.msra.mxu0 0
        %4543 = vmatprep.subr.bf16.mxu0 0
        %4544 = vmatpush1.bf16.msra.mxu0 0
        %4545 = vmatprep.subr.bf16.mxu0 0
        %4546 = vmatpush1.bf16.msra.mxu0 0
        %4547 = vmatprep.subr.bf16.mxu0 0
        %4548 = vmatpush1.bf16.msra.mxu0 0
        %4549 = vmatprep.subr.bf16.mxu0 0
        %4550 = vmatpush1.bf16.msra.mxu0 0
        %4551 = vmatprep.mubr.bf16.mxu0 0
        %4552 = vmatmul.mubr.bf16.gmra.mrb[0].mxu0 %v4514
        %v4553 = vpop.f32.mrb[0].mxu0
        %v4554 = vadd.f32 0.0, %v4553
        %v4555 = vpop.f32.mrb[0].mxu0
        %v4556 = vpop.f32.mrb[0].mxu0
        %v4557 = vadd.f32 0.0, %v4556
        %v4558 = vpop.f32.mrb[0].mxu0
        %4559 = vmatprep.mubr.bf16.mxu0 0
        %4560 = vmatmul.mubr.bf16.gmra.mrb[0].mxu0 %v4517
        %v4561 = vpop.f32.mrb[0].mxu0
        %v4562 = vadd.f32 0.0, %v4561
        %v4563 = vpop.f32.mrb[0].mxu0
        %v4564 = vpop.f32.mrb[0].mxu0
        %v4565 = vadd.f32 0.0, %v4564
        %v4566 = vpop.f32.mrb[0].mxu0
        %4567 = vdwg.mxu0
        %v4569 = vsel %vm3391, %v4112, 0
        %v4572 = vsel %vm3391, %v4113, 0
        %4574 = vmatprep.subr.bf16.mxu0 0
        %4575 = vmatpush1.bf16.msra.mxu0 %v2591
        %4576 = vmatprep.subr.bf16.mxu0 0
        %4577 = vmatpush1.bf16.msra.mxu0 %v2592
        %4578 = vmatprep.subr.bf16.mxu0 0
        %4579 = vmatpush1.bf16.msra.mxu0 0
        %4580 = vmatprep.subr.bf16.mxu0 0
        %4581 = vmatpush1.bf16.msra.mxu0 0
        %4582 = vmatprep.subr.bf16.mxu0 0
        %4583 = vmatpush1.bf16.msra.mxu0 0
        %4584 = vmatprep.subr.bf16.mxu0 0
        %4585 = vmatpush1.bf16.msra.mxu0 0
        %4586 = vmatprep.subr.bf16.mxu0 0
        %4587 = vmatpush1.bf16.msra.mxu0 0
        %4588 = vmatprep.subr.bf16.mxu0 0
        %4589 = vmatpush1.bf16.msra.mxu0 0
        %4590 = vmatprep.subr.bf16.mxu0 0
        %4591 = vmatpush1.bf16.msra.mxu0 0
        %4592 = vmatprep.subr.bf16.mxu0 0
        %4593 = vmatpush1.bf16.msra.mxu0 0
        %4594 = vmatprep.subr.bf16.mxu0 0
        %4595 = vmatpush1.bf16.msra.mxu0 0
        %4596 = vmatprep.subr.bf16.mxu0 0
        %4597 = vmatpush1.bf16.msra.mxu0 0
        %4598 = vmatprep.subr.bf16.mxu0 0
        %4599 = vmatpush1.bf16.msra.mxu0 0
        %4600 = vmatprep.subr.bf16.mxu0 0
        %4601 = vmatpush1.bf16.msra.mxu0 0
        %4602 = vmatprep.subr.bf16.mxu0 0
        %4603 = vmatpush1.bf16.msra.mxu0 0
        %4604 = vmatprep.subr.bf16.mxu0 0
        %4605 = vmatpush1.bf16.msra.mxu0 0
        %4606 = vmatprep.mubr.bf16.mxu0 0
        %4607 = vmatmul.mubr.bf16.gmra.mrb[0].mxu0 %v4569
        %v4608 = vpop.f32.mrb[0].mxu0
        %v4609 = vadd.f32 0.0, %v4608
        %v4610 = vpop.f32.mrb[0].mxu0
        %v4611 = vpop.f32.mrb[0].mxu0
        %v4612 = vadd.f32 0.0, %v4611
        %v4613 = vpop.f32.mrb[0].mxu0
        %4614 = vmatprep.mubr.bf16.mxu0 0
        %4615 = vmatmul.mubr.bf16.gmra.mrb[0].mxu0 %v4572
        %v4616 = vpop.f32.mrb[0].mxu0
        %v4617 = vadd.f32 0.0, %v4616
        %v4618 = vpop.f32.mrb[0].mxu0
        %v4619 = vpop.f32.mrb[0].mxu0
        %v4620 = vadd.f32 0.0, %v4619
        %v4621 = vpop.f32.mrb[0].mxu0
        %4622 = vdwg.mxu0
        %v4624 = vsel %vm3391, %v4114, 0
        %v4627 = vsel %vm3391, %v4115, 0
        %4629 = vmatprep.subr.bf16.mxu0 0
        %4630 = vmatpush1.bf16.msra.mxu0 %v2593
        %4631 = vmatprep.subr.bf16.mxu0 0
        %4632 = vmatpush1.bf16.msra.mxu0 %v2594
        %4633 = vmatprep.subr.bf16.mxu0 0
        %4634 = vmatpush1.bf16.msra.mxu0 0
        %4635 = vmatprep.subr.bf16.mxu0 0
        %4636 = vmatpush1.bf16.msra.mxu0 0
        %4637 = vmatprep.subr.bf16.mxu0 0
        %4638 = vmatpush1.bf16.msra.mxu0 0
        %4639 = vmatprep.subr.bf16.mxu0 0
        %4640 = vmatpush1.bf16.msra.mxu0 0
        %4641 = vmatprep.subr.bf16.mxu0 0
        %4642 = vmatpush1.bf16.msra.mxu0 0
        %4643 = vmatprep.subr.bf16.mxu0 0
        %4644 = vmatpush1.bf16.msra.mxu0 0
        %4645 = vmatprep.subr.bf16.mxu0 0
        %4646 = vmatpush1.bf16.msra.mxu0 0
        %4647 = vmatprep.subr.bf16.mxu0 0
        %4648 = vmatpush1.bf16.msra.mxu0 0
        %4649 = vmatprep.subr.bf16.mxu0 0
        %4650 = vmatpush1.bf16.msra.mxu0 0
        %4651 = vmatprep.subr.bf16.mxu0 0
        %4652 = vmatpush1.bf16.msra.mxu0 0
        %4653 = vmatprep.subr.bf16.mxu0 0
        %4654 = vmatpush1.bf16.msra.mxu0 0
        %4655 = vmatprep.subr.bf16.mxu0 0
        %4656 = vmatpush1.bf16.msra.mxu0 0
        %4657 = vmatprep.subr.bf16.mxu0 0
        %4658 = vmatpush1.bf16.msra.mxu0 0
        %4659 = vmatprep.subr.bf16.mxu0 0
        %4660 = vmatpush1.bf16.msra.mxu0 0
        %4661 = vmatprep.mubr.bf16.mxu0 0
        %4662 = vmatmul.mubr.bf16.gmra.mrb[0].mxu0 %v4624
        %v4663 = vpop.f32.mrb[0].mxu0
        %v4664 = vadd.f32 0.0, %v4663
        %v4665 = vpop.f32.mrb[0].mxu0
        %v4666 = vpop.f32.mrb[0].mxu0
        %v4667 = vadd.f32 0.0, %v4666
        %v4668 = vpop.f32.mrb[0].mxu0
        %4669 = vmatprep.mubr.bf16.mxu0 0
        %4670 = vmatmul.mubr.bf16.gmra.mrb[0].mxu0 %v4627
        %v4671 = vpop.f32.mrb[0].mxu0
        %v4672 = vadd.f32 0.0, %v4671
        %v4673 = vpop.f32.mrb[0].mxu0
        %v4674 = vpop.f32.mrb[0].mxu0
        %v4675 = vadd.f32 0.0, %v4674
        %v4676 = vpop.f32.mrb[0].mxu0
        %4677 = vdwg.mxu0
        %v4679 = vsel %vm3391, %v4116, 0
        %v4682 = vsel %vm3391, %v4117, 0
        %4684 = vmatprep.subr.bf16.mxu0 0
        %4685 = vmatpush1.bf16.msra.mxu0 %v2595
        %4686 = vmatprep.subr.bf16.mxu0 0
        %4687 = vmatpush1.bf16.msra.mxu0 %v2596
        %4688 = vmatprep.subr.bf16.mxu0 0
        %4689 = vmatpush1.bf16.msra.mxu0 0
        %4690 = vmatprep.subr.bf16.mxu0 0
        %4691 = vmatpush1.bf16.msra.mxu0 0
        %4692 = vmatprep.subr.bf16.mxu0 0
        %4693 = vmatpush1.bf16.msra.mxu0 0
        %4694 = vmatprep.subr.bf16.mxu0 0
        %4695 = vmatpush1.bf16.msra.mxu0 0
        %4696 = vmatprep.subr.bf16.mxu0 0
        %4697 = vmatpush1.bf16.msra.mxu0 0
        %4698 = vmatprep.subr.bf16.mxu0 0
        %4699 = vmatpush1.bf16.msra.mxu0 0
        %4700 = vmatprep.subr.bf16.mxu0 0
        %4701 = vmatpush1.bf16.msra.mxu0 0
        %4702 = vmatprep.subr.bf16.mxu0 0
        %4703 = vmatpush1.bf16.msra.mxu0 0
        %4704 = vmatprep.subr.bf16.mxu0 0
        %4705 = vmatpush1.bf16.msra.mxu0 0
        %4706 = vmatprep.subr.bf16.mxu0 0
        %4707 = vmatpush1.bf16.msra.mxu0 0
        %4708 = vmatprep.subr.bf16.mxu0 0
        %4709 = vmatpush1.bf16.msra.mxu0 0
        %4710 = vmatprep.subr.bf16.mxu0 0
        %4711 = vmatpush1.bf16.msra.mxu0 0
        %4712 = vmatprep.subr.bf16.mxu0 0
        %4713 = vmatpush1.bf16.msra.mxu0 0
        %4714 = vmatprep.subr.bf16.mxu0 0
        %4715 = vmatpush1.bf16.msra.mxu0 0
        %4716 = vmatprep.mubr.bf16.mxu0 0
        %4717 = vmatmul.mubr.bf16.gmra.mrb[0].mxu0 %v4679
        %v4718 = vpop.f32.mrb[0].mxu0
        %v4719 = vadd.f32 0.0, %v4718
        %v4720 = vpop.f32.mrb[0].mxu0
        %v4721 = vpop.f32.mrb[0].mxu0
        %v4722 = vadd.f32 0.0, %v4721
        %v4723 = vpop.f32.mrb[0].mxu0
        %4724 = vmatprep.mubr.bf16.mxu0 0
        %4725 = vmatmul.mubr.bf16.gmra.mrb[0].mxu0 %v4682
        %v4726 = vpop.f32.mrb[0].mxu0
        %v4727 = vadd.f32 0.0, %v4726
        %v4728 = vpop.f32.mrb[0].mxu0
        %v4729 = vpop.f32.mrb[0].mxu0
        %v4730 = vadd.f32 0.0, %v4729
        %v4731 = vpop.f32.mrb[0].mxu0
        %4732 = vdwg.mxu0
        %v4734 = vsel %vm3391, %v4118, 0
        %v4737 = vsel %vm3391, %v4119, 0
        %4739 = vmatprep.subr.bf16.mxu0 0
        %4740 = vmatpush1.bf16.msra.mxu0 %v2597
        %4741 = vmatprep.subr.bf16.mxu0 0
        %4742 = vmatpush1.bf16.msra.mxu0 %v2598
        %4743 = vmatprep.subr.bf16.mxu0 0
        %4744 = vmatpush1.bf16.msra.mxu0 0
        %4745 = vmatprep.subr.bf16.mxu0 0
        %4746 = vmatpush1.bf16.msra.mxu0 0
        %4747 = vmatprep.subr.bf16.mxu0 0
        %4748 = vmatpush1.bf16.msra.mxu0 0
        %4749 = vmatprep.subr.bf16.mxu0 0
        %4750 = vmatpush1.bf16.msra.mxu0 0
        %4751 = vmatprep.subr.bf16.mxu0 0
        %4752 = vmatpush1.bf16.msra.mxu0 0
        %4753 = vmatprep.subr.bf16.mxu0 0
        %4754 = vmatpush1.bf16.msra.mxu0 0
        %4755 = vmatprep.subr.bf16.mxu0 0
        %4756 = vmatpush1.bf16.msra.mxu0 0
        %4757 = vmatprep.subr.bf16.mxu0 0
        %4758 = vmatpush1.bf16.msra.mxu0 0
        %4759 = vmatprep.subr.bf16.mxu0 0
        %4760 = vmatpush1.bf16.msra.mxu0 0
        %4761 = vmatprep.subr.bf16.mxu0 0
        %4762 = vmatpush1.bf16.msra.mxu0 0
        %4763 = vmatprep.subr.bf16.mxu0 0
        %4764 = vmatpush1.bf16.msra.mxu0 0
        %4765 = vmatprep.subr.bf16.mxu0 0
        %4766 = vmatpush1.bf16.msra.mxu0 0
        %4767 = vmatprep.subr.bf16.mxu0 0
        %4768 = vmatpush1.bf16.msra.mxu0 0
        %4769 = vmatprep.subr.bf16.mxu0 0
        %4770 = vmatpush1.bf16.msra.mxu0 0
        %4771 = vmatprep.mubr.bf16.mxu0 0
        %4772 = vmatmul.mubr.bf16.gmra.mrb[0].mxu0 %v4734
        %v4773 = vpop.f32.mrb[0].mxu0
        %v4774 = vadd.f32 0.0, %v4773
        %v4775 = vpop.f32.mrb[0].mxu0
        %v4776 = vpop.f32.mrb[0].mxu0
        %v4777 = vadd.f32 0.0, %v4776
        %v4778 = vpop.f32.mrb[0].mxu0
        %4779 = vmatprep.mubr.bf16.mxu0 0
        %4780 = vmatmul.mubr.bf16.gmra.mrb[0].mxu0 %v4737
        %v4781 = vpop.f32.mrb[0].mxu0
        %v4782 = vadd.f32 0.0, %v4781
        %v4783 = vpop.f32.mrb[0].mxu0
        %v4784 = vpop.f32.mrb[0].mxu0
        %v4785 = vadd.f32 0.0, %v4784
        %v4786 = vpop.f32.mrb[0].mxu0
        %4787 = vdwg.mxu0
        %v4789 = vsel %vm3391, %v4120, 0
        %v4792 = vsel %vm3391, %v4121, 0
        %4794 = vmatprep.subr.bf16.mxu0 0
        %4795 = vmatpush1.bf16.msra.mxu0 %v2599
        %4796 = vmatprep.subr.bf16.mxu0 0
        %4797 = vmatpush1.bf16.msra.mxu0 %v2600
        %4798 = vmatprep.subr.bf16.mxu0 0
        %4799 = vmatpush1.bf16.msra.mxu0 0
        %4800 = vmatprep.subr.bf16.mxu0 0
        %4801 = vmatpush1.bf16.msra.mxu0 0
        %4802 = vmatprep.subr.bf16.mxu0 0
        %4803 = vmatpush1.bf16.msra.mxu0 0
        %4804 = vmatprep.subr.bf16.mxu0 0
        %4805 = vmatpush1.bf16.msra.mxu0 0
        %4806 = vmatprep.subr.bf16.mxu0 0
        %4807 = vmatpush1.bf16.msra.mxu0 0
        %4808 = vmatprep.subr.bf16.mxu0 0
        %4809 = vmatpush1.bf16.msra.mxu0 0
        %4810 = vmatprep.subr.bf16.mxu0 0
        %4811 = vmatpush1.bf16.msra.mxu0 0
        %4812 = vmatprep.subr.bf16.mxu0 0
        %4813 = vmatpush1.bf16.msra.mxu0 0
        %4814 = vmatprep.subr.bf16.mxu0 0
        %4815 = vmatpush1.bf16.msra.mxu0 0
        %4816 = vmatprep.subr.bf16.mxu0 0
        %4817 = vmatpush1.bf16.msra.mxu0 0
        %4818 = vmatprep.subr.bf16.mxu0 0
        %4819 = vmatpush1.bf16.msra.mxu0 0
        %4820 = vmatprep.subr.bf16.mxu0 0
        %4821 = vmatpush1.bf16.msra.mxu0 0
        %4822 = vmatprep.subr.bf16.mxu0 0
        %4823 = vmatpush1.bf16.msra.mxu0 0
        %4824 = vmatprep.subr.bf16.mxu0 0
        %4825 = vmatpush1.bf16.msra.mxu0 0
        %4826 = vmatprep.mubr.bf16.mxu0 0
        %4827 = vmatmul.mubr.bf16.gmra.mrb[0].mxu0 %v4789
        %v4828 = vpop.f32.mrb[0].mxu0
        %v4829 = vadd.f32 0.0, %v4828
        %v4830 = vpop.f32.mrb[0].mxu0
        %v4831 = vpop.f32.mrb[0].mxu0
        %v4832 = vadd.f32 0.0, %v4831
        %v4833 = vpop.f32.mrb[0].mxu0
        %4834 = vmatprep.mubr.bf16.mxu0 0
        %4835 = vmatmul.mubr.bf16.gmra.mrb[0].mxu0 %v4792
        %v4836 = vpop.f32.mrb[0].mxu0
        %v4837 = vadd.f32 0.0, %v4836
        %v4838 = vpop.f32.mrb[0].mxu0
        %v4839 = vpop.f32.mrb[0].mxu0
        %v4840 = vadd.f32 0.0, %v4839
        %v4841 = vpop.f32.mrb[0].mxu0
        %4842 = vdwg.mxu0
        %v4844 = vsel %vm3391, %v4122, 0
        %v4847 = vsel %vm3391, %v4123, 0
        %4849 = vmatprep.subr.bf16.mxu0 0
        %4850 = vmatpush1.bf16.msra.mxu0 %v2601
        %4851 = vmatprep.subr.bf16.mxu0 0
        %4852 = vmatpush1.bf16.msra.mxu0 %v2602
        %4853 = vmatprep.subr.bf16.mxu0 0
        %4854 = vmatpush1.bf16.msra.mxu0 0
        %4855 = vmatprep.subr.bf16.mxu0 0
        %4856 = vmatpush1.bf16.msra.mxu0 0
        %4857 = vmatprep.subr.bf16.mxu0 0
        %4858 = vmatpush1.bf16.msra.mxu0 0
        %4859 = vmatprep.subr.bf16.mxu0 0
        %4860 = vmatpush1.bf16.msra.mxu0 0
        %4861 = vmatprep.subr.bf16.mxu0 0
        %4862 = vmatpush1.bf16.msra.mxu0 0
        %4863 = vmatprep.subr.bf16.mxu0 0
        %4864 = vmatpush1.bf16.msra.mxu0 0
        %4865 = vmatprep.subr.bf16.mxu0 0
        %4866 = vmatpush1.bf16.msra.mxu0 0
        %4867 = vmatprep.subr.bf16.mxu0 0
        %4868 = vmatpush1.bf16.msra.mxu0 0
        %4869 = vmatprep.subr.bf16.mxu0 0
        %4870 = vmatpush1.bf16.msra.mxu0 0
        %4871 = vmatprep.subr.bf16.mxu0 0
        %4872 = vmatpush1.bf16.msra.mxu0 0
        %4873 = vmatprep.subr.bf16.mxu0 0
        %4874 = vmatpush1.bf16.msra.mxu0 0
        %4875 = vmatprep.subr.bf16.mxu0 0
        %4876 = vmatpush1.bf16.msra.mxu0 0
        %4877 = vmatprep.subr.bf16.mxu0 0
        %4878 = vmatpush1.bf16.msra.mxu0 0
        %4879 = vmatprep.subr.bf16.mxu0 0
        %4880 = vmatpush1.bf16.msra.mxu0 0
        %4881 = vmatprep.mubr.bf16.mxu0 0
        %4882 = vmatmul.mubr.bf16.gmra.mrb[0].mxu0 %v4844
        %v4883 = vpop.f32.mrb[0].mxu0
        %v4884 = vadd.f32 0.0, %v4883
        %v4885 = vpop.f32.mrb[0].mxu0
        %v4886 = vpop.f32.mrb[0].mxu0
        %v4887 = vadd.f32 0.0, %v4886
        %v4888 = vpop.f32.mrb[0].mxu0
        %4889 = vmatprep.mubr.bf16.mxu0 0
        %4890 = vmatmul.mubr.bf16.gmra.mrb[0].mxu0 %v4847
        %v4891 = vpop.f32.mrb[0].mxu0
        %v4892 = vadd.f32 0.0, %v4891
        %v4893 = vpop.f32.mrb[0].mxu0
        %v4894 = vpop.f32.mrb[0].mxu0
        %v4895 = vadd.f32 0.0, %v4894
        %v4896 = vpop.f32.mrb[0].mxu0
        %4897 = vdwg.mxu0
        %v4899 = vsel %vm3391, %v4124, 0
        %v4902 = vsel %vm3391, %v4125, 0
        %4904 = vmatprep.subr.bf16.mxu0 0
        %4905 = vmatpush1.bf16.msra.mxu0 %v2603
        %4906 = vmatprep.subr.bf16.mxu0 0
        %4907 = vmatpush1.bf16.msra.mxu0 %v2604
        %4908 = vmatprep.subr.bf16.mxu0 0
        %4909 = vmatpush1.bf16.msra.mxu0 0
        %4910 = vmatprep.subr.bf16.mxu0 0
        %4911 = vmatpush1.bf16.msra.mxu0 0
        %4912 = vmatprep.subr.bf16.mxu0 0
        %4913 = vmatpush1.bf16.msra.mxu0 0
        %4914 = vmatprep.subr.bf16.mxu0 0
        %4915 = vmatpush1.bf16.msra.mxu0 0
        %4916 = vmatprep.subr.bf16.mxu0 0
        %4917 = vmatpush1.bf16.msra.mxu0 0
        %4918 = vmatprep.subr.bf16.mxu0 0
        %4919 = vmatpush1.bf16.msra.mxu0 0
        %4920 = vmatprep.subr.bf16.mxu0 0
        %4921 = vmatpush1.bf16.msra.mxu0 0
        %4922 = vmatprep.subr.bf16.mxu0 0
        %4923 = vmatpush1.bf16.msra.mxu0 0
        %4924 = vmatprep.subr.bf16.mxu0 0
        %4925 = vmatpush1.bf16.msra.mxu0 0
        %4926 = vmatprep.subr.bf16.mxu0 0
        %4927 = vmatpush1.bf16.msra.mxu0 0
        %4928 = vmatprep.subr.bf16.mxu0 0
        %4929 = vmatpush1.bf16.msra.mxu0 0
        %4930 = vmatprep.subr.bf16.mxu0 0
        %4931 = vmatpush1.bf16.msra.mxu0 0
        %4932 = vmatprep.subr.bf16.mxu0 0
        %4933 = vmatpush1.bf16.msra.mxu0 0
        %4934 = vmatprep.subr.bf16.mxu0 0
        %4935 = vmatpush1.bf16.msra.mxu0 0
        %4936 = vmatprep.mubr.bf16.mxu0 0
        %4937 = vmatmul.mubr.bf16.gmra.mrb[0].mxu0 %v4899
        %v4938 = vpop.f32.mrb[0].mxu0
        %v4939 = vadd.f32 0.0, %v4938
        %v4940 = vpop.f32.mrb[0].mxu0
        %v4941 = vpop.f32.mrb[0].mxu0
        %v4942 = vadd.f32 0.0, %v4941
        %v4943 = vpop.f32.mrb[0].mxu0
        %4944 = vmatprep.mubr.bf16.mxu0 0
        %4945 = vmatmul.mubr.bf16.gmra.mrb[0].mxu0 %v4902
        %v4946 = vpop.f32.mrb[0].mxu0
        %v4947 = vadd.f32 0.0, %v4946
        %v4948 = vpop.f32.mrb[0].mxu0
        %v4949 = vpop.f32.mrb[0].mxu0
        %v4950 = vadd.f32 0.0, %v4949
        %v4951 = vpop.f32.mrb[0].mxu0
        %4952 = vdwg.mxu0
        %v4954 = vsel %vm3391, %v4126, 0
        %v4957 = vsel %vm3391, %v4127, 0
        %4959 = vmatprep.subr.bf16.mxu0 0
        %4960 = vmatpush1.bf16.msra.mxu0 %v2605
        %4961 = vmatprep.subr.bf16.mxu0 0
        %4962 = vmatpush1.bf16.msra.mxu0 %v2606
        %4963 = vmatprep.subr.bf16.mxu0 0
        %4964 = vmatpush1.bf16.msra.mxu0 0
        %4965 = vmatprep.subr.bf16.mxu0 0
        %4966 = vmatpush1.bf16.msra.mxu0 0
        %4967 = vmatprep.subr.bf16.mxu0 0
        %4968 = vmatpush1.bf16.msra.mxu0 0
        %4969 = vmatprep.subr.bf16.mxu0 0
        %4970 = vmatpush1.bf16.msra.mxu0 0
        %4971 = vmatprep.subr.bf16.mxu0 0
        %4972 = vmatpush1.bf16.msra.mxu0 0
        %4973 = vmatprep.subr.bf16.mxu0 0
        %4974 = vmatpush1.bf16.msra.mxu0 0
        %4975 = vmatprep.subr.bf16.mxu0 0
        %4976 = vmatpush1.bf16.msra.mxu0 0
        %4977 = vmatprep.subr.bf16.mxu0 0
        %4978 = vmatpush1.bf16.msra.mxu0 0
        %4979 = vmatprep.subr.bf16.mxu0 0
        %4980 = vmatpush1.bf16.msra.mxu0 0
        %4981 = vmatprep.subr.bf16.mxu0 0
        %4982 = vmatpush1.bf16.msra.mxu0 0
        %4983 = vmatprep.subr.bf16.mxu0 0
        %4984 = vmatpush1.bf16.msra.mxu0 0
        %4985 = vmatprep.subr.bf16.mxu0 0
        %4986 = vmatpush1.bf16.msra.mxu0 0
        %4987 = vmatprep.subr.bf16.mxu0 0
        %4988 = vmatpush1.bf16.msra.mxu0 0
        %4989 = vmatprep.subr.bf16.mxu0 0
        %4990 = vmatpush1.bf16.msra.mxu0 0
        %4991 = vmatprep.mubr.bf16.mxu0 0
        %4992 = vmatmul.mubr.bf16.gmra.mrb[0].mxu0 %v4954
        %v4993 = vpop.f32.mrb[0].mxu0
        %v4994 = vadd.f32 0.0, %v4993
        %v4995 = vpop.f32.mrb[0].mxu0
        %v4996 = vpop.f32.mrb[0].mxu0
        %v4997 = vadd.f32 0.0, %v4996
        %v4998 = vpop.f32.mrb[0].mxu0
        %4999 = vmatprep.mubr.bf16.mxu0 0
        %5000 = vmatmul.mubr.bf16.gmra.mrb[0].mxu0 %v4957
        %v5001 = vpop.f32.mrb[0].mxu0
        %v5002 = vadd.f32 0.0, %v5001
        %v5003 = vpop.f32.mrb[0].mxu0
        %v5004 = vpop.f32.mrb[0].mxu0
        %v5005 = vadd.f32 0.0, %v5004
        %v5006 = vpop.f32.mrb[0].mxu0
        %5007 = vdwg.mxu0
        %v5008 = vpack.c.bf16 %v4172, %v4169
        %v5009 = vpack.c.bf16 %v4612, %v4609
        %v5010 = vpack.c.bf16 %v4180, %v4177
        %v5011 = vpack.c.bf16 %v4620, %v4617
        %v5012 = vpack.c.bf16 %v4227, %v4224
        %v5013 = vpack.c.bf16 %v4667, %v4664
        %v5014 = vpack.c.bf16 %v4235, %v4232
        %v5015 = vpack.c.bf16 %v4675, %v4672
        %v5016 = vpack.c.bf16 %v4282, %v4279
        %v5017 = vpack.c.bf16 %v4722, %v4719
        %v5018 = vpack.c.bf16 %v4290, %v4287
        %v5019 = vpack.c.bf16 %v4730, %v4727
        %v5020 = vpack.c.bf16 %v4337, %v4334
        %v5021 = vpack.c.bf16 %v4777, %v4774
        %v5022 = vpack.c.bf16 %v4345, %v4342
        %v5023 = vpack.c.bf16 %v4785, %v4782
        %v5024 = vpack.c.bf16 %v4392, %v4389
        %v5025 = vpack.c.bf16 %v4832, %v4829
        %v5026 = vpack.c.bf16 %v4400, %v4397
        %v5027 = vpack.c.bf16 %v4840, %v4837
        %v5028 = vpack.c.bf16 %v4447, %v4444
        %v5029 = vpack.c.bf16 %v4887, %v4884
        %v5030 = vpack.c.bf16 %v4455, %v4452
        %v5031 = vpack.c.bf16 %v4895, %v4892
        %v5032 = vpack.c.bf16 %v4502, %v4499
        %v5033 = vpack.c.bf16 %v4942, %v4939
        %v5034 = vpack.c.bf16 %v4510, %v4507
        %v5035 = vpack.c.bf16 %v4950, %v4947
        %v5036 = vpack.c.bf16 %v4557, %v4554
        %v5037 = vpack.c.bf16 %v4997, %v4994
        %v5038 = vpack.c.bf16 %v4565, %v4562
        %v5039 = vpack.c.bf16 %v5005, %v5002
        %v5040 = vld [vmem:[%s823] sm:$0xff]
        %v5041 = vld [vmem:[%s823 + $0x8] sm:$0xff]
        %v5042 = vld [vmem:[%s823 + $0x10] sm:$0xff]
        %v5043 = vld [vmem:[%s823 + $0x18] sm:$0xff]
        %v5044 = vld [vmem:[%s823 + $0x20] sm:$0xff]
        %v5045 = vld [vmem:[%s823 + $0x28] sm:$0xff]
        %v5046 = vld [vmem:[%s823 + $0x30] sm:$0xff]
        %v5047 = vld [vmem:[%s823 + $0x38] sm:$0xff]
        %v5048 = vld [vmem:[%s823 + $0x40] sm:$0xff]
        %v5049 = vld [vmem:[%s823 + $0x48] sm:$0xff]
        %v5050 = vld [vmem:[%s823 + $0x50] sm:$0xff]
        %v5051 = vld [vmem:[%s823 + $0x58] sm:$0xff]
        %v5052 = vld [vmem:[%s823 + $0x60] sm:$0xff]
        %v5053 = vld [vmem:[%s823 + $0x68] sm:$0xff]
        %v5054 = vld [vmem:[%s823 + $0x70] sm:$0xff]
        %v5055 = vld [vmem:[%s823 + $0x78] sm:$0xff]
        %v5056 = vld [vmem:[%s823 + $0x80] sm:$0xff]
        %v5057 = vld [vmem:[%s823 + $0x88] sm:$0xff]
        %v5058 = vld [vmem:[%s823 + $0x90] sm:$0xff]
        %v5059 = vld [vmem:[%s823 + $0x98] sm:$0xff]
        %v5060 = vld [vmem:[%s823 + $0xa0] sm:$0xff]
        %v5061 = vld [vmem:[%s823 + $0xa8] sm:$0xff]
        %v5062 = vld [vmem:[%s823 + $0xb0] sm:$0xff]
        %v5063 = vld [vmem:[%s823 + $0xb8] sm:$0xff]
        %v5064 = vld [vmem:[%s823 + $0xc0] sm:$0xff]
        %v5065 = vld [vmem:[%s823 + $0xc8] sm:$0xff]
        %v5066 = vld [vmem:[%s823 + $0xd0] sm:$0xff]
        %v5067 = vld [vmem:[%s823 + $0xd8] sm:$0xff]
        %v5068 = vld [vmem:[%s823 + $0xe0] sm:$0xff]
        %v5069 = vld [vmem:[%s823 + $0xe8] sm:$0xff]
        %v5070 = vld [vmem:[%s823 + $0xf0] sm:$0xff]
        %v5071 = vld [vmem:[%s823 + $0xf8] sm:$0xff]
        %v5072 = vld [vmem:[%s832] sm:$0x3]
        %v5074 = vlaneseq
        %v5075 = vshrl.u32 %v5074, 7
        %v5076 = vsub.s32 0, %v5075
        %v5077 = vrot.slane %v5072, %v5076
        %v5078 = vlaneseq
        %v5079 = vshrl.u32 %v5078, 7
        %v5080 = vsub.s32 1, %v5079
        %v5081 = vrot.slane %v5072, %v5080
        %v5116 = vunpack.c.l.b16 %v5040
        %v5117 = vunpack.c.h.b16 %v5040
        %v5118 = vunpack.c.l.b16 %v5041
        %v5119 = vunpack.c.h.b16 %v5041
        %v5120 = vunpack.c.l.b16 %v5042
        %v5121 = vunpack.c.h.b16 %v5042
        %v5122 = vunpack.c.l.b16 %v5043
        %v5123 = vunpack.c.h.b16 %v5043
        %v5124 = vunpack.c.l.b16 %v5044
        %v5125 = vunpack.c.h.b16 %v5044
        %v5126 = vunpack.c.l.b16 %v5045
        %v5127 = vunpack.c.h.b16 %v5045
        %v5128 = vunpack.c.l.b16 %v5046
        %v5129 = vunpack.c.h.b16 %v5046
        %v5130 = vunpack.c.l.b16 %v5047
        %v5131 = vunpack.c.h.b16 %v5047
        %v5132 = vunpack.c.l.b16 %v5048
        %v5133 = vunpack.c.h.b16 %v5048
        %v5134 = vunpack.c.l.b16 %v5049
        %v5135 = vunpack.c.h.b16 %v5049
        %v5136 = vunpack.c.l.b16 %v5050
        %v5137 = vunpack.c.h.b16 %v5050
        %v5138 = vunpack.c.l.b16 %v5051
        %v5139 = vunpack.c.h.b16 %v5051
        %v5140 = vunpack.c.l.b16 %v5052
        %v5141 = vunpack.c.h.b16 %v5052
        %v5142 = vunpack.c.l.b16 %v5053
        %v5143 = vunpack.c.h.b16 %v5053
        %v5144 = vunpack.c.l.b16 %v5054
        %v5145 = vunpack.c.h.b16 %v5054
        %v5146 = vunpack.c.l.b16 %v5055
        %v5147 = vunpack.c.h.b16 %v5055
        %v5148 = vunpack.c.l.b16 %v5056
        %v5149 = vunpack.c.h.b16 %v5056
        %v5150 = vunpack.c.l.b16 %v5057
        %v5151 = vunpack.c.h.b16 %v5057
        %v5152 = vunpack.c.l.b16 %v5058
        %v5153 = vunpack.c.h.b16 %v5058
        %v5154 = vunpack.c.l.b16 %v5059
        %v5155 = vunpack.c.h.b16 %v5059
        %v5156 = vunpack.c.l.b16 %v5060
        %v5157 = vunpack.c.h.b16 %v5060
        %v5158 = vunpack.c.l.b16 %v5061
        %v5159 = vunpack.c.h.b16 %v5061
        %v5160 = vunpack.c.l.b16 %v5062
        %v5161 = vunpack.c.h.b16 %v5062
        %v5162 = vunpack.c.l.b16 %v5063
        %v5163 = vunpack.c.h.b16 %v5063
        %v5164 = vunpack.c.l.b16 %v5064
        %v5165 = vunpack.c.h.b16 %v5064
        %v5166 = vunpack.c.l.b16 %v5065
        %v5167 = vunpack.c.h.b16 %v5065
        %v5168 = vunpack.c.l.b16 %v5066
        %v5169 = vunpack.c.h.b16 %v5066
        %v5170 = vunpack.c.l.b16 %v5067
        %v5171 = vunpack.c.h.b16 %v5067
        %v5172 = vunpack.c.l.b16 %v5068
        %v5173 = vunpack.c.h.b16 %v5068
        %v5174 = vunpack.c.l.b16 %v5069
        %v5175 = vunpack.c.h.b16 %v5069
        %v5176 = vunpack.c.l.b16 %v5070
        %v5177 = vunpack.c.h.b16 %v5070
        %v5178 = vunpack.c.l.b16 %v5071
        %v5179 = vunpack.c.h.b16 %v5071
        %v5180 = vpack.c.b16 %v5118, %v5116
        %v5181 = vpack.c.b16 %v5119, %v5117
        %v5182 = vpack.c.b16 %v5122, %v5120
        %v5183 = vpack.c.b16 %v5123, %v5121
        %v5184 = vpack.c.b16 %v5126, %v5124
        %v5185 = vpack.c.b16 %v5127, %v5125
        %v5186 = vpack.c.b16 %v5130, %v5128
        %v5187 = vpack.c.b16 %v5131, %v5129
        %v5188 = vpack.c.b16 %v5134, %v5132
        %v5189 = vpack.c.b16 %v5135, %v5133
        %v5190 = vpack.c.b16 %v5138, %v5136
        %v5191 = vpack.c.b16 %v5139, %v5137
        %v5192 = vpack.c.b16 %v5142, %v5140
        %v5193 = vpack.c.b16 %v5143, %v5141
        %v5194 = vpack.c.b16 %v5146, %v5144
        %v5195 = vpack.c.b16 %v5147, %v5145
        %v5196 = vpack.c.b16 %v5150, %v5148
        %v5197 = vpack.c.b16 %v5151, %v5149
        %v5198 = vpack.c.b16 %v5154, %v5152
        %v5199 = vpack.c.b16 %v5155, %v5153
        %v5200 = vpack.c.b16 %v5158, %v5156
        %v5201 = vpack.c.b16 %v5159, %v5157
        %v5202 = vpack.c.b16 %v5162, %v5160
        %v5203 = vpack.c.b16 %v5163, %v5161
        %v5204 = vpack.c.b16 %v5166, %v5164
        %v5205 = vpack.c.b16 %v5167, %v5165
        %v5206 = vpack.c.b16 %v5170, %v5168
        %v5207 = vpack.c.b16 %v5171, %v5169
        %v5208 = vpack.c.b16 %v5174, %v5172
        %v5209 = vpack.c.b16 %v5175, %v5173
        %v5210 = vpack.c.b16 %v5178, %v5176
        %v5211 = vpack.c.b16 %v5179, %v5177
        %5244 = vmatprep.subr.bf16.mxu0 %v5181
        %5245 = vmatpush1.bf16.msra.mxu0 %v5180
        %5246 = vmatprep.subr.bf16.mxu0 %v5183
        %5247 = vmatpush1.bf16.msra.mxu0 %v5182
        %5248 = vmatprep.subr.bf16.mxu0 %v5185
        %5249 = vmatpush1.bf16.msra.mxu0 %v5184
        %5250 = vmatprep.subr.bf16.mxu0 %v5187
        %5251 = vmatpush1.bf16.msra.mxu0 %v5186
        %5252 = vmatprep.subr.bf16.mxu0 %v5189
        %5253 = vmatpush1.bf16.msra.mxu0 %v5188
        %5254 = vmatprep.subr.bf16.mxu0 %v5191
        %5255 = vmatpush1.bf16.msra.mxu0 %v5190
        %5256 = vmatprep.subr.bf16.mxu0 %v5193
        %5257 = vmatpush1.bf16.msra.mxu0 %v5192
        %5258 = vmatprep.subr.bf16.mxu0 %v5195
        %5259 = vmatpush1.bf16.msra.mxu0 %v5194
        %5260 = vmatprep.subr.bf16.mxu0 %v5197
        %5261 = vmatpush1.bf16.msra.mxu0 %v5196
        %5262 = vmatprep.subr.bf16.mxu0 %v5199
        %5263 = vmatpush1.bf16.msra.mxu0 %v5198
        %5264 = vmatprep.subr.bf16.mxu0 %v5201
        %5265 = vmatpush1.bf16.msra.mxu0 %v5200
        %5266 = vmatprep.subr.bf16.mxu0 %v5203
        %5267 = vmatpush1.bf16.msra.mxu0 %v5202
        %5268 = vmatprep.subr.bf16.mxu0 %v5205
        %5269 = vmatpush1.bf16.msra.mxu0 %v5204
        %5270 = vmatprep.subr.bf16.mxu0 %v5207
        %5271 = vmatpush1.bf16.msra.mxu0 %v5206
        %5272 = vmatprep.subr.bf16.mxu0 %v5209
        %5273 = vmatpush1.bf16.msra.mxu0 %v5208
        %5274 = vmatprep.subr.bf16.mxu0 %v5211
        %5275 = vmatpush1.bf16.msra.mxu0 %v5210
        %5276 = vmatprep.mubr.bf16.mxu0 %v5009
        %5277 = vmatmul.mubr.bf16.gmra.mrb[0].mxu0 %v5008
        %v5278 = vpop.f32.mrb[0].mxu0
        %v5279 = vadd.f32 %v5077, %v5278
        %v5280 = vpop.f32.mrb[0].mxu0
        %v5281 = vadd.f32 %v5081, %v5280
        %v5282 = vpop.f32.mrb[0].mxu0
        %v5283 = vadd.f32 %v5077, %v5282
        %v5284 = vpop.f32.mrb[0].mxu0
        %v5285 = vadd.f32 %v5081, %v5284
        %5286 = vmatprep.mubr.bf16.mxu0 %v5011
        %5287 = vmatmul.mubr.bf16.gmra.mrb[0].mxu0 %v5010
        %v5288 = vpop.f32.mrb[0].mxu0
        %v5289 = vadd.f32 %v5077, %v5288
        %v5290 = vpop.f32.mrb[0].mxu0
        %v5291 = vadd.f32 %v5081, %v5290
        %v5292 = vpop.f32.mrb[0].mxu0
        %v5293 = vadd.f32 %v5077, %v5292
        %v5294 = vpop.f32.mrb[0].mxu0
        %v5295 = vadd.f32 %v5081, %v5294
        %5296 = vmatprep.mubr.bf16.mxu0 %v5013
        %5297 = vmatmul.mubr.bf16.gmra.mrb[0].mxu0 %v5012
        %v5298 = vpop.f32.mrb[0].mxu0
        %v5299 = vadd.f32 %v5077, %v5298
        %v5300 = vpop.f32.mrb[0].mxu0
        %v5301 = vadd.f32 %v5081, %v5300
        %v5302 = vpop.f32.mrb[0].mxu0
        %v5303 = vadd.f32 %v5077, %v5302
        %v5304 = vpop.f32.mrb[0].mxu0
        %v5305 = vadd.f32 %v5081, %v5304
        %5306 = vmatprep.mubr.bf16.mxu0 %v5015
        %5307 = vmatmul.mubr.bf16.gmra.mrb[0].mxu0 %v5014
        %v5308 = vpop.f32.mrb[0].mxu0
        %v5309 = vadd.f32 %v5077, %v5308
        %v5310 = vpop.f32.mrb[0].mxu0
        %v5311 = vadd.f32 %v5081, %v5310
        %v5312 = vpop.f32.mrb[0].mxu0
        %v5313 = vadd.f32 %v5077, %v5312
        %v5314 = vpop.f32.mrb[0].mxu0
        %v5315 = vadd.f32 %v5081, %v5314
        %5316 = vmatprep.mubr.bf16.mxu0 %v5017
        %5317 = vmatmul.mubr.bf16.gmra.mrb[0].mxu0 %v5016
        %v5318 = vpop.f32.mrb[0].mxu0
        %v5319 = vadd.f32 %v5077, %v5318
        %v5320 = vpop.f32.mrb[0].mxu0
        %v5321 = vadd.f32 %v5081, %v5320
        %v5322 = vpop.f32.mrb[0].mxu0
        %v5323 = vadd.f32 %v5077, %v5322
        %v5324 = vpop.f32.mrb[0].mxu0
        %v5325 = vadd.f32 %v5081, %v5324
        %5326 = vmatprep.mubr.bf16.mxu0 %v5019
        %5327 = vmatmul.mubr.bf16.gmra.mrb[0].mxu0 %v5018
        %v5328 = vpop.f32.mrb[0].mxu0
        %v5329 = vadd.f32 %v5077, %v5328
        %v5330 = vpop.f32.mrb[0].mxu0
        %v5331 = vadd.f32 %v5081, %v5330
        %v5332 = vpop.f32.mrb[0].mxu0
        %v5333 = vadd.f32 %v5077, %v5332
        %v5334 = vpop.f32.mrb[0].mxu0
        %v5335 = vadd.f32 %v5081, %v5334
        %5336 = vmatprep.mubr.bf16.mxu0 %v5021
        %5337 = vmatmul.mubr.bf16.gmra.mrb[0].mxu0 %v5020
        %v5338 = vpop.f32.mrb[0].mxu0
        %v5339 = vadd.f32 %v5077, %v5338
        %v5340 = vpop.f32.mrb[0].mxu0
        %v5341 = vadd.f32 %v5081, %v5340
        %v5342 = vpop.f32.mrb[0].mxu0
        %v5343 = vadd.f32 %v5077, %v5342
        %v5344 = vpop.f32.mrb[0].mxu0
        %v5345 = vadd.f32 %v5081, %v5344
        %5346 = vmatprep.mubr.bf16.mxu0 %v5023
        %5347 = vmatmul.mubr.bf16.gmra.mrb[0].mxu0 %v5022
        %v5348 = vpop.f32.mrb[0].mxu0
        %v5349 = vadd.f32 %v5077, %v5348
        %v5350 = vpop.f32.mrb[0].mxu0
        %v5351 = vadd.f32 %v5081, %v5350
        %v5352 = vpop.f32.mrb[0].mxu0
        %v5353 = vadd.f32 %v5077, %v5352
        %v5354 = vpop.f32.mrb[0].mxu0
        %v5355 = vadd.f32 %v5081, %v5354
        %5356 = vmatprep.mubr.bf16.mxu0 %v5025
        %5357 = vmatmul.mubr.bf16.gmra.mrb[0].mxu0 %v5024
        %v5358 = vpop.f32.mrb[0].mxu0
        %v5359 = vadd.f32 %v5077, %v5358
        %v5360 = vpop.f32.mrb[0].mxu0
        %v5361 = vadd.f32 %v5081, %v5360
        %v5362 = vpop.f32.mrb[0].mxu0
        %v5363 = vadd.f32 %v5077, %v5362
        %v5364 = vpop.f32.mrb[0].mxu0
        %v5365 = vadd.f32 %v5081, %v5364
        %5366 = vmatprep.mubr.bf16.mxu0 %v5027
        %5367 = vmatmul.mubr.bf16.gmra.mrb[0].mxu0 %v5026
        %v5368 = vpop.f32.mrb[0].mxu0
        %v5369 = vadd.f32 %v5077, %v5368
        %v5370 = vpop.f32.mrb[0].mxu0
        %v5371 = vadd.f32 %v5081, %v5370
        %v5372 = vpop.f32.mrb[0].mxu0
        %v5373 = vadd.f32 %v5077, %v5372
        %v5374 = vpop.f32.mrb[0].mxu0
        %v5375 = vadd.f32 %v5081, %v5374
        %5376 = vmatprep.mubr.bf16.mxu0 %v5029
        %5377 = vmatmul.mubr.bf16.gmra.mrb[0].mxu0 %v5028
        %v5378 = vpop.f32.mrb[0].mxu0
        %v5379 = vadd.f32 %v5077, %v5378
        %v5380 = vpop.f32.mrb[0].mxu0
        %v5381 = vadd.f32 %v5081, %v5380
        %v5382 = vpop.f32.mrb[0].mxu0
        %v5383 = vadd.f32 %v5077, %v5382
        %v5384 = vpop.f32.mrb[0].mxu0
        %v5385 = vadd.f32 %v5081, %v5384
        %5386 = vmatprep.mubr.bf16.mxu0 %v5031
        %5387 = vmatmul.mubr.bf16.gmra.mrb[0].mxu0 %v5030
        %v5388 = vpop.f32.mrb[0].mxu0
        %v5389 = vadd.f32 %v5077, %v5388
        %v5390 = vpop.f32.mrb[0].mxu0
        %v5391 = vadd.f32 %v5081, %v5390
        %v5392 = vpop.f32.mrb[0].mxu0
        %v5393 = vadd.f32 %v5077, %v5392
        %v5394 = vpop.f32.mrb[0].mxu0
        %v5395 = vadd.f32 %v5081, %v5394
        %5396 = vmatprep.mubr.bf16.mxu0 %v5033
        %5397 = vmatmul.mubr.bf16.gmra.mrb[0].mxu0 %v5032
        %v5398 = vpop.f32.mrb[0].mxu0
        %v5399 = vadd.f32 %v5077, %v5398
        %v5400 = vpop.f32.mrb[0].mxu0
        %v5401 = vadd.f32 %v5081, %v5400
        %v5402 = vpop.f32.mrb[0].mxu0
        %v5403 = vadd.f32 %v5077, %v5402
        %v5404 = vpop.f32.mrb[0].mxu0
        %v5405 = vadd.f32 %v5081, %v5404
        %5406 = vmatprep.mubr.bf16.mxu0 %v5035
        %5407 = vmatmul.mubr.bf16.gmra.mrb[0].mxu0 %v5034
        %v5408 = vpop.f32.mrb[0].mxu0
        %v5409 = vadd.f32 %v5077, %v5408
        %v5410 = vpop.f32.mrb[0].mxu0
        %v5411 = vadd.f32 %v5081, %v5410
        %v5412 = vpop.f32.mrb[0].mxu0
        %v5413 = vadd.f32 %v5077, %v5412
        %v5414 = vpop.f32.mrb[0].mxu0
        %v5415 = vadd.f32 %v5081, %v5414
        %5416 = vmatprep.mubr.bf16.mxu0 %v5037
        %5417 = vmatmul.mubr.bf16.gmra.mrb[0].mxu0 %v5036
        %v5418 = vpop.f32.mrb[0].mxu0
        %v5419 = vadd.f32 %v5077, %v5418
        %v5420 = vpop.f32.mrb[0].mxu0
        %v5421 = vadd.f32 %v5081, %v5420
        %v5422 = vpop.f32.mrb[0].mxu0
        %v5423 = vadd.f32 %v5077, %v5422
        %v5424 = vpop.f32.mrb[0].mxu0
        %v5425 = vadd.f32 %v5081, %v5424
        %5426 = vmatprep.mubr.bf16.mxu0 %v5039
        %5427 = vmatmul.mubr.bf16.gmra.mrb[0].mxu0 %v5038
        %v5428 = vpop.f32.mrb[0].mxu0
        %v5429 = vadd.f32 %v5077, %v5428
        %v5430 = vpop.f32.mrb[0].mxu0
        %v5431 = vadd.f32 %v5081, %v5430
        %v5432 = vpop.f32.mrb[0].mxu0
        %v5433 = vadd.f32 %v5077, %v5432
        %v5434 = vpop.f32.mrb[0].mxu0
        %v5435 = vadd.f32 %v5081, %v5434
        %5436 = vdwg.mxu0
        %v5437 = vadd.f32 %v1228, %v5279
        %v5438 = vadd.f32 %v1229, %v5281
        %v5439 = vadd.f32 %v1230, %v5283
        %v5440 = vadd.f32 %v1231, %v5285
        %v5441 = vadd.f32 %v1232, %v5289
        %v5442 = vadd.f32 %v1233, %v5291
        %v5443 = vadd.f32 %v1234, %v5293
        %v5444 = vadd.f32 %v1235, %v5295
        %v5445 = vadd.f32 %v1236, %v5299
        %v5446 = vadd.f32 %v1237, %v5301
        %v5447 = vadd.f32 %v1238, %v5303
        %v5448 = vadd.f32 %v1239, %v5305
        %v5449 = vadd.f32 %v1240, %v5309
        %v5450 = vadd.f32 %v1241, %v5311
        %v5451 = vadd.f32 %v1242, %v5313
        %v5452 = vadd.f32 %v1243, %v5315
        %v5453 = vadd.f32 %v1244, %v5319
        %v5454 = vadd.f32 %v1245, %v5321
        %v5455 = vadd.f32 %v1246, %v5323
        %v5456 = vadd.f32 %v1247, %v5325
        %v5457 = vadd.f32 %v1248, %v5329
        %v5458 = vadd.f32 %v1249, %v5331
        %v5459 = vadd.f32 %v1250, %v5333
        %v5460 = vadd.f32 %v1251, %v5335
        %v5461 = vadd.f32 %v1252, %v5339
        %v5462 = vadd.f32 %v1253, %v5341
        %v5463 = vadd.f32 %v1254, %v5343
        %v5464 = vadd.f32 %v1255, %v5345
        %v5465 = vadd.f32 %v1256, %v5349
        %v5466 = vadd.f32 %v1257, %v5351
        %v5467 = vadd.f32 %v1258, %v5353
        %v5468 = vadd.f32 %v1259, %v5355
        %v5469 = vadd.f32 %v1260, %v5359
        %v5470 = vadd.f32 %v1261, %v5361
        %v5471 = vadd.f32 %v1262, %v5363
        %v5472 = vadd.f32 %v1263, %v5365
        %v5473 = vadd.f32 %v1264, %v5369
        %v5474 = vadd.f32 %v1265, %v5371
        %v5475 = vadd.f32 %v1266, %v5373
        %v5476 = vadd.f32 %v1267, %v5375
        %v5477 = vadd.f32 %v1268, %v5379
        %v5478 = vadd.f32 %v1269, %v5381
        %v5479 = vadd.f32 %v1270, %v5383
        %v5480 = vadd.f32 %v1271, %v5385
        %v5481 = vadd.f32 %v1272, %v5389
        %v5482 = vadd.f32 %v1273, %v5391
        %v5483 = vadd.f32 %v1274, %v5393
        %v5484 = vadd.f32 %v1275, %v5395
        %v5485 = vadd.f32 %v1276, %v5399
        %v5486 = vadd.f32 %v1277, %v5401
        %v5487 = vadd.f32 %v1278, %v5403
        %v5488 = vadd.f32 %v1279, %v5405
        %v5489 = vadd.f32 %v1280, %v5409
        %v5490 = vadd.f32 %v1281, %v5411
        %v5491 = vadd.f32 %v1282, %v5413
        %v5492 = vadd.f32 %v1283, %v5415
        %v5493 = vadd.f32 %v1284, %v5419
        %v5494 = vadd.f32 %v1285, %v5421
        %v5495 = vadd.f32 %v1286, %v5423
        %v5496 = vadd.f32 %v1287, %v5425
        %v5497 = vadd.f32 %v1288, %v5429
        %v5498 = vadd.f32 %v1289, %v5431
        %v5499 = vadd.f32 %v1290, %v5433
        %v5500 = vadd.f32 %v1291, %v5435
        %v5501 = vld [vmem:[%s877] sm:$0x3]
        %v5502 = vld [vmem:[%s886] sm:$0x3]
        %v5503 = vadd.f32 %v5437, %v5438
        %5504 = vadd.xlane.f32.xlu0 %v5503
        %v5505 = vpop.xlane.xlu0 %5504
        %v5506 = vadd.f32 %v5439, %v5440
        %5507 = vadd.xlane.f32.xlu0 %v5506
        %v5508 = vpop.xlane.xlu0 %5507
        %v5509 = vadd.f32 %v5441, %v5442
        %5510 = vadd.xlane.f32.xlu0 %v5509
        %v5511 = vpop.xlane.xlu0 %5510
        %v5512 = vadd.f32 %v5443, %v5444
        %5513 = vadd.xlane.f32.xlu0 %v5512
        %v5514 = vpop.xlane.xlu0 %5513
        %v5515 = vadd.f32 %v5445, %v5446
        %5516 = vadd.xlane.f32.xlu0 %v5515
        %v5517 = vpop.xlane.xlu0 %5516
        %v5518 = vadd.f32 %v5447, %v5448
        %5519 = vadd.xlane.f32.xlu0 %v5518
        %v5520 = vpop.xlane.xlu0 %5519
        %v5521 = vadd.f32 %v5449, %v5450
        %5522 = vadd.xlane.f32.xlu0 %v5521
        %v5523 = vpop.xlane.xlu0 %5522
        %v5524 = vadd.f32 %v5451, %v5452
        %5525 = vadd.xlane.f32.xlu0 %v5524
        %v5526 = vpop.xlane.xlu0 %5525
        %v5527 = vadd.f32 %v5453, %v5454
        %5528 = vadd.xlane.f32.xlu0 %v5527
        %v5529 = vpop.xlane.xlu0 %5528
        %v5530 = vadd.f32 %v5455, %v5456
        %5531 = vadd.xlane.f32.xlu0 %v5530
        %v5532 = vpop.xlane.xlu0 %5531
        %v5533 = vadd.f32 %v5457, %v5458
        %5534 = vadd.xlane.f32.xlu0 %v5533
        %v5535 = vpop.xlane.xlu0 %5534
        %v5536 = vadd.f32 %v5459, %v5460
        %5537 = vadd.xlane.f32.xlu0 %v5536
        %v5538 = vpop.xlane.xlu0 %5537
        %v5539 = vadd.f32 %v5461, %v5462
        %5540 = vadd.xlane.f32.xlu0 %v5539
        %v5541 = vpop.xlane.xlu0 %5540
        %v5542 = vadd.f32 %v5463, %v5464
        %5543 = vadd.xlane.f32.xlu0 %v5542
        %v5544 = vpop.xlane.xlu0 %5543
        %v5545 = vadd.f32 %v5465, %v5466
        %5546 = vadd.xlane.f32.xlu0 %v5545
        %v5547 = vpop.xlane.xlu0 %5546
        %v5548 = vadd.f32 %v5467, %v5468
        %5549 = vadd.xlane.f32.xlu0 %v5548
        %v5550 = vpop.xlane.xlu0 %5549
        %v5551 = vadd.f32 %v5469, %v5470
        %5552 = vadd.xlane.f32.xlu0 %v5551
        %v5553 = vpop.xlane.xlu0 %5552
        %v5554 = vadd.f32 %v5471, %v5472
        %5555 = vadd.xlane.f32.xlu0 %v5554
        %v5556 = vpop.xlane.xlu0 %5555
        %v5557 = vadd.f32 %v5473, %v5474
        %5558 = vadd.xlane.f32.xlu0 %v5557
        %v5559 = vpop.xlane.xlu0 %5558
        %v5560 = vadd.f32 %v5475, %v5476
        %5561 = vadd.xlane.f32.xlu0 %v5560
        %v5562 = vpop.xlane.xlu0 %5561
        %v5563 = vadd.f32 %v5477, %v5478
        %5564 = vadd.xlane.f32.xlu0 %v5563
        %v5565 = vpop.xlane.xlu0 %5564
        %v5566 = vadd.f32 %v5479, %v5480
        %5567 = vadd.xlane.f32.xlu0 %v5566
        %v5568 = vpop.xlane.xlu0 %5567
        %v5569 = vadd.f32 %v5481, %v5482
        %5570 = vadd.xlane.f32.xlu0 %v5569
        %v5571 = vpop.xlane.xlu0 %5570
        %v5572 = vadd.f32 %v5483, %v5484
        %5573 = vadd.xlane.f32.xlu0 %v5572
        %v5574 = vpop.xlane.xlu0 %5573
        %v5575 = vadd.f32 %v5485, %v5486
        %5576 = vadd.xlane.f32.xlu0 %v5575
        %v5577 = vpop.xlane.xlu0 %5576
        %v5578 = vadd.f32 %v5487, %v5488
        %5579 = vadd.xlane.f32.xlu0 %v5578
        %v5580 = vpop.xlane.xlu0 %5579
        %v5581 = vadd.f32 %v5489, %v5490
        %5582 = vadd.xlane.f32.xlu0 %v5581
        %v5583 = vpop.xlane.xlu0 %5582
        %v5584 = vadd.f32 %v5491, %v5492
        %5585 = vadd.xlane.f32.xlu0 %v5584
        %v5586 = vpop.xlane.xlu0 %5585
        %v5587 = vadd.f32 %v5493, %v5494
        %5588 = vadd.xlane.f32.xlu0 %v5587
        %v5589 = vpop.xlane.xlu0 %5588
        %v5590 = vadd.f32 %v5495, %v5496
        %5591 = vadd.xlane.f32.xlu0 %v5590
        %v5592 = vpop.xlane.xlu0 %5591
        %v5593 = vadd.f32 %v5497, %v5498
        %5594 = vadd.xlane.f32.xlu0 %v5593
        %v5595 = vpop.xlane.xlu0 %5594
        %v5596 = vadd.f32 %v5499, %v5500
        %5597 = vadd.xlane.f32.xlu0 %v5596
        %v5598 = vpop.xlane.xlu0 %5597
        %v5599 = vrcp.pop 256.0
        %v5600 = vmul.f32 %v5505, %v5599
        %v5601 = vmul.f32 %v5508, %v5599
        %v5602 = vmul.f32 %v5511, %v5599
        %v5603 = vmul.f32 %v5514, %v5599
        %v5604 = vmul.f32 %v5517, %v5599
        %v5605 = vmul.f32 %v5520, %v5599
        %v5606 = vmul.f32 %v5523, %v5599
        %v5607 = vmul.f32 %v5526, %v5599
        %v5608 = vmul.f32 %v5529, %v5599
        %v5609 = vmul.f32 %v5532, %v5599
        %v5610 = vmul.f32 %v5535, %v5599
        %v5611 = vmul.f32 %v5538, %v5599
        %v5612 = vmul.f32 %v5541, %v5599
        %v5613 = vmul.f32 %v5544, %v5599
        %v5614 = vmul.f32 %v5547, %v5599
        %v5615 = vmul.f32 %v5550, %v5599
        %v5616 = vmul.f32 %v5553, %v5599
        %v5617 = vmul.f32 %v5556, %v5599
        %v5618 = vmul.f32 %v5559, %v5599
        %v5619 = vmul.f32 %v5562, %v5599
        %v5620 = vmul.f32 %v5565, %v5599
        %v5621 = vmul.f32 %v5568, %v5599
        %v5622 = vmul.f32 %v5571, %v5599
        %v5623 = vmul.f32 %v5574, %v5599
        %v5624 = vmul.f32 %v5577, %v5599
        %v5625 = vmul.f32 %v5580, %v5599
        %v5626 = vmul.f32 %v5583, %v5599
        %v5627 = vmul.f32 %v5586, %v5599
        %v5628 = vmul.f32 %v5589, %v5599
        %v5629 = vmul.f32 %v5592, %v5599
        %v5630 = vmul.f32 %v5595, %v5599
        %v5631 = vmul.f32 %v5598, %v5599
        %v5632 = vsub.f32 %v5437, %v5600
        %v5633 = vsub.f32 %v5438, %v5600
        %v5634 = vsub.f32 %v5439, %v5601
        %v5635 = vsub.f32 %v5440, %v5601
        %v5636 = vsub.f32 %v5441, %v5602
        %v5637 = vsub.f32 %v5442, %v5602
        %v5638 = vsub.f32 %v5443, %v5603
        %v5639 = vsub.f32 %v5444, %v5603
        %v5640 = vsub.f32 %v5445, %v5604
        %v5641 = vsub.f32 %v5446, %v5604
        %v5642 = vsub.f32 %v5447, %v5605
        %v5643 = vsub.f32 %v5448, %v5605
        %v5644 = vsub.f32 %v5449, %v5606
        %v5645 = vsub.f32 %v5450, %v5606
        %v5646 = vsub.f32 %v5451, %v5607
        %v5647 = vsub.f32 %v5452, %v5607
        %v5648 = vsub.f32 %v5453, %v5608
        %v5649 = vsub.f32 %v5454, %v5608
        %v5650 = vsub.f32 %v5455, %v5609
        %v5651 = vsub.f32 %v5456, %v5609
        %v5652 = vsub.f32 %v5457, %v5610
        %v5653 = vsub.f32 %v5458, %v5610
        %v5654 = vsub.f32 %v5459, %v5611
        %v5655 = vsub.f32 %v5460, %v5611
        %v5656 = vsub.f32 %v5461, %v5612
        %v5657 = vsub.f32 %v5462, %v5612
        %v5658 = vsub.f32 %v5463, %v5613
        %v5659 = vsub.f32 %v5464, %v5613
        %v5660 = vsub.f32 %v5465, %v5614
        %v5661 = vsub.f32 %v5466, %v5614
        %v5662 = vsub.f32 %v5467, %v5615
        %v5663 = vsub.f32 %v5468, %v5615
        %v5664 = vsub.f32 %v5469, %v5616
        %v5665 = vsub.f32 %v5470, %v5616
        %v5666 = vsub.f32 %v5471, %v5617
        %v5667 = vsub.f32 %v5472, %v5617
        %v5668 = vsub.f32 %v5473, %v5618
        %v5669 = vsub.f32 %v5474, %v5618
        %v5670 = vsub.f32 %v5475, %v5619
        %v5671 = vsub.f32 %v5476, %v5619
        %v5672 = vsub.f32 %v5477, %v5620
        %v5673 = vsub.f32 %v5478, %v5620
        %v5674 = vsub.f32 %v5479, %v5621
        %v5675 = vsub.f32 %v5480, %v5621
        %v5676 = vsub.f32 %v5481, %v5622
        %v5677 = vsub.f32 %v5482, %v5622
        %v5678 = vsub.f32 %v5483, %v5623
        %v5679 = vsub.f32 %v5484, %v5623
        %v5680 = vsub.f32 %v5485, %v5624
        %v5681 = vsub.f32 %v5486, %v5624
        %v5682 = vsub.f32 %v5487, %v5625
        %v5683 = vsub.f32 %v5488, %v5625
        %v5684 = vsub.f32 %v5489, %v5626
        %v5685 = vsub.f32 %v5490, %v5626
        %v5686 = vsub.f32 %v5491, %v5627
        %v5687 = vsub.f32 %v5492, %v5627
        %v5688 = vsub.f32 %v5493, %v5628
        %v5689 = vsub.f32 %v5494, %v5628
        %v5690 = vsub.f32 %v5495, %v5629
        %v5691 = vsub.f32 %v5496, %v5629
        %v5692 = vsub.f32 %v5497, %v5630
        %v5693 = vsub.f32 %v5498, %v5630
        %v5694 = vsub.f32 %v5499, %v5631
        %v5695 = vsub.f32 %v5500, %v5631
        %v5696 = vmul.f32 %v5632, %v5632
        %v5697 = vmul.f32 %v5633, %v5633
        %v5698 = vmul.f32 %v5634, %v5634
        %v5699 = vmul.f32 %v5635, %v5635
        %v5700 = vmul.f32 %v5636, %v5636
        %v5701 = vmul.f32 %v5637, %v5637
        %v5702 = vmul.f32 %v5638, %v5638
        %v5703 = vmul.f32 %v5639, %v5639
        %v5704 = vmul.f32 %v5640, %v5640
        %v5705 = vmul.f32 %v5641, %v5641
        %v5706 = vmul.f32 %v5642, %v5642
        %v5707 = vmul.f32 %v5643, %v5643
        %v5708 = vmul.f32 %v5644, %v5644
        %v5709 = vmul.f32 %v5645, %v5645
        %v5710 = vmul.f32 %v5646, %v5646
        %v5711 = vmul.f32 %v5647, %v5647
        %v5712 = vmul.f32 %v5648, %v5648
        %v5713 = vmul.f32 %v5649, %v5649
        %v5714 = vmul.f32 %v5650, %v5650
        %v5715 = vmul.f32 %v5651, %v5651
        %v5716 = vmul.f32 %v5652, %v5652
        %v5717 = vmul.f32 %v5653, %v5653
        %v5718 = vmul.f32 %v5654, %v5654
        %v5719 = vmul.f32 %v5655, %v5655
        %v5720 = vmul.f32 %v5656, %v5656
        %v5721 = vmul.f32 %v5657, %v5657
        %v5722 = vmul.f32 %v5658, %v5658
        %v5723 = vmul.f32 %v5659, %v5659
        %v5724 = vmul.f32 %v5660, %v5660
        %v5725 = vmul.f32 %v5661, %v5661
        %v5726 = vmul.f32 %v5662, %v5662
        %v5727 = vmul.f32 %v5663, %v5663
        %v5728 = vmul.f32 %v5664, %v5664
        %v5729 = vmul.f32 %v5665, %v5665
        %v5730 = vmul.f32 %v5666, %v5666
        %v5731 = vmul.f32 %v5667, %v5667
        %v5732 = vmul.f32 %v5668, %v5668
        %v5733 = vmul.f32 %v5669, %v5669
        %v5734 = vmul.f32 %v5670, %v5670
        %v5735 = vmul.f32 %v5671, %v5671
        %v5736 = vmul.f32 %v5672, %v5672
        %v5737 = vmul.f32 %v5673, %v5673
        %v5738 = vmul.f32 %v5674, %v5674
        %v5739 = vmul.f32 %v5675, %v5675
        %v5740 = vmul.f32 %v5676, %v5676
        %v5741 = vmul.f32 %v5677, %v5677
        %v5742 = vmul.f32 %v5678, %v5678
        %v5743 = vmul.f32 %v5679, %v5679
        %v5744 = vmul.f32 %v5680, %v5680
        %v5745 = vmul.f32 %v5681, %v5681
        %v5746 = vmul.f32 %v5682, %v5682
        %v5747 = vmul.f32 %v5683, %v5683
        %v5748 = vmul.f32 %v5684, %v5684
        %v5749 = vmul.f32 %v5685, %v5685
        %v5750 = vmul.f32 %v5686, %v5686
        %v5751 = vmul.f32 %v5687, %v5687
        %v5752 = vmul.f32 %v5688, %v5688
        %v5753 = vmul.f32 %v5689, %v5689
        %v5754 = vmul.f32 %v5690, %v5690
        %v5755 = vmul.f32 %v5691, %v5691
        %v5756 = vmul.f32 %v5692, %v5692
        %v5757 = vmul.f32 %v5693, %v5693
        %v5758 = vmul.f32 %v5694, %v5694
        %v5759 = vmul.f32 %v5695, %v5695
        %v5760 = vadd.f32 %v5696, %v5697
        %5761 = vadd.xlane.f32.xlu0 %v5760
        %v5762 = vpop.xlane.xlu0 %5761
        %v5763 = vadd.f32 %v5698, %v5699
        %5764 = vadd.xlane.f32.xlu0 %v5763
        %v5765 = vpop.xlane.xlu0 %5764
        %v5766 = vadd.f32 %v5700, %v5701
        %5767 = vadd.xlane.f32.xlu0 %v5766
        %v5768 = vpop.xlane.xlu0 %5767
        %v5769 = vadd.f32 %v5702, %v5703
        %5770 = vadd.xlane.f32.xlu0 %v5769
        %v5771 = vpop.xlane.xlu0 %5770
        %v5772 = vadd.f32 %v5704, %v5705
        %5773 = vadd.xlane.f32.xlu0 %v5772
        %v5774 = vpop.xlane.xlu0 %5773
        %v5775 = vadd.f32 %v5706, %v5707
        %5776 = vadd.xlane.f32.xlu0 %v5775
        %v5777 = vpop.xlane.xlu0 %5776
        %v5778 = vadd.f32 %v5708, %v5709
        %5779 = vadd.xlane.f32.xlu0 %v5778
        %v5780 = vpop.xlane.xlu0 %5779
        %v5781 = vadd.f32 %v5710, %v5711
        %5782 = vadd.xlane.f32.xlu0 %v5781
        %v5783 = vpop.xlane.xlu0 %5782
        %v5784 = vadd.f32 %v5712, %v5713
        %5785 = vadd.xlane.f32.xlu0 %v5784
        %v5786 = vpop.xlane.xlu0 %5785
        %v5787 = vadd.f32 %v5714, %v5715
        %5788 = vadd.xlane.f32.xlu0 %v5787
        %v5789 = vpop.xlane.xlu0 %5788
        %v5790 = vadd.f32 %v5716, %v5717
        %5791 = vadd.xlane.f32.xlu0 %v5790
        %v5792 = vpop.xlane.xlu0 %5791
        %v5793 = vadd.f32 %v5718, %v5719
        %5794 = vadd.xlane.f32.xlu0 %v5793
        %v5795 = vpop.xlane.xlu0 %5794
        %v5796 = vadd.f32 %v5720, %v5721
        %5797 = vadd.xlane.f32.xlu0 %v5796
        %v5798 = vpop.xlane.xlu0 %5797
        %v5799 = vadd.f32 %v5722, %v5723
        %5800 = vadd.xlane.f32.xlu0 %v5799
        %v5801 = vpop.xlane.xlu0 %5800
        %v5802 = vadd.f32 %v5724, %v5725
        %5803 = vadd.xlane.f32.xlu0 %v5802
        %v5804 = vpop.xlane.xlu0 %5803
        %v5805 = vadd.f32 %v5726, %v5727
        %5806 = vadd.xlane.f32.xlu0 %v5805
        %v5807 = vpop.xlane.xlu0 %5806
        %v5808 = vadd.f32 %v5728, %v5729
        %5809 = vadd.xlane.f32.xlu0 %v5808
        %v5810 = vpop.xlane.xlu0 %5809
        %v5811 = vadd.f32 %v5730, %v5731
        %5812 = vadd.xlane.f32.xlu0 %v5811
        %v5813 = vpop.xlane.xlu0 %5812
        %v5814 = vadd.f32 %v5732, %v5733
        %5815 = vadd.xlane.f32.xlu0 %v5814
        %v5816 = vpop.xlane.xlu0 %5815
        %v5817 = vadd.f32 %v5734, %v5735
        %5818 = vadd.xlane.f32.xlu0 %v5817
        %v5819 = vpop.xlane.xlu0 %5818
        %v5820 = vadd.f32 %v5736, %v5737
        %5821 = vadd.xlane.f32.xlu0 %v5820
        %v5822 = vpop.xlane.xlu0 %5821
        %v5823 = vadd.f32 %v5738, %v5739
        %5824 = vadd.xlane.f32.xlu0 %v5823
        %v5825 = vpop.xlane.xlu0 %5824
        %v5826 = vadd.f32 %v5740, %v5741
        %5827 = vadd.xlane.f32.xlu0 %v5826
        %v5828 = vpop.xlane.xlu0 %5827
        %v5829 = vadd.f32 %v5742, %v5743
        %5830 = vadd.xlane.f32.xlu0 %v5829
        %v5831 = vpop.xlane.xlu0 %5830
        %v5832 = vadd.f32 %v5744, %v5745
        %5833 = vadd.xlane.f32.xlu0 %v5832
        %v5834 = vpop.xlane.xlu0 %5833
        %v5835 = vadd.f32 %v5746, %v5747
        %5836 = vadd.xlane.f32.xlu0 %v5835
        %v5837 = vpop.xlane.xlu0 %5836
        %v5838 = vadd.f32 %v5748, %v5749
        %5839 = vadd.xlane.f32.xlu0 %v5838
        %v5840 = vpop.xlane.xlu0 %5839
        %v5841 = vadd.f32 %v5750, %v5751
        %5842 = vadd.xlane.f32.xlu0 %v5841
        %v5843 = vpop.xlane.xlu0 %5842
        %v5844 = vadd.f32 %v5752, %v5753
        %5845 = vadd.xlane.f32.xlu0 %v5844
        %v5846 = vpop.xlane.xlu0 %5845
        %v5847 = vadd.f32 %v5754, %v5755
        %5848 = vadd.xlane.f32.xlu0 %v5847
        %v5849 = vpop.xlane.xlu0 %5848
        %v5850 = vadd.f32 %v5756, %v5757
        %5851 = vadd.xlane.f32.xlu0 %v5850
        %v5852 = vpop.xlane.xlu0 %5851
        %v5853 = vadd.f32 %v5758, %v5759
        %5854 = vadd.xlane.f32.xlu0 %v5853
        %v5855 = vpop.xlane.xlu0 %5854
        %v5856 = vmul.f32 %v5762, %v5599
        %v5857 = vmul.f32 %v5765, %v5599
        %v5858 = vmul.f32 %v5768, %v5599
        %v5859 = vmul.f32 %v5771, %v5599
        %v5860 = vmul.f32 %v5774, %v5599
        %v5861 = vmul.f32 %v5777, %v5599
        %v5862 = vmul.f32 %v5780, %v5599
        %v5863 = vmul.f32 %v5783, %v5599
        %v5864 = vmul.f32 %v5786, %v5599
        %v5865 = vmul.f32 %v5789, %v5599
        %v5866 = vmul.f32 %v5792, %v5599
        %v5867 = vmul.f32 %v5795, %v5599
        %v5868 = vmul.f32 %v5798, %v5599
        %v5869 = vmul.f32 %v5801, %v5599
        %v5870 = vmul.f32 %v5804, %v5599
        %v5871 = vmul.f32 %v5807, %v5599
        %v5872 = vmul.f32 %v5810, %v5599
        %v5873 = vmul.f32 %v5813, %v5599
        %v5874 = vmul.f32 %v5816, %v5599
        %v5875 = vmul.f32 %v5819, %v5599
        %v5876 = vmul.f32 %v5822, %v5599
        %v5877 = vmul.f32 %v5825, %v5599
        %v5878 = vmul.f32 %v5828, %v5599
        %v5879 = vmul.f32 %v5831, %v5599
        %v5880 = vmul.f32 %v5834, %v5599
        %v5881 = vmul.f32 %v5837, %v5599
        %v5882 = vmul.f32 %v5840, %v5599
        %v5883 = vmul.f32 %v5843, %v5599
        %v5884 = vmul.f32 %v5846, %v5599
        %v5885 = vmul.f32 %v5849, %v5599
        %v5886 = vmul.f32 %v5852, %v5599
        %v5887 = vmul.f32 %v5855, %v5599
        %v5888 = vadd.f32 %v5856, 1e-05
        %v5889 = vadd.f32 %v5857, 1e-05
        %v5890 = vadd.f32 %v5858, 1e-05
        %v5891 = vadd.f32 %v5859, 1e-05
        %v5892 = vadd.f32 %v5860, 1e-05
        %v5893 = vadd.f32 %v5861, 1e-05
        %v5894 = vadd.f32 %v5862, 1e-05
        %v5895 = vadd.f32 %v5863, 1e-05
        %v5896 = vadd.f32 %v5864, 1e-05
        %v5897 = vadd.f32 %v5865, 1e-05
        %v5898 = vadd.f32 %v5866, 1e-05
        %v5899 = vadd.f32 %v5867, 1e-05
        %v5900 = vadd.f32 %v5868, 1e-05
        %v5901 = vadd.f32 %v5869, 1e-05
        %v5902 = vadd.f32 %v5870, 1e-05
        %v5903 = vadd.f32 %v5871, 1e-05
        %v5904 = vadd.f32 %v5872, 1e-05
        %v5905 = vadd.f32 %v5873, 1e-05
        %v5906 = vadd.f32 %v5874, 1e-05
        %v5907 = vadd.f32 %v5875, 1e-05
        %v5908 = vadd.f32 %v5876, 1e-05
        %v5909 = vadd.f32 %v5877, 1e-05
        %v5910 = vadd.f32 %v5878, 1e-05
        %v5911 = vadd.f32 %v5879, 1e-05
        %v5912 = vadd.f32 %v5880, 1e-05
        %v5913 = vadd.f32 %v5881, 1e-05
        %v5914 = vadd.f32 %v5882, 1e-05
        %v5915 = vadd.f32 %v5883, 1e-05
        %v5916 = vadd.f32 %v5884, 1e-05
        %v5917 = vadd.f32 %v5885, 1e-05
        %v5918 = vadd.f32 %v5886, 1e-05
        %v5919 = vadd.f32 %v5887, 1e-05
        %v5920 = vrsqrt.pop %v5888
        %v5921 = vrsqrt.pop %v5889
        %v5922 = vrsqrt.pop %v5890
        %v5923 = vrsqrt.pop %v5891
        %v5924 = vrsqrt.pop %v5892
        %v5925 = vrsqrt.pop %v5893
        %v5926 = vrsqrt.pop %v5894
        %v5927 = vrsqrt.pop %v5895
        %v5928 = vrsqrt.pop %v5896
        %v5929 = vrsqrt.pop %v5897
        %v5930 = vrsqrt.pop %v5898
        %v5931 = vrsqrt.pop %v5899
        %v5932 = vrsqrt.pop %v5900
        %v5933 = vrsqrt.pop %v5901
        %v5934 = vrsqrt.pop %v5902
        %v5935 = vrsqrt.pop %v5903
        %v5936 = vrsqrt.pop %v5904
        %v5937 = vrsqrt.pop %v5905
        %v5938 = vrsqrt.pop %v5906
        %v5939 = vrsqrt.pop %v5907
        %v5940 = vrsqrt.pop %v5908
        %v5941 = vrsqrt.pop %v5909
        %v5942 = vrsqrt.pop %v5910
        %v5943 = vrsqrt.pop %v5911
        %v5944 = vrsqrt.pop %v5912
        %v5945 = vrsqrt.pop %v5913
        %v5946 = vrsqrt.pop %v5914
        %v5947 = vrsqrt.pop %v5915
        %v5948 = vrsqrt.pop %v5916
        %v5949 = vrsqrt.pop %v5917
        %v5950 = vrsqrt.pop %v5918
        %v5951 = vrsqrt.pop %v5919
        %v5952 = vmul.f32 %v5632, %v5920
        %v5953 = vmul.f32 %v5633, %v5920
        %v5954 = vmul.f32 %v5634, %v5921
        %v5955 = vmul.f32 %v5635, %v5921
        %v5956 = vmul.f32 %v5636, %v5922
        %v5957 = vmul.f32 %v5637, %v5922
        %v5958 = vmul.f32 %v5638, %v5923
        %v5959 = vmul.f32 %v5639, %v5923
        %v5960 = vmul.f32 %v5640, %v5924
        %v5961 = vmul.f32 %v5641, %v5924
        %v5962 = vmul.f32 %v5642, %v5925
        %v5963 = vmul.f32 %v5643, %v5925
        %v5964 = vmul.f32 %v5644, %v5926
        %v5965 = vmul.f32 %v5645, %v5926
        %v5966 = vmul.f32 %v5646, %v5927
        %v5967 = vmul.f32 %v5647, %v5927
        %v5968 = vmul.f32 %v5648, %v5928
        %v5969 = vmul.f32 %v5649, %v5928
        %v5970 = vmul.f32 %v5650, %v5929
        %v5971 = vmul.f32 %v5651, %v5929
        %v5972 = vmul.f32 %v5652, %v5930
        %v5973 = vmul.f32 %v5653, %v5930
        %v5974 = vmul.f32 %v5654, %v5931
        %v5975 = vmul.f32 %v5655, %v5931
        %v5976 = vmul.f32 %v5656, %v5932
        %v5977 = vmul.f32 %v5657, %v5932
        %v5978 = vmul.f32 %v5658, %v5933
        %v5979 = vmul.f32 %v5659, %v5933
        %v5980 = vmul.f32 %v5660, %v5934
        %v5981 = vmul.f32 %v5661, %v5934
        %v5982 = vmul.f32 %v5662, %v5935
        %v5983 = vmul.f32 %v5663, %v5935
        %v5984 = vmul.f32 %v5664, %v5936
        %v5985 = vmul.f32 %v5665, %v5936
        %v5986 = vmul.f32 %v5666, %v5937
        %v5987 = vmul.f32 %v5667, %v5937
        %v5988 = vmul.f32 %v5668, %v5938
        %v5989 = vmul.f32 %v5669, %v5938
        %v5990 = vmul.f32 %v5670, %v5939
        %v5991 = vmul.f32 %v5671, %v5939
        %v5992 = vmul.f32 %v5672, %v5940
        %v5993 = vmul.f32 %v5673, %v5940
        %v5994 = vmul.f32 %v5674, %v5941
        %v5995 = vmul.f32 %v5675, %v5941
        %v5996 = vmul.f32 %v5676, %v5942
        %v5997 = vmul.f32 %v5677, %v5942
        %v5998 = vmul.f32 %v5678, %v5943
        %v5999 = vmul.f32 %v5679, %v5943
        %v6000 = vmul.f32 %v5680, %v5944
        %v6001 = vmul.f32 %v5681, %v5944
        %v6002 = vmul.f32 %v5682, %v5945
        %v6003 = vmul.f32 %v5683, %v5945
        %v6004 = vmul.f32 %v5684, %v5946
        %v6005 = vmul.f32 %v5685, %v5946
        %v6006 = vmul.f32 %v5686, %v5947
        %v6007 = vmul.f32 %v5687, %v5947
        %v6008 = vmul.f32 %v5688, %v5948
        %v6009 = vmul.f32 %v5689, %v5948
        %v6010 = vmul.f32 %v5690, %v5949
        %v6011 = vmul.f32 %v5691, %v5949
        %v6012 = vmul.f32 %v5692, %v5950
        %v6013 = vmul.f32 %v5693, %v5950
        %v6014 = vmul.f32 %v5694, %v5951
        %v6015 = vmul.f32 %v5695, %v5951
        %v6017 = vlaneseq
        %v6018 = vshrl.u32 %v6017, 7
        %v6019 = vsub.s32 0, %v6018
        %v6020 = vrot.slane %v5501, %v6019
        %v6021 = vlaneseq
        %v6022 = vshrl.u32 %v6021, 7
        %v6023 = vsub.s32 1, %v6022
        %v6024 = vrot.slane %v5501, %v6023
        %v6027 = vmul.f32 %v5952, %v6020
        %v6028 = vmul.f32 %v5953, %v6024
        %v6029 = vmul.f32 %v5954, %v6020
        %v6030 = vmul.f32 %v5955, %v6024
        %v6031 = vmul.f32 %v5956, %v6020
        %v6032 = vmul.f32 %v5957, %v6024
        %v6033 = vmul.f32 %v5958, %v6020
        %v6034 = vmul.f32 %v5959, %v6024
        %v6035 = vmul.f32 %v5960, %v6020
        %v6036 = vmul.f32 %v5961, %v6024
        %v6037 = vmul.f32 %v5962, %v6020
        %v6038 = vmul.f32 %v5963, %v6024
        %v6039 = vmul.f32 %v5964, %v6020
        %v6040 = vmul.f32 %v5965, %v6024
        %v6041 = vmul.f32 %v5966, %v6020
        %v6042 = vmul.f32 %v5967, %v6024
        %v6043 = vmul.f32 %v5968, %v6020
        %v6044 = vmul.f32 %v5969, %v6024
        %v6045 = vmul.f32 %v5970, %v6020
        %v6046 = vmul.f32 %v5971, %v6024
        %v6047 = vmul.f32 %v5972, %v6020
        %v6048 = vmul.f32 %v5973, %v6024
        %v6049 = vmul.f32 %v5974, %v6020
        %v6050 = vmul.f32 %v5975, %v6024
        %v6051 = vmul.f32 %v5976, %v6020
        %v6052 = vmul.f32 %v5977, %v6024
        %v6053 = vmul.f32 %v5978, %v6020
        %v6054 = vmul.f32 %v5979, %v6024
        %v6055 = vmul.f32 %v5980, %v6020
        %v6056 = vmul.f32 %v5981, %v6024
        %v6057 = vmul.f32 %v5982, %v6020
        %v6058 = vmul.f32 %v5983, %v6024
        %v6059 = vmul.f32 %v5984, %v6020
        %v6060 = vmul.f32 %v5985, %v6024
        %v6061 = vmul.f32 %v5986, %v6020
        %v6062 = vmul.f32 %v5987, %v6024
        %v6063 = vmul.f32 %v5988, %v6020
        %v6064 = vmul.f32 %v5989, %v6024
        %v6065 = vmul.f32 %v5990, %v6020
        %v6066 = vmul.f32 %v5991, %v6024
        %v6067 = vmul.f32 %v5992, %v6020
        %v6068 = vmul.f32 %v5993, %v6024
        %v6069 = vmul.f32 %v5994, %v6020
        %v6070 = vmul.f32 %v5995, %v6024
        %v6071 = vmul.f32 %v5996, %v6020
        %v6072 = vmul.f32 %v5997, %v6024
        %v6073 = vmul.f32 %v5998, %v6020
        %v6074 = vmul.f32 %v5999, %v6024
        %v6075 = vmul.f32 %v6000, %v6020
        %v6076 = vmul.f32 %v6001, %v6024
        %v6077 = vmul.f32 %v6002, %v6020
        %v6078 = vmul.f32 %v6003, %v6024
        %v6079 = vmul.f32 %v6004, %v6020
        %v6080 = vmul.f32 %v6005, %v6024
        %v6081 = vmul.f32 %v6006, %v6020
        %v6082 = vmul.f32 %v6007, %v6024
        %v6083 = vmul.f32 %v6008, %v6020
        %v6084 = vmul.f32 %v6009, %v6024
        %v6085 = vmul.f32 %v6010, %v6020
        %v6086 = vmul.f32 %v6011, %v6024
        %v6087 = vmul.f32 %v6012, %v6020
        %v6088 = vmul.f32 %v6013, %v6024
        %v6089 = vmul.f32 %v6014, %v6020
        %v6090 = vmul.f32 %v6015, %v6024
        %v6092 = vlaneseq
        %v6093 = vshrl.u32 %v6092, 7
        %v6094 = vsub.s32 0, %v6093
        %v6095 = vrot.slane %v5502, %v6094
        %v6096 = vlaneseq
        %v6097 = vshrl.u32 %v6096, 7
        %v6098 = vsub.s32 1, %v6097
        %v6099 = vrot.slane %v5502, %v6098
        %v6102 = vadd.f32 %v6027, %v6095
        %v6103 = vadd.f32 %v6028, %v6099
        %v6104 = vadd.f32 %v6029, %v6095
        %v6105 = vadd.f32 %v6030, %v6099
        %v6106 = vadd.f32 %v6031, %v6095
        %v6107 = vadd.f32 %v6032, %v6099
        %v6108 = vadd.f32 %v6033, %v6095
        %v6109 = vadd.f32 %v6034, %v6099
        %v6110 = vadd.f32 %v6035, %v6095
        %v6111 = vadd.f32 %v6036, %v6099
        %v6112 = vadd.f32 %v6037, %v6095
        %v6113 = vadd.f32 %v6038, %v6099
        %v6114 = vadd.f32 %v6039, %v6095
        %v6115 = vadd.f32 %v6040, %v6099
        %v6116 = vadd.f32 %v6041, %v6095
        %v6117 = vadd.f32 %v6042, %v6099
        %v6118 = vadd.f32 %v6043, %v6095
        %v6119 = vadd.f32 %v6044, %v6099
        %v6120 = vadd.f32 %v6045, %v6095
        %v6121 = vadd.f32 %v6046, %v6099
        %v6122 = vadd.f32 %v6047, %v6095
        %v6123 = vadd.f32 %v6048, %v6099
        %v6124 = vadd.f32 %v6049, %v6095
        %v6125 = vadd.f32 %v6050, %v6099
        %v6126 = vadd.f32 %v6051, %v6095
        %v6127 = vadd.f32 %v6052, %v6099
        %v6128 = vadd.f32 %v6053, %v6095
        %v6129 = vadd.f32 %v6054, %v6099
        %v6130 = vadd.f32 %v6055, %v6095
        %v6131 = vadd.f32 %v6056, %v6099
        %v6132 = vadd.f32 %v6057, %v6095
        %v6133 = vadd.f32 %v6058, %v6099
        %v6134 = vadd.f32 %v6059, %v6095
        %v6135 = vadd.f32 %v6060, %v6099
        %v6136 = vadd.f32 %v6061, %v6095
        %v6137 = vadd.f32 %v6062, %v6099
        %v6138 = vadd.f32 %v6063, %v6095
        %v6139 = vadd.f32 %v6064, %v6099
        %v6140 = vadd.f32 %v6065, %v6095
        %v6141 = vadd.f32 %v6066, %v6099
        %v6142 = vadd.f32 %v6067, %v6095
        %v6143 = vadd.f32 %v6068, %v6099
        %v6144 = vadd.f32 %v6069, %v6095
        %v6145 = vadd.f32 %v6070, %v6099
        %v6146 = vadd.f32 %v6071, %v6095
        %v6147 = vadd.f32 %v6072, %v6099
        %v6148 = vadd.f32 %v6073, %v6095
        %v6149 = vadd.f32 %v6074, %v6099
        %v6150 = vadd.f32 %v6075, %v6095
        %v6151 = vadd.f32 %v6076, %v6099
        %v6152 = vadd.f32 %v6077, %v6095
        %v6153 = vadd.f32 %v6078, %v6099
        %v6154 = vadd.f32 %v6079, %v6095
        %v6155 = vadd.f32 %v6080, %v6099
        %v6156 = vadd.f32 %v6081, %v6095
        %v6157 = vadd.f32 %v6082, %v6099
        %v6158 = vadd.f32 %v6083, %v6095
        %v6159 = vadd.f32 %v6084, %v6099
        %v6160 = vadd.f32 %v6085, %v6095
        %v6161 = vadd.f32 %v6086, %v6099
        %v6162 = vadd.f32 %v6087, %v6095
        %v6163 = vadd.f32 %v6088, %v6099
        %v6164 = vadd.f32 %v6089, %v6095
        %v6165 = vadd.f32 %v6090, %v6099
        %v6166 = vpack.c.bf16 %v6104, %v6102
        %v6167 = vpack.c.bf16 %v6105, %v6103
        %v6168 = vpack.c.bf16 %v6108, %v6106
        %v6169 = vpack.c.bf16 %v6109, %v6107
        %v6170 = vpack.c.bf16 %v6112, %v6110
        %v6171 = vpack.c.bf16 %v6113, %v6111
        %v6172 = vpack.c.bf16 %v6116, %v6114
        %v6173 = vpack.c.bf16 %v6117, %v6115
        %v6174 = vpack.c.bf16 %v6120, %v6118
        %v6175 = vpack.c.bf16 %v6121, %v6119
        %v6176 = vpack.c.bf16 %v6124, %v6122
        %v6177 = vpack.c.bf16 %v6125, %v6123
        %v6178 = vpack.c.bf16 %v6128, %v6126
        %v6179 = vpack.c.bf16 %v6129, %v6127
        %v6180 = vpack.c.bf16 %v6132, %v6130
        %v6181 = vpack.c.bf16 %v6133, %v6131
        %v6182 = vpack.c.bf16 %v6136, %v6134
        %v6183 = vpack.c.bf16 %v6137, %v6135
        %v6184 = vpack.c.bf16 %v6140, %v6138
        %v6185 = vpack.c.bf16 %v6141, %v6139
        %v6186 = vpack.c.bf16 %v6144, %v6142
        %v6187 = vpack.c.bf16 %v6145, %v6143
        %v6188 = vpack.c.bf16 %v6148, %v6146
        %v6189 = vpack.c.bf16 %v6149, %v6147
        %v6190 = vpack.c.bf16 %v6152, %v6150
        %v6191 = vpack.c.bf16 %v6153, %v6151
        %v6192 = vpack.c.bf16 %v6156, %v6154
        %v6193 = vpack.c.bf16 %v6157, %v6155
        %v6194 = vpack.c.bf16 %v6160, %v6158
        %v6195 = vpack.c.bf16 %v6161, %v6159
        %v6196 = vpack.c.bf16 %v6164, %v6162
        %v6197 = vpack.c.bf16 %v6165, %v6163
        %v6198 = vld [vmem:[%s841] sm:$0xff]
        %v6199 = vld [vmem:[%s841 + $0x8] sm:$0xff]
        %v6200 = vld [vmem:[%s841 + $0x10] sm:$0xff]
        %v6201 = vld [vmem:[%s841 + $0x18] sm:$0xff]
        %v6202 = vld [vmem:[%s841 + $0x20] sm:$0xff]
        %v6203 = vld [vmem:[%s841 + $0x28] sm:$0xff]
        %v6204 = vld [vmem:[%s841 + $0x30] sm:$0xff]
        %v6205 = vld [vmem:[%s841 + $0x38] sm:$0xff]
        %v6206 = vld [vmem:[%s841 + $0x40] sm:$0xff]
        %v6207 = vld [vmem:[%s841 + $0x48] sm:$0xff]
        %v6208 = vld [vmem:[%s841 + $0x50] sm:$0xff]
        %v6209 = vld [vmem:[%s841 + $0x58] sm:$0xff]
        %v6210 = vld [vmem:[%s841 + $0x60] sm:$0xff]
        %v6211 = vld [vmem:[%s841 + $0x68] sm:$0xff]
        %v6212 = vld [vmem:[%s841 + $0x70] sm:$0xff]
        %v6213 = vld [vmem:[%s841 + $0x78] sm:$0xff]
        %v6214 = vld [vmem:[%s841 + $0x80] sm:$0xff]
        %v6215 = vld [vmem:[%s841 + $0x88] sm:$0xff]
        %v6216 = vld [vmem:[%s841 + $0x90] sm:$0xff]
        %v6217 = vld [vmem:[%s841 + $0x98] sm:$0xff]
        %v6218 = vld [vmem:[%s841 + $0xa0] sm:$0xff]
        %v6219 = vld [vmem:[%s841 + $0xa8] sm:$0xff]
        %v6220 = vld [vmem:[%s841 + $0xb0] sm:$0xff]
        %v6221 = vld [vmem:[%s841 + $0xb8] sm:$0xff]
        %v6222 = vld [vmem:[%s841 + $0xc0] sm:$0xff]
        %v6223 = vld [vmem:[%s841 + $0xc8] sm:$0xff]
        %v6224 = vld [vmem:[%s841 + $0xd0] sm:$0xff]
        %v6225 = vld [vmem:[%s841 + $0xd8] sm:$0xff]
        %v6226 = vld [vmem:[%s841 + $0xe0] sm:$0xff]
        %v6227 = vld [vmem:[%s841 + $0xe8] sm:$0xff]
        %v6228 = vld [vmem:[%s841 + $0xf0] sm:$0xff]
        %v6229 = vld [vmem:[%s841 + $0xf8] sm:$0xff]
        %v6230 = vld [vmem:[%s841 + $0x100] sm:$0xff]
        %v6231 = vld [vmem:[%s841 + $0x108] sm:$0xff]
        %v6232 = vld [vmem:[%s841 + $0x110] sm:$0xff]
        %v6233 = vld [vmem:[%s841 + $0x118] sm:$0xff]
        %v6234 = vld [vmem:[%s841 + $0x120] sm:$0xff]
        %v6235 = vld [vmem:[%s841 + $0x128] sm:$0xff]
        %v6236 = vld [vmem:[%s841 + $0x130] sm:$0xff]
        %v6237 = vld [vmem:[%s841 + $0x138] sm:$0xff]
        %v6238 = vld [vmem:[%s841 + $0x140] sm:$0xff]
        %v6239 = vld [vmem:[%s841 + $0x148] sm:$0xff]
        %v6240 = vld [vmem:[%s841 + $0x150] sm:$0xff]
        %v6241 = vld [vmem:[%s841 + $0x158] sm:$0xff]
        %v6242 = vld [vmem:[%s841 + $0x160] sm:$0xff]
        %v6243 = vld [vmem:[%s841 + $0x168] sm:$0xff]
        %v6244 = vld [vmem:[%s841 + $0x170] sm:$0xff]
        %v6245 = vld [vmem:[%s841 + $0x178] sm:$0xff]
        %v6246 = vld [vmem:[%s841 + $0x180] sm:$0xff]
        %v6247 = vld [vmem:[%s841 + $0x188] sm:$0xff]
        %v6248 = vld [vmem:[%s841 + $0x190] sm:$0xff]
        %v6249 = vld [vmem:[%s841 + $0x198] sm:$0xff]
        %v6250 = vld [vmem:[%s841 + $0x1a0] sm:$0xff]
        %v6251 = vld [vmem:[%s841 + $0x1a8] sm:$0xff]
        %v6252 = vld [vmem:[%s841 + $0x1b0] sm:$0xff]
        %v6253 = vld [vmem:[%s841 + $0x1b8] sm:$0xff]
        %v6254 = vld [vmem:[%s841 + $0x1c0] sm:$0xff]
        %v6255 = vld [vmem:[%s841 + $0x1c8] sm:$0xff]
        %v6256 = vld [vmem:[%s841 + $0x1d0] sm:$0xff]
        %v6257 = vld [vmem:[%s841 + $0x1d8] sm:$0xff]
        %v6258 = vld [vmem:[%s841 + $0x1e0] sm:$0xff]
        %v6259 = vld [vmem:[%s841 + $0x1e8] sm:$0xff]
        %v6260 = vld [vmem:[%s841 + $0x1f0] sm:$0xff]
        %v6261 = vld [vmem:[%s841 + $0x1f8] sm:$0xff]
        %v6262 = vld [vmem:[%s850] sm:$0xf]
        %v6264 = vlaneseq
        %v6265 = vshrl.u32 %v6264, 7
        %v6266 = vsub.s32 0, %v6265
        %v6267 = vrot.slane %v6262, %v6266
        %v6268 = vlaneseq
        %v6269 = vshrl.u32 %v6268, 7
        %v6270 = vsub.s32 1, %v6269
        %v6271 = vrot.slane %v6262, %v6270
        %v6272 = vlaneseq
        %v6273 = vshrl.u32 %v6272, 7
        %v6274 = vsub.s32 2, %v6273
        %v6275 = vrot.slane %v6262, %v6274
        %v6276 = vlaneseq
        %v6277 = vshrl.u32 %v6276, 7
        %v6278 = vsub.s32 3, %v6277
        %v6279 = vrot.slane %v6262, %v6278
        %v6348 = vunpack.c.l.b16 %v6198
        %v6349 = vunpack.c.h.b16 %v6198
        %v6350 = vunpack.c.l.b16 %v6199
        %v6351 = vunpack.c.h.b16 %v6199
        %v6352 = vunpack.c.l.b16 %v6200
        %v6353 = vunpack.c.h.b16 %v6200
        %v6354 = vunpack.c.l.b16 %v6201
        %v6355 = vunpack.c.h.b16 %v6201
        %v6356 = vunpack.c.l.b16 %v6202
        %v6357 = vunpack.c.h.b16 %v6202
        %v6358 = vunpack.c.l.b16 %v6203
        %v6359 = vunpack.c.h.b16 %v6203
        %v6360 = vunpack.c.l.b16 %v6204
        %v6361 = vunpack.c.h.b16 %v6204
        %v6362 = vunpack.c.l.b16 %v6205
        %v6363 = vunpack.c.h.b16 %v6205
        %v6364 = vunpack.c.l.b16 %v6206
        %v6365 = vunpack.c.h.b16 %v6206
        %v6366 = vunpack.c.l.b16 %v6207
        %v6367 = vunpack.c.h.b16 %v6207
        %v6368 = vunpack.c.l.b16 %v6208
        %v6369 = vunpack.c.h.b16 %v6208
        %v6370 = vunpack.c.l.b16 %v6209
        %v6371 = vunpack.c.h.b16 %v6209
        %v6372 = vunpack.c.l.b16 %v6210
        %v6373 = vunpack.c.h.b16 %v6210
        %v6374 = vunpack.c.l.b16 %v6211
        %v6375 = vunpack.c.h.b16 %v6211
        %v6376 = vunpack.c.l.b16 %v6212
        %v6377 = vunpack.c.h.b16 %v6212
        %v6378 = vunpack.c.l.b16 %v6213
        %v6379 = vunpack.c.h.b16 %v6213
        %v6380 = vunpack.c.l.b16 %v6214
        %v6381 = vunpack.c.h.b16 %v6214
        %v6382 = vunpack.c.l.b16 %v6215
        %v6383 = vunpack.c.h.b16 %v6215
        %v6384 = vunpack.c.l.b16 %v6216
        %v6385 = vunpack.c.h.b16 %v6216
        %v6386 = vunpack.c.l.b16 %v6217
        %v6387 = vunpack.c.h.b16 %v6217
        %v6388 = vunpack.c.l.b16 %v6218
        %v6389 = vunpack.c.h.b16 %v6218
        %v6390 = vunpack.c.l.b16 %v6219
        %v6391 = vunpack.c.h.b16 %v6219
        %v6392 = vunpack.c.l.b16 %v6220
        %v6393 = vunpack.c.h.b16 %v6220
        %v6394 = vunpack.c.l.b16 %v6221
        %v6395 = vunpack.c.h.b16 %v6221
        %v6396 = vunpack.c.l.b16 %v6222
        %v6397 = vunpack.c.h.b16 %v6222
        %v6398 = vunpack.c.l.b16 %v6223
        %v6399 = vunpack.c.h.b16 %v6223
        %v6400 = vunpack.c.l.b16 %v6224
        %v6401 = vunpack.c.h.b16 %v6224
        %v6402 = vunpack.c.l.b16 %v6225
        %v6403 = vunpack.c.h.b16 %v6225
        %v6404 = vunpack.c.l.b16 %v6226
        %v6405 = vunpack.c.h.b16 %v6226
        %v6406 = vunpack.c.l.b16 %v6227
        %v6407 = vunpack.c.h.b16 %v6227
        %v6408 = vunpack.c.l.b16 %v6228
        %v6409 = vunpack.c.h.b16 %v6228
        %v6410 = vunpack.c.l.b16 %v6229
        %v6411 = vunpack.c.h.b16 %v6229
        %v6412 = vunpack.c.l.b16 %v6230
        %v6413 = vunpack.c.h.b16 %v6230
        %v6414 = vunpack.c.l.b16 %v6231
        %v6415 = vunpack.c.h.b16 %v6231
        %v6416 = vunpack.c.l.b16 %v6232
        %v6417 = vunpack.c.h.b16 %v6232
        %v6418 = vunpack.c.l.b16 %v6233
        %v6419 = vunpack.c.h.b16 %v6233
        %v6420 = vunpack.c.l.b16 %v6234
        %v6421 = vunpack.c.h.b16 %v6234
        %v6422 = vunpack.c.l.b16 %v6235
        %v6423 = vunpack.c.h.b16 %v6235
        %v6424 = vunpack.c.l.b16 %v6236
        %v6425 = vunpack.c.h.b16 %v6236
        %v6426 = vunpack.c.l.b16 %v6237
        %v6427 = vunpack.c.h.b16 %v6237
        %v6428 = vunpack.c.l.b16 %v6238
        %v6429 = vunpack.c.h.b16 %v6238
        %v6430 = vunpack.c.l.b16 %v6239
        %v6431 = vunpack.c.h.b16 %v6239
        %v6432 = vunpack.c.l.b16 %v6240
        %v6433 = vunpack.c.h.b16 %v6240
        %v6434 = vunpack.c.l.b16 %v6241
        %v6435 = vunpack.c.h.b16 %v6241
        %v6436 = vunpack.c.l.b16 %v6242
        %v6437 = vunpack.c.h.b16 %v6242
        %v6438 = vunpack.c.l.b16 %v6243
        %v6439 = vunpack.c.h.b16 %v6243
        %v6440 = vunpack.c.l.b16 %v6244
        %v6441 = vunpack.c.h.b16 %v6244
        %v6442 = vunpack.c.l.b16 %v6245
        %v6443 = vunpack.c.h.b16 %v6245
        %v6444 = vunpack.c.l.b16 %v6246
        %v6445 = vunpack.c.h.b16 %v6246
        %v6446 = vunpack.c.l.b16 %v6247
        %v6447 = vunpack.c.h.b16 %v6247
        %v6448 = vunpack.c.l.b16 %v6248
        %v6449 = vunpack.c.h.b16 %v6248
        %v6450 = vunpack.c.l.b16 %v6249
        %v6451 = vunpack.c.h.b16 %v6249
        %v6452 = vunpack.c.l.b16 %v6250
        %v6453 = vunpack.c.h.b16 %v6250
        %v6454 = vunpack.c.l.b16 %v6251
        %v6455 = vunpack.c.h.b16 %v6251
        %v6456 = vunpack.c.l.b16 %v6252
        %v6457 = vunpack.c.h.b16 %v6252
        %v6458 = vunpack.c.l.b16 %v6253
        %v6459 = vunpack.c.h.b16 %v6253
        %v6460 = vunpack.c.l.b16 %v6254
        %v6461 = vunpack.c.h.b16 %v6254
        %v6462 = vunpack.c.l.b16 %v6255
        %v6463 = vunpack.c.h.b16 %v6255
        %v6464 = vunpack.c.l.b16 %v6256
        %v6465 = vunpack.c.h.b16 %v6256
        %v6466 = vunpack.c.l.b16 %v6257
        %v6467 = vunpack.c.h.b16 %v6257
        %v6468 = vunpack.c.l.b16 %v6258
        %v6469 = vunpack.c.h.b16 %v6258
        %v6470 = vunpack.c.l.b16 %v6259
        %v6471 = vunpack.c.h.b16 %v6259
        %v6472 = vunpack.c.l.b16 %v6260
        %v6473 = vunpack.c.h.b16 %v6260
        %v6474 = vunpack.c.l.b16 %v6261
        %v6475 = vunpack.c.h.b16 %v6261
        %v6476 = vpack.c.b16 %v6352, %v6348
        %v6477 = vpack.c.b16 %v6353, %v6349
        %v6478 = vpack.c.b16 %v6354, %v6350
        %v6479 = vpack.c.b16 %v6355, %v6351
        %v6480 = vpack.c.b16 %v6360, %v6356
        %v6481 = vpack.c.b16 %v6361, %v6357
        %v6482 = vpack.c.b16 %v6362, %v6358
        %v6483 = vpack.c.b16 %v6363, %v6359
        %v6484 = vpack.c.b16 %v6368, %v6364
        %v6485 = vpack.c.b16 %v6369, %v6365
        %v6486 = vpack.c.b16 %v6370, %v6366
        %v6487 = vpack.c.b16 %v6371, %v6367
        %v6488 = vpack.c.b16 %v6376, %v6372
        %v6489 = vpack.c.b16 %v6377, %v6373
        %v6490 = vpack.c.b16 %v6378, %v6374
        %v6491 = vpack.c.b16 %v6379, %v6375
        %v6492 = vpack.c.b16 %v6384, %v6380
        %v6493 = vpack.c.b16 %v6385, %v6381
        %v6494 = vpack.c.b16 %v6386, %v6382
        %v6495 = vpack.c.b16 %v6387, %v6383
        %v6496 = vpack.c.b16 %v6392, %v6388
        %v6497 = vpack.c.b16 %v6393, %v6389
        %v6498 = vpack.c.b16 %v6394, %v6390
        %v6499 = vpack.c.b16 %v6395, %v6391
        %v6500 = vpack.c.b16 %v6400, %v6396
        %v6501 = vpack.c.b16 %v6401, %v6397
        %v6502 = vpack.c.b16 %v6402, %v6398
        %v6503 = vpack.c.b16 %v6403, %v6399
        %v6504 = vpack.c.b16 %v6408, %v6404
        %v6505 = vpack.c.b16 %v6409, %v6405
        %v6506 = vpack.c.b16 %v6410, %v6406
        %v6507 = vpack.c.b16 %v6411, %v6407
        %v6508 = vpack.c.b16 %v6416, %v6412
        %v6509 = vpack.c.b16 %v6417, %v6413
        %v6510 = vpack.c.b16 %v6418, %v6414
        %v6511 = vpack.c.b16 %v6419, %v6415
        %v6512 = vpack.c.b16 %v6424, %v6420
        %v6513 = vpack.c.b16 %v6425, %v6421
        %v6514 = vpack.c.b16 %v6426, %v6422
        %v6515 = vpack.c.b16 %v6427, %v6423
        %v6516 = vpack.c.b16 %v6432, %v6428
        %v6517 = vpack.c.b16 %v6433, %v6429
        %v6518 = vpack.c.b16 %v6434, %v6430
        %v6519 = vpack.c.b16 %v6435, %v6431
        %v6520 = vpack.c.b16 %v6440, %v6436
        %v6521 = vpack.c.b16 %v6441, %v6437
        %v6522 = vpack.c.b16 %v6442, %v6438
        %v6523 = vpack.c.b16 %v6443, %v6439
        %v6524 = vpack.c.b16 %v6448, %v6444
        %v6525 = vpack.c.b16 %v6449, %v6445
        %v6526 = vpack.c.b16 %v6450, %v6446
        %v6527 = vpack.c.b16 %v6451, %v6447
        %v6528 = vpack.c.b16 %v6456, %v6452
        %v6529 = vpack.c.b16 %v6457, %v6453
        %v6530 = vpack.c.b16 %v6458, %v6454
        %v6531 = vpack.c.b16 %v6459, %v6455
        %v6532 = vpack.c.b16 %v6464, %v6460
        %v6533 = vpack.c.b16 %v6465, %v6461
        %v6534 = vpack.c.b16 %v6466, %v6462
        %v6535 = vpack.c.b16 %v6467, %v6463
        %v6536 = vpack.c.b16 %v6472, %v6468
        %v6537 = vpack.c.b16 %v6473, %v6469
        %v6538 = vpack.c.b16 %v6474, %v6470
        %v6539 = vpack.c.b16 %v6475, %v6471
        %6604 = vmatprep.subr.bf16.mxu0 %v6477
        %6605 = vmatpush1.bf16.msra.mxu0 %v6476
        %6606 = vmatprep.subr.bf16.mxu0 %v6481
        %6607 = vmatpush1.bf16.msra.mxu0 %v6480
        %6608 = vmatprep.subr.bf16.mxu0 %v6485
        %6609 = vmatpush1.bf16.msra.mxu0 %v6484
        %6610 = vmatprep.subr.bf16.mxu0 %v6489
        %6611 = vmatpush1.bf16.msra.mxu0 %v6488
        %6612 = vmatprep.subr.bf16.mxu0 %v6493
        %6613 = vmatpush1.bf16.msra.mxu0 %v6492
        %6614 = vmatprep.subr.bf16.mxu0 %v6497
        %6615 = vmatpush1.bf16.msra.mxu0 %v6496
        %6616 = vmatprep.subr.bf16.mxu0 %v6501
        %6617 = vmatpush1.bf16.msra.mxu0 %v6500
        %6618 = vmatprep.subr.bf16.mxu0 %v6505
        %6619 = vmatpush1.bf16.msra.mxu0 %v6504
        %6620 = vmatprep.subr.bf16.mxu0 %v6509
        %6621 = vmatpush1.bf16.msra.mxu0 %v6508
        %6622 = vmatprep.subr.bf16.mxu0 %v6513
        %6623 = vmatpush1.bf16.msra.mxu0 %v6512
        %6624 = vmatprep.subr.bf16.mxu0 %v6517
        %6625 = vmatpush1.bf16.msra.mxu0 %v6516
        %6626 = vmatprep.subr.bf16.mxu0 %v6521
        %6627 = vmatpush1.bf16.msra.mxu0 %v6520
        %6628 = vmatprep.subr.bf16.mxu0 %v6525
        %6629 = vmatpush1.bf16.msra.mxu0 %v6524
        %6630 = vmatprep.subr.bf16.mxu0 %v6529
        %6631 = vmatpush1.bf16.msra.mxu0 %v6528
        %6632 = vmatprep.subr.bf16.mxu0 %v6533
        %6633 = vmatpush1.bf16.msra.mxu0 %v6532
        %6634 = vmatprep.subr.bf16.mxu0 %v6537
        %6635 = vmatpush1.bf16.msra.mxu0 %v6536
        %6636 = vmatprep.mubr.bf16.mxu0 %v6167
        %6637 = vmatmul.mubr.bf16.gmra.mrb[0].mxu0 %v6166
        %v6638 = vpop.f32.mrb[0].mxu0
        %v6639 = vadd.f32 %v6267, %v6638
        %v6640 = vpop.f32.mrb[0].mxu0
        %v6641 = vadd.f32 %v6271, %v6640
        %v6642 = vpop.f32.mrb[0].mxu0
        %v6643 = vadd.f32 %v6267, %v6642
        %v6644 = vpop.f32.mrb[0].mxu0
        %v6645 = vadd.f32 %v6271, %v6644
        %6646 = vmatprep.mubr.bf16.mxu0 %v6169
        %6647 = vmatmul.mubr.bf16.gmra.mrb[0].mxu0 %v6168
        %v6648 = vpop.f32.mrb[0].mxu0
        %v6649 = vadd.f32 %v6267, %v6648
        %v6650 = vpop.f32.mrb[0].mxu0
        %v6651 = vadd.f32 %v6271, %v6650
        %v6652 = vpop.f32.mrb[0].mxu0
        %v6653 = vadd.f32 %v6267, %v6652
        %v6654 = vpop.f32.mrb[0].mxu0
        %v6655 = vadd.f32 %v6271, %v6654
        %6656 = vmatprep.mubr.bf16.mxu0 %v6171
        %6657 = vmatmul.mubr.bf16.gmra.mrb[0].mxu0 %v6170
        %v6658 = vpop.f32.mrb[0].mxu0
        %v6659 = vadd.f32 %v6267, %v6658
        %v6660 = vpop.f32.mrb[0].mxu0
        %v6661 = vadd.f32 %v6271, %v6660
        %v6662 = vpop.f32.mrb[0].mxu0
        %v6663 = vadd.f32 %v6267, %v6662
        %v6664 = vpop.f32.mrb[0].mxu0
        %v6665 = vadd.f32 %v6271, %v6664
        %6666 = vmatprep.mubr.bf16.mxu0 %v6173
        %6667 = vmatmul.mubr.bf16.gmra.mrb[0].mxu0 %v6172
        %v6668 = vpop.f32.mrb[0].mxu0
        %v6669 = vadd.f32 %v6267, %v6668
        %v6670 = vpop.f32.mrb[0].mxu0
        %v6671 = vadd.f32 %v6271, %v6670
        %v6672 = vpop.f32.mrb[0].mxu0
        %v6673 = vadd.f32 %v6267, %v6672
        %v6674 = vpop.f32.mrb[0].mxu0
        %v6675 = vadd.f32 %v6271, %v6674
        %6676 = vmatprep.mubr.bf16.mxu0 %v6175
        %6677 = vmatmul.mubr.bf16.gmra.mrb[0].mxu0 %v6174
        %v6678 = vpop.f32.mrb[0].mxu0
        %v6679 = vadd.f32 %v6267, %v6678
        %v6680 = vpop.f32.mrb[0].mxu0
        %v6681 = vadd.f32 %v6271, %v6680
        %v6682 = vpop.f32.mrb[0].mxu0
        %v6683 = vadd.f32 %v6267, %v6682
        %v6684 = vpop.f32.mrb[0].mxu0
        %v6685 = vadd.f32 %v6271, %v6684
        %6686 = vmatprep.mubr.bf16.mxu0 %v6177
        %6687 = vmatmul.mubr.bf16.gmra.mrb[0].mxu0 %v6176
        %v6688 = vpop.f32.mrb[0].mxu0
        %v6689 = vadd.f32 %v6267, %v6688
        %v6690 = vpop.f32.mrb[0].mxu0
        %v6691 = vadd.f32 %v6271, %v6690
        %v6692 = vpop.f32.mrb[0].mxu0
        %v6693 = vadd.f32 %v6267, %v6692
        %v6694 = vpop.f32.mrb[0].mxu0
        %v6695 = vadd.f32 %v6271, %v6694
        %6696 = vmatprep.mubr.bf16.mxu0 %v6179
        %6697 = vmatmul.mubr.bf16.gmra.mrb[0].mxu0 %v6178
        %v6698 = vpop.f32.mrb[0].mxu0
        %v6699 = vadd.f32 %v6267, %v6698
        %v6700 = vpop.f32.mrb[0].mxu0
        %v6701 = vadd.f32 %v6271, %v6700
        %v6702 = vpop.f32.mrb[0].mxu0
        %v6703 = vadd.f32 %v6267, %v6702
        %v6704 = vpop.f32.mrb[0].mxu0
        %v6705 = vadd.f32 %v6271, %v6704
        %6706 = vmatprep.mubr.bf16.mxu0 %v6181
        %6707 = vmatmul.mubr.bf16.gmra.mrb[0].mxu0 %v6180
        %v6708 = vpop.f32.mrb[0].mxu0
        %v6709 = vadd.f32 %v6267, %v6708
        %v6710 = vpop.f32.mrb[0].mxu0
        %v6711 = vadd.f32 %v6271, %v6710
        %v6712 = vpop.f32.mrb[0].mxu0
        %v6713 = vadd.f32 %v6267, %v6712
        %v6714 = vpop.f32.mrb[0].mxu0
        %v6715 = vadd.f32 %v6271, %v6714
        %6716 = vmatprep.mubr.bf16.mxu0 %v6183
        %6717 = vmatmul.mubr.bf16.gmra.mrb[0].mxu0 %v6182
        %v6718 = vpop.f32.mrb[0].mxu0
        %v6719 = vadd.f32 %v6267, %v6718
        %v6720 = vpop.f32.mrb[0].mxu0
        %v6721 = vadd.f32 %v6271, %v6720
        %v6722 = vpop.f32.mrb[0].mxu0
        %v6723 = vadd.f32 %v6267, %v6722
        %v6724 = vpop.f32.mrb[0].mxu0
        %v6725 = vadd.f32 %v6271, %v6724
        %6726 = vmatprep.mubr.bf16.mxu0 %v6185
        %6727 = vmatmul.mubr.bf16.gmra.mrb[0].mxu0 %v6184
        %v6728 = vpop.f32.mrb[0].mxu0
        %v6729 = vadd.f32 %v6267, %v6728
        %v6730 = vpop.f32.mrb[0].mxu0
        %v6731 = vadd.f32 %v6271, %v6730
        %v6732 = vpop.f32.mrb[0].mxu0
        %v6733 = vadd.f32 %v6267, %v6732
        %v6734 = vpop.f32.mrb[0].mxu0
        %v6735 = vadd.f32 %v6271, %v6734
        %6736 = vmatprep.mubr.bf16.mxu0 %v6187
        %6737 = vmatmul.mubr.bf16.gmra.mrb[0].mxu0 %v6186
        %v6738 = vpop.f32.mrb[0].mxu0
        %v6739 = vadd.f32 %v6267, %v6738
        %v6740 = vpop.f32.mrb[0].mxu0
        %v6741 = vadd.f32 %v6271, %v6740
        %v6742 = vpop.f32.mrb[0].mxu0
        %v6743 = vadd.f32 %v6267, %v6742
        %v6744 = vpop.f32.mrb[0].mxu0
        %v6745 = vadd.f32 %v6271, %v6744
        %6746 = vmatprep.mubr.bf16.mxu0 %v6189
        %6747 = vmatmul.mubr.bf16.gmra.mrb[0].mxu0 %v6188
        %v6748 = vpop.f32.mrb[0].mxu0
        %v6749 = vadd.f32 %v6267, %v6748
        %v6750 = vpop.f32.mrb[0].mxu0
        %v6751 = vadd.f32 %v6271, %v6750
        %v6752 = vpop.f32.mrb[0].mxu0
        %v6753 = vadd.f32 %v6267, %v6752
        %v6754 = vpop.f32.mrb[0].mxu0
        %v6755 = vadd.f32 %v6271, %v6754
        %6756 = vmatprep.mubr.bf16.mxu0 %v6191
        %6757 = vmatmul.mubr.bf16.gmra.mrb[0].mxu0 %v6190
        %v6758 = vpop.f32.mrb[0].mxu0
        %v6759 = vadd.f32 %v6267, %v6758
        %v6760 = vpop.f32.mrb[0].mxu0
        %v6761 = vadd.f32 %v6271, %v6760
        %v6762 = vpop.f32.mrb[0].mxu0
        %v6763 = vadd.f32 %v6267, %v6762
        %v6764 = vpop.f32.mrb[0].mxu0
        %v6765 = vadd.f32 %v6271, %v6764
        %6766 = vmatprep.mubr.bf16.mxu0 %v6193
        %6767 = vmatmul.mubr.bf16.gmra.mrb[0].mxu0 %v6192
        %v6768 = vpop.f32.mrb[0].mxu0
        %v6769 = vadd.f32 %v6267, %v6768
        %v6770 = vpop.f32.mrb[0].mxu0
        %v6771 = vadd.f32 %v6271, %v6770
        %v6772 = vpop.f32.mrb[0].mxu0
        %v6773 = vadd.f32 %v6267, %v6772
        %v6774 = vpop.f32.mrb[0].mxu0
        %v6775 = vadd.f32 %v6271, %v6774
        %6776 = vmatprep.mubr.bf16.mxu0 %v6195
        %6777 = vmatmul.mubr.bf16.gmra.mrb[0].mxu0 %v6194
        %v6778 = vpop.f32.mrb[0].mxu0
        %v6779 = vadd.f32 %v6267, %v6778
        %v6780 = vpop.f32.mrb[0].mxu0
        %v6781 = vadd.f32 %v6271, %v6780
        %v6782 = vpop.f32.mrb[0].mxu0
        %v6783 = vadd.f32 %v6267, %v6782
        %v6784 = vpop.f32.mrb[0].mxu0
        %v6785 = vadd.f32 %v6271, %v6784
        %6786 = vmatprep.mubr.bf16.mxu0 %v6197
        %6787 = vmatmul.mubr.bf16.gmra.mrb[0].mxu0 %v6196
        %v6788 = vpop.f32.mrb[0].mxu0
        %v6789 = vadd.f32 %v6267, %v6788
        %v6790 = vpop.f32.mrb[0].mxu0
        %v6791 = vadd.f32 %v6271, %v6790
        %v6792 = vpop.f32.mrb[0].mxu0
        %v6793 = vadd.f32 %v6267, %v6792
        %v6794 = vpop.f32.mrb[0].mxu0
        %v6795 = vadd.f32 %v6271, %v6794
        %6796 = vdwg.mxu0
        %6797 = vmatprep.subr.bf16.mxu0 %v6479
        %6798 = vmatpush1.bf16.msra.mxu0 %v6478
        %6799 = vmatprep.subr.bf16.mxu0 %v6483
        %6800 = vmatpush1.bf16.msra.mxu0 %v6482
        %6801 = vmatprep.subr.bf16.mxu0 %v6487
        %6802 = vmatpush1.bf16.msra.mxu0 %v6486
        %6803 = vmatprep.subr.bf16.mxu0 %v6491
        %6804 = vmatpush1.bf16.msra.mxu0 %v6490
        %6805 = vmatprep.subr.bf16.mxu0 %v6495
        %6806 = vmatpush1.bf16.msra.mxu0 %v6494
        %6807 = vmatprep.subr.bf16.mxu0 %v6499
        %6808 = vmatpush1.bf16.msra.mxu0 %v6498
        %6809 = vmatprep.subr.bf16.mxu0 %v6503
        %6810 = vmatpush1.bf16.msra.mxu0 %v6502
        %6811 = vmatprep.subr.bf16.mxu0 %v6507
        %6812 = vmatpush1.bf16.msra.mxu0 %v6506
        %6813 = vmatprep.subr.bf16.mxu0 %v6511
        %6814 = vmatpush1.bf16.msra.mxu0 %v6510
        %6815 = vmatprep.subr.bf16.mxu0 %v6515
        %6816 = vmatpush1.bf16.msra.mxu0 %v6514
        %6817 = vmatprep.subr.bf16.mxu0 %v6519
        %6818 = vmatpush1.bf16.msra.mxu0 %v6518
        %6819 = vmatprep.subr.bf16.mxu0 %v6523
        %6820 = vmatpush1.bf16.msra.mxu0 %v6522
        %6821 = vmatprep.subr.bf16.mxu0 %v6527
        %6822 = vmatpush1.bf16.msra.mxu0 %v6526
        %6823 = vmatprep.subr.bf16.mxu0 %v6531
        %6824 = vmatpush1.bf16.msra.mxu0 %v6530
        %6825 = vmatprep.subr.bf16.mxu0 %v6535
        %6826 = vmatpush1.bf16.msra.mxu0 %v6534
        %6827 = vmatprep.subr.bf16.mxu0 %v6539
        %6828 = vmatpush1.bf16.msra.mxu0 %v6538
        %6829 = vmatprep.mubr.bf16.mxu0 %v6167
        %6830 = vmatmul.mubr.bf16.gmra.mrb[0].mxu0 %v6166
        %v6831 = vpop.f32.mrb[0].mxu0
        %v6832 = vadd.f32 %v6275, %v6831
        %v6833 = vpop.f32.mrb[0].mxu0
        %v6834 = vadd.f32 %v6279, %v6833
        %v6835 = vpop.f32.mrb[0].mxu0
        %v6836 = vadd.f32 %v6275, %v6835
        %v6837 = vpop.f32.mrb[0].mxu0
        %v6838 = vadd.f32 %v6279, %v6837
        %6839 = vmatprep.mubr.bf16.mxu0 %v6169
        %6840 = vmatmul.mubr.bf16.gmra.mrb[0].mxu0 %v6168
        %v6841 = vpop.f32.mrb[0].mxu0
        %v6842 = vadd.f32 %v6275, %v6841
        %v6843 = vpop.f32.mrb[0].mxu0
        %v6844 = vadd.f32 %v6279, %v6843
        %v6845 = vpop.f32.mrb[0].mxu0
        %v6846 = vadd.f32 %v6275, %v6845
        %v6847 = vpop.f32.mrb[0].mxu0
        %v6848 = vadd.f32 %v6279, %v6847
        %6849 = vmatprep.mubr.bf16.mxu0 %v6171
        %6850 = vmatmul.mubr.bf16.gmra.mrb[0].mxu0 %v6170
        %v6851 = vpop.f32.mrb[0].mxu0
        %v6852 = vadd.f32 %v6275, %v6851
        %v6853 = vpop.f32.mrb[0].mxu0
        %v6854 = vadd.f32 %v6279, %v6853
        %v6855 = vpop.f32.mrb[0].mxu0
        %v6856 = vadd.f32 %v6275, %v6855
        %v6857 = vpop.f32.mrb[0].mxu0
        %v6858 = vadd.f32 %v6279, %v6857
        %6859 = vmatprep.mubr.bf16.mxu0 %v6173
        %6860 = vmatmul.mubr.bf16.gmra.mrb[0].mxu0 %v6172
        %v6861 = vpop.f32.mrb[0].mxu0
        %v6862 = vadd.f32 %v6275, %v6861
        %v6863 = vpop.f32.mrb[0].mxu0
        %v6864 = vadd.f32 %v6279, %v6863
        %v6865 = vpop.f32.mrb[0].mxu0
        %v6866 = vadd.f32 %v6275, %v6865
        %v6867 = vpop.f32.mrb[0].mxu0
        %v6868 = vadd.f32 %v6279, %v6867
        %6869 = vmatprep.mubr.bf16.mxu0 %v6175
        %6870 = vmatmul.mubr.bf16.gmra.mrb[0].mxu0 %v6174
        %v6871 = vpop.f32.mrb[0].mxu0
        %v6872 = vadd.f32 %v6275, %v6871
        %v6873 = vpop.f32.mrb[0].mxu0
        %v6874 = vadd.f32 %v6279, %v6873
        %v6875 = vpop.f32.mrb[0].mxu0
        %v6876 = vadd.f32 %v6275, %v6875
        %v6877 = vpop.f32.mrb[0].mxu0
        %v6878 = vadd.f32 %v6279, %v6877
        %6879 = vmatprep.mubr.bf16.mxu0 %v6177
        %6880 = vmatmul.mubr.bf16.gmra.mrb[0].mxu0 %v6176
        %v6881 = vpop.f32.mrb[0].mxu0
        %v6882 = vadd.f32 %v6275, %v6881
        %v6883 = vpop.f32.mrb[0].mxu0
        %v6884 = vadd.f32 %v6279, %v6883
        %v6885 = vpop.f32.mrb[0].mxu0
        %v6886 = vadd.f32 %v6275, %v6885
        %v6887 = vpop.f32.mrb[0].mxu0
        %v6888 = vadd.f32 %v6279, %v6887
        %6889 = vmatprep.mubr.bf16.mxu0 %v6179
        %6890 = vmatmul.mubr.bf16.gmra.mrb[0].mxu0 %v6178
        %v6891 = vpop.f32.mrb[0].mxu0
        %v6892 = vadd.f32 %v6275, %v6891
        %v6893 = vpop.f32.mrb[0].mxu0
        %v6894 = vadd.f32 %v6279, %v6893
        %v6895 = vpop.f32.mrb[0].mxu0
        %v6896 = vadd.f32 %v6275, %v6895
        %v6897 = vpop.f32.mrb[0].mxu0
        %v6898 = vadd.f32 %v6279, %v6897
        %6899 = vmatprep.mubr.bf16.mxu0 %v6181
        %6900 = vmatmul.mubr.bf16.gmra.mrb[0].mxu0 %v6180
        %v6901 = vpop.f32.mrb[0].mxu0
        %v6902 = vadd.f32 %v6275, %v6901
        %v6903 = vpop.f32.mrb[0].mxu0
        %v6904 = vadd.f32 %v6279, %v6903
        %v6905 = vpop.f32.mrb[0].mxu0
        %v6906 = vadd.f32 %v6275, %v6905
        %v6907 = vpop.f32.mrb[0].mxu0
        %v6908 = vadd.f32 %v6279, %v6907
        %6909 = vmatprep.mubr.bf16.mxu0 %v6183
        %6910 = vmatmul.mubr.bf16.gmra.mrb[0].mxu0 %v6182
        %v6911 = vpop.f32.mrb[0].mxu0
        %v6912 = vadd.f32 %v6275, %v6911
        %v6913 = vpop.f32.mrb[0].mxu0
        %v6914 = vadd.f32 %v6279, %v6913
        %v6915 = vpop.f32.mrb[0].mxu0
        %v6916 = vadd.f32 %v6275, %v6915
        %v6917 = vpop.f32.mrb[0].mxu0
        %v6918 = vadd.f32 %v6279, %v6917
        %6919 = vmatprep.mubr.bf16.mxu0 %v6185
        %6920 = vmatmul.mubr.bf16.gmra.mrb[0].mxu0 %v6184
        %v6921 = vpop.f32.mrb[0].mxu0
        %v6922 = vadd.f32 %v6275, %v6921
        %v6923 = vpop.f32.mrb[0].mxu0
        %v6924 = vadd.f32 %v6279, %v6923
        %v6925 = vpop.f32.mrb[0].mxu0
        %v6926 = vadd.f32 %v6275, %v6925
        %v6927 = vpop.f32.mrb[0].mxu0
        %v6928 = vadd.f32 %v6279, %v6927
        %6929 = vmatprep.mubr.bf16.mxu0 %v6187
        %6930 = vmatmul.mubr.bf16.gmra.mrb[0].mxu0 %v6186
        %v6931 = vpop.f32.mrb[0].mxu0
        %v6932 = vadd.f32 %v6275, %v6931
        %v6933 = vpop.f32.mrb[0].mxu0
        %v6934 = vadd.f32 %v6279, %v6933
        %v6935 = vpop.f32.mrb[0].mxu0
        %v6936 = vadd.f32 %v6275, %v6935
        %v6937 = vpop.f32.mrb[0].mxu0
        %v6938 = vadd.f32 %v6279, %v6937
        %6939 = vmatprep.mubr.bf16.mxu0 %v6189
        %6940 = vmatmul.mubr.bf16.gmra.mrb[0].mxu0 %v6188
        %v6941 = vpop.f32.mrb[0].mxu0
        %v6942 = vadd.f32 %v6275, %v6941
        %v6943 = vpop.f32.mrb[0].mxu0
        %v6944 = vadd.f32 %v6279, %v6943
        %v6945 = vpop.f32.mrb[0].mxu0
        %v6946 = vadd.f32 %v6275, %v6945
        %v6947 = vpop.f32.mrb[0].mxu0
        %v6948 = vadd.f32 %v6279, %v6947
        %6949 = vmatprep.mubr.bf16.mxu0 %v6191
        %6950 = vmatmul.mubr.bf16.gmra.mrb[0].mxu0 %v6190
        %v6951 = vpop.f32.mrb[0].mxu0
        %v6952 = vadd.f32 %v6275, %v6951
        %v6953 = vpop.f32.mrb[0].mxu0
        %v6954 = vadd.f32 %v6279, %v6953
        %v6955 = vpop.f32.mrb[0].mxu0
        %v6956 = vadd.f32 %v6275, %v6955
        %v6957 = vpop.f32.mrb[0].mxu0
        %v6958 = vadd.f32 %v6279, %v6957
        %6959 = vmatprep.mubr.bf16.mxu0 %v6193
        %6960 = vmatmul.mubr.bf16.gmra.mrb[0].mxu0 %v6192
        %v6961 = vpop.f32.mrb[0].mxu0
        %v6962 = vadd.f32 %v6275, %v6961
        %v6963 = vpop.f32.mrb[0].mxu0
        %v6964 = vadd.f32 %v6279, %v6963
        %v6965 = vpop.f32.mrb[0].mxu0
        %v6966 = vadd.f32 %v6275, %v6965
        %v6967 = vpop.f32.mrb[0].mxu0
        %v6968 = vadd.f32 %v6279, %v6967
        %6969 = vmatprep.mubr.bf16.mxu0 %v6195
        %6970 = vmatmul.mubr.bf16.gmra.mrb[0].mxu0 %v6194
        %v6971 = vpop.f32.mrb[0].mxu0
        %v6972 = vadd.f32 %v6275, %v6971
        %v6973 = vpop.f32.mrb[0].mxu0
        %v6974 = vadd.f32 %v6279, %v6973
        %v6975 = vpop.f32.mrb[0].mxu0
        %v6976 = vadd.f32 %v6275, %v6975
        %v6977 = vpop.f32.mrb[0].mxu0
        %v6978 = vadd.f32 %v6279, %v6977
        %6979 = vmatprep.mubr.bf16.mxu0 %v6197
        %6980 = vmatmul.mubr.bf16.gmra.mrb[0].mxu0 %v6196
        %v6981 = vpop.f32.mrb[0].mxu0
        %v6982 = vadd.f32 %v6275, %v6981
        %v6983 = vpop.f32.mrb[0].mxu0
        %v6984 = vadd.f32 %v6279, %v6983
        %v6985 = vpop.f32.mrb[0].mxu0
        %v6986 = vadd.f32 %v6275, %v6985
        %v6987 = vpop.f32.mrb[0].mxu0
        %v6988 = vadd.f32 %v6279, %v6987
        %6989 = vdwg.mxu0
        %v6990 = vmax.f32 %v6639, 0.0
        %v6991 = vmax.f32 %v6641, 0.0
        %v6992 = vmax.f32 %v6832, 0.0
        %v6993 = vmax.f32 %v6834, 0.0
        %v6994 = vmax.f32 %v6643, 0.0
        %v6995 = vmax.f32 %v6645, 0.0
        %v6996 = vmax.f32 %v6836, 0.0
        %v6997 = vmax.f32 %v6838, 0.0
        %v6998 = vmax.f32 %v6649, 0.0
        %v6999 = vmax.f32 %v6651, 0.0
        %v7000 = vmax.f32 %v6842, 0.0
        %v7001 = vmax.f32 %v6844, 0.0
        %v7002 = vmax.f32 %v6653, 0.0
        %v7003 = vmax.f32 %v6655, 0.0
        %v7004 = vmax.f32 %v6846, 0.0
        %v7005 = vmax.f32 %v6848, 0.0
        %v7006 = vmax.f32 %v6659, 0.0
        %v7007 = vmax.f32 %v6661, 0.0
        %v7008 = vmax.f32 %v6852, 0.0
        %v7009 = vmax.f32 %v6854, 0.0
        %v7010 = vmax.f32 %v6663, 0.0
        %v7011 = vmax.f32 %v6665, 0.0
        %v7012 = vmax.f32 %v6856, 0.0
        %v7013 = vmax.f32 %v6858, 0.0
        %v7014 = vmax.f32 %v6669, 0.0
        %v7015 = vmax.f32 %v6671, 0.0
        %v7016 = vmax.f32 %v6862, 0.0
        %v7017 = vmax.f32 %v6864, 0.0
        %v7018 = vmax.f32 %v6673, 0.0
        %v7019 = vmax.f32 %v6675, 0.0
        %v7020 = vmax.f32 %v6866, 0.0
        %v7021 = vmax.f32 %v6868, 0.0
        %v7022 = vmax.f32 %v6679, 0.0
        %v7023 = vmax.f32 %v6681, 0.0
        %v7024 = vmax.f32 %v6872, 0.0
        %v7025 = vmax.f32 %v6874, 0.0
        %v7026 = vmax.f32 %v6683, 0.0
        %v7027 = vmax.f32 %v6685, 0.0
        %v7028 = vmax.f32 %v6876, 0.0
        %v7029 = vmax.f32 %v6878, 0.0
        %v7030 = vmax.f32 %v6689, 0.0
        %v7031 = vmax.f32 %v6691, 0.0
        %v7032 = vmax.f32 %v6882, 0.0
        %v7033 = vmax.f32 %v6884, 0.0
        %v7034 = vmax.f32 %v6693, 0.0
        %v7035 = vmax.f32 %v6695, 0.0
        %v7036 = vmax.f32 %v6886, 0.0
        %v7037 = vmax.f32 %v6888, 0.0
        %v7038 = vmax.f32 %v6699, 0.0
        %v7039 = vmax.f32 %v6701, 0.0
        %v7040 = vmax.f32 %v6892, 0.0
        %v7041 = vmax.f32 %v6894, 0.0
        %v7042 = vmax.f32 %v6703, 0.0
        %v7043 = vmax.f32 %v6705, 0.0
        %v7044 = vmax.f32 %v6896, 0.0
        %v7045 = vmax.f32 %v6898, 0.0
        %v7046 = vmax.f32 %v6709, 0.0
        %v7047 = vmax.f32 %v6711, 0.0
        %v7048 = vmax.f32 %v6902, 0.0
        %v7049 = vmax.f32 %v6904, 0.0
        %v7050 = vmax.f32 %v6713, 0.0
        %v7051 = vmax.f32 %v6715, 0.0
        %v7052 = vmax.f32 %v6906, 0.0
        %v7053 = vmax.f32 %v6908, 0.0
        %v7054 = vmax.f32 %v6719, 0.0
        %v7055 = vmax.f32 %v6721, 0.0
        %v7056 = vmax.f32 %v6912, 0.0
        %v7057 = vmax.f32 %v6914, 0.0
        %v7058 = vmax.f32 %v6723, 0.0
        %v7059 = vmax.f32 %v6725, 0.0
        %v7060 = vmax.f32 %v6916, 0.0
        %v7061 = vmax.f32 %v6918, 0.0
        %v7062 = vmax.f32 %v6729, 0.0
        %v7063 = vmax.f32 %v6731, 0.0
        %v7064 = vmax.f32 %v6922, 0.0
        %v7065 = vmax.f32 %v6924, 0.0
        %v7066 = vmax.f32 %v6733, 0.0
        %v7067 = vmax.f32 %v6735, 0.0
        %v7068 = vmax.f32 %v6926, 0.0
        %v7069 = vmax.f32 %v6928, 0.0
        %v7070 = vmax.f32 %v6739, 0.0
        %v7071 = vmax.f32 %v6741, 0.0
        %v7072 = vmax.f32 %v6932, 0.0
        %v7073 = vmax.f32 %v6934, 0.0
        %v7074 = vmax.f32 %v6743, 0.0
        %v7075 = vmax.f32 %v6745, 0.0
        %v7076 = vmax.f32 %v6936, 0.0
        %v7077 = vmax.f32 %v6938, 0.0
        %v7078 = vmax.f32 %v6749, 0.0
        %v7079 = vmax.f32 %v6751, 0.0
        %v7080 = vmax.f32 %v6942, 0.0
        %v7081 = vmax.f32 %v6944, 0.0
        %v7082 = vmax.f32 %v6753, 0.0
        %v7083 = vmax.f32 %v6755, 0.0
        %v7084 = vmax.f32 %v6946, 0.0
        %v7085 = vmax.f32 %v6948, 0.0
        %v7086 = vmax.f32 %v6759, 0.0
        %v7087 = vmax.f32 %v6761, 0.0
        %v7088 = vmax.f32 %v6952, 0.0
        %v7089 = vmax.f32 %v6954, 0.0
        %v7090 = vmax.f32 %v6763, 0.0
        %v7091 = vmax.f32 %v6765, 0.0
        %v7092 = vmax.f32 %v6956, 0.0
        %v7093 = vmax.f32 %v6958, 0.0
        %v7094 = vmax.f32 %v6769, 0.0
        %v7095 = vmax.f32 %v6771, 0.0
        %v7096 = vmax.f32 %v6962, 0.0
        %v7097 = vmax.f32 %v6964, 0.0
        %v7098 = vmax.f32 %v6773, 0.0
        %v7099 = vmax.f32 %v6775, 0.0
        %v7100 = vmax.f32 %v6966, 0.0
        %v7101 = vmax.f32 %v6968, 0.0
        %v7102 = vmax.f32 %v6779, 0.0
        %v7103 = vmax.f32 %v6781, 0.0
        %v7104 = vmax.f32 %v6972, 0.0
        %v7105 = vmax.f32 %v6974, 0.0
        %v7106 = vmax.f32 %v6783, 0.0
        %v7107 = vmax.f32 %v6785, 0.0
        %v7108 = vmax.f32 %v6976, 0.0
        %v7109 = vmax.f32 %v6978, 0.0
        %v7110 = vmax.f32 %v6789, 0.0
        %v7111 = vmax.f32 %v6791, 0.0
        %v7112 = vmax.f32 %v6982, 0.0
        %v7113 = vmax.f32 %v6984, 0.0
        %v7114 = vmax.f32 %v6793, 0.0
        %v7115 = vmax.f32 %v6795, 0.0
        %v7116 = vmax.f32 %v6986, 0.0
        %v7117 = vmax.f32 %v6988, 0.0
        %v7118 = vpack.c.bf16 %v6994, %v6990
        %v7119 = vpack.c.bf16 %v6995, %v6991
        %v7120 = vpack.c.bf16 %v6996, %v6992
        %v7121 = vpack.c.bf16 %v6997, %v6993
        %v7122 = vpack.c.bf16 %v7002, %v6998
        %v7123 = vpack.c.bf16 %v7003, %v6999
        %v7124 = vpack.c.bf16 %v7004, %v7000
        %v7125 = vpack.c.bf16 %v7005, %v7001
        %v7126 = vpack.c.bf16 %v7010, %v7006
        %v7127 = vpack.c.bf16 %v7011, %v7007
        %v7128 = vpack.c.bf16 %v7012, %v7008
        %v7129 = vpack.c.bf16 %v7013, %v7009
        %v7130 = vpack.c.bf16 %v7018, %v7014
        %v7131 = vpack.c.bf16 %v7019, %v7015
        %v7132 = vpack.c.bf16 %v7020, %v7016
        %v7133 = vpack.c.bf16 %v7021, %v7017
        %v7134 = vpack.c.bf16 %v7026, %v7022
        %v7135 = vpack.c.bf16 %v7027, %v7023
        %v7136 = vpack.c.bf16 %v7028, %v7024
        %v7137 = vpack.c.bf16 %v7029, %v7025
        %v7138 = vpack.c.bf16 %v7034, %v7030
        %v7139 = vpack.c.bf16 %v7035, %v7031
        %v7140 = vpack.c.bf16 %v7036, %v7032
        %v7141 = vpack.c.bf16 %v7037, %v7033
        %v7142 = vpack.c.bf16 %v7042, %v7038
        %v7143 = vpack.c.bf16 %v7043, %v7039
        %v7144 = vpack.c.bf16 %v7044, %v7040
        %v7145 = vpack.c.bf16 %v7045, %v7041
        %v7146 = vpack.c.bf16 %v7050, %v7046
        %v7147 = vpack.c.bf16 %v7051, %v7047
        %v7148 = vpack.c.bf16 %v7052, %v7048
        %v7149 = vpack.c.bf16 %v7053, %v7049
        %v7150 = vpack.c.bf16 %v7058, %v7054
        %v7151 = vpack.c.bf16 %v7059, %v7055
        %v7152 = vpack.c.bf16 %v7060, %v7056
        %v7153 = vpack.c.bf16 %v7061, %v7057
        %v7154 = vpack.c.bf16 %v7066, %v7062
        %v7155 = vpack.c.bf16 %v7067, %v7063
        %v7156 = vpack.c.bf16 %v7068, %v7064
        %v7157 = vpack.c.bf16 %v7069, %v7065
        %v7158 = vpack.c.bf16 %v7074, %v7070
        %v7159 = vpack.c.bf16 %v7075, %v7071
        %v7160 = vpack.c.bf16 %v7076, %v7072
        %v7161 = vpack.c.bf16 %v7077, %v7073
        %v7162 = vpack.c.bf16 %v7082, %v7078
        %v7163 = vpack.c.bf16 %v7083, %v7079
        %v7164 = vpack.c.bf16 %v7084, %v7080
        %v7165 = vpack.c.bf16 %v7085, %v7081
        %v7166 = vpack.c.bf16 %v7090, %v7086
        %v7167 = vpack.c.bf16 %v7091, %v7087
        %v7168 = vpack.c.bf16 %v7092, %v7088
        %v7169 = vpack.c.bf16 %v7093, %v7089
        %v7170 = vpack.c.bf16 %v7098, %v7094
        %v7171 = vpack.c.bf16 %v7099, %v7095
        %v7172 = vpack.c.bf16 %v7100, %v7096
        %v7173 = vpack.c.bf16 %v7101, %v7097
        %v7174 = vpack.c.bf16 %v7106, %v7102
        %v7175 = vpack.c.bf16 %v7107, %v7103
        %v7176 = vpack.c.bf16 %v7108, %v7104
        %v7177 = vpack.c.bf16 %v7109, %v7105
        %v7178 = vpack.c.bf16 %v7114, %v7110
        %v7179 = vpack.c.bf16 %v7115, %v7111
        %v7180 = vpack.c.bf16 %v7116, %v7112
        %v7181 = vpack.c.bf16 %v7117, %v7113
        %v7182 = vld [vmem:[%s859] sm:$0xff]
        %v7183 = vld [vmem:[%s859 + $0x8] sm:$0xff]
        %v7184 = vld [vmem:[%s859 + $0x10] sm:$0xff]
        %v7185 = vld [vmem:[%s859 + $0x18] sm:$0xff]
        %v7186 = vld [vmem:[%s859 + $0x20] sm:$0xff]
        %v7187 = vld [vmem:[%s859 + $0x28] sm:$0xff]
        %v7188 = vld [vmem:[%s859 + $0x30] sm:$0xff]
        %v7189 = vld [vmem:[%s859 + $0x38] sm:$0xff]
        %v7190 = vld [vmem:[%s859 + $0x40] sm:$0xff]
        %v7191 = vld [vmem:[%s859 + $0x48] sm:$0xff]
        %v7192 = vld [vmem:[%s859 + $0x50] sm:$0xff]
        %v7193 = vld [vmem:[%s859 + $0x58] sm:$0xff]
        %v7194 = vld [vmem:[%s859 + $0x60] sm:$0xff]
        %v7195 = vld [vmem:[%s859 + $0x68] sm:$0xff]
        %v7196 = vld [vmem:[%s859 + $0x70] sm:$0xff]
        %v7197 = vld [vmem:[%s859 + $0x78] sm:$0xff]
        %v7198 = vld [vmem:[%s859 + $0x80] sm:$0xff]
        %v7199 = vld [vmem:[%s859 + $0x88] sm:$0xff]
        %v7200 = vld [vmem:[%s859 + $0x90] sm:$0xff]
        %v7201 = vld [vmem:[%s859 + $0x98] sm:$0xff]
        %v7202 = vld [vmem:[%s859 + $0xa0] sm:$0xff]
        %v7203 = vld [vmem:[%s859 + $0xa8] sm:$0xff]
        %v7204 = vld [vmem:[%s859 + $0xb0] sm:$0xff]
        %v7205 = vld [vmem:[%s859 + $0xb8] sm:$0xff]
        %v7206 = vld [vmem:[%s859 + $0xc0] sm:$0xff]
        %v7207 = vld [vmem:[%s859 + $0xc8] sm:$0xff]
        %v7208 = vld [vmem:[%s859 + $0xd0] sm:$0xff]
        %v7209 = vld [vmem:[%s859 + $0xd8] sm:$0xff]
        %v7210 = vld [vmem:[%s859 + $0xe0] sm:$0xff]
        %v7211 = vld [vmem:[%s859 + $0xe8] sm:$0xff]
        %v7212 = vld [vmem:[%s859 + $0xf0] sm:$0xff]
        %v7213 = vld [vmem:[%s859 + $0xf8] sm:$0xff]
        %v7214 = vld [vmem:[%s859 + $0x100] sm:$0xff]
        %v7215 = vld [vmem:[%s859 + $0x108] sm:$0xff]
        %v7216 = vld [vmem:[%s859 + $0x110] sm:$0xff]
        %v7217 = vld [vmem:[%s859 + $0x118] sm:$0xff]
        %v7218 = vld [vmem:[%s859 + $0x120] sm:$0xff]
        %v7219 = vld [vmem:[%s859 + $0x128] sm:$0xff]
        %v7220 = vld [vmem:[%s859 + $0x130] sm:$0xff]
        %v7221 = vld [vmem:[%s859 + $0x138] sm:$0xff]
        %v7222 = vld [vmem:[%s859 + $0x140] sm:$0xff]
        %v7223 = vld [vmem:[%s859 + $0x148] sm:$0xff]
        %v7224 = vld [vmem:[%s859 + $0x150] sm:$0xff]
        %v7225 = vld [vmem:[%s859 + $0x158] sm:$0xff]
        %v7226 = vld [vmem:[%s859 + $0x160] sm:$0xff]
        %v7227 = vld [vmem:[%s859 + $0x168] sm:$0xff]
        %v7228 = vld [vmem:[%s859 + $0x170] sm:$0xff]
        %v7229 = vld [vmem:[%s859 + $0x178] sm:$0xff]
        %v7230 = vld [vmem:[%s859 + $0x180] sm:$0xff]
        %v7231 = vld [vmem:[%s859 + $0x188] sm:$0xff]
        %v7232 = vld [vmem:[%s859 + $0x190] sm:$0xff]
        %v7233 = vld [vmem:[%s859 + $0x198] sm:$0xff]
        %v7234 = vld [vmem:[%s859 + $0x1a0] sm:$0xff]
        %v7235 = vld [vmem:[%s859 + $0x1a8] sm:$0xff]
        %v7236 = vld [vmem:[%s859 + $0x1b0] sm:$0xff]
        %v7237 = vld [vmem:[%s859 + $0x1b8] sm:$0xff]
        %v7238 = vld [vmem:[%s859 + $0x1c0] sm:$0xff]
        %v7239 = vld [vmem:[%s859 + $0x1c8] sm:$0xff]
        %v7240 = vld [vmem:[%s859 + $0x1d0] sm:$0xff]
        %v7241 = vld [vmem:[%s859 + $0x1d8] sm:$0xff]
        %v7242 = vld [vmem:[%s859 + $0x1e0] sm:$0xff]
        %v7243 = vld [vmem:[%s859 + $0x1e8] sm:$0xff]
        %v7244 = vld [vmem:[%s859 + $0x1f0] sm:$0xff]
        %v7245 = vld [vmem:[%s859 + $0x1f8] sm:$0xff]
        %v7246 = vld [vmem:[%s868] sm:$0x3]
        %v7248 = vlaneseq
        %v7249 = vshrl.u32 %v7248, 7
        %v7250 = vsub.s32 0, %v7249
        %v7251 = vrot.slane %v7246, %v7250
        %v7252 = vlaneseq
        %v7253 = vshrl.u32 %v7252, 7
        %v7254 = vsub.s32 1, %v7253
        %v7255 = vrot.slane %v7246, %v7254
        %v7322 = vunpack.c.l.b16 %v7182
        %v7323 = vunpack.c.h.b16 %v7182
        %v7324 = vunpack.c.l.b16 %v7183
        %v7325 = vunpack.c.h.b16 %v7183
        %v7326 = vunpack.c.l.b16 %v7184
        %v7327 = vunpack.c.h.b16 %v7184
        %v7328 = vunpack.c.l.b16 %v7185
        %v7329 = vunpack.c.h.b16 %v7185
        %v7330 = vunpack.c.l.b16 %v7186
        %v7331 = vunpack.c.h.b16 %v7186
        %v7332 = vunpack.c.l.b16 %v7187
        %v7333 = vunpack.c.h.b16 %v7187
        %v7334 = vunpack.c.l.b16 %v7188
        %v7335 = vunpack.c.h.b16 %v7188
        %v7336 = vunpack.c.l.b16 %v7189
        %v7337 = vunpack.c.h.b16 %v7189
        %v7338 = vunpack.c.l.b16 %v7190
        %v7339 = vunpack.c.h.b16 %v7190
        %v7340 = vunpack.c.l.b16 %v7191
        %v7341 = vunpack.c.h.b16 %v7191
        %v7342 = vunpack.c.l.b16 %v7192
        %v7343 = vunpack.c.h.b16 %v7192
        %v7344 = vunpack.c.l.b16 %v7193
        %v7345 = vunpack.c.h.b16 %v7193
        %v7346 = vunpack.c.l.b16 %v7194
        %v7347 = vunpack.c.h.b16 %v7194
        %v7348 = vunpack.c.l.b16 %v7195
        %v7349 = vunpack.c.h.b16 %v7195
        %v7350 = vunpack.c.l.b16 %v7196
        %v7351 = vunpack.c.h.b16 %v7196
        %v7352 = vunpack.c.l.b16 %v7197
        %v7353 = vunpack.c.h.b16 %v7197
        %v7354 = vunpack.c.l.b16 %v7198
        %v7355 = vunpack.c.h.b16 %v7198
        %v7356 = vunpack.c.l.b16 %v7199
        %v7357 = vunpack.c.h.b16 %v7199
        %v7358 = vunpack.c.l.b16 %v7200
        %v7359 = vunpack.c.h.b16 %v7200
        %v7360 = vunpack.c.l.b16 %v7201
        %v7361 = vunpack.c.h.b16 %v7201
        %v7362 = vunpack.c.l.b16 %v7202
        %v7363 = vunpack.c.h.b16 %v7202
        %v7364 = vunpack.c.l.b16 %v7203
        %v7365 = vunpack.c.h.b16 %v7203
        %v7366 = vunpack.c.l.b16 %v7204
        %v7367 = vunpack.c.h.b16 %v7204
        %v7368 = vunpack.c.l.b16 %v7205
        %v7369 = vunpack.c.h.b16 %v7205
        %v7370 = vunpack.c.l.b16 %v7206
        %v7371 = vunpack.c.h.b16 %v7206
        %v7372 = vunpack.c.l.b16 %v7207
        %v7373 = vunpack.c.h.b16 %v7207
        %v7374 = vunpack.c.l.b16 %v7208
        %v7375 = vunpack.c.h.b16 %v7208
        %v7376 = vunpack.c.l.b16 %v7209
        %v7377 = vunpack.c.h.b16 %v7209
        %v7378 = vunpack.c.l.b16 %v7210
        %v7379 = vunpack.c.h.b16 %v7210
        %v7380 = vunpack.c.l.b16 %v7211
        %v7381 = vunpack.c.h.b16 %v7211
        %v7382 = vunpack.c.l.b16 %v7212
        %v7383 = vunpack.c.h.b16 %v7212
        %v7384 = vunpack.c.l.b16 %v7213
        %v7385 = vunpack.c.h.b16 %v7213
        %v7386 = vunpack.c.l.b16 %v7214
        %v7387 = vunpack.c.h.b16 %v7214
        %v7388 = vunpack.c.l.b16 %v7215
        %v7389 = vunpack.c.h.b16 %v7215
        %v7390 = vunpack.c.l.b16 %v7216
        %v7391 = vunpack.c.h.b16 %v7216
        %v7392 = vunpack.c.l.b16 %v7217
        %v7393 = vunpack.c.h.b16 %v7217
        %v7394 = vunpack.c.l.b16 %v7218
        %v7395 = vunpack.c.h.b16 %v7218
        %v7396 = vunpack.c.l.b16 %v7219
        %v7397 = vunpack.c.h.b16 %v7219
        %v7398 = vunpack.c.l.b16 %v7220
        %v7399 = vunpack.c.h.b16 %v7220
        %v7400 = vunpack.c.l.b16 %v7221
        %v7401 = vunpack.c.h.b16 %v7221
        %v7402 = vunpack.c.l.b16 %v7222
        %v7403 = vunpack.c.h.b16 %v7222
        %v7404 = vunpack.c.l.b16 %v7223
        %v7405 = vunpack.c.h.b16 %v7223
        %v7406 = vunpack.c.l.b16 %v7224
        %v7407 = vunpack.c.h.b16 %v7224
        %v7408 = vunpack.c.l.b16 %v7225
        %v7409 = vunpack.c.h.b16 %v7225
        %v7410 = vunpack.c.l.b16 %v7226
        %v7411 = vunpack.c.h.b16 %v7226
        %v7412 = vunpack.c.l.b16 %v7227
        %v7413 = vunpack.c.h.b16 %v7227
        %v7414 = vunpack.c.l.b16 %v7228
        %v7415 = vunpack.c.h.b16 %v7228
        %v7416 = vunpack.c.l.b16 %v7229
        %v7417 = vunpack.c.h.b16 %v7229
        %v7418 = vunpack.c.l.b16 %v7230
        %v7419 = vunpack.c.h.b16 %v7230
        %v7420 = vunpack.c.l.b16 %v7231
        %v7421 = vunpack.c.h.b16 %v7231
        %v7422 = vunpack.c.l.b16 %v7232
        %v7423 = vunpack.c.h.b16 %v7232
        %v7424 = vunpack.c.l.b16 %v7233
        %v7425 = vunpack.c.h.b16 %v7233
        %v7426 = vunpack.c.l.b16 %v7234
        %v7427 = vunpack.c.h.b16 %v7234
        %v7428 = vunpack.c.l.b16 %v7235
        %v7429 = vunpack.c.h.b16 %v7235
        %v7430 = vunpack.c.l.b16 %v7236
        %v7431 = vunpack.c.h.b16 %v7236
        %v7432 = vunpack.c.l.b16 %v7237
        %v7433 = vunpack.c.h.b16 %v7237
        %v7434 = vunpack.c.l.b16 %v7238
        %v7435 = vunpack.c.h.b16 %v7238
        %v7436 = vunpack.c.l.b16 %v7239
        %v7437 = vunpack.c.h.b16 %v7239
        %v7438 = vunpack.c.l.b16 %v7240
        %v7439 = vunpack.c.h.b16 %v7240
        %v7440 = vunpack.c.l.b16 %v7241
        %v7441 = vunpack.c.h.b16 %v7241
        %v7442 = vunpack.c.l.b16 %v7242
        %v7443 = vunpack.c.h.b16 %v7242
        %v7444 = vunpack.c.l.b16 %v7243
        %v7445 = vunpack.c.h.b16 %v7243
        %v7446 = vunpack.c.l.b16 %v7244
        %v7447 = vunpack.c.h.b16 %v7244
        %v7448 = vunpack.c.l.b16 %v7245
        %v7449 = vunpack.c.h.b16 %v7245
        %v7450 = vpack.c.b16 %v7324, %v7322
        %v7451 = vpack.c.b16 %v7325, %v7323
        %v7452 = vpack.c.b16 %v7328, %v7326
        %v7453 = vpack.c.b16 %v7329, %v7327
        %v7454 = vpack.c.b16 %v7332, %v7330
        %v7455 = vpack.c.b16 %v7333, %v7331
        %v7456 = vpack.c.b16 %v7336, %v7334
        %v7457 = vpack.c.b16 %v7337, %v7335
        %v7458 = vpack.c.b16 %v7340, %v7338
        %v7459 = vpack.c.b16 %v7341, %v7339
        %v7460 = vpack.c.b16 %v7344, %v7342
        %v7461 = vpack.c.b16 %v7345, %v7343
        %v7462 = vpack.c.b16 %v7348, %v7346
        %v7463 = vpack.c.b16 %v7349, %v7347
        %v7464 = vpack.c.b16 %v7352, %v7350
        %v7465 = vpack.c.b16 %v7353, %v7351
        %v7466 = vpack.c.b16 %v7356, %v7354
        %v7467 = vpack.c.b16 %v7357, %v7355
        %v7468 = vpack.c.b16 %v7360, %v7358
        %v7469 = vpack.c.b16 %v7361, %v7359
        %v7470 = vpack.c.b16 %v7364, %v7362
        %v7471 = vpack.c.b16 %v7365, %v7363
        %v7472 = vpack.c.b16 %v7368, %v7366
        %v7473 = vpack.c.b16 %v7369, %v7367
        %v7474 = vpack.c.b16 %v7372, %v7370
        %v7475 = vpack.c.b16 %v7373, %v7371
        %v7476 = vpack.c.b16 %v7376, %v7374
        %v7477 = vpack.c.b16 %v7377, %v7375
        %v7478 = vpack.c.b16 %v7380, %v7378
        %v7479 = vpack.c.b16 %v7381, %v7379
        %v7480 = vpack.c.b16 %v7384, %v7382
        %v7481 = vpack.c.b16 %v7385, %v7383
        %v7482 = vpack.c.b16 %v7388, %v7386
        %v7483 = vpack.c.b16 %v7389, %v7387
        %v7484 = vpack.c.b16 %v7392, %v7390
        %v7485 = vpack.c.b16 %v7393, %v7391
        %v7486 = vpack.c.b16 %v7396, %v7394
        %v7487 = vpack.c.b16 %v7397, %v7395
        %v7488 = vpack.c.b16 %v7400, %v7398
        %v7489 = vpack.c.b16 %v7401, %v7399
        %v7490 = vpack.c.b16 %v7404, %v7402
        %v7491 = vpack.c.b16 %v7405, %v7403
        %v7492 = vpack.c.b16 %v7408, %v7406
        %v7493 = vpack.c.b16 %v7409, %v7407
        %v7494 = vpack.c.b16 %v7412, %v7410
        %v7495 = vpack.c.b16 %v7413, %v7411
        %v7496 = vpack.c.b16 %v7416, %v7414
        %v7497 = vpack.c.b16 %v7417, %v7415
        %v7498 = vpack.c.b16 %v7420, %v7418
        %v7499 = vpack.c.b16 %v7421, %v7419
        %v7500 = vpack.c.b16 %v7424, %v7422
        %v7501 = vpack.c.b16 %v7425, %v7423
        %v7502 = vpack.c.b16 %v7428, %v7426
        %v7503 = vpack.c.b16 %v7429, %v7427
        %v7504 = vpack.c.b16 %v7432, %v7430
        %v7505 = vpack.c.b16 %v7433, %v7431
        %v7506 = vpack.c.b16 %v7436, %v7434
        %v7507 = vpack.c.b16 %v7437, %v7435
        %v7508 = vpack.c.b16 %v7440, %v7438
        %v7509 = vpack.c.b16 %v7441, %v7439
        %v7510 = vpack.c.b16 %v7444, %v7442
        %v7511 = vpack.c.b16 %v7445, %v7443
        %v7512 = vpack.c.b16 %v7448, %v7446
        %v7513 = vpack.c.b16 %v7449, %v7447
        %7578 = vmatprep.subr.bf16.mxu0 %v7451
        %7579 = vmatpush1.bf16.msra.mxu0 %v7450
        %7580 = vmatprep.subr.bf16.mxu0 %v7453
        %7581 = vmatpush1.bf16.msra.mxu0 %v7452
        %7582 = vmatprep.subr.bf16.mxu0 %v7455
        %7583 = vmatpush1.bf16.msra.mxu0 %v7454
        %7584 = vmatprep.subr.bf16.mxu0 %v7457
        %7585 = vmatpush1.bf16.msra.mxu0 %v7456
        %7586 = vmatprep.subr.bf16.mxu0 %v7459
        %7587 = vmatpush1.bf16.msra.mxu0 %v7458
        %7588 = vmatprep.subr.bf16.mxu0 %v7461
        %7589 = vmatpush1.bf16.msra.mxu0 %v7460
        %7590 = vmatprep.subr.bf16.mxu0 %v7463
        %7591 = vmatpush1.bf16.msra.mxu0 %v7462
        %7592 = vmatprep.subr.bf16.mxu0 %v7465
        %7593 = vmatpush1.bf16.msra.mxu0 %v7464
        %7594 = vmatprep.subr.bf16.mxu0 %v7467
        %7595 = vmatpush1.bf16.msra.mxu0 %v7466
        %7596 = vmatprep.subr.bf16.mxu0 %v7469
        %7597 = vmatpush1.bf16.msra.mxu0 %v7468
        %7598 = vmatprep.subr.bf16.mxu0 %v7471
        %7599 = vmatpush1.bf16.msra.mxu0 %v7470
        %7600 = vmatprep.subr.bf16.mxu0 %v7473
        %7601 = vmatpush1.bf16.msra.mxu0 %v7472
        %7602 = vmatprep.subr.bf16.mxu0 %v7475
        %7603 = vmatpush1.bf16.msra.mxu0 %v7474
        %7604 = vmatprep.subr.bf16.mxu0 %v7477
        %7605 = vmatpush1.bf16.msra.mxu0 %v7476
        %7606 = vmatprep.subr.bf16.mxu0 %v7479
        %7607 = vmatpush1.bf16.msra.mxu0 %v7478
        %7608 = vmatprep.subr.bf16.mxu0 %v7481
        %7609 = vmatpush1.bf16.msra.mxu0 %v7480
        %7610 = vmatprep.mubr.bf16.mxu0 %v7119
        %7611 = vmatmul.mubr.bf16.gmra.mrb[0].mxu0 %v7118
        %v7612 = vpop.f32.mrb[0].mxu0
        %v7613 = vadd.f32 %v7251, %v7612
        %v7614 = vpop.f32.mrb[0].mxu0
        %v7615 = vadd.f32 %v7255, %v7614
        %v7616 = vpop.f32.mrb[0].mxu0
        %v7617 = vadd.f32 %v7251, %v7616
        %v7618 = vpop.f32.mrb[0].mxu0
        %v7619 = vadd.f32 %v7255, %v7618
        %7620 = vmatprep.mubr.bf16.mxu0 %v7123
        %7621 = vmatmul.mubr.bf16.gmra.mrb[0].mxu0 %v7122
        %v7622 = vpop.f32.mrb[0].mxu0
        %v7623 = vadd.f32 %v7251, %v7622
        %v7624 = vpop.f32.mrb[0].mxu0
        %v7625 = vadd.f32 %v7255, %v7624
        %v7626 = vpop.f32.mrb[0].mxu0
        %v7627 = vadd.f32 %v7251, %v7626
        %v7628 = vpop.f32.mrb[0].mxu0
        %v7629 = vadd.f32 %v7255, %v7628
        %7630 = vmatprep.mubr.bf16.mxu0 %v7127
        %7631 = vmatmul.mubr.bf16.gmra.mrb[0].mxu0 %v7126
        %v7632 = vpop.f32.mrb[0].mxu0
        %v7633 = vadd.f32 %v7251, %v7632
        %v7634 = vpop.f32.mrb[0].mxu0
        %v7635 = vadd.f32 %v7255, %v7634
        %v7636 = vpop.f32.mrb[0].mxu0
        %v7637 = vadd.f32 %v7251, %v7636
        %v7638 = vpop.f32.mrb[0].mxu0
        %v7639 = vadd.f32 %v7255, %v7638
        %7640 = vmatprep.mubr.bf16.mxu0 %v7131
        %7641 = vmatmul.mubr.bf16.gmra.mrb[0].mxu0 %v7130
        %v7642 = vpop.f32.mrb[0].mxu0
        %v7643 = vadd.f32 %v7251, %v7642
        %v7644 = vpop.f32.mrb[0].mxu0
        %v7645 = vadd.f32 %v7255, %v7644
        %v7646 = vpop.f32.mrb[0].mxu0
        %v7647 = vadd.f32 %v7251, %v7646
        %v7648 = vpop.f32.mrb[0].mxu0
        %v7649 = vadd.f32 %v7255, %v7648
        %7650 = vmatprep.mubr.bf16.mxu0 %v7135
        %7651 = vmatmul.mubr.bf16.gmra.mrb[0].mxu0 %v7134
        %v7652 = vpop.f32.mrb[0].mxu0
        %v7653 = vadd.f32 %v7251, %v7652
        %v7654 = vpop.f32.mrb[0].mxu0
        %v7655 = vadd.f32 %v7255, %v7654
        %v7656 = vpop.f32.mrb[0].mxu0
        %v7657 = vadd.f32 %v7251, %v7656
        %v7658 = vpop.f32.mrb[0].mxu0
        %v7659 = vadd.f32 %v7255, %v7658
        %7660 = vmatprep.mubr.bf16.mxu0 %v7139
        %7661 = vmatmul.mubr.bf16.gmra.mrb[0].mxu0 %v7138
        %v7662 = vpop.f32.mrb[0].mxu0
        %v7663 = vadd.f32 %v7251, %v7662
        %v7664 = vpop.f32.mrb[0].mxu0
        %v7665 = vadd.f32 %v7255, %v7664
        %v7666 = vpop.f32.mrb[0].mxu0
        %v7667 = vadd.f32 %v7251, %v7666
        %v7668 = vpop.f32.mrb[0].mxu0
        %v7669 = vadd.f32 %v7255, %v7668
        %7670 = vmatprep.mubr.bf16.mxu0 %v7143
        %7671 = vmatmul.mubr.bf16.gmra.mrb[0].mxu0 %v7142
        %v7672 = vpop.f32.mrb[0].mxu0
        %v7673 = vadd.f32 %v7251, %v7672
        %v7674 = vpop.f32.mrb[0].mxu0
        %v7675 = vadd.f32 %v7255, %v7674
        %v7676 = vpop.f32.mrb[0].mxu0
        %v7677 = vadd.f32 %v7251, %v7676
        %v7678 = vpop.f32.mrb[0].mxu0
        %v7679 = vadd.f32 %v7255, %v7678
        %7680 = vmatprep.mubr.bf16.mxu0 %v7147
        %7681 = vmatmul.mubr.bf16.gmra.mrb[0].mxu0 %v7146
        %v7682 = vpop.f32.mrb[0].mxu0
        %v7683 = vadd.f32 %v7251, %v7682
        %v7684 = vpop.f32.mrb[0].mxu0
        %v7685 = vadd.f32 %v7255, %v7684
        %v7686 = vpop.f32.mrb[0].mxu0
        %v7687 = vadd.f32 %v7251, %v7686
        %v7688 = vpop.f32.mrb[0].mxu0
        %v7689 = vadd.f32 %v7255, %v7688
        %7690 = vmatprep.mubr.bf16.mxu0 %v7151
        %7691 = vmatmul.mubr.bf16.gmra.mrb[0].mxu0 %v7150
        %v7692 = vpop.f32.mrb[0].mxu0
        %v7693 = vadd.f32 %v7251, %v7692
        %v7694 = vpop.f32.mrb[0].mxu0
        %v7695 = vadd.f32 %v7255, %v7694
        %v7696 = vpop.f32.mrb[0].mxu0
        %v7697 = vadd.f32 %v7251, %v7696
        %v7698 = vpop.f32.mrb[0].mxu0
        %v7699 = vadd.f32 %v7255, %v7698
        %7700 = vmatprep.mubr.bf16.mxu0 %v7155
        %7701 = vmatmul.mubr.bf16.gmra.mrb[0].mxu0 %v7154
        %v7702 = vpop.f32.mrb[0].mxu0
        %v7703 = vadd.f32 %v7251, %v7702
        %v7704 = vpop.f32.mrb[0].mxu0
        %v7705 = vadd.f32 %v7255, %v7704
        %v7706 = vpop.f32.mrb[0].mxu0
        %v7707 = vadd.f32 %v7251, %v7706
        %v7708 = vpop.f32.mrb[0].mxu0
        %v7709 = vadd.f32 %v7255, %v7708
        %7710 = vmatprep.mubr.bf16.mxu0 %v7159
        %7711 = vmatmul.mubr.bf16.gmra.mrb[0].mxu0 %v7158
        %v7712 = vpop.f32.mrb[0].mxu0
        %v7713 = vadd.f32 %v7251, %v7712
        %v7714 = vpop.f32.mrb[0].mxu0
        %v7715 = vadd.f32 %v7255, %v7714
        %v7716 = vpop.f32.mrb[0].mxu0
        %v7717 = vadd.f32 %v7251, %v7716
        %v7718 = vpop.f32.mrb[0].mxu0
        %v7719 = vadd.f32 %v7255, %v7718
        %7720 = vmatprep.mubr.bf16.mxu0 %v7163
        %7721 = vmatmul.mubr.bf16.gmra.mrb[0].mxu0 %v7162
        %v7722 = vpop.f32.mrb[0].mxu0
        %v7723 = vadd.f32 %v7251, %v7722
        %v7724 = vpop.f32.mrb[0].mxu0
        %v7725 = vadd.f32 %v7255, %v7724
        %v7726 = vpop.f32.mrb[0].mxu0
        %v7727 = vadd.f32 %v7251, %v7726
        %v7728 = vpop.f32.mrb[0].mxu0
        %v7729 = vadd.f32 %v7255, %v7728
        %7730 = vmatprep.mubr.bf16.mxu0 %v7167
        %7731 = vmatmul.mubr.bf16.gmra.mrb[0].mxu0 %v7166
        %v7732 = vpop.f32.mrb[0].mxu0
        %v7733 = vadd.f32 %v7251, %v7732
        %v7734 = vpop.f32.mrb[0].mxu0
        %v7735 = vadd.f32 %v7255, %v7734
        %v7736 = vpop.f32.mrb[0].mxu0
        %v7737 = vadd.f32 %v7251, %v7736
        %v7738 = vpop.f32.mrb[0].mxu0
        %v7739 = vadd.f32 %v7255, %v7738
        %7740 = vmatprep.mubr.bf16.mxu0 %v7171
        %7741 = vmatmul.mubr.bf16.gmra.mrb[0].mxu0 %v7170
        %v7742 = vpop.f32.mrb[0].mxu0
        %v7743 = vadd.f32 %v7251, %v7742
        %v7744 = vpop.f32.mrb[0].mxu0
        %v7745 = vadd.f32 %v7255, %v7744
        %v7746 = vpop.f32.mrb[0].mxu0
        %v7747 = vadd.f32 %v7251, %v7746
        %v7748 = vpop.f32.mrb[0].mxu0
        %v7749 = vadd.f32 %v7255, %v7748
        %7750 = vmatprep.mubr.bf16.mxu0 %v7175
        %7751 = vmatmul.mubr.bf16.gmra.mrb[0].mxu0 %v7174
        %v7752 = vpop.f32.mrb[0].mxu0
        %v7753 = vadd.f32 %v7251, %v7752
        %v7754 = vpop.f32.mrb[0].mxu0
        %v7755 = vadd.f32 %v7255, %v7754
        %v7756 = vpop.f32.mrb[0].mxu0
        %v7757 = vadd.f32 %v7251, %v7756
        %v7758 = vpop.f32.mrb[0].mxu0
        %v7759 = vadd.f32 %v7255, %v7758
        %7760 = vmatprep.mubr.bf16.mxu0 %v7179
        %7761 = vmatmul.mubr.bf16.gmra.mrb[0].mxu0 %v7178
        %v7762 = vpop.f32.mrb[0].mxu0
        %v7763 = vadd.f32 %v7251, %v7762
        %v7764 = vpop.f32.mrb[0].mxu0
        %v7765 = vadd.f32 %v7255, %v7764
        %v7766 = vpop.f32.mrb[0].mxu0
        %v7767 = vadd.f32 %v7251, %v7766
        %v7768 = vpop.f32.mrb[0].mxu0
        %v7769 = vadd.f32 %v7255, %v7768
        %7770 = vdwg.mxu0
        %7771 = vmatprep.subr.bf16.mxu0 %v7483
        %7772 = vmatpush1.bf16.msra.mxu0 %v7482
        %7773 = vmatprep.subr.bf16.mxu0 %v7485
        %7774 = vmatpush1.bf16.msra.mxu0 %v7484
        %7775 = vmatprep.subr.bf16.mxu0 %v7487
        %7776 = vmatpush1.bf16.msra.mxu0 %v7486
        %7777 = vmatprep.subr.bf16.mxu0 %v7489
        %7778 = vmatpush1.bf16.msra.mxu0 %v7488
        %7779 = vmatprep.subr.bf16.mxu0 %v7491
        %7780 = vmatpush1.bf16.msra.mxu0 %v7490
        %7781 = vmatprep.subr.bf16.mxu0 %v7493
        %7782 = vmatpush1.bf16.msra.mxu0 %v7492
        %7783 = vmatprep.subr.bf16.mxu0 %v7495
        %7784 = vmatpush1.bf16.msra.mxu0 %v7494
        %7785 = vmatprep.subr.bf16.mxu0 %v7497
        %7786 = vmatpush1.bf16.msra.mxu0 %v7496
        %7787 = vmatprep.subr.bf16.mxu0 %v7499
        %7788 = vmatpush1.bf16.msra.mxu0 %v7498
        %7789 = vmatprep.subr.bf16.mxu0 %v7501
        %7790 = vmatpush1.bf16.msra.mxu0 %v7500
        %7791 = vmatprep.subr.bf16.mxu0 %v7503
        %7792 = vmatpush1.bf16.msra.mxu0 %v7502
        %7793 = vmatprep.subr.bf16.mxu0 %v7505
        %7794 = vmatpush1.bf16.msra.mxu0 %v7504
        %7795 = vmatprep.subr.bf16.mxu0 %v7507
        %7796 = vmatpush1.bf16.msra.mxu0 %v7506
        %7797 = vmatprep.subr.bf16.mxu0 %v7509
        %7798 = vmatpush1.bf16.msra.mxu0 %v7508
        %7799 = vmatprep.subr.bf16.mxu0 %v7511
        %7800 = vmatpush1.bf16.msra.mxu0 %v7510
        %7801 = vmatprep.subr.bf16.mxu0 %v7513
        %7802 = vmatpush1.bf16.msra.mxu0 %v7512
        %7803 = vmatprep.mubr.bf16.mxu0 %v7121
        %7804 = vmatmul.mubr.bf16.gmra.mrb[0].mxu0 %v7120
        %v7805 = vpop.f32.mrb[0].mxu0
        %v7806 = vadd.f32 %v7613, %v7805
        %v7807 = vpop.f32.mrb[0].mxu0
        %v7808 = vadd.f32 %v7615, %v7807
        %v7809 = vpop.f32.mrb[0].mxu0
        %v7810 = vadd.f32 %v7617, %v7809
        %v7811 = vpop.f32.mrb[0].mxu0
        %v7812 = vadd.f32 %v7619, %v7811
        %7813 = vmatprep.mubr.bf16.mxu0 %v7125
        %7814 = vmatmul.mubr.bf16.gmra.mrb[0].mxu0 %v7124
        %v7815 = vpop.f32.mrb[0].mxu0
        %v7816 = vadd.f32 %v7623, %v7815
        %v7817 = vpop.f32.mrb[0].mxu0
        %v7818 = vadd.f32 %v7625, %v7817
        %v7819 = vpop.f32.mrb[0].mxu0
        %v7820 = vadd.f32 %v7627, %v7819
        %v7821 = vpop.f32.mrb[0].mxu0
        %v7822 = vadd.f32 %v7629, %v7821
        %7823 = vmatprep.mubr.bf16.mxu0 %v7129
        %7824 = vmatmul.mubr.bf16.gmra.mrb[0].mxu0 %v7128
        %v7825 = vpop.f32.mrb[0].mxu0
        %v7826 = vadd.f32 %v7633, %v7825
        %v7827 = vpop.f32.mrb[0].mxu0
        %v7828 = vadd.f32 %v7635, %v7827
        %v7829 = vpop.f32.mrb[0].mxu0
        %v7830 = vadd.f32 %v7637, %v7829
        %v7831 = vpop.f32.mrb[0].mxu0
        %v7832 = vadd.f32 %v7639, %v7831
        %7833 = vmatprep.mubr.bf16.mxu0 %v7133
        %7834 = vmatmul.mubr.bf16.gmra.mrb[0].mxu0 %v7132
        %v7835 = vpop.f32.mrb[0].mxu0
        %v7836 = vadd.f32 %v7643, %v7835
        %v7837 = vpop.f32.mrb[0].mxu0
        %v7838 = vadd.f32 %v7645, %v7837
        %v7839 = vpop.f32.mrb[0].mxu0
        %v7840 = vadd.f32 %v7647, %v7839
        %v7841 = vpop.f32.mrb[0].mxu0
        %v7842 = vadd.f32 %v7649, %v7841
        %7843 = vmatprep.mubr.bf16.mxu0 %v7137
        %7844 = vmatmul.mubr.bf16.gmra.mrb[0].mxu0 %v7136
        %v7845 = vpop.f32.mrb[0].mxu0
        %v7846 = vadd.f32 %v7653, %v7845
        %v7847 = vpop.f32.mrb[0].mxu0
        %v7848 = vadd.f32 %v7655, %v7847
        %v7849 = vpop.f32.mrb[0].mxu0
        %v7850 = vadd.f32 %v7657, %v7849
        %v7851 = vpop.f32.mrb[0].mxu0
        %v7852 = vadd.f32 %v7659, %v7851
        %7853 = vmatprep.mubr.bf16.mxu0 %v7141
        %7854 = vmatmul.mubr.bf16.gmra.mrb[0].mxu0 %v7140
        %v7855 = vpop.f32.mrb[0].mxu0
        %v7856 = vadd.f32 %v7663, %v7855
        %v7857 = vpop.f32.mrb[0].mxu0
        %v7858 = vadd.f32 %v7665, %v7857
        %v7859 = vpop.f32.mrb[0].mxu0
        %v7860 = vadd.f32 %v7667, %v7859
        %v7861 = vpop.f32.mrb[0].mxu0
        %v7862 = vadd.f32 %v7669, %v7861
        %7863 = vmatprep.mubr.bf16.mxu0 %v7145
        %7864 = vmatmul.mubr.bf16.gmra.mrb[0].mxu0 %v7144
        %v7865 = vpop.f32.mrb[0].mxu0
        %v7866 = vadd.f32 %v7673, %v7865
        %v7867 = vpop.f32.mrb[0].mxu0
        %v7868 = vadd.f32 %v7675, %v7867
        %v7869 = vpop.f32.mrb[0].mxu0
        %v7870 = vadd.f32 %v7677, %v7869
        %v7871 = vpop.f32.mrb[0].mxu0
        %v7872 = vadd.f32 %v7679, %v7871
        %7873 = vmatprep.mubr.bf16.mxu0 %v7149
        %7874 = vmatmul.mubr.bf16.gmra.mrb[0].mxu0 %v7148
        %v7875 = vpop.f32.mrb[0].mxu0
        %v7876 = vadd.f32 %v7683, %v7875
        %v7877 = vpop.f32.mrb[0].mxu0
        %v7878 = vadd.f32 %v7685, %v7877
        %v7879 = vpop.f32.mrb[0].mxu0
        %v7880 = vadd.f32 %v7687, %v7879
        %v7881 = vpop.f32.mrb[0].mxu0
        %v7882 = vadd.f32 %v7689, %v7881
        %7883 = vmatprep.mubr.bf16.mxu0 %v7153
        %7884 = vmatmul.mubr.bf16.gmra.mrb[0].mxu0 %v7152
        %v7885 = vpop.f32.mrb[0].mxu0
        %v7886 = vadd.f32 %v7693, %v7885
        %v7887 = vpop.f32.mrb[0].mxu0
        %v7888 = vadd.f32 %v7695, %v7887
        %v7889 = vpop.f32.mrb[0].mxu0
        %v7890 = vadd.f32 %v7697, %v7889
        %v7891 = vpop.f32.mrb[0].mxu0
        %v7892 = vadd.f32 %v7699, %v7891
        %7893 = vmatprep.mubr.bf16.mxu0 %v7157
        %7894 = vmatmul.mubr.bf16.gmra.mrb[0].mxu0 %v7156
        %v7895 = vpop.f32.mrb[0].mxu0
        %v7896 = vadd.f32 %v7703, %v7895
        %v7897 = vpop.f32.mrb[0].mxu0
        %v7898 = vadd.f32 %v7705, %v7897
        %v7899 = vpop.f32.mrb[0].mxu0
        %v7900 = vadd.f32 %v7707, %v7899
        %v7901 = vpop.f32.mrb[0].mxu0
        %v7902 = vadd.f32 %v7709, %v7901
        %7903 = vmatprep.mubr.bf16.mxu0 %v7161
        %7904 = vmatmul.mubr.bf16.gmra.mrb[0].mxu0 %v7160
        %v7905 = vpop.f32.mrb[0].mxu0
        %v7906 = vadd.f32 %v7713, %v7905
        %v7907 = vpop.f32.mrb[0].mxu0
        %v7908 = vadd.f32 %v7715, %v7907
        %v7909 = vpop.f32.mrb[0].mxu0
        %v7910 = vadd.f32 %v7717, %v7909
        %v7911 = vpop.f32.mrb[0].mxu0
        %v7912 = vadd.f32 %v7719, %v7911
        %7913 = vmatprep.mubr.bf16.mxu0 %v7165
        %7914 = vmatmul.mubr.bf16.gmra.mrb[0].mxu0 %v7164
        %v7915 = vpop.f32.mrb[0].mxu0
        %v7916 = vadd.f32 %v7723, %v7915
        %v7917 = vpop.f32.mrb[0].mxu0
        %v7918 = vadd.f32 %v7725, %v7917
        %v7919 = vpop.f32.mrb[0].mxu0
        %v7920 = vadd.f32 %v7727, %v7919
        %v7921 = vpop.f32.mrb[0].mxu0
        %v7922 = vadd.f32 %v7729, %v7921
        %7923 = vmatprep.mubr.bf16.mxu0 %v7169
        %7924 = vmatmul.mubr.bf16.gmra.mrb[0].mxu0 %v7168
        %v7925 = vpop.f32.mrb[0].mxu0
        %v7926 = vadd.f32 %v7733, %v7925
        %v7927 = vpop.f32.mrb[0].mxu0
        %v7928 = vadd.f32 %v7735, %v7927
        %v7929 = vpop.f32.mrb[0].mxu0
        %v7930 = vadd.f32 %v7737, %v7929
        %v7931 = vpop.f32.mrb[0].mxu0
        %v7932 = vadd.f32 %v7739, %v7931
        %7933 = vmatprep.mubr.bf16.mxu0 %v7173
        %7934 = vmatmul.mubr.bf16.gmra.mrb[0].mxu0 %v7172
        %v7935 = vpop.f32.mrb[0].mxu0
        %v7936 = vadd.f32 %v7743, %v7935
        %v7937 = vpop.f32.mrb[0].mxu0
        %v7938 = vadd.f32 %v7745, %v7937
        %v7939 = vpop.f32.mrb[0].mxu0
        %v7940 = vadd.f32 %v7747, %v7939
        %v7941 = vpop.f32.mrb[0].mxu0
        %v7942 = vadd.f32 %v7749, %v7941
        %7943 = vmatprep.mubr.bf16.mxu0 %v7177
        %7944 = vmatmul.mubr.bf16.gmra.mrb[0].mxu0 %v7176
        %v7945 = vpop.f32.mrb[0].mxu0
        %v7946 = vadd.f32 %v7753, %v7945
        %v7947 = vpop.f32.mrb[0].mxu0
        %v7948 = vadd.f32 %v7755, %v7947
        %v7949 = vpop.f32.mrb[0].mxu0
        %v7950 = vadd.f32 %v7757, %v7949
        %v7951 = vpop.f32.mrb[0].mxu0
        %v7952 = vadd.f32 %v7759, %v7951
        %7953 = vmatprep.mubr.bf16.mxu0 %v7181
        %7954 = vmatmul.mubr.bf16.gmra.mrb[0].mxu0 %v7180
        %v7955 = vpop.f32.mrb[0].mxu0
        %v7956 = vadd.f32 %v7763, %v7955
        %v7957 = vpop.f32.mrb[0].mxu0
        %v7958 = vadd.f32 %v7765, %v7957
        %v7959 = vpop.f32.mrb[0].mxu0
        %v7960 = vadd.f32 %v7767, %v7959
        %v7961 = vpop.f32.mrb[0].mxu0
        %v7962 = vadd.f32 %v7769, %v7961
        %7963 = vdwg.mxu0
        %v7964 = vadd.f32 %v6102, %v7806
        %v7965 = vadd.f32 %v6103, %v7808
        %v7966 = vadd.f32 %v6104, %v7810
        %v7967 = vadd.f32 %v6105, %v7812
        %v7968 = vadd.f32 %v6106, %v7816
        %v7969 = vadd.f32 %v6107, %v7818
        %v7970 = vadd.f32 %v6108, %v7820
        %v7971 = vadd.f32 %v6109, %v7822
        %v7972 = vadd.f32 %v6110, %v7826
        %v7973 = vadd.f32 %v6111, %v7828
        %v7974 = vadd.f32 %v6112, %v7830
        %v7975 = vadd.f32 %v6113, %v7832
        %v7976 = vadd.f32 %v6114, %v7836
        %v7977 = vadd.f32 %v6115, %v7838
        %v7978 = vadd.f32 %v6116, %v7840
        %v7979 = vadd.f32 %v6117, %v7842
        %v7980 = vadd.f32 %v6118, %v7846
        %v7981 = vadd.f32 %v6119, %v7848
        %v7982 = vadd.f32 %v6120, %v7850
        %v7983 = vadd.f32 %v6121, %v7852
        %v7984 = vadd.f32 %v6122, %v7856
        %v7985 = vadd.f32 %v6123, %v7858
        %v7986 = vadd.f32 %v6124, %v7860
        %v7987 = vadd.f32 %v6125, %v7862
        %v7988 = vadd.f32 %v6126, %v7866
        %v7989 = vadd.f32 %v6127, %v7868
        %v7990 = vadd.f32 %v6128, %v7870
        %v7991 = vadd.f32 %v6129, %v7872
        %v7992 = vadd.f32 %v6130, %v7876
        %v7993 = vadd.f32 %v6131, %v7878
        %v7994 = vadd.f32 %v6132, %v7880
        %v7995 = vadd.f32 %v6133, %v7882
        %v7996 = vadd.f32 %v6134, %v7886
        %v7997 = vadd.f32 %v6135, %v7888
        %v7998 = vadd.f32 %v6136, %v7890
        %v7999 = vadd.f32 %v6137, %v7892
        %v8000 = vadd.f32 %v6138, %v7896
        %v8001 = vadd.f32 %v6139, %v7898
        %v8002 = vadd.f32 %v6140, %v7900
        %v8003 = vadd.f32 %v6141, %v7902
        %v8004 = vadd.f32 %v6142, %v7906
        %v8005 = vadd.f32 %v6143, %v7908
        %v8006 = vadd.f32 %v6144, %v7910
        %v8007 = vadd.f32 %v6145, %v7912
        %v8008 = vadd.f32 %v6146, %v7916
        %v8009 = vadd.f32 %v6147, %v7918
        %v8010 = vadd.f32 %v6148, %v7920
        %v8011 = vadd.f32 %v6149, %v7922
        %v8012 = vadd.f32 %v6150, %v7926
        %v8013 = vadd.f32 %v6151, %v7928
        %v8014 = vadd.f32 %v6152, %v7930
        %v8015 = vadd.f32 %v6153, %v7932
        %v8016 = vadd.f32 %v6154, %v7936
        %v8017 = vadd.f32 %v6155, %v7938
        %v8018 = vadd.f32 %v6156, %v7940
        %v8019 = vadd.f32 %v6157, %v7942
        %v8020 = vadd.f32 %v6158, %v7946
        %v8021 = vadd.f32 %v6159, %v7948
        %v8022 = vadd.f32 %v6160, %v7950
        %v8023 = vadd.f32 %v6161, %v7952
        %v8024 = vadd.f32 %v6162, %v7956
        %v8025 = vadd.f32 %v6163, %v7958
        %v8026 = vadd.f32 %v6164, %v7960
        %v8027 = vadd.f32 %v6165, %v7962
        %v8028 = vld [vmem:[%s895] sm:$0x3]
        %v8029 = vld [vmem:[%s904] sm:$0x3]
        %v8030 = vadd.f32 %v7964, %v7965
        %8031 = vadd.xlane.f32.xlu0 %v8030
        %v8032 = vpop.xlane.xlu0 %8031
        %v8033 = vadd.f32 %v7966, %v7967
        %8034 = vadd.xlane.f32.xlu0 %v8033
        %v8035 = vpop.xlane.xlu0 %8034
        %v8036 = vadd.f32 %v7968, %v7969
        %8037 = vadd.xlane.f32.xlu0 %v8036
        %v8038 = vpop.xlane.xlu0 %8037
        %v8039 = vadd.f32 %v7970, %v7971
        %8040 = vadd.xlane.f32.xlu0 %v8039
        %v8041 = vpop.xlane.xlu0 %8040
        %v8042 = vadd.f32 %v7972, %v7973
        %8043 = vadd.xlane.f32.xlu0 %v8042
        %v8044 = vpop.xlane.xlu0 %8043
        %v8045 = vadd.f32 %v7974, %v7975
        %8046 = vadd.xlane.f32.xlu0 %v8045
        %v8047 = vpop.xlane.xlu0 %8046
        %v8048 = vadd.f32 %v7976, %v7977
        %8049 = vadd.xlane.f32.xlu0 %v8048
        %v8050 = vpop.xlane.xlu0 %8049
        %v8051 = vadd.f32 %v7978, %v7979
        %8052 = vadd.xlane.f32.xlu0 %v8051
        %v8053 = vpop.xlane.xlu0 %8052
        %v8054 = vadd.f32 %v7980, %v7981
        %8055 = vadd.xlane.f32.xlu0 %v8054
        %v8056 = vpop.xlane.xlu0 %8055
        %v8057 = vadd.f32 %v7982, %v7983
        %8058 = vadd.xlane.f32.xlu0 %v8057
        %v8059 = vpop.xlane.xlu0 %8058
        %v8060 = vadd.f32 %v7984, %v7985
        %8061 = vadd.xlane.f32.xlu0 %v8060
        %v8062 = vpop.xlane.xlu0 %8061
        %v8063 = vadd.f32 %v7986, %v7987
        %8064 = vadd.xlane.f32.xlu0 %v8063
        %v8065 = vpop.xlane.xlu0 %8064
        %v8066 = vadd.f32 %v7988, %v7989
        %8067 = vadd.xlane.f32.xlu0 %v8066
        %v8068 = vpop.xlane.xlu0 %8067
        %v8069 = vadd.f32 %v7990, %v7991
        %8070 = vadd.xlane.f32.xlu0 %v8069
        %v8071 = vpop.xlane.xlu0 %8070
        %v8072 = vadd.f32 %v7992, %v7993
        %8073 = vadd.xlane.f32.xlu0 %v8072
        %v8074 = vpop.xlane.xlu0 %8073
        %v8075 = vadd.f32 %v7994, %v7995
        %8076 = vadd.xlane.f32.xlu0 %v8075
        %v8077 = vpop.xlane.xlu0 %8076
        %v8078 = vadd.f32 %v7996, %v7997
        %8079 = vadd.xlane.f32.xlu0 %v8078
        %v8080 = vpop.xlane.xlu0 %8079
        %v8081 = vadd.f32 %v7998, %v7999
        %8082 = vadd.xlane.f32.xlu0 %v8081
        %v8083 = vpop.xlane.xlu0 %8082
        %v8084 = vadd.f32 %v8000, %v8001
        %8085 = vadd.xlane.f32.xlu0 %v8084
        %v8086 = vpop.xlane.xlu0 %8085
        %v8087 = vadd.f32 %v8002, %v8003
        %8088 = vadd.xlane.f32.xlu0 %v8087
        %v8089 = vpop.xlane.xlu0 %8088
        %v8090 = vadd.f32 %v8004, %v8005
        %8091 = vadd.xlane.f32.xlu0 %v8090
        %v8092 = vpop.xlane.xlu0 %8091
        %v8093 = vadd.f32 %v8006, %v8007
        %8094 = vadd.xlane.f32.xlu0 %v8093
        %v8095 = vpop.xlane.xlu0 %8094
        %v8096 = vadd.f32 %v8008, %v8009
        %8097 = vadd.xlane.f32.xlu0 %v8096
        %v8098 = vpop.xlane.xlu0 %8097
        %v8099 = vadd.f32 %v8010, %v8011
        %8100 = vadd.xlane.f32.xlu0 %v8099
        %v8101 = vpop.xlane.xlu0 %8100
        %v8102 = vadd.f32 %v8012, %v8013
        %8103 = vadd.xlane.f32.xlu0 %v8102
        %v8104 = vpop.xlane.xlu0 %8103
        %v8105 = vadd.f32 %v8014, %v8015
        %8106 = vadd.xlane.f32.xlu0 %v8105
        %v8107 = vpop.xlane.xlu0 %8106
        %v8108 = vadd.f32 %v8016, %v8017
        %8109 = vadd.xlane.f32.xlu0 %v8108
        %v8110 = vpop.xlane.xlu0 %8109
        %v8111 = vadd.f32 %v8018, %v8019
        %8112 = vadd.xlane.f32.xlu0 %v8111
        %v8113 = vpop.xlane.xlu0 %8112
        %v8114 = vadd.f32 %v8020, %v8021
        %8115 = vadd.xlane.f32.xlu0 %v8114
        %v8116 = vpop.xlane.xlu0 %8115
        %v8117 = vadd.f32 %v8022, %v8023
        %8118 = vadd.xlane.f32.xlu0 %v8117
        %v8119 = vpop.xlane.xlu0 %8118
        %v8120 = vadd.f32 %v8024, %v8025
        %8121 = vadd.xlane.f32.xlu0 %v8120
        %v8122 = vpop.xlane.xlu0 %8121
        %v8123 = vadd.f32 %v8026, %v8027
        %8124 = vadd.xlane.f32.xlu0 %v8123
        %v8125 = vpop.xlane.xlu0 %8124
        %v8126 = vmul.f32 %v8032, %v5599
        %v8127 = vmul.f32 %v8035, %v5599
        %v8128 = vmul.f32 %v8038, %v5599
        %v8129 = vmul.f32 %v8041, %v5599
        %v8130 = vmul.f32 %v8044, %v5599
        %v8131 = vmul.f32 %v8047, %v5599
        %v8132 = vmul.f32 %v8050, %v5599
        %v8133 = vmul.f32 %v8053, %v5599
        %v8134 = vmul.f32 %v8056, %v5599
        %v8135 = vmul.f32 %v8059, %v5599
        %v8136 = vmul.f32 %v8062, %v5599
        %v8137 = vmul.f32 %v8065, %v5599
        %v8138 = vmul.f32 %v8068, %v5599
        %v8139 = vmul.f32 %v8071, %v5599
        %v8140 = vmul.f32 %v8074, %v5599
        %v8141 = vmul.f32 %v8077, %v5599
        %v8142 = vmul.f32 %v8080, %v5599
        %v8143 = vmul.f32 %v8083, %v5599
        %v8144 = vmul.f32 %v8086, %v5599
        %v8145 = vmul.f32 %v8089, %v5599
        %v8146 = vmul.f32 %v8092, %v5599
        %v8147 = vmul.f32 %v8095, %v5599
        %v8148 = vmul.f32 %v8098, %v5599
        %v8149 = vmul.f32 %v8101, %v5599
        %v8150 = vmul.f32 %v8104, %v5599
        %v8151 = vmul.f32 %v8107, %v5599
        %v8152 = vmul.f32 %v8110, %v5599
        %v8153 = vmul.f32 %v8113, %v5599
        %v8154 = vmul.f32 %v8116, %v5599
        %v8155 = vmul.f32 %v8119, %v5599
        %v8156 = vmul.f32 %v8122, %v5599
        %v8157 = vmul.f32 %v8125, %v5599
        %v8158 = vsub.f32 %v7964, %v8126
        %v8159 = vsub.f32 %v7965, %v8126
        %v8160 = vsub.f32 %v7966, %v8127
        %v8161 = vsub.f32 %v7967, %v8127
        %v8162 = vsub.f32 %v7968, %v8128
        %v8163 = vsub.f32 %v7969, %v8128
        %v8164 = vsub.f32 %v7970, %v8129
        %v8165 = vsub.f32 %v7971, %v8129
        %v8166 = vsub.f32 %v7972, %v8130
        %v8167 = vsub.f32 %v7973, %v8130
        %v8168 = vsub.f32 %v7974, %v8131
        %v8169 = vsub.f32 %v7975, %v8131
        %v8170 = vsub.f32 %v7976, %v8132
        %v8171 = vsub.f32 %v7977, %v8132
        %v8172 = vsub.f32 %v7978, %v8133
        %v8173 = vsub.f32 %v7979, %v8133
        %v8174 = vsub.f32 %v7980, %v8134
        %v8175 = vsub.f32 %v7981, %v8134
        %v8176 = vsub.f32 %v7982, %v8135
        %v8177 = vsub.f32 %v7983, %v8135
        %v8178 = vsub.f32 %v7984, %v8136
        %v8179 = vsub.f32 %v7985, %v8136
        %v8180 = vsub.f32 %v7986, %v8137
        %v8181 = vsub.f32 %v7987, %v8137
        %v8182 = vsub.f32 %v7988, %v8138
        %v8183 = vsub.f32 %v7989, %v8138
        %v8184 = vsub.f32 %v7990, %v8139
        %v8185 = vsub.f32 %v7991, %v8139
        %v8186 = vsub.f32 %v7992, %v8140
        %v8187 = vsub.f32 %v7993, %v8140
        %v8188 = vsub.f32 %v7994, %v8141
        %v8189 = vsub.f32 %v7995, %v8141
        %v8190 = vsub.f32 %v7996, %v8142
        %v8191 = vsub.f32 %v7997, %v8142
        %v8192 = vsub.f32 %v7998, %v8143
        %v8193 = vsub.f32 %v7999, %v8143
        %v8194 = vsub.f32 %v8000, %v8144
        %v8195 = vsub.f32 %v8001, %v8144
        %v8196 = vsub.f32 %v8002, %v8145
        %v8197 = vsub.f32 %v8003, %v8145
        %v8198 = vsub.f32 %v8004, %v8146
        %v8199 = vsub.f32 %v8005, %v8146
        %v8200 = vsub.f32 %v8006, %v8147
        %v8201 = vsub.f32 %v8007, %v8147
        %v8202 = vsub.f32 %v8008, %v8148
        %v8203 = vsub.f32 %v8009, %v8148
        %v8204 = vsub.f32 %v8010, %v8149
        %v8205 = vsub.f32 %v8011, %v8149
        %v8206 = vsub.f32 %v8012, %v8150
        %v8207 = vsub.f32 %v8013, %v8150
        %v8208 = vsub.f32 %v8014, %v8151
        %v8209 = vsub.f32 %v8015, %v8151
        %v8210 = vsub.f32 %v8016, %v8152
        %v8211 = vsub.f32 %v8017, %v8152
        %v8212 = vsub.f32 %v8018, %v8153
        %v8213 = vsub.f32 %v8019, %v8153
        %v8214 = vsub.f32 %v8020, %v8154
        %v8215 = vsub.f32 %v8021, %v8154
        %v8216 = vsub.f32 %v8022, %v8155
        %v8217 = vsub.f32 %v8023, %v8155
        %v8218 = vsub.f32 %v8024, %v8156
        %v8219 = vsub.f32 %v8025, %v8156
        %v8220 = vsub.f32 %v8026, %v8157
        %v8221 = vsub.f32 %v8027, %v8157
        %v8222 = vmul.f32 %v8158, %v8158
        %v8223 = vmul.f32 %v8159, %v8159
        %v8224 = vmul.f32 %v8160, %v8160
        %v8225 = vmul.f32 %v8161, %v8161
        %v8226 = vmul.f32 %v8162, %v8162
        %v8227 = vmul.f32 %v8163, %v8163
        %v8228 = vmul.f32 %v8164, %v8164
        %v8229 = vmul.f32 %v8165, %v8165
        %v8230 = vmul.f32 %v8166, %v8166
        %v8231 = vmul.f32 %v8167, %v8167
        %v8232 = vmul.f32 %v8168, %v8168
        %v8233 = vmul.f32 %v8169, %v8169
        %v8234 = vmul.f32 %v8170, %v8170
        %v8235 = vmul.f32 %v8171, %v8171
        %v8236 = vmul.f32 %v8172, %v8172
        %v8237 = vmul.f32 %v8173, %v8173
        %v8238 = vmul.f32 %v8174, %v8174
        %v8239 = vmul.f32 %v8175, %v8175
        %v8240 = vmul.f32 %v8176, %v8176
        %v8241 = vmul.f32 %v8177, %v8177
        %v8242 = vmul.f32 %v8178, %v8178
        %v8243 = vmul.f32 %v8179, %v8179
        %v8244 = vmul.f32 %v8180, %v8180
        %v8245 = vmul.f32 %v8181, %v8181
        %v8246 = vmul.f32 %v8182, %v8182
        %v8247 = vmul.f32 %v8183, %v8183
        %v8248 = vmul.f32 %v8184, %v8184
        %v8249 = vmul.f32 %v8185, %v8185
        %v8250 = vmul.f32 %v8186, %v8186
        %v8251 = vmul.f32 %v8187, %v8187
        %v8252 = vmul.f32 %v8188, %v8188
        %v8253 = vmul.f32 %v8189, %v8189
        %v8254 = vmul.f32 %v8190, %v8190
        %v8255 = vmul.f32 %v8191, %v8191
        %v8256 = vmul.f32 %v8192, %v8192
        %v8257 = vmul.f32 %v8193, %v8193
        %v8258 = vmul.f32 %v8194, %v8194
        %v8259 = vmul.f32 %v8195, %v8195
        %v8260 = vmul.f32 %v8196, %v8196
        %v8261 = vmul.f32 %v8197, %v8197
        %v8262 = vmul.f32 %v8198, %v8198
        %v8263 = vmul.f32 %v8199, %v8199
        %v8264 = vmul.f32 %v8200, %v8200
        %v8265 = vmul.f32 %v8201, %v8201
        %v8266 = vmul.f32 %v8202, %v8202
        %v8267 = vmul.f32 %v8203, %v8203
        %v8268 = vmul.f32 %v8204, %v8204
        %v8269 = vmul.f32 %v8205, %v8205
        %v8270 = vmul.f32 %v8206, %v8206
        %v8271 = vmul.f32 %v8207, %v8207
        %v8272 = vmul.f32 %v8208, %v8208
        %v8273 = vmul.f32 %v8209, %v8209
        %v8274 = vmul.f32 %v8210, %v8210
        %v8275 = vmul.f32 %v8211, %v8211
        %v8276 = vmul.f32 %v8212, %v8212
        %v8277 = vmul.f32 %v8213, %v8213
        %v8278 = vmul.f32 %v8214, %v8214
        %v8279 = vmul.f32 %v8215, %v8215
        %v8280 = vmul.f32 %v8216, %v8216
        %v8281 = vmul.f32 %v8217, %v8217
        %v8282 = vmul.f32 %v8218, %v8218
        %v8283 = vmul.f32 %v8219, %v8219
        %v8284 = vmul.f32 %v8220, %v8220
        %v8285 = vmul.f32 %v8221, %v8221
        %v8286 = vadd.f32 %v8222, %v8223
        %8287 = vadd.xlane.f32.xlu0 %v8286
        %v8288 = vpop.xlane.xlu0 %8287
        %v8289 = vadd.f32 %v8224, %v8225
        %8290 = vadd.xlane.f32.xlu0 %v8289
        %v8291 = vpop.xlane.xlu0 %8290
        %v8292 = vadd.f32 %v8226, %v8227
        %8293 = vadd.xlane.f32.xlu0 %v8292
        %v8294 = vpop.xlane.xlu0 %8293
        %v8295 = vadd.f32 %v8228, %v8229
        %8296 = vadd.xlane.f32.xlu0 %v8295
        %v8297 = vpop.xlane.xlu0 %8296
        %v8298 = vadd.f32 %v8230, %v8231
        %8299 = vadd.xlane.f32.xlu0 %v8298
        %v8300 = vpop.xlane.xlu0 %8299
        %v8301 = vadd.f32 %v8232, %v8233
        %8302 = vadd.xlane.f32.xlu0 %v8301
        %v8303 = vpop.xlane.xlu0 %8302
        %v8304 = vadd.f32 %v8234, %v8235
        %8305 = vadd.xlane.f32.xlu0 %v8304
        %v8306 = vpop.xlane.xlu0 %8305
        %v8307 = vadd.f32 %v8236, %v8237
        %8308 = vadd.xlane.f32.xlu0 %v8307
        %v8309 = vpop.xlane.xlu0 %8308
        %v8310 = vadd.f32 %v8238, %v8239
        %8311 = vadd.xlane.f32.xlu0 %v8310
        %v8312 = vpop.xlane.xlu0 %8311
        %v8313 = vadd.f32 %v8240, %v8241
        %8314 = vadd.xlane.f32.xlu0 %v8313
        %v8315 = vpop.xlane.xlu0 %8314
        %v8316 = vadd.f32 %v8242, %v8243
        %8317 = vadd.xlane.f32.xlu0 %v8316
        %v8318 = vpop.xlane.xlu0 %8317
        %v8319 = vadd.f32 %v8244, %v8245
        %8320 = vadd.xlane.f32.xlu0 %v8319
        %v8321 = vpop.xlane.xlu0 %8320
        %v8322 = vadd.f32 %v8246, %v8247
        %8323 = vadd.xlane.f32.xlu0 %v8322
        %v8324 = vpop.xlane.xlu0 %8323
        %v8325 = vadd.f32 %v8248, %v8249
        %8326 = vadd.xlane.f32.xlu0 %v8325
        %v8327 = vpop.xlane.xlu0 %8326
        %v8328 = vadd.f32 %v8250, %v8251
        %8329 = vadd.xlane.f32.xlu0 %v8328
        %v8330 = vpop.xlane.xlu0 %8329
        %v8331 = vadd.f32 %v8252, %v8253
        %8332 = vadd.xlane.f32.xlu0 %v8331
        %v8333 = vpop.xlane.xlu0 %8332
        %v8334 = vadd.f32 %v8254, %v8255
        %8335 = vadd.xlane.f32.xlu0 %v8334
        %v8336 = vpop.xlane.xlu0 %8335
        %v8337 = vadd.f32 %v8256, %v8257
        %8338 = vadd.xlane.f32.xlu0 %v8337
        %v8339 = vpop.xlane.xlu0 %8338
        %v8340 = vadd.f32 %v8258, %v8259
        %8341 = vadd.xlane.f32.xlu0 %v8340
        %v8342 = vpop.xlane.xlu0 %8341
        %v8343 = vadd.f32 %v8260, %v8261
        %8344 = vadd.xlane.f32.xlu0 %v8343
        %v8345 = vpop.xlane.xlu0 %8344
        %v8346 = vadd.f32 %v8262, %v8263
        %8347 = vadd.xlane.f32.xlu0 %v8346
        %v8348 = vpop.xlane.xlu0 %8347
        %v8349 = vadd.f32 %v8264, %v8265
        %8350 = vadd.xlane.f32.xlu0 %v8349
        %v8351 = vpop.xlane.xlu0 %8350
        %v8352 = vadd.f32 %v8266, %v8267
        %8353 = vadd.xlane.f32.xlu0 %v8352
        %v8354 = vpop.xlane.xlu0 %8353
        %v8355 = vadd.f32 %v8268, %v8269
        %8356 = vadd.xlane.f32.xlu0 %v8355
        %v8357 = vpop.xlane.xlu0 %8356
        %v8358 = vadd.f32 %v8270, %v8271
        %8359 = vadd.xlane.f32.xlu0 %v8358
        %v8360 = vpop.xlane.xlu0 %8359
        %v8361 = vadd.f32 %v8272, %v8273
        %8362 = vadd.xlane.f32.xlu0 %v8361
        %v8363 = vpop.xlane.xlu0 %8362
        %v8364 = vadd.f32 %v8274, %v8275
        %8365 = vadd.xlane.f32.xlu0 %v8364
        %v8366 = vpop.xlane.xlu0 %8365
        %v8367 = vadd.f32 %v8276, %v8277
        %8368 = vadd.xlane.f32.xlu0 %v8367
        %v8369 = vpop.xlane.xlu0 %8368
        %v8370 = vadd.f32 %v8278, %v8279
        %8371 = vadd.xlane.f32.xlu0 %v8370
        %v8372 = vpop.xlane.xlu0 %8371
        %v8373 = vadd.f32 %v8280, %v8281
        %8374 = vadd.xlane.f32.xlu0 %v8373
        %v8375 = vpop.xlane.xlu0 %8374
        %v8376 = vadd.f32 %v8282, %v8283
        %8377 = vadd.xlane.f32.xlu0 %v8376
        %v8378 = vpop.xlane.xlu0 %8377
        %v8379 = vadd.f32 %v8284, %v8285
        %8380 = vadd.xlane.f32.xlu0 %v8379
        %v8381 = vpop.xlane.xlu0 %8380
        %v8382 = vmul.f32 %v8288, %v5599
        %v8383 = vmul.f32 %v8291, %v5599
        %v8384 = vmul.f32 %v8294, %v5599
        %v8385 = vmul.f32 %v8297, %v5599
        %v8386 = vmul.f32 %v8300, %v5599
        %v8387 = vmul.f32 %v8303, %v5599
        %v8388 = vmul.f32 %v8306, %v5599
        %v8389 = vmul.f32 %v8309, %v5599
        %v8390 = vmul.f32 %v8312, %v5599
        %v8391 = vmul.f32 %v8315, %v5599
        %v8392 = vmul.f32 %v8318, %v5599
        %v8393 = vmul.f32 %v8321, %v5599
        %v8394 = vmul.f32 %v8324, %v5599
        %v8395 = vmul.f32 %v8327, %v5599
        %v8396 = vmul.f32 %v8330, %v5599
        %v8397 = vmul.f32 %v8333, %v5599
        %v8398 = vmul.f32 %v8336, %v5599
        %v8399 = vmul.f32 %v8339, %v5599
        %v8400 = vmul.f32 %v8342, %v5599
        %v8401 = vmul.f32 %v8345, %v5599
        %v8402 = vmul.f32 %v8348, %v5599
        %v8403 = vmul.f32 %v8351, %v5599
        %v8404 = vmul.f32 %v8354, %v5599
        %v8405 = vmul.f32 %v8357, %v5599
        %v8406 = vmul.f32 %v8360, %v5599
        %v8407 = vmul.f32 %v8363, %v5599
        %v8408 = vmul.f32 %v8366, %v5599
        %v8409 = vmul.f32 %v8369, %v5599
        %v8410 = vmul.f32 %v8372, %v5599
        %v8411 = vmul.f32 %v8375, %v5599
        %v8412 = vmul.f32 %v8378, %v5599
        %v8413 = vmul.f32 %v8381, %v5599
        %v8414 = vadd.f32 %v8382, 1e-05
        %v8415 = vadd.f32 %v8383, 1e-05
        %v8416 = vadd.f32 %v8384, 1e-05
        %v8417 = vadd.f32 %v8385, 1e-05
        %v8418 = vadd.f32 %v8386, 1e-05
        %v8419 = vadd.f32 %v8387, 1e-05
        %v8420 = vadd.f32 %v8388, 1e-05
        %v8421 = vadd.f32 %v8389, 1e-05
        %v8422 = vadd.f32 %v8390, 1e-05
        %v8423 = vadd.f32 %v8391, 1e-05
        %v8424 = vadd.f32 %v8392, 1e-05
        %v8425 = vadd.f32 %v8393, 1e-05
        %v8426 = vadd.f32 %v8394, 1e-05
        %v8427 = vadd.f32 %v8395, 1e-05
        %v8428 = vadd.f32 %v8396, 1e-05
        %v8429 = vadd.f32 %v8397, 1e-05
        %v8430 = vadd.f32 %v8398, 1e-05
        %v8431 = vadd.f32 %v8399, 1e-05
        %v8432 = vadd.f32 %v8400, 1e-05
        %v8433 = vadd.f32 %v8401, 1e-05
        %v8434 = vadd.f32 %v8402, 1e-05
        %v8435 = vadd.f32 %v8403, 1e-05
        %v8436 = vadd.f32 %v8404, 1e-05
        %v8437 = vadd.f32 %v8405, 1e-05
        %v8438 = vadd.f32 %v8406, 1e-05
        %v8439 = vadd.f32 %v8407, 1e-05
        %v8440 = vadd.f32 %v8408, 1e-05
        %v8441 = vadd.f32 %v8409, 1e-05
        %v8442 = vadd.f32 %v8410, 1e-05
        %v8443 = vadd.f32 %v8411, 1e-05
        %v8444 = vadd.f32 %v8412, 1e-05
        %v8445 = vadd.f32 %v8413, 1e-05
        %v8446 = vrsqrt.pop %v8414
        %v8447 = vrsqrt.pop %v8415
        %v8448 = vrsqrt.pop %v8416
        %v8449 = vrsqrt.pop %v8417
        %v8450 = vrsqrt.pop %v8418
        %v8451 = vrsqrt.pop %v8419
        %v8452 = vrsqrt.pop %v8420
        %v8453 = vrsqrt.pop %v8421
        %v8454 = vrsqrt.pop %v8422
        %v8455 = vrsqrt.pop %v8423
        %v8456 = vrsqrt.pop %v8424
        %v8457 = vrsqrt.pop %v8425
        %v8458 = vrsqrt.pop %v8426
        %v8459 = vrsqrt.pop %v8427
        %v8460 = vrsqrt.pop %v8428
        %v8461 = vrsqrt.pop %v8429
        %v8462 = vrsqrt.pop %v8430
        %v8463 = vrsqrt.pop %v8431
        %v8464 = vrsqrt.pop %v8432
        %v8465 = vrsqrt.pop %v8433
        %v8466 = vrsqrt.pop %v8434
        %v8467 = vrsqrt.pop %v8435
        %v8468 = vrsqrt.pop %v8436
        %v8469 = vrsqrt.pop %v8437
        %v8470 = vrsqrt.pop %v8438
        %v8471 = vrsqrt.pop %v8439
        %v8472 = vrsqrt.pop %v8440
        %v8473 = vrsqrt.pop %v8441
        %v8474 = vrsqrt.pop %v8442
        %v8475 = vrsqrt.pop %v8443
        %v8476 = vrsqrt.pop %v8444
        %v8477 = vrsqrt.pop %v8445
        %v8478 = vmul.f32 %v8158, %v8446
        %v8479 = vmul.f32 %v8159, %v8446
        %v8480 = vmul.f32 %v8160, %v8447
        %v8481 = vmul.f32 %v8161, %v8447
        %v8482 = vmul.f32 %v8162, %v8448
        %v8483 = vmul.f32 %v8163, %v8448
        %v8484 = vmul.f32 %v8164, %v8449
        %v8485 = vmul.f32 %v8165, %v8449
        %v8486 = vmul.f32 %v8166, %v8450
        %v8487 = vmul.f32 %v8167, %v8450
        %v8488 = vmul.f32 %v8168, %v8451
        %v8489 = vmul.f32 %v8169, %v8451
        %v8490 = vmul.f32 %v8170, %v8452
        %v8491 = vmul.f32 %v8171, %v8452
        %v8492 = vmul.f32 %v8172, %v8453
        %v8493 = vmul.f32 %v8173, %v8453
        %v8494 = vmul.f32 %v8174, %v8454
        %v8495 = vmul.f32 %v8175, %v8454
        %v8496 = vmul.f32 %v8176, %v8455
        %v8497 = vmul.f32 %v8177, %v8455
        %v8498 = vmul.f32 %v8178, %v8456
        %v8499 = vmul.f32 %v8179, %v8456
        %v8500 = vmul.f32 %v8180, %v8457
        %v8501 = vmul.f32 %v8181, %v8457
        %v8502 = vmul.f32 %v8182, %v8458
        %v8503 = vmul.f32 %v8183, %v8458
        %v8504 = vmul.f32 %v8184, %v8459
        %v8505 = vmul.f32 %v8185, %v8459
        %v8506 = vmul.f32 %v8186, %v8460
        %v8507 = vmul.f32 %v8187, %v8460
        %v8508 = vmul.f32 %v8188, %v8461
        %v8509 = vmul.f32 %v8189, %v8461
        %v8510 = vmul.f32 %v8190, %v8462
        %v8511 = vmul.f32 %v8191, %v8462
        %v8512 = vmul.f32 %v8192, %v8463
        %v8513 = vmul.f32 %v8193, %v8463
        %v8514 = vmul.f32 %v8194, %v8464
        %v8515 = vmul.f32 %v8195, %v8464
        %v8516 = vmul.f32 %v8196, %v8465
        %v8517 = vmul.f32 %v8197, %v8465
        %v8518 = vmul.f32 %v8198, %v8466
        %v8519 = vmul.f32 %v8199, %v8466
        %v8520 = vmul.f32 %v8200, %v8467
        %v8521 = vmul.f32 %v8201, %v8467
        %v8522 = vmul.f32 %v8202, %v8468
        %v8523 = vmul.f32 %v8203, %v8468
        %v8524 = vmul.f32 %v8204, %v8469
        %v8525 = vmul.f32 %v8205, %v8469
        %v8526 = vmul.f32 %v8206, %v8470
        %v8527 = vmul.f32 %v8207, %v8470
        %v8528 = vmul.f32 %v8208, %v8471
        %v8529 = vmul.f32 %v8209, %v8471
        %v8530 = vmul.f32 %v8210, %v8472
        %v8531 = vmul.f32 %v8211, %v8472
        %v8532 = vmul.f32 %v8212, %v8473
        %v8533 = vmul.f32 %v8213, %v8473
        %v8534 = vmul.f32 %v8214, %v8474
        %v8535 = vmul.f32 %v8215, %v8474
        %v8536 = vmul.f32 %v8216, %v8475
        %v8537 = vmul.f32 %v8217, %v8475
        %v8538 = vmul.f32 %v8218, %v8476
        %v8539 = vmul.f32 %v8219, %v8476
        %v8540 = vmul.f32 %v8220, %v8477
        %v8541 = vmul.f32 %v8221, %v8477
        %v8543 = vlaneseq
        %v8544 = vshrl.u32 %v8543, 7
        %v8545 = vsub.s32 0, %v8544
        %v8546 = vrot.slane %v8028, %v8545
        %v8547 = vlaneseq
        %v8548 = vshrl.u32 %v8547, 7
        %v8549 = vsub.s32 1, %v8548
        %v8550 = vrot.slane %v8028, %v8549
        %v8553 = vmul.f32 %v8478, %v8546
        %v8554 = vmul.f32 %v8479, %v8550
        %v8555 = vmul.f32 %v8480, %v8546
        %v8556 = vmul.f32 %v8481, %v8550
        %v8557 = vmul.f32 %v8482, %v8546
        %v8558 = vmul.f32 %v8483, %v8550
        %v8559 = vmul.f32 %v8484, %v8546
        %v8560 = vmul.f32 %v8485, %v8550
        %v8561 = vmul.f32 %v8486, %v8546
        %v8562 = vmul.f32 %v8487, %v8550
        %v8563 = vmul.f32 %v8488, %v8546
        %v8564 = vmul.f32 %v8489, %v8550
        %v8565 = vmul.f32 %v8490, %v8546
        %v8566 = vmul.f32 %v8491, %v8550
        %v8567 = vmul.f32 %v8492, %v8546
        %v8568 = vmul.f32 %v8493, %v8550
        %v8569 = vmul.f32 %v8494, %v8546
        %v8570 = vmul.f32 %v8495, %v8550
        %v8571 = vmul.f32 %v8496, %v8546
        %v8572 = vmul.f32 %v8497, %v8550
        %v8573 = vmul.f32 %v8498, %v8546
        %v8574 = vmul.f32 %v8499, %v8550
        %v8575 = vmul.f32 %v8500, %v8546
        %v8576 = vmul.f32 %v8501, %v8550
        %v8577 = vmul.f32 %v8502, %v8546
        %v8578 = vmul.f32 %v8503, %v8550
        %v8579 = vmul.f32 %v8504, %v8546
        %v8580 = vmul.f32 %v8505, %v8550
        %v8581 = vmul.f32 %v8506, %v8546
        %v8582 = vmul.f32 %v8507, %v8550
        %v8583 = vmul.f32 %v8508, %v8546
        %v8584 = vmul.f32 %v8509, %v8550
        %v8585 = vmul.f32 %v8510, %v8546
        %v8586 = vmul.f32 %v8511, %v8550
        %v8587 = vmul.f32 %v8512, %v8546
        %v8588 = vmul.f32 %v8513, %v8550
        %v8589 = vmul.f32 %v8514, %v8546
        %v8590 = vmul.f32 %v8515, %v8550
        %v8591 = vmul.f32 %v8516, %v8546
        %v8592 = vmul.f32 %v8517, %v8550
        %v8593 = vmul.f32 %v8518, %v8546
        %v8594 = vmul.f32 %v8519, %v8550
        %v8595 = vmul.f32 %v8520, %v8546
        %v8596 = vmul.f32 %v8521, %v8550
        %v8597 = vmul.f32 %v8522, %v8546
        %v8598 = vmul.f32 %v8523, %v8550
        %v8599 = vmul.f32 %v8524, %v8546
        %v8600 = vmul.f32 %v8525, %v8550
        %v8601 = vmul.f32 %v8526, %v8546
        %v8602 = vmul.f32 %v8527, %v8550
        %v8603 = vmul.f32 %v8528, %v8546
        %v8604 = vmul.f32 %v8529, %v8550
        %v8605 = vmul.f32 %v8530, %v8546
        %v8606 = vmul.f32 %v8531, %v8550
        %v8607 = vmul.f32 %v8532, %v8546
        %v8608 = vmul.f32 %v8533, %v8550
        %v8609 = vmul.f32 %v8534, %v8546
        %v8610 = vmul.f32 %v8535, %v8550
        %v8611 = vmul.f32 %v8536, %v8546
        %v8612 = vmul.f32 %v8537, %v8550
        %v8613 = vmul.f32 %v8538, %v8546
        %v8614 = vmul.f32 %v8539, %v8550
        %v8615 = vmul.f32 %v8540, %v8546
        %v8616 = vmul.f32 %v8541, %v8550
        %v8618 = vlaneseq
        %v8619 = vshrl.u32 %v8618, 7
        %v8620 = vsub.s32 0, %v8619
        %v8621 = vrot.slane %v8029, %v8620
        %v8622 = vlaneseq
        %v8623 = vshrl.u32 %v8622, 7
        %v8624 = vsub.s32 1, %v8623
        %v8625 = vrot.slane %v8029, %v8624
        %v8628 = vadd.f32 %v8553, %v8621
        %v8629 = vadd.f32 %v8554, %v8625
        %v8630 = vadd.f32 %v8555, %v8621
        %v8631 = vadd.f32 %v8556, %v8625
        %v8632 = vadd.f32 %v8557, %v8621
        %v8633 = vadd.f32 %v8558, %v8625
        %v8634 = vadd.f32 %v8559, %v8621
        %v8635 = vadd.f32 %v8560, %v8625
        %v8636 = vadd.f32 %v8561, %v8621
        %v8637 = vadd.f32 %v8562, %v8625
        %v8638 = vadd.f32 %v8563, %v8621
        %v8639 = vadd.f32 %v8564, %v8625
        %v8640 = vadd.f32 %v8565, %v8621
        %v8641 = vadd.f32 %v8566, %v8625
        %v8642 = vadd.f32 %v8567, %v8621
        %v8643 = vadd.f32 %v8568, %v8625
        %v8644 = vadd.f32 %v8569, %v8621
        %v8645 = vadd.f32 %v8570, %v8625
        %v8646 = vadd.f32 %v8571, %v8621
        %v8647 = vadd.f32 %v8572, %v8625
        %v8648 = vadd.f32 %v8573, %v8621
        %v8649 = vadd.f32 %v8574, %v8625
        %v8650 = vadd.f32 %v8575, %v8621
        %v8651 = vadd.f32 %v8576, %v8625
        %v8652 = vadd.f32 %v8577, %v8621
        %v8653 = vadd.f32 %v8578, %v8625
        %v8654 = vadd.f32 %v8579, %v8621
        %v8655 = vadd.f32 %v8580, %v8625
        %v8656 = vadd.f32 %v8581, %v8621
        %v8657 = vadd.f32 %v8582, %v8625
        %v8658 = vadd.f32 %v8583, %v8621
        %v8659 = vadd.f32 %v8584, %v8625
        %v8660 = vadd.f32 %v8585, %v8621
        %v8661 = vadd.f32 %v8586, %v8625
        %v8662 = vadd.f32 %v8587, %v8621
        %v8663 = vadd.f32 %v8588, %v8625
        %v8664 = vadd.f32 %v8589, %v8621
        %v8665 = vadd.f32 %v8590, %v8625
        %v8666 = vadd.f32 %v8591, %v8621
        %v8667 = vadd.f32 %v8592, %v8625
        %v8668 = vadd.f32 %v8593, %v8621
        %v8669 = vadd.f32 %v8594, %v8625
        %v8670 = vadd.f32 %v8595, %v8621
        %v8671 = vadd.f32 %v8596, %v8625
        %v8672 = vadd.f32 %v8597, %v8621
        %v8673 = vadd.f32 %v8598, %v8625
        %v8674 = vadd.f32 %v8599, %v8621
        %v8675 = vadd.f32 %v8600, %v8625
        %v8676 = vadd.f32 %v8601, %v8621
        %v8677 = vadd.f32 %v8602, %v8625
        %v8678 = vadd.f32 %v8603, %v8621
        %v8679 = vadd.f32 %v8604, %v8625
        %v8680 = vadd.f32 %v8605, %v8621
        %v8681 = vadd.f32 %v8606, %v8625
        %v8682 = vadd.f32 %v8607, %v8621
        %v8683 = vadd.f32 %v8608, %v8625
        %v8684 = vadd.f32 %v8609, %v8621
        %v8685 = vadd.f32 %v8610, %v8625
        %v8686 = vadd.f32 %v8611, %v8621
        %v8687 = vadd.f32 %v8612, %v8625
        %v8688 = vadd.f32 %v8613, %v8621
        %v8689 = vadd.f32 %v8614, %v8625
        %v8690 = vadd.f32 %v8615, %v8621
        %v8691 = vadd.f32 %v8616, %v8625
        %8692 = vst [vmem:[#allocation2] sm:$0xff] %v8628
        %8693 = vst [vmem:[#allocation2 + $0x8] sm:$0xff] %v8629
        %8694 = vst [vmem:[#allocation2 + $0x10] sm:$0xff] %v8630
        %8695 = vst [vmem:[#allocation2 + $0x18] sm:$0xff] %v8631
        %8696 = vst [vmem:[#allocation2 + $0x20] sm:$0xff] %v8632
        %8697 = vst [vmem:[#allocation2 + $0x28] sm:$0xff] %v8633
        %8698 = vst [vmem:[#allocation2 + $0x30] sm:$0xff] %v8634
        %8699 = vst [vmem:[#allocation2 + $0x38] sm:$0xff] %v8635
        %8700 = vst [vmem:[#allocation2 + $0x40] sm:$0xff] %v8636
        %8701 = vst [vmem:[#allocation2 + $0x48] sm:$0xff] %v8637
        %8702 = vst [vmem:[#allocation2 + $0x50] sm:$0xff] %v8638
        %8703 = vst [vmem:[#allocation2 + $0x58] sm:$0xff] %v8639
        %8704 = vst [vmem:[#allocation2 + $0x60] sm:$0xff] %v8640
        %8705 = vst [vmem:[#allocation2 + $0x68] sm:$0xff] %v8641
        %8706 = vst [vmem:[#allocation2 + $0x70] sm:$0xff] %v8642
        %8707 = vst [vmem:[#allocation2 + $0x78] sm:$0xff] %v8643
        %8708 = vst [vmem:[#allocation2 + $0x80] sm:$0xff] %v8644
        %8709 = vst [vmem:[#allocation2 + $0x88] sm:$0xff] %v8645
        %8710 = vst [vmem:[#allocation2 + $0x90] sm:$0xff] %v8646
        %8711 = vst [vmem:[#allocation2 + $0x98] sm:$0xff] %v8647
        %8712 = vst [vmem:[#allocation2 + $0xa0] sm:$0xff] %v8648
        %8713 = vst [vmem:[#allocation2 + $0xa8] sm:$0xff] %v8649
        %8714 = vst [vmem:[#allocation2 + $0xb0] sm:$0xff] %v8650
        %8715 = vst [vmem:[#allocation2 + $0xb8] sm:$0xff] %v8651
        %8716 = vst [vmem:[#allocation2 + $0xc0] sm:$0xff] %v8652
        %8717 = vst [vmem:[#allocation2 + $0xc8] sm:$0xff] %v8653
        %8718 = vst [vmem:[#allocation2 + $0xd0] sm:$0xff] %v8654
        %8719 = vst [vmem:[#allocation2 + $0xd8] sm:$0xff] %v8655
        %8720 = vst [vmem:[#allocation2 + $0xe0] sm:$0xff] %v8656
        %8721 = vst [vmem:[#allocation2 + $0xe8] sm:$0xff] %v8657
        %8722 = vst [vmem:[#allocation2 + $0xf0] sm:$0xff] %v8658
        %8723 = vst [vmem:[#allocation2 + $0xf8] sm:$0xff] %v8659
        %8724 = vst [vmem:[#allocation2 + $0x100] sm:$0xff] %v8660
        %8725 = vst [vmem:[#allocation2 + $0x108] sm:$0xff] %v8661
        %8726 = vst [vmem:[#allocation2 + $0x110] sm:$0xff] %v8662
        %8727 = vst [vmem:[#allocation2 + $0x118] sm:$0xff] %v8663
        %8728 = vst [vmem:[#allocation2 + $0x120] sm:$0xff] %v8664
        %8729 = vst [vmem:[#allocation2 + $0x128] sm:$0xff] %v8665
        %8730 = vst [vmem:[#allocation2 + $0x130] sm:$0xff] %v8666
        %8731 = vst [vmem:[#allocation2 + $0x138] sm:$0xff] %v8667
        %8732 = vst [vmem:[#allocation2 + $0x140] sm:$0xff] %v8668
        %8733 = vst [vmem:[#allocation2 + $0x148] sm:$0xff] %v8669
        %8734 = vst [vmem:[#allocation2 + $0x150] sm:$0xff] %v8670
        %8735 = vst [vmem:[#allocation2 + $0x158] sm:$0xff] %v8671
        %8736 = vst [vmem:[#allocation2 + $0x160] sm:$0xff] %v8672
        %8737 = vst [vmem:[#allocation2 + $0x168] sm:$0xff] %v8673
        %8738 = vst [vmem:[#allocation2 + $0x170] sm:$0xff] %v8674
        %8739 = vst [vmem:[#allocation2 + $0x178] sm:$0xff] %v8675
        %8740 = vst [vmem:[#allocation2 + $0x180] sm:$0xff] %v8676
        %8741 = vst [vmem:[#allocation2 + $0x188] sm:$0xff] %v8677
        %8742 = vst [vmem:[#allocation2 + $0x190] sm:$0xff] %v8678
        %8743 = vst [vmem:[#allocation2 + $0x198] sm:$0xff] %v8679
        %8744 = vst [vmem:[#allocation2 + $0x1a0] sm:$0xff] %v8680
        %8745 = vst [vmem:[#allocation2 + $0x1a8] sm:$0xff] %v8681
        %8746 = vst [vmem:[#allocation2 + $0x1b0] sm:$0xff] %v8682
        %8747 = vst [vmem:[#allocation2 + $0x1b8] sm:$0xff] %v8683
        %8748 = vst [vmem:[#allocation2 + $0x1c0] sm:$0xff] %v8684
        %8749 = vst [vmem:[#allocation2 + $0x1c8] sm:$0xff] %v8685
        %8750 = vst [vmem:[#allocation2 + $0x1d0] sm:$0xff] %v8686
        %8751 = vst [vmem:[#allocation2 + $0x1d8] sm:$0xff] %v8687
        %8752 = vst [vmem:[#allocation2 + $0x1e0] sm:$0xff] %v8688
        %8753 = vst [vmem:[#allocation2 + $0x1e8] sm:$0xff] %v8689
        %8754 = vst [vmem:[#allocation2 + $0x1f0] sm:$0xff] %v8690
        %8755 = vst [vmem:[#allocation2 + $0x1f8] sm:$0xff] %v8691
        %p8756 = scmp.eq.s32.totalorder %s40, 2
        // Predicated region
        $region153: #{tpu_custom_call.1} parent=83 // pred_check
          %p8757 = pneg %p8756
        $region154: #{tpu_custom_call.1} parent=83 // pred_check_branch
          %8759 = sbr.rel (%p8757) target = $region156
        $region155: #{tpu_custom_call.1} parent=83 // pred_region
          %v8760 = vld [vmem:[#allocation20] sm:$0x3]
          %v8761 = vld [vmem:[#allocation21] sm:$0x3]
          %v8762 = vadd.f32 %v8628, %v8629
          %8763 = vadd.xlane.f32.xlu0 %v8762
          %v8764 = vpop.xlane.xlu0 %8763
          %v8765 = vadd.f32 %v8630, %v8631
          %8766 = vadd.xlane.f32.xlu0 %v8765
          %v8767 = vpop.xlane.xlu0 %8766
          %v8768 = vadd.f32 %v8632, %v8633
          %8769 = vadd.xlane.f32.xlu0 %v8768
          %v8770 = vpop.xlane.xlu0 %8769
          %v8771 = vadd.f32 %v8634, %v8635
          %8772 = vadd.xlane.f32.xlu0 %v8771
          %v8773 = vpop.xlane.xlu0 %8772
          %v8774 = vadd.f32 %v8636, %v8637
          %8775 = vadd.xlane.f32.xlu0 %v8774
          %v8776 = vpop.xlane.xlu0 %8775
          %v8777 = vadd.f32 %v8638, %v8639
          %8778 = vadd.xlane.f32.xlu0 %v8777
          %v8779 = vpop.xlane.xlu0 %8778
          %v8780 = vadd.f32 %v8640, %v8641
          %8781 = vadd.xlane.f32.xlu0 %v8780
          %v8782 = vpop.xlane.xlu0 %8781
          %v8783 = vadd.f32 %v8642, %v8643
          %8784 = vadd.xlane.f32.xlu0 %v8783
          %v8785 = vpop.xlane.xlu0 %8784
          %v8786 = vadd.f32 %v8644, %v8645
          %8787 = vadd.xlane.f32.xlu0 %v8786
          %v8788 = vpop.xlane.xlu0 %8787
          %v8789 = vadd.f32 %v8646, %v8647
          %8790 = vadd.xlane.f32.xlu0 %v8789
          %v8791 = vpop.xlane.xlu0 %8790
          %v8792 = vadd.f32 %v8648, %v8649
          %8793 = vadd.xlane.f32.xlu0 %v8792
          %v8794 = vpop.xlane.xlu0 %8793
          %v8795 = vadd.f32 %v8650, %v8651
          %8796 = vadd.xlane.f32.xlu0 %v8795
          %v8797 = vpop.xlane.xlu0 %8796
          %v8798 = vadd.f32 %v8652, %v8653
          %8799 = vadd.xlane.f32.xlu0 %v8798
          %v8800 = vpop.xlane.xlu0 %8799
          %v8801 = vadd.f32 %v8654, %v8655
          %8802 = vadd.xlane.f32.xlu0 %v8801
          %v8803 = vpop.xlane.xlu0 %8802
          %v8804 = vadd.f32 %v8656, %v8657
          %8805 = vadd.xlane.f32.xlu0 %v8804
          %v8806 = vpop.xlane.xlu0 %8805
          %v8807 = vadd.f32 %v8658, %v8659
          %8808 = vadd.xlane.f32.xlu0 %v8807
          %v8809 = vpop.xlane.xlu0 %8808
          %v8810 = vadd.f32 %v8660, %v8661
          %8811 = vadd.xlane.f32.xlu0 %v8810
          %v8812 = vpop.xlane.xlu0 %8811
          %v8813 = vadd.f32 %v8662, %v8663
          %8814 = vadd.xlane.f32.xlu0 %v8813
          %v8815 = vpop.xlane.xlu0 %8814
          %v8816 = vadd.f32 %v8664, %v8665
          %8817 = vadd.xlane.f32.xlu0 %v8816
          %v8818 = vpop.xlane.xlu0 %8817
          %v8819 = vadd.f32 %v8666, %v8667
          %8820 = vadd.xlane.f32.xlu0 %v8819
          %v8821 = vpop.xlane.xlu0 %8820
          %v8822 = vadd.f32 %v8668, %v8669
          %8823 = vadd.xlane.f32.xlu0 %v8822
          %v8824 = vpop.xlane.xlu0 %8823
          %v8825 = vadd.f32 %v8670, %v8671
          %8826 = vadd.xlane.f32.xlu0 %v8825
          %v8827 = vpop.xlane.xlu0 %8826
          %v8828 = vadd.f32 %v8672, %v8673
          %8829 = vadd.xlane.f32.xlu0 %v8828
          %v8830 = vpop.xlane.xlu0 %8829
          %v8831 = vadd.f32 %v8674, %v8675
          %8832 = vadd.xlane.f32.xlu0 %v8831
          %v8833 = vpop.xlane.xlu0 %8832
          %v8834 = vadd.f32 %v8676, %v8677
          %8835 = vadd.xlane.f32.xlu0 %v8834
          %v8836 = vpop.xlane.xlu0 %8835
          %v8837 = vadd.f32 %v8678, %v8679
          %8838 = vadd.xlane.f32.xlu0 %v8837
          %v8839 = vpop.xlane.xlu0 %8838
          %v8840 = vadd.f32 %v8680, %v8681
          %8841 = vadd.xlane.f32.xlu0 %v8840
          %v8842 = vpop.xlane.xlu0 %8841
          %v8843 = vadd.f32 %v8682, %v8683
          %8844 = vadd.xlane.f32.xlu0 %v8843
          %v8845 = vpop.xlane.xlu0 %8844
          %v8846 = vadd.f32 %v8684, %v8685
          %8847 = vadd.xlane.f32.xlu0 %v8846
          %v8848 = vpop.xlane.xlu0 %8847
          %v8849 = vadd.f32 %v8686, %v8687
          %8850 = vadd.xlane.f32.xlu0 %v8849
          %v8851 = vpop.xlane.xlu0 %8850
          %v8852 = vadd.f32 %v8688, %v8689
          %8853 = vadd.xlane.f32.xlu0 %v8852
          %v8854 = vpop.xlane.xlu0 %8853
          %v8855 = vadd.f32 %v8690, %v8691
          %8856 = vadd.xlane.f32.xlu0 %v8855
          %v8857 = vpop.xlane.xlu0 %8856
          %v8858 = vmul.f32 %v8764, %v5599
          %v8859 = vmul.f32 %v8767, %v5599
          %v8860 = vmul.f32 %v8770, %v5599
          %v8861 = vmul.f32 %v8773, %v5599
          %v8862 = vmul.f32 %v8776, %v5599
          %v8863 = vmul.f32 %v8779, %v5599
          %v8864 = vmul.f32 %v8782, %v5599
          %v8865 = vmul.f32 %v8785, %v5599
          %v8866 = vmul.f32 %v8788, %v5599
          %v8867 = vmul.f32 %v8791, %v5599
          %v8868 = vmul.f32 %v8794, %v5599
          %v8869 = vmul.f32 %v8797, %v5599
          %v8870 = vmul.f32 %v8800, %v5599
          %v8871 = vmul.f32 %v8803, %v5599
          %v8872 = vmul.f32 %v8806, %v5599
          %v8873 = vmul.f32 %v8809, %v5599
          %v8874 = vmul.f32 %v8812, %v5599
          %v8875 = vmul.f32 %v8815, %v5599
          %v8876 = vmul.f32 %v8818, %v5599
          %v8877 = vmul.f32 %v8821, %v5599
          %v8878 = vmul.f32 %v8824, %v5599
          %v8879 = vmul.f32 %v8827, %v5599
          %v8880 = vmul.f32 %v8830, %v5599
          %v8881 = vmul.f32 %v8833, %v5599
          %v8882 = vmul.f32 %v8836, %v5599
          %v8883 = vmul.f32 %v8839, %v5599
          %v8884 = vmul.f32 %v8842, %v5599
          %v8885 = vmul.f32 %v8845, %v5599
          %v8886 = vmul.f32 %v8848, %v5599
          %v8887 = vmul.f32 %v8851, %v5599
          %v8888 = vmul.f32 %v8854, %v5599
          %v8889 = vmul.f32 %v8857, %v5599
          %v8890 = vsub.f32 %v8628, %v8858
          %v8891 = vsub.f32 %v8629, %v8858
          %v8892 = vsub.f32 %v8630, %v8859
          %v8893 = vsub.f32 %v8631, %v8859
          %v8894 = vsub.f32 %v8632, %v8860
          %v8895 = vsub.f32 %v8633, %v8860
          %v8896 = vsub.f32 %v8634, %v8861
          %v8897 = vsub.f32 %v8635, %v8861
          %v8898 = vsub.f32 %v8636, %v8862
          %v8899 = vsub.f32 %v8637, %v8862
          %v8900 = vsub.f32 %v8638, %v8863
          %v8901 = vsub.f32 %v8639, %v8863
          %v8902 = vsub.f32 %v8640, %v8864
          %v8903 = vsub.f32 %v8641, %v8864
          %v8904 = vsub.f32 %v8642, %v8865
          %v8905 = vsub.f32 %v8643, %v8865
          %v8906 = vsub.f32 %v8644, %v8866
          %v8907 = vsub.f32 %v8645, %v8866
          %v8908 = vsub.f32 %v8646, %v8867
          %v8909 = vsub.f32 %v8647, %v8867
          %v8910 = vsub.f32 %v8648, %v8868
          %v8911 = vsub.f32 %v8649, %v8868
          %v8912 = vsub.f32 %v8650, %v8869
          %v8913 = vsub.f32 %v8651, %v8869
          %v8914 = vsub.f32 %v8652, %v8870
          %v8915 = vsub.f32 %v8653, %v8870
          %v8916 = vsub.f32 %v8654, %v8871
          %v8917 = vsub.f32 %v8655, %v8871
          %v8918 = vsub.f32 %v8656, %v8872
          %v8919 = vsub.f32 %v8657, %v8872
          %v8920 = vsub.f32 %v8658, %v8873
          %v8921 = vsub.f32 %v8659, %v8873
          %v8922 = vsub.f32 %v8660, %v8874
          %v8923 = vsub.f32 %v8661, %v8874
          %v8924 = vsub.f32 %v8662, %v8875
          %v8925 = vsub.f32 %v8663, %v8875
          %v8926 = vsub.f32 %v8664, %v8876
          %v8927 = vsub.f32 %v8665, %v8876
          %v8928 = vsub.f32 %v8666, %v8877
          %v8929 = vsub.f32 %v8667, %v8877
          %v8930 = vsub.f32 %v8668, %v8878
          %v8931 = vsub.f32 %v8669, %v8878
          %v8932 = vsub.f32 %v8670, %v8879
          %v8933 = vsub.f32 %v8671, %v8879
          %v8934 = vsub.f32 %v8672, %v8880
          %v8935 = vsub.f32 %v8673, %v8880
          %v8936 = vsub.f32 %v8674, %v8881
          %v8937 = vsub.f32 %v8675, %v8881
          %v8938 = vsub.f32 %v8676, %v8882
          %v8939 = vsub.f32 %v8677, %v8882
          %v8940 = vsub.f32 %v8678, %v8883
          %v8941 = vsub.f32 %v8679, %v8883
          %v8942 = vsub.f32 %v8680, %v8884
          %v8943 = vsub.f32 %v8681, %v8884
          %v8944 = vsub.f32 %v8682, %v8885
          %v8945 = vsub.f32 %v8683, %v8885
          %v8946 = vsub.f32 %v8684, %v8886
          %v8947 = vsub.f32 %v8685, %v8886
          %v8948 = vsub.f32 %v8686, %v8887
          %v8949 = vsub.f32 %v8687, %v8887
          %v8950 = vsub.f32 %v8688, %v8888
          %v8951 = vsub.f32 %v8689, %v8888
          %v8952 = vsub.f32 %v8690, %v8889
          %v8953 = vsub.f32 %v8691, %v8889
          %v8954 = vmul.f32 %v8890, %v8890
          %v8955 = vmul.f32 %v8891, %v8891
          %v8956 = vmul.f32 %v8892, %v8892
          %v8957 = vmul.f32 %v8893, %v8893
          %v8958 = vmul.f32 %v8894, %v8894
          %v8959 = vmul.f32 %v8895, %v8895
          %v8960 = vmul.f32 %v8896, %v8896
          %v8961 = vmul.f32 %v8897, %v8897
          %v8962 = vmul.f32 %v8898, %v8898
          %v8963 = vmul.f32 %v8899, %v8899
          %v8964 = vmul.f32 %v8900, %v8900
          %v8965 = vmul.f32 %v8901, %v8901
          %v8966 = vmul.f32 %v8902, %v8902
          %v8967 = vmul.f32 %v8903, %v8903
          %v8968 = vmul.f32 %v8904, %v8904
          %v8969 = vmul.f32 %v8905, %v8905
          %v8970 = vmul.f32 %v8906, %v8906
          %v8971 = vmul.f32 %v8907, %v8907
          %v8972 = vmul.f32 %v8908, %v8908
          %v8973 = vmul.f32 %v8909, %v8909
          %v8974 = vmul.f32 %v8910, %v8910
          %v8975 = vmul.f32 %v8911, %v8911
          %v8976 = vmul.f32 %v8912, %v8912
          %v8977 = vmul.f32 %v8913, %v8913
          %v8978 = vmul.f32 %v8914, %v8914
          %v8979 = vmul.f32 %v8915, %v8915
          %v8980 = vmul.f32 %v8916, %v8916
          %v8981 = vmul.f32 %v8917, %v8917
          %v8982 = vmul.f32 %v8918, %v8918
          %v8983 = vmul.f32 %v8919, %v8919
          %v8984 = vmul.f32 %v8920, %v8920
          %v8985 = vmul.f32 %v8921, %v8921
          %v8986 = vmul.f32 %v8922, %v8922
          %v8987 = vmul.f32 %v8923, %v8923
          %v8988 = vmul.f32 %v8924, %v8924
          %v8989 = vmul.f32 %v8925, %v8925
          %v8990 = vmul.f32 %v8926, %v8926
          %v8991 = vmul.f32 %v8927, %v8927
          %v8992 = vmul.f32 %v8928, %v8928
          %v8993 = vmul.f32 %v8929, %v8929
          %v8994 = vmul.f32 %v8930, %v8930
          %v8995 = vmul.f32 %v8931, %v8931
          %v8996 = vmul.f32 %v8932, %v8932
          %v8997 = vmul.f32 %v8933, %v8933
          %v8998 = vmul.f32 %v8934, %v8934
          %v8999 = vmul.f32 %v8935, %v8935
          %v9000 = vmul.f32 %v8936, %v8936
          %v9001 = vmul.f32 %v8937, %v8937
          %v9002 = vmul.f32 %v8938, %v8938
          %v9003 = vmul.f32 %v8939, %v8939
          %v9004 = vmul.f32 %v8940, %v8940
          %v9005 = vmul.f32 %v8941, %v8941
          %v9006 = vmul.f32 %v8942, %v8942
          %v9007 = vmul.f32 %v8943, %v8943
          %v9008 = vmul.f32 %v8944, %v8944
          %v9009 = vmul.f32 %v8945, %v8945
          %v9010 = vmul.f32 %v8946, %v8946
          %v9011 = vmul.f32 %v8947, %v8947
          %v9012 = vmul.f32 %v8948, %v8948
          %v9013 = vmul.f32 %v8949, %v8949
          %v9014 = vmul.f32 %v8950, %v8950
          %v9015 = vmul.f32 %v8951, %v8951
          %v9016 = vmul.f32 %v8952, %v8952
          %v9017 = vmul.f32 %v8953, %v8953
          %v9018 = vadd.f32 %v8954, %v8955
          %9019 = vadd.xlane.f32.xlu0 %v9018
          %v9020 = vpop.xlane.xlu0 %9019
          %v9021 = vadd.f32 %v8956, %v8957
          %9022 = vadd.xlane.f32.xlu0 %v9021
          %v9023 = vpop.xlane.xlu0 %9022
          %v9024 = vadd.f32 %v8958, %v8959
          %9025 = vadd.xlane.f32.xlu0 %v9024
          %v9026 = vpop.xlane.xlu0 %9025
          %v9027 = vadd.f32 %v8960, %v8961
          %9028 = vadd.xlane.f32.xlu0 %v9027
          %v9029 = vpop.xlane.xlu0 %9028
          %v9030 = vadd.f32 %v8962, %v8963
          %9031 = vadd.xlane.f32.xlu0 %v9030
          %v9032 = vpop.xlane.xlu0 %9031
          %v9033 = vadd.f32 %v8964, %v8965
          %9034 = vadd.xlane.f32.xlu0 %v9033
          %v9035 = vpop.xlane.xlu0 %9034
          %v9036 = vadd.f32 %v8966, %v8967
          %9037 = vadd.xlane.f32.xlu0 %v9036
          %v9038 = vpop.xlane.xlu0 %9037
          %v9039 = vadd.f32 %v8968, %v8969
          %9040 = vadd.xlane.f32.xlu0 %v9039
          %v9041 = vpop.xlane.xlu0 %9040
          %v9042 = vadd.f32 %v8970, %v8971
          %9043 = vadd.xlane.f32.xlu0 %v9042
          %v9044 = vpop.xlane.xlu0 %9043
          %v9045 = vadd.f32 %v8972, %v8973
          %9046 = vadd.xlane.f32.xlu0 %v9045
          %v9047 = vpop.xlane.xlu0 %9046
          %v9048 = vadd.f32 %v8974, %v8975
          %9049 = vadd.xlane.f32.xlu0 %v9048
          %v9050 = vpop.xlane.xlu0 %9049
          %v9051 = vadd.f32 %v8976, %v8977
          %9052 = vadd.xlane.f32.xlu0 %v9051
          %v9053 = vpop.xlane.xlu0 %9052
          %v9054 = vadd.f32 %v8978, %v8979
          %9055 = vadd.xlane.f32.xlu0 %v9054
          %v9056 = vpop.xlane.xlu0 %9055
          %v9057 = vadd.f32 %v8980, %v8981
          %9058 = vadd.xlane.f32.xlu0 %v9057
          %v9059 = vpop.xlane.xlu0 %9058
          %v9060 = vadd.f32 %v8982, %v8983
          %9061 = vadd.xlane.f32.xlu0 %v9060
          %v9062 = vpop.xlane.xlu0 %9061
          %v9063 = vadd.f32 %v8984, %v8985
          %9064 = vadd.xlane.f32.xlu0 %v9063
          %v9065 = vpop.xlane.xlu0 %9064
          %v9066 = vadd.f32 %v8986, %v8987
          %9067 = vadd.xlane.f32.xlu0 %v9066
          %v9068 = vpop.xlane.xlu0 %9067
          %v9069 = vadd.f32 %v8988, %v8989
          %9070 = vadd.xlane.f32.xlu0 %v9069
          %v9071 = vpop.xlane.xlu0 %9070
          %v9072 = vadd.f32 %v8990, %v8991
          %9073 = vadd.xlane.f32.xlu0 %v9072
          %v9074 = vpop.xlane.xlu0 %9073
          %v9075 = vadd.f32 %v8992, %v8993
          %9076 = vadd.xlane.f32.xlu0 %v9075
          %v9077 = vpop.xlane.xlu0 %9076
          %v9078 = vadd.f32 %v8994, %v8995
          %9079 = vadd.xlane.f32.xlu0 %v9078
          %v9080 = vpop.xlane.xlu0 %9079
          %v9081 = vadd.f32 %v8996, %v8997
          %9082 = vadd.xlane.f32.xlu0 %v9081
          %v9083 = vpop.xlane.xlu0 %9082
          %v9084 = vadd.f32 %v8998, %v8999
          %9085 = vadd.xlane.f32.xlu0 %v9084
          %v9086 = vpop.xlane.xlu0 %9085
          %v9087 = vadd.f32 %v9000, %v9001
          %9088 = vadd.xlane.f32.xlu0 %v9087
          %v9089 = vpop.xlane.xlu0 %9088
          %v9090 = vadd.f32 %v9002, %v9003
          %9091 = vadd.xlane.f32.xlu0 %v9090
          %v9092 = vpop.xlane.xlu0 %9091
          %v9093 = vadd.f32 %v9004, %v9005
          %9094 = vadd.xlane.f32.xlu0 %v9093
          %v9095 = vpop.xlane.xlu0 %9094
          %v9096 = vadd.f32 %v9006, %v9007
          %9097 = vadd.xlane.f32.xlu0 %v9096
          %v9098 = vpop.xlane.xlu0 %9097
          %v9099 = vadd.f32 %v9008, %v9009
          %9100 = vadd.xlane.f32.xlu0 %v9099
          %v9101 = vpop.xlane.xlu0 %9100
          %v9102 = vadd.f32 %v9010, %v9011
          %9103 = vadd.xlane.f32.xlu0 %v9102
          %v9104 = vpop.xlane.xlu0 %9103
          %v9105 = vadd.f32 %v9012, %v9013
          %9106 = vadd.xlane.f32.xlu0 %v9105
          %v9107 = vpop.xlane.xlu0 %9106
          %v9108 = vadd.f32 %v9014, %v9015
          %9109 = vadd.xlane.f32.xlu0 %v9108
          %v9110 = vpop.xlane.xlu0 %9109
          %v9111 = vadd.f32 %v9016, %v9017
          %9112 = vadd.xlane.f32.xlu0 %v9111
          %v9113 = vpop.xlane.xlu0 %9112
          %v9114 = vmul.f32 %v9020, %v5599
          %v9115 = vmul.f32 %v9023, %v5599
          %v9116 = vmul.f32 %v9026, %v5599
          %v9117 = vmul.f32 %v9029, %v5599
          %v9118 = vmul.f32 %v9032, %v5599
          %v9119 = vmul.f32 %v9035, %v5599
          %v9120 = vmul.f32 %v9038, %v5599
          %v9121 = vmul.f32 %v9041, %v5599
          %v9122 = vmul.f32 %v9044, %v5599
          %v9123 = vmul.f32 %v9047, %v5599
          %v9124 = vmul.f32 %v9050, %v5599
          %v9125 = vmul.f32 %v9053, %v5599
          %v9126 = vmul.f32 %v9056, %v5599
          %v9127 = vmul.f32 %v9059, %v5599
          %v9128 = vmul.f32 %v9062, %v5599
          %v9129 = vmul.f32 %v9065, %v5599
          %v9130 = vmul.f32 %v9068, %v5599
          %v9131 = vmul.f32 %v9071, %v5599
          %v9132 = vmul.f32 %v9074, %v5599
          %v9133 = vmul.f32 %v9077, %v5599
          %v9134 = vmul.f32 %v9080, %v5599
          %v9135 = vmul.f32 %v9083, %v5599
          %v9136 = vmul.f32 %v9086, %v5599
          %v9137 = vmul.f32 %v9089, %v5599
          %v9138 = vmul.f32 %v9092, %v5599
          %v9139 = vmul.f32 %v9095, %v5599
          %v9140 = vmul.f32 %v9098, %v5599
          %v9141 = vmul.f32 %v9101, %v5599
          %v9142 = vmul.f32 %v9104, %v5599
          %v9143 = vmul.f32 %v9107, %v5599
          %v9144 = vmul.f32 %v9110, %v5599
          %v9145 = vmul.f32 %v9113, %v5599
          %v9146 = vadd.f32 %v9114, 1e-05
          %v9147 = vadd.f32 %v9115, 1e-05
          %v9148 = vadd.f32 %v9116, 1e-05
          %v9149 = vadd.f32 %v9117, 1e-05
          %v9150 = vadd.f32 %v9118, 1e-05
          %v9151 = vadd.f32 %v9119, 1e-05
          %v9152 = vadd.f32 %v9120, 1e-05
          %v9153 = vadd.f32 %v9121, 1e-05
          %v9154 = vadd.f32 %v9122, 1e-05
          %v9155 = vadd.f32 %v9123, 1e-05
          %v9156 = vadd.f32 %v9124, 1e-05
          %v9157 = vadd.f32 %v9125, 1e-05
          %v9158 = vadd.f32 %v9126, 1e-05
          %v9159 = vadd.f32 %v9127, 1e-05
          %v9160 = vadd.f32 %v9128, 1e-05
          %v9161 = vadd.f32 %v9129, 1e-05
          %v9162 = vadd.f32 %v9130, 1e-05
          %v9163 = vadd.f32 %v9131, 1e-05
          %v9164 = vadd.f32 %v9132, 1e-05
          %v9165 = vadd.f32 %v9133, 1e-05
          %v9166 = vadd.f32 %v9134, 1e-05
          %v9167 = vadd.f32 %v9135, 1e-05
          %v9168 = vadd.f32 %v9136, 1e-05
          %v9169 = vadd.f32 %v9137, 1e-05
          %v9170 = vadd.f32 %v9138, 1e-05
          %v9171 = vadd.f32 %v9139, 1e-05
          %v9172 = vadd.f32 %v9140, 1e-05
          %v9173 = vadd.f32 %v9141, 1e-05
          %v9174 = vadd.f32 %v9142, 1e-05
          %v9175 = vadd.f32 %v9143, 1e-05
          %v9176 = vadd.f32 %v9144, 1e-05
          %v9177 = vadd.f32 %v9145, 1e-05
          %v9178 = vrsqrt.pop %v9146
          %v9179 = vrsqrt.pop %v9147
          %v9180 = vrsqrt.pop %v9148
          %v9181 = vrsqrt.pop %v9149
          %v9182 = vrsqrt.pop %v9150
          %v9183 = vrsqrt.pop %v9151
          %v9184 = vrsqrt.pop %v9152
          %v9185 = vrsqrt.pop %v9153
          %v9186 = vrsqrt.pop %v9154
          %v9187 = vrsqrt.pop %v9155
          %v9188 = vrsqrt.pop %v9156
          %v9189 = vrsqrt.pop %v9157
          %v9190 = vrsqrt.pop %v9158
          %v9191 = vrsqrt.pop %v9159
          %v9192 = vrsqrt.pop %v9160
          %v9193 = vrsqrt.pop %v9161
          %v9194 = vrsqrt.pop %v9162
          %v9195 = vrsqrt.pop %v9163
          %v9196 = vrsqrt.pop %v9164
          %v9197 = vrsqrt.pop %v9165
          %v9198 = vrsqrt.pop %v9166
          %v9199 = vrsqrt.pop %v9167
          %v9200 = vrsqrt.pop %v9168
          %v9201 = vrsqrt.pop %v9169
          %v9202 = vrsqrt.pop %v9170
          %v9203 = vrsqrt.pop %v9171
          %v9204 = vrsqrt.pop %v9172
          %v9205 = vrsqrt.pop %v9173
          %v9206 = vrsqrt.pop %v9174
          %v9207 = vrsqrt.pop %v9175
          %v9208 = vrsqrt.pop %v9176
          %v9209 = vrsqrt.pop %v9177
          %v9210 = vmul.f32 %v8890, %v9178
          %v9211 = vmul.f32 %v8891, %v9178
          %v9212 = vmul.f32 %v8892, %v9179
          %v9213 = vmul.f32 %v8893, %v9179
          %v9214 = vmul.f32 %v8894, %v9180
          %v9215 = vmul.f32 %v8895, %v9180
          %v9216 = vmul.f32 %v8896, %v9181
          %v9217 = vmul.f32 %v8897, %v9181
          %v9218 = vmul.f32 %v8898, %v9182
          %v9219 = vmul.f32 %v8899, %v9182
          %v9220 = vmul.f32 %v8900, %v9183
          %v9221 = vmul.f32 %v8901, %v9183
          %v9222 = vmul.f32 %v8902, %v9184
          %v9223 = vmul.f32 %v8903, %v9184
          %v9224 = vmul.f32 %v8904, %v9185
          %v9225 = vmul.f32 %v8905, %v9185
          %v9226 = vmul.f32 %v8906, %v9186
          %v9227 = vmul.f32 %v8907, %v9186
          %v9228 = vmul.f32 %v8908, %v9187
          %v9229 = vmul.f32 %v8909, %v9187
          %v9230 = vmul.f32 %v8910, %v9188
          %v9231 = vmul.f32 %v8911, %v9188
          %v9232 = vmul.f32 %v8912, %v9189
          %v9233 = vmul.f32 %v8913, %v9189
          %v9234 = vmul.f32 %v8914, %v9190
          %v9235 = vmul.f32 %v8915, %v9190
          %v9236 = vmul.f32 %v8916, %v9191
          %v9237 = vmul.f32 %v8917, %v9191
          %v9238 = vmul.f32 %v8918, %v9192
          %v9239 = vmul.f32 %v8919, %v9192
          %v9240 = vmul.f32 %v8920, %v9193
          %v9241 = vmul.f32 %v8921, %v9193
          %v9242 = vmul.f32 %v8922, %v9194
          %v9243 = vmul.f32 %v8923, %v9194
          %v9244 = vmul.f32 %v8924, %v9195
          %v9245 = vmul.f32 %v8925, %v9195
          %v9246 = vmul.f32 %v8926, %v9196
          %v9247 = vmul.f32 %v8927, %v9196
          %v9248 = vmul.f32 %v8928, %v9197
          %v9249 = vmul.f32 %v8929, %v9197
          %v9250 = vmul.f32 %v8930, %v9198
          %v9251 = vmul.f32 %v8931, %v9198
          %v9252 = vmul.f32 %v8932, %v9199
          %v9253 = vmul.f32 %v8933, %v9199
          %v9254 = vmul.f32 %v8934, %v9200
          %v9255 = vmul.f32 %v8935, %v9200
          %v9256 = vmul.f32 %v8936, %v9201
          %v9257 = vmul.f32 %v8937, %v9201
          %v9258 = vmul.f32 %v8938, %v9202
          %v9259 = vmul.f32 %v8939, %v9202
          %v9260 = vmul.f32 %v8940, %v9203
          %v9261 = vmul.f32 %v8941, %v9203
          %v9262 = vmul.f32 %v8942, %v9204
          %v9263 = vmul.f32 %v8943, %v9204
          %v9264 = vmul.f32 %v8944, %v9205
          %v9265 = vmul.f32 %v8945, %v9205
          %v9266 = vmul.f32 %v8946, %v9206
          %v9267 = vmul.f32 %v8947, %v9206
          %v9268 = vmul.f32 %v8948, %v9207
          %v9269 = vmul.f32 %v8949, %v9207
          %v9270 = vmul.f32 %v8950, %v9208
          %v9271 = vmul.f32 %v8951, %v9208
          %v9272 = vmul.f32 %v8952, %v9209
          %v9273 = vmul.f32 %v8953, %v9209
          %v9275 = vlaneseq
          %v9276 = vshrl.u32 %v9275, 7
          %v9277 = vsub.s32 0, %v9276
          %v9278 = vrot.slane %v8760, %v9277
          %v9279 = vlaneseq
          %v9280 = vshrl.u32 %v9279, 7
          %v9281 = vsub.s32 1, %v9280
          %v9282 = vrot.slane %v8760, %v9281
          %v9285 = vmul.f32 %v9210, %v9278
          %v9286 = vmul.f32 %v9211, %v9282
          %v9287 = vmul.f32 %v9212, %v9278
          %v9288 = vmul.f32 %v9213, %v9282
          %v9289 = vmul.f32 %v9214, %v9278
          %v9290 = vmul.f32 %v9215, %v9282
          %v9291 = vmul.f32 %v9216, %v9278
          %v9292 = vmul.f32 %v9217, %v9282
          %v9293 = vmul.f32 %v9218, %v9278
          %v9294 = vmul.f32 %v9219, %v9282
          %v9295 = vmul.f32 %v9220, %v9278
          %v9296 = vmul.f32 %v9221, %v9282
          %v9297 = vmul.f32 %v9222, %v9278
          %v9298 = vmul.f32 %v9223, %v9282
          %v9299 = vmul.f32 %v9224, %v9278
          %v9300 = vmul.f32 %v9225, %v9282
          %v9301 = vmul.f32 %v9226, %v9278
          %v9302 = vmul.f32 %v9227, %v9282
          %v9303 = vmul.f32 %v9228, %v9278
          %v9304 = vmul.f32 %v9229, %v9282
          %v9305 = vmul.f32 %v9230, %v9278
          %v9306 = vmul.f32 %v9231, %v9282
          %v9307 = vmul.f32 %v9232, %v9278
          %v9308 = vmul.f32 %v9233, %v9282
          %v9309 = vmul.f32 %v9234, %v9278
          %v9310 = vmul.f32 %v9235, %v9282
          %v9311 = vmul.f32 %v9236, %v9278
          %v9312 = vmul.f32 %v9237, %v9282
          %v9313 = vmul.f32 %v9238, %v9278
          %v9314 = vmul.f32 %v9239, %v9282
          %v9315 = vmul.f32 %v9240, %v9278
          %v9316 = vmul.f32 %v9241, %v9282
          %v9317 = vmul.f32 %v9242, %v9278
          %v9318 = vmul.f32 %v9243, %v9282
          %v9319 = vmul.f32 %v9244, %v9278
          %v9320 = vmul.f32 %v9245, %v9282
          %v9321 = vmul.f32 %v9246, %v9278
          %v9322 = vmul.f32 %v9247, %v9282
          %v9323 = vmul.f32 %v9248, %v9278
          %v9324 = vmul.f32 %v9249, %v9282
          %v9325 = vmul.f32 %v9250, %v9278
          %v9326 = vmul.f32 %v9251, %v9282
          %v9327 = vmul.f32 %v9252, %v9278
          %v9328 = vmul.f32 %v9253, %v9282
          %v9329 = vmul.f32 %v9254, %v9278
          %v9330 = vmul.f32 %v9255, %v9282
          %v9331 = vmul.f32 %v9256, %v9278
          %v9332 = vmul.f32 %v9257, %v9282
          %v9333 = vmul.f32 %v9258, %v9278
          %v9334 = vmul.f32 %v9259, %v9282
          %v9335 = vmul.f32 %v9260, %v9278
          %v9336 = vmul.f32 %v9261, %v9282
          %v9337 = vmul.f32 %v9262, %v9278
          %v9338 = vmul.f32 %v9263, %v9282
          %v9339 = vmul.f32 %v9264, %v9278
          %v9340 = vmul.f32 %v9265, %v9282
          %v9341 = vmul.f32 %v9266, %v9278
          %v9342 = vmul.f32 %v9267, %v9282
          %v9343 = vmul.f32 %v9268, %v9278
          %v9344 = vmul.f32 %v9269, %v9282
          %v9345 = vmul.f32 %v9270, %v9278
          %v9346 = vmul.f32 %v9271, %v9282
          %v9347 = vmul.f32 %v9272, %v9278
          %v9348 = vmul.f32 %v9273, %v9282
          %v9350 = vlaneseq
          %v9351 = vshrl.u32 %v9350, 7
          %v9352 = vsub.s32 0, %v9351
          %v9353 = vrot.slane %v8761, %v9352
          %v9354 = vlaneseq
          %v9355 = vshrl.u32 %v9354, 7
          %v9356 = vsub.s32 1, %v9355
          %v9357 = vrot.slane %v8761, %v9356
          %v9360 = vadd.f32 %v9285, %v9353
          %v9361 = vadd.f32 %v9286, %v9357
          %v9362 = vadd.f32 %v9287, %v9353
          %v9363 = vadd.f32 %v9288, %v9357
          %v9364 = vadd.f32 %v9289, %v9353
          %v9365 = vadd.f32 %v9290, %v9357
          %v9366 = vadd.f32 %v9291, %v9353
          %v9367 = vadd.f32 %v9292, %v9357
          %v9368 = vadd.f32 %v9293, %v9353
          %v9369 = vadd.f32 %v9294, %v9357
          %v9370 = vadd.f32 %v9295, %v9353
          %v9371 = vadd.f32 %v9296, %v9357
          %v9372 = vadd.f32 %v9297, %v9353
          %v9373 = vadd.f32 %v9298, %v9357
          %v9374 = vadd.f32 %v9299, %v9353
          %v9375 = vadd.f32 %v9300, %v9357
          %v9376 = vadd.f32 %v9301, %v9353
          %v9377 = vadd.f32 %v9302, %v9357
          %v9378 = vadd.f32 %v9303, %v9353
          %v9379 = vadd.f32 %v9304, %v9357
          %v9380 = vadd.f32 %v9305, %v9353
          %v9381 = vadd.f32 %v9306, %v9357
          %v9382 = vadd.f32 %v9307, %v9353
          %v9383 = vadd.f32 %v9308, %v9357
          %v9384 = vadd.f32 %v9309, %v9353
          %v9385 = vadd.f32 %v9310, %v9357
          %v9386 = vadd.f32 %v9311, %v9353
          %v9387 = vadd.f32 %v9312, %v9357
          %v9388 = vadd.f32 %v9313, %v9353
          %v9389 = vadd.f32 %v9314, %v9357
          %v9390 = vadd.f32 %v9315, %v9353
          %v9391 = vadd.f32 %v9316, %v9357
          %v9392 = vadd.f32 %v9317, %v9353
          %v9393 = vadd.f32 %v9318, %v9357
          %v9394 = vadd.f32 %v9319, %v9353
          %v9395 = vadd.f32 %v9320, %v9357
          %v9396 = vadd.f32 %v9321, %v9353
          %v9397 = vadd.f32 %v9322, %v9357
          %v9398 = vadd.f32 %v9323, %v9353
          %v9399 = vadd.f32 %v9324, %v9357
          %v9400 = vadd.f32 %v9325, %v9353
          %v9401 = vadd.f32 %v9326, %v9357
          %v9402 = vadd.f32 %v9327, %v9353
          %v9403 = vadd.f32 %v9328, %v9357
          %v9404 = vadd.f32 %v9329, %v9353
          %v9405 = vadd.f32 %v9330, %v9357
          %v9406 = vadd.f32 %v9331, %v9353
          %v9407 = vadd.f32 %v9332, %v9357
          %v9408 = vadd.f32 %v9333, %v9353
          %v9409 = vadd.f32 %v9334, %v9357
          %v9410 = vadd.f32 %v9335, %v9353
          %v9411 = vadd.f32 %v9336, %v9357
          %v9412 = vadd.f32 %v9337, %v9353
          %v9413 = vadd.f32 %v9338, %v9357
          %v9414 = vadd.f32 %v9339, %v9353
          %v9415 = vadd.f32 %v9340, %v9357
          %v9416 = vadd.f32 %v9341, %v9353
          %v9417 = vadd.f32 %v9342, %v9357
          %v9418 = vadd.f32 %v9343, %v9353
          %v9419 = vadd.f32 %v9344, %v9357
          %v9420 = vadd.f32 %v9345, %v9353
          %v9421 = vadd.f32 %v9346, %v9357
          %v9422 = vadd.f32 %v9347, %v9353
          %v9423 = vadd.f32 %v9348, %v9357
          %9424 = vst [vmem:[%s1020] sm:$0xff] %v9360
          %9425 = vst [vmem:[%s1020 + $0x8] sm:$0xff] %v9361
          %9426 = vst [vmem:[%s1020 + $0x10] sm:$0xff] %v9362
          %9427 = vst [vmem:[%s1020 + $0x18] sm:$0xff] %v9363
          %9428 = vst [vmem:[%s1020 + $0x20] sm:$0xff] %v9364
          %9429 = vst [vmem:[%s1020 + $0x28] sm:$0xff] %v9365
          %9430 = vst [vmem:[%s1020 + $0x30] sm:$0xff] %v9366
          %9431 = vst [vmem:[%s1020 + $0x38] sm:$0xff] %v9367
          %9432 = vst [vmem:[%s1020 + $0x40] sm:$0xff] %v9368
          %9433 = vst [vmem:[%s1020 + $0x48] sm:$0xff] %v9369
          %9434 = vst [vmem:[%s1020 + $0x50] sm:$0xff] %v9370
          %9435 = vst [vmem:[%s1020 + $0x58] sm:$0xff] %v9371
          %9436 = vst [vmem:[%s1020 + $0x60] sm:$0xff] %v9372
          %9437 = vst [vmem:[%s1020 + $0x68] sm:$0xff] %v9373
          %9438 = vst [vmem:[%s1020 + $0x70] sm:$0xff] %v9374
          %9439 = vst [vmem:[%s1020 + $0x78] sm:$0xff] %v9375
          %9440 = vst [vmem:[%s1020 + $0x80] sm:$0xff] %v9376
          %9441 = vst [vmem:[%s1020 + $0x88] sm:$0xff] %v9377
          %9442 = vst [vmem:[%s1020 + $0x90] sm:$0xff] %v9378
          %9443 = vst [vmem:[%s1020 + $0x98] sm:$0xff] %v9379
          %9444 = vst [vmem:[%s1020 + $0xa0] sm:$0xff] %v9380
          %9445 = vst [vmem:[%s1020 + $0xa8] sm:$0xff] %v9381
          %9446 = vst [vmem:[%s1020 + $0xb0] sm:$0xff] %v9382
          %9447 = vst [vmem:[%s1020 + $0xb8] sm:$0xff] %v9383
          %9448 = vst [vmem:[%s1020 + $0xc0] sm:$0xff] %v9384
          %9449 = vst [vmem:[%s1020 + $0xc8] sm:$0xff] %v9385
          %9450 = vst [vmem:[%s1020 + $0xd0] sm:$0xff] %v9386
          %9451 = vst [vmem:[%s1020 + $0xd8] sm:$0xff] %v9387
          %9452 = vst [vmem:[%s1020 + $0xe0] sm:$0xff] %v9388
          %9453 = vst [vmem:[%s1020 + $0xe8] sm:$0xff] %v9389
          %9454 = vst [vmem:[%s1020 + $0xf0] sm:$0xff] %v9390
          %9455 = vst [vmem:[%s1020 + $0xf8] sm:$0xff] %v9391
          %9456 = vst [vmem:[%s1020 + $0x100] sm:$0xff] %v9392
          %9457 = vst [vmem:[%s1020 + $0x108] sm:$0xff] %v9393
          %9458 = vst [vmem:[%s1020 + $0x110] sm:$0xff] %v9394
          %9459 = vst [vmem:[%s1020 + $0x118] sm:$0xff] %v9395
          %9460 = vst [vmem:[%s1020 + $0x120] sm:$0xff] %v9396
          %9461 = vst [vmem:[%s1020 + $0x128] sm:$0xff] %v9397
          %9462 = vst [vmem:[%s1020 + $0x130] sm:$0xff] %v9398
          %9463 = vst [vmem:[%s1020 + $0x138] sm:$0xff] %v9399
          %9464 = vst [vmem:[%s1020 + $0x140] sm:$0xff] %v9400
          %9465 = vst [vmem:[%s1020 + $0x148] sm:$0xff] %v9401
          %9466 = vst [vmem:[%s1020 + $0x150] sm:$0xff] %v9402
          %9467 = vst [vmem:[%s1020 + $0x158] sm:$0xff] %v9403
          %9468 = vst [vmem:[%s1020 + $0x160] sm:$0xff] %v9404
          %9469 = vst [vmem:[%s1020 + $0x168] sm:$0xff] %v9405
          %9470 = vst [vmem:[%s1020 + $0x170] sm:$0xff] %v9406
          %9471 = vst [vmem:[%s1020 + $0x178] sm:$0xff] %v9407
          %9472 = vst [vmem:[%s1020 + $0x180] sm:$0xff] %v9408
          %9473 = vst [vmem:[%s1020 + $0x188] sm:$0xff] %v9409
          %9474 = vst [vmem:[%s1020 + $0x190] sm:$0xff] %v9410
          %9475 = vst [vmem:[%s1020 + $0x198] sm:$0xff] %v9411
          %9476 = vst [vmem:[%s1020 + $0x1a0] sm:$0xff] %v9412
          %9477 = vst [vmem:[%s1020 + $0x1a8] sm:$0xff] %v9413
          %9478 = vst [vmem:[%s1020 + $0x1b0] sm:$0xff] %v9414
          %9479 = vst [vmem:[%s1020 + $0x1b8] sm:$0xff] %v9415
          %9480 = vst [vmem:[%s1020 + $0x1c0] sm:$0xff] %v9416
          %9481 = vst [vmem:[%s1020 + $0x1c8] sm:$0xff] %v9417
          %9482 = vst [vmem:[%s1020 + $0x1d0] sm:$0xff] %v9418
          %9483 = vst [vmem:[%s1020 + $0x1d8] sm:$0xff] %v9419
          %9484 = vst [vmem:[%s1020 + $0x1e0] sm:$0xff] %v9420
          %9485 = vst [vmem:[%s1020 + $0x1e8] sm:$0xff] %v9421
          %9486 = vst [vmem:[%s1020 + $0x1f0] sm:$0xff] %v9422
          %9487 = vst [vmem:[%s1020 + $0x1f8] sm:$0xff] %v9423
        $region156: #{tpu_custom_call.1} parent=83 // pred_fallthru
          _
        %s9488 = sand.u32 %s456, 1
        %s9489 = scalar_lea.sflag [#allocation5], %s9488
        %s9490 = sand.u32 %s456, 1
        %s9491 = smul.addr %s9490, 512
        %s9492 = scalar_lea.vmem [#allocation23], %s9491
        // Predicated region
        $region157: #{tpu_custom_call.1} parent=83 // pred_check
          %p9493 = pneg %p466
        $region158: #{tpu_custom_call.1} parent=83 // pred_check_branch
          %9495 = sbr.rel (%p9493) target = $region160
        $region159: #{tpu_custom_call.1} parent=83 // pred_region
          %s9496 = smul.u32 8, %s39
          %s9498 = ssub.s32 8192, 8192
          %9499 = vsyncadd %s9489, %s9498
          %s9500 = smul.addr %s9496, 8
          %s9501 = smul.addr %s9500, 128
          %s9502 = scalar_lea.hbm %s16, %s9501
          %s9503 = sshll.u32 %s9492, 4
          %s9504 = int_to_ptr.vmem [resolvable:$true] %s9503
          %9509 = dma.vmem_to_hbm [thread:$0]  %s9504, 8192, %s9502, %s9489, 256, 256, 16
        $region160: #{tpu_custom_call.1} parent=83 // pred_fallthru
          _
      $region84: #{tpu_custom_call.1} parent=5 // pred_fallthru
        _
      %p9510 = scmp.le.s32.totalorder 2, %s30
      // Predicated region
      $region161: #{tpu_custom_call.1} parent=5 // pred_check
        %p9511 = pneg %p9510
      $region162: #{tpu_custom_call.1} parent=5 // pred_check_branch
        %9513 = sbr.rel (%p9511) target = $region164
      $region163: #{tpu_custom_call.1} parent=5 // pred_region
        %s9514 = ssub.s32 %s30, 2
        // Predicated region
        $region165: #{tpu_custom_call.1} parent=163 // pred_check
          %p9515 = pneg %p472
        $region166: #{tpu_custom_call.1} parent=163 // pred_check_branch
          %9517 = sbr.rel (%p9515) target = $region168
        $region167: #{tpu_custom_call.1} parent=163 // pred_region
          %s9518 = sand.u32 %s457, 1
          %s9519 = scalar_lea.sflag [#allocation5], %s9518
          %s9520 = sand.u32 %s457, 1
          %s9521 = smul.addr %s9520, 512
          %s9522 = scalar_lea.vmem [#allocation23], %s9521
          %9523 = dma.done %s9519, 8192
        $region168: #{tpu_custom_call.1} parent=163 // pred_fallthru
          _
      $region164: #{tpu_custom_call.1} parent=5 // pred_fallthru
        _
    $region6: #{tpu_custom_call.1} parent=1 // loop_footer
      %s34 = sadd.s32 1, %s30
    $region7: #{tpu_custom_call.1} parent=1 // loop_footer_branch
      %29 = sbr.rel target = $region3
    $region8: #{tpu_custom_call.1} parent=1 // loop_exit
      _
    %9524 = vsyncpa [#allocation4], 1
    %s9525 = scalar_lea.sflag [#allocation4], 1
    %9526 = vsyncpa %s9525, 1
    %9527 = vsyncpa [#allocation7], 1
    %9528 = vsyncpa [#allocation22], 1
    %9529 = vsyncpa [#allocation5], 1
    %s9530 = scalar_lea.sflag [#allocation5], 1
    %9531 = vsyncpa %s9530, 1

</llo_original>
